<compile_context>
chip_gen: v6e
topology: v6e:2x2x1
jax: 0.10.0
libtpu: 0.0.40
codegen_flags: <defaults>
</compile_context>

<pallas_src>
import functools

import jax
import jax.numpy as jnp
import numpy as np
from jax.experimental import pallas as pl
from jax.experimental.pallas import tpu as pltpu

BN_EPS = 1e-5
LANE = 128


def _round_up(v, m=LANE):
    return ((v + m - 1) // m) * m


# --------------------------------------------------------------------------
# Fused whole-network kernel (B images per grid step, weights VMEM-resident).
# --------------------------------------------------------------------------
def _fused_kernel(x_ref,
                  t1_ref, cb1_ref, cs1_ref, co1_ref,
                  t2_ref, cb2_ref, cs2_ref, co2_ref,
                  t3_ref, cb3_ref, cs3_ref, co3_ref,
                  wl1_ref, bl1_ref, wl2_ref, bl2_ref,
                  logits_ref, feat_ref):

    def conv_stage(a, t_ref, bias_ref, scale_ref, shift_ref):
        # a: (Ha, B, (W+2)*Cin) bf16, width-pad columns already zero.
        # Conv2d(3x3, padding=(0,1)) -> ReLU -> folded BN -> MaxPool((3,1)),
        # computed as 3 row-Toeplitz lane-dense matmuls (one per kernel row).
        Ha, B, Lin = a.shape
        Hc = Ha - 2                      # 'valid' conv height
        Hp = Hc // 3                     # floor-mode (3,1) pool height
        Lout = t_ref.shape[-1]           # (W+2)*Cout

        # Outer-dim slices + sublane-merging reshapes (B % 8 == 0 -> no relayout).
        acc = jnp.dot(a[0:Hc].reshape(Hc * B, Lin), t_ref[0],
                      preferred_element_type=jnp.float32)
        acc = acc + jnp.dot(a[1:Hc + 1].reshape(Hc * B, Lin), t_ref[1],
                            preferred_element_type=jnp.float32)
        acc = acc + jnp.dot(a[2:Hc + 2].reshape(Hc * B, Lin), t_ref[2],
                            preferred_element_type=jnp.float32)

        # bias -> ReLU (Dropout = id) -> BN (running stats).  The pre-tiled
        # lane vectors are zero on pad columns, so pad columns stay exactly 0.
        acc = jnp.maximum(acc + bias_ref[...], 0.0) * scale_ref[...] + shift_ref[...]

        # MaxPool2d((3,1)), floor mode (drop leftover rows).
        y = acc.reshape(Hc, B, Lout)[:Hp * 3].reshape(Hp, 3, B, Lout)
        pooled = jnp.maximum(jnp.maximum(y[:, 0], y[:, 1]), y[:, 2])
        return pooled.astype(jnp.bfloat16)           # (Hp, B, Lout)

    a = x_ref[0]                                     # (H, B, (W+2)*Cin) bf16
    a = conv_stage(a, t1_ref, cb1_ref, cs1_ref, co1_ref)
    a = conv_stage(a, t2_ref, cb2_ref, cs2_ref, co2_ref)
    a = conv_stage(a, t3_ref, cb3_ref, cs3_ref, co3_ref)   # (Hp3, B, (W+2)*C3)

    # Flatten + Linear as a sum of per-row matmuls (contracts rows and lanes
    # without any relayout); the NCHW Flatten(1,3) permutation and the zero
    # pad columns are folded into wl1 at prep time.
    Hp3 = a.shape[0]
    h = jnp.dot(a[0], wl1_ref[0], preferred_element_type=jnp.float32)
    for r in range(1, Hp3):
        h = h + jnp.dot(a[r], wl1_ref[r], preferred_element_type=jnp.float32)

    feat = jnp.tanh(h + bl1_ref[...])                # (B, emb_p) f32
    feat_ref[...] = feat.astype(feat_ref.dtype)
    logits_ref[...] = (jnp.dot(feat.astype(jnp.bfloat16), wl2_ref[...],
                               preferred_element_type=jnp.float32)
                       + bl2_ref[...]).astype(logits_ref.dtype)


# --------------------------------------------------------------------------
# Wrapper: one pallas_call for the whole forward pass.
# --------------------------------------------------------------------------
@functools.partial(jax.jit,
                   static_argnames=("out_feature", "embedding_dim", "block_n"))
def forward(x, kp, *, out_feature, embedding_dim, block_n=8):
    assert block_n % 8 == 0, "block_n must be a multiple of 8 (sublane aligned)"
    N, H, W, Cin = x.shape
    Wp = W + 2
    L0 = Wp * Cin
    nb = pl.cdiv(N, block_n)
    Np = nb * block_n
    emb_p = kp["wl1"].shape[-1]
    out_p = kp["wl2"].shape[-1]

    # One-shot input prep outside the kernel: bf16 cast, batch pad, width pad,
    # and (blocks, H, B, (W+2)*Cin) layout (B on sublanes inside the kernel).
    xp = jnp.pad(x.astype(jnp.bfloat16),
                 ((0, Np - N), (0, 0), (1, 1), (0, 0)))
    xp = xp.reshape(Np, H, L0).reshape(nb, block_n, H, L0).transpose(0, 2, 1, 3)

    def rep(arr):    # whole (small) array resident in VMEM, fetched once
        nd = arr.ndim
        return pl.BlockSpec(arr.shape, lambda n, _nd=nd: (0,) * _nd)

    conv_args = [a for name in ("c1", "c2", "c3") for a in kp[name]]
    mlp_args = [kp["wl1"], kp["bl1"], kp["wl2"], kp["bl2"]]
    in_specs = ([pl.BlockSpec((1, H, block_n, L0), lambda n: (n, 0, 0, 0))]
                + [rep(a) for a in conv_args + mlp_args])

    logits_p, feat_p = pl.pallas_call(
        _fused_kernel,
        out_shape=(jax.ShapeDtypeStruct((Np, out_p), jnp.float32),
                   jax.ShapeDtypeStruct((Np, emb_p), jnp.float32)),
        grid=(nb,),
        in_specs=in_specs,
        out_specs=(pl.BlockSpec((block_n, out_p), lambda n: (n, 0)),
                   pl.BlockSpec((block_n, emb_p), lambda n: (n, 0))),
        compiler_params=pltpu.CompilerParams(
            dimension_semantics=("parallel",),
            vmem_limit_bytes=64 * 1024 * 1024),
    )(xp, *conv_args, *mlp_args)

    return logits_p[:N, :out_feature], feat_p[:N, :embedding_dim]


# --------------------------------------------------------------------------
# Parameter preparation: reference params -> fused-kernel layout.
# --------------------------------------------------------------------------
def prepare_kernel_params(params, *, H, W, out_feature, embedding_dim):
    Wp = W + 2

    def conv(p):
        w, b, scale, shift = (np.asarray(a, np.float32) for a in p)
        _, _, cin, cout = w.shape                        # HWIO
        # Row-Toeplitz matrices: T[kh] maps padded-width input lanes (wi, ci)
        # to padded-width output lanes (wo, co); pad output columns are zero.
        T = np.zeros((3, Wp * cin, Wp * cout), np.float32)
        for kh in range(3):
            for wo in range(1, W + 1):
                for kw in range(3):
                    wi = wo - 1 + kw
                    T[kh, wi * cin:(wi + 1) * cin,
                      wo * cout:(wo + 1) * cout] = w[kh, kw]

        def lanevec(v):   # (cout,) values tiled over real columns, 0 on pads
            out = np.zeros((Wp, cout), np.float32)
            out[1:W + 1, :] = np.asarray(v, np.float32).reshape(1, cout)
            return jnp.asarray(out.reshape(1, Wp * cout))

        return (jnp.asarray(T, jnp.bfloat16),
                lanevec(b), lanevec(scale), lanevec(shift))

    h1 = (H - 2) // 3
    h2 = (h1 - 2) // 3
    h3 = (h2 - 2) // 3                                   # height after 3 stages
    c3 = np.asarray(params["c3"][0]).shape[-1]
    dim = np.asarray(params["w1"]).shape[0]
    assert dim == c3 * h3 * W, (dim, c3, h3, W)

    emb_p = _round_up(embedding_dim)
    out_p = _round_up(out_feature)

    # lin1 weight: NCHW flat row (c, r, j) -> kernel layout (r, (j+1)*c3 + c),
    # with zero rows for the width-pad columns and zero-padded emb lanes.
    w1 = np.asarray(params["w1"], np.float32)            # (dim, emb)
    w1r = w1.reshape(c3, h3, W, embedding_dim).transpose(1, 2, 0, 3)
    wl1 = np.zeros((h3, Wp, c3, emb_p), np.float32)
    wl1[:, 1:W + 1, :, :embedding_dim] = w1r
    wl1 = jnp.asarray(wl1.reshape(h3, Wp * c3, emb_p), jnp.bfloat16)

    bl1 = np.zeros((1, emb_p), np.float32)
    bl1[:, :embedding_dim] = np.asarray(params["b1"], np.float32)
    wl2 = np.zeros((emb_p, out_p), np.float32)
    wl2[:embedding_dim, :out_feature] = np.asarray(params["w2"], np.float32)
    bl2 = np.zeros((1, out_p), np.float32)
    bl2[:, :out_feature] = np.asarray(params["b2"], np.float32)

    return {"c1": conv(params["c1"]), "c2": conv(params["c2"]),
            "c3": conv(params["c3"]),
            "wl1": wl1, "bl1": jnp.asarray(bl1),
            "wl2": jnp.asarray(wl2, jnp.bfloat16), "bl2": jnp.asarray(bl2)}


# --------------------------------------------------------------------------
# Deterministic synthetic parameters (shapes follow the module's __init__)
# --------------------------------------------------------------------------
def init_params(key, in_feature, out_feature, dim, embedding_dim):
    ks = jax.random.split(key, 7)

    def conv_block(k, cin, cout):
        k1, k2, k3, k4, k5, k6 = jax.random.split(k, 6)
        w = 0.1 * jax.random.normal(k1, (3, 3, cin, cout), jnp.float32)   # HWIO
        b = 0.1 * jax.random.normal(k2, (1, cout), jnp.float32)
        gamma = 1.0 + 0.1 * jax.random.normal(k3, (1, cout), jnp.float32)
        beta = 0.1 * jax.random.normal(k4, (1, cout), jnp.float32)
        mean = 0.1 * jax.random.normal(k5, (1, cout), jnp.float32)
        var = 0.5 + jax.random.uniform(k6, (1, cout), jnp.float32)
        scale = gamma / jnp.sqrt(var + BN_EPS)
        shift = beta - mean * scale
        return (w, b, scale, shift)

    return {
        "c1": conv_block(ks[0], in_feature, 64),
        "c2": conv_block(ks[1], 64, 32),
        "c3": conv_block(ks[2], 32, 16),
        "w1": 0.05 * jax.random.normal(ks[3], (dim, embedding_dim), jnp.float32),
        "b1": 0.05 * jax.random.normal(ks[4], (1, embedding_dim), jnp.float32),
        "w2": 0.1 * jax.random.normal(ks[5], (embedding_dim, out_feature), jnp.float32),
        "b2": 0.1 * jax.random.normal(ks[6], (1, out_feature), jnp.float32),
    }


# --------------------------------------------------------------------------
# Pure-JAX f32 reference (mirrors the PyTorch eval forward) for sanity check
# --------------------------------------------------------------------------
def ref_forward(x, params):
    h = jnp.transpose(x, (0, 3, 1, 2))  # NCHW, as in the PyTorch module
    for name in ("c1", "c2", "c3"):
        w, b, scale, shift = params[name]
        h = jax.lax.conv_general_dilated(
            h, w, window_strides=(1, 1), padding=((0, 0), (1, 1)),
            dimension_numbers=("NCHW", "HWIO", "NCHW"))
        h = h + b.reshape(1, -1, 1, 1)
        h = jnp.maximum(h, 0.0)
        h = h * scale.reshape(1, -1, 1, 1) + shift.reshape(1, -1, 1, 1)
        h = jax.lax.reduce_window(h, -jnp.inf, jax.lax.max,
                                  (1, 1, 3, 1), (1, 1, 3, 1), "VALID")
    flat = h.reshape(h.shape[0], -1)
    feat = jnp.tanh(flat @ params["w1"] + params["b1"])
    out = feat @ params["w2"] + params["b2"]
    return out, feat


if __name__ == "__main__":
    # Small shapes consistent with the module:
    #  heights 56 -> 54 -> 18 -> 16 -> 5 -> 3 -> 1, width stays 8
    #  flattened dim = 16 * 1 * 8 = 128 (stands in for the default dim=1840)
    # N=16 with block_n=8 gives a grid of length 2 (sharded across TCs on v7x).
    N, H, W, C = 16, 56, 8, 4
    in_feature, out_feature = C, 10
    dim, embedding_dim = 16 * 1 * W, 32

    root = jax.random.PRNGKey(0)
    k_x, k_p = jax.random.split(root)
    x = jax.random.normal(k_x, (N, H, W, C), jnp.float32)
    params = init_params(k_p, in_feature, out_feature, dim, embedding_dim)
    kparams = prepare_kernel_params(params, H=H, W=W,
                                    out_feature=out_feature,
                                    embedding_dim=embedding_dim)

    logits, feature = forward(x, kparams, out_feature=out_feature,
                              embedding_dim=embedding_dim, block_n=8)
    jax.block_until_ready((logits, feature))

    ref_logits, ref_feature = ref_forward(x, params)
    np.testing.assert_allclose(np.asarray(logits), np.asarray(ref_logits),
                               rtol=2e-2, atol=2e-2)
    np.testing.assert_allclose(np.asarray(feature), np.asarray(ref_feature),
                               rtol=2e-2, atol=2e-2)

    assert logits.shape == (N, out_feature) and feature.shape == (N, embedding_dim)
    print("KERNEL_OK")
</pallas_src>

<mosaic_0001>
module attributes {stable_mosaic.version = 11 : i64} {
  func.func @_fused_kernel(%arg0: i32, %arg1: memref<1x56x8x40xbf16, #tpu.memory_space<vmem>>, %arg2: memref<3x40x640xbf16, #tpu.memory_space<vmem>>, %arg3: memref<1x640xf32, #tpu.memory_space<vmem>>, %arg4: memref<1x640xf32, #tpu.memory_space<vmem>>, %arg5: memref<1x640xf32, #tpu.memory_space<vmem>>, %arg6: memref<3x640x320xbf16, #tpu.memory_space<vmem>>, %arg7: memref<1x320xf32, #tpu.memory_space<vmem>>, %arg8: memref<1x320xf32, #tpu.memory_space<vmem>>, %arg9: memref<1x320xf32, #tpu.memory_space<vmem>>, %arg10: memref<3x320x160xbf16, #tpu.memory_space<vmem>>, %arg11: memref<1x160xf32, #tpu.memory_space<vmem>>, %arg12: memref<1x160xf32, #tpu.memory_space<vmem>>, %arg13: memref<1x160xf32, #tpu.memory_space<vmem>>, %arg14: memref<1x160x128xbf16, #tpu.memory_space<vmem>>, %arg15: memref<1x128xf32, #tpu.memory_space<vmem>>, %arg16: memref<128x128xbf16, #tpu.memory_space<vmem>>, %arg17: memref<1x128xf32, #tpu.memory_space<vmem>>, %arg18: memref<8x128xf32, #tpu.memory_space<vmem>>, %arg19: memref<8x128xf32, #tpu.memory_space<vmem>>) attributes {dimension_semantics = [#tpu.dimension_semantics<parallel>], iteration_bounds = array<i64: 2>, scalar_prefetch = 0 : i64, scratch_operands = 0 : i64, tpu.core_type = #tpu.core_type<tc>, window_params = [{transform_indices = @transform_0, window_bounds = array<i64: 1, 56, 8, 40>}, {pipeline_mode = #tpu.pipeline_mode<synchronous>, transform_indices = @transform_1, window_bounds = array<i64: 3, 40, 640>}, {pipeline_mode = #tpu.pipeline_mode<synchronous>, transform_indices = @transform_2, window_bounds = array<i64: 1, 640>}, {pipeline_mode = #tpu.pipeline_mode<synchronous>, transform_indices = @transform_3, window_bounds = array<i64: 1, 640>}, {pipeline_mode = #tpu.pipeline_mode<synchronous>, transform_indices = @transform_4, window_bounds = array<i64: 1, 640>}, {pipeline_mode = #tpu.pipeline_mode<synchronous>, transform_indices = @transform_5, window_bounds = array<i64: 3, 640, 320>}, {pipeline_mode = #tpu.pipeline_mode<synchronous>, transform_indices = @transform_6, window_bounds = array<i64: 1, 320>}, {pipeline_mode = #tpu.pipeline_mode<synchronous>, transform_indices = @transform_7, window_bounds = array<i64: 1, 320>}, {pipeline_mode = #tpu.pipeline_mode<synchronous>, transform_indices = @transform_8, window_bounds = array<i64: 1, 320>}, {pipeline_mode = #tpu.pipeline_mode<synchronous>, transform_indices = @transform_9, window_bounds = array<i64: 3, 320, 160>}, {pipeline_mode = #tpu.pipeline_mode<synchronous>, transform_indices = @transform_10, window_bounds = array<i64: 1, 160>}, {pipeline_mode = #tpu.pipeline_mode<synchronous>, transform_indices = @transform_11, window_bounds = array<i64: 1, 160>}, {pipeline_mode = #tpu.pipeline_mode<synchronous>, transform_indices = @transform_12, window_bounds = array<i64: 1, 160>}, {pipeline_mode = #tpu.pipeline_mode<synchronous>, transform_indices = @transform_13, window_bounds = array<i64: 1, 160, 128>}, {pipeline_mode = #tpu.pipeline_mode<synchronous>, transform_indices = @transform_14, window_bounds = array<i64: 1, 128>}, {pipeline_mode = #tpu.pipeline_mode<synchronous>, transform_indices = @transform_15, window_bounds = array<i64: 128, 128>}, {pipeline_mode = #tpu.pipeline_mode<synchronous>, transform_indices = @transform_16, window_bounds = array<i64: 1, 128>}, {transform_indices = @transform_17, window_bounds = array<i64: 8, 128>}, {transform_indices = @transform_18, window_bounds = array<i64: 8, 128>}]} {
    %c0 = arith.constant 0 : index
    %c0_0 = arith.constant 0 : index
    %c0_1 = arith.constant 0 : index
    %c0_2 = arith.constant 0 : index
    %0 = vector.load %arg1[%c0, %c0_0, %c0_1, %c0_2] : memref<1x56x8x40xbf16, #tpu.memory_space<vmem>>, vector<1x56x8x40xbf16>
    %1 = vector.shape_cast %0 : vector<1x56x8x40xbf16> to vector<56x8x40xbf16>
    %2 = vector.extract_strided_slice %1 {offsets = [0, 0, 0], sizes = [54, 8, 40], strides = [1, 1, 1]} : vector<56x8x40xbf16> to vector<54x8x40xbf16>
    %3 = vector.shape_cast %2 : vector<54x8x40xbf16> to vector<432x40xbf16>
    %c0_3 = arith.constant 0 : index
    %c0_4 = arith.constant 0 : index
    %c0_5 = arith.constant 0 : index
    %4 = vector.load %arg2[%c0_3, %c0_4, %c0_5] : memref<3x40x640xbf16, #tpu.memory_space<vmem>>, vector<1x40x640xbf16>
    %5 = vector.shape_cast %4 : vector<1x40x640xbf16> to vector<40x640xbf16>
    %cst = arith.constant dense<0.000000e+00> : vector<432x640xf32>
    %6 = tpu.matmul %3, %5, %cst {dimension_numbers = #tpu.dot_dimension_numbers<[1], [0], [0], [1], [0, 0, 1, 1], [], []>} : vector<432x40xbf16>, vector<40x640xbf16>, vector<432x640xf32> -> vector<432x640xf32>
    %7 = vector.extract_strided_slice %1 {offsets = [1, 0, 0], sizes = [54, 8, 40], strides = [1, 1, 1]} : vector<56x8x40xbf16> to vector<54x8x40xbf16>
    %8 = vector.shape_cast %7 : vector<54x8x40xbf16> to vector<432x40xbf16>
    %c1 = arith.constant 1 : index
    %c0_6 = arith.constant 0 : index
    %c0_7 = arith.constant 0 : index
    %9 = vector.load %arg2[%c1, %c0_6, %c0_7] : memref<3x40x640xbf16, #tpu.memory_space<vmem>>, vector<1x40x640xbf16>
    %10 = vector.shape_cast %9 : vector<1x40x640xbf16> to vector<40x640xbf16>
    %cst_8 = arith.constant dense<0.000000e+00> : vector<432x640xf32>
    %11 = tpu.matmul %8, %10, %cst_8 {dimension_numbers = #tpu.dot_dimension_numbers<[1], [0], [0], [1], [0, 0, 1, 1], [], []>} : vector<432x40xbf16>, vector<40x640xbf16>, vector<432x640xf32> -> vector<432x640xf32>
    %12 = arith.addf %6, %11 : vector<432x640xf32>
    %13 = vector.extract_strided_slice %1 {offsets = [2, 0, 0], sizes = [54, 8, 40], strides = [1, 1, 1]} : vector<56x8x40xbf16> to vector<54x8x40xbf16>
    %14 = vector.shape_cast %13 : vector<54x8x40xbf16> to vector<432x40xbf16>
    %c2 = arith.constant 2 : index
    %c0_9 = arith.constant 0 : index
    %c0_10 = arith.constant 0 : index
    %15 = vector.load %arg2[%c2, %c0_9, %c0_10] : memref<3x40x640xbf16, #tpu.memory_space<vmem>>, vector<1x40x640xbf16>
    %16 = vector.shape_cast %15 : vector<1x40x640xbf16> to vector<40x640xbf16>
    %cst_11 = arith.constant dense<0.000000e+00> : vector<432x640xf32>
    %17 = tpu.matmul %14, %16, %cst_11 {dimension_numbers = #tpu.dot_dimension_numbers<[1], [0], [0], [1], [0, 0, 1, 1], [], []>} : vector<432x40xbf16>, vector<40x640xbf16>, vector<432x640xf32> -> vector<432x640xf32>
    %18 = arith.addf %12, %17 : vector<432x640xf32>
    %c0_12 = arith.constant 0 : index
    %c0_13 = arith.constant 0 : index
    %19 = vector.load %arg3[%c0_12, %c0_13] : memref<1x640xf32, #tpu.memory_space<vmem>>, vector<1x640xf32>
    %20 = vector.broadcast %19 : vector<1x640xf32> to vector<432x640xf32>
    %21 = arith.addf %18, %20 : vector<432x640xf32>
    %cst_14 = arith.constant 0.000000e+00 : f32
    %22 = vector.broadcast %cst_14 : f32 to vector<432x640xf32>
    %23 = arith.maximumf %21, %22 : vector<432x640xf32>
    %c0_15 = arith.constant 0 : index
    %c0_16 = arith.constant 0 : index
    %24 = vector.load %arg4[%c0_15, %c0_16] : memref<1x640xf32, #tpu.memory_space<vmem>>, vector<1x640xf32>
    %25 = vector.broadcast %24 : vector<1x640xf32> to vector<432x640xf32>
    %26 = arith.mulf %23, %25 : vector<432x640xf32>
    %c0_17 = arith.constant 0 : index
    %c0_18 = arith.constant 0 : index
    %27 = vector.load %arg5[%c0_17, %c0_18] : memref<1x640xf32, #tpu.memory_space<vmem>>, vector<1x640xf32>
    %28 = vector.broadcast %27 : vector<1x640xf32> to vector<432x640xf32>
    %29 = arith.addf %26, %28 : vector<432x640xf32>
    %30 = vector.shape_cast %29 : vector<432x640xf32> to vector<54x8x640xf32>
    %31 = vector.shape_cast %30 : vector<54x8x640xf32> to vector<18x3x8x640xf32>
    %32 = vector.extract_strided_slice %31 {offsets = [0, 0, 0, 0], sizes = [18, 1, 8, 640], strides = [1, 1, 1, 1]} : vector<18x3x8x640xf32> to vector<18x1x8x640xf32>
    %33 = vector.shape_cast %32 : vector<18x1x8x640xf32> to vector<18x8x640xf32>
    %34 = vector.extract_strided_slice %31 {offsets = [0, 1, 0, 0], sizes = [18, 1, 8, 640], strides = [1, 1, 1, 1]} : vector<18x3x8x640xf32> to vector<18x1x8x640xf32>
    %35 = vector.shape_cast %34 : vector<18x1x8x640xf32> to vector<18x8x640xf32>
    %36 = arith.maximumf %33, %35 : vector<18x8x640xf32>
    %37 = vector.extract_strided_slice %31 {offsets = [0, 2, 0, 0], sizes = [18, 1, 8, 640], strides = [1, 1, 1, 1]} : vector<18x3x8x640xf32> to vector<18x1x8x640xf32>
    %38 = vector.shape_cast %37 : vector<18x1x8x640xf32> to vector<18x8x640xf32>
    %39 = arith.maximumf %36, %38 : vector<18x8x640xf32>
    %40 = arith.truncf %39 : vector<18x8x640xf32> to vector<18x8x640xbf16>
    %41 = vector.extract_strided_slice %40 {offsets = [0, 0, 0], sizes = [16, 8, 640], strides = [1, 1, 1]} : vector<18x8x640xbf16> to vector<16x8x640xbf16>
    %42 = vector.shape_cast %41 : vector<16x8x640xbf16> to vector<128x640xbf16>
    %c0_19 = arith.constant 0 : index
    %c0_20 = arith.constant 0 : index
    %c0_21 = arith.constant 0 : index
    %43 = vector.load %arg6[%c0_19, %c0_20, %c0_21] : memref<3x640x320xbf16, #tpu.memory_space<vmem>>, vector<1x640x320xbf16>
    %44 = vector.shape_cast %43 : vector<1x640x320xbf16> to vector<640x320xbf16>
    %cst_22 = arith.constant dense<0.000000e+00> : vector<128x320xf32>
    %45 = tpu.matmul %42, %44, %cst_22 {dimension_numbers = #tpu.dot_dimension_numbers<[1], [0], [0], [1], [0, 0, 1, 1], [], []>} : vector<128x640xbf16>, vector<640x320xbf16>, vector<128x320xf32> -> vector<128x320xf32>
    %46 = vector.extract_strided_slice %40 {offsets = [1, 0, 0], sizes = [16, 8, 640], strides = [1, 1, 1]} : vector<18x8x640xbf16> to vector<16x8x640xbf16>
    %47 = vector.shape_cast %46 : vector<16x8x640xbf16> to vector<128x640xbf16>
    %c1_23 = arith.constant 1 : index
    %c0_24 = arith.constant 0 : index
    %c0_25 = arith.constant 0 : index
    %48 = vector.load %arg6[%c1_23, %c0_24, %c0_25] : memref<3x640x320xbf16, #tpu.memory_space<vmem>>, vector<1x640x320xbf16>
    %49 = vector.shape_cast %48 : vector<1x640x320xbf16> to vector<640x320xbf16>
    %cst_26 = arith.constant dense<0.000000e+00> : vector<128x320xf32>
    %50 = tpu.matmul %47, %49, %cst_26 {dimension_numbers = #tpu.dot_dimension_numbers<[1], [0], [0], [1], [0, 0, 1, 1], [], []>} : vector<128x640xbf16>, vector<640x320xbf16>, vector<128x320xf32> -> vector<128x320xf32>
    %51 = arith.addf %45, %50 : vector<128x320xf32>
    %52 = vector.extract_strided_slice %40 {offsets = [2, 0, 0], sizes = [16, 8, 640], strides = [1, 1, 1]} : vector<18x8x640xbf16> to vector<16x8x640xbf16>
    %53 = vector.shape_cast %52 : vector<16x8x640xbf16> to vector<128x640xbf16>
    %c2_27 = arith.constant 2 : index
    %c0_28 = arith.constant 0 : index
    %c0_29 = arith.constant 0 : index
    %54 = vector.load %arg6[%c2_27, %c0_28, %c0_29] : memref<3x640x320xbf16, #tpu.memory_space<vmem>>, vector<1x640x320xbf16>
    %55 = vector.shape_cast %54 : vector<1x640x320xbf16> to vector<640x320xbf16>
    %cst_30 = arith.constant dense<0.000000e+00> : vector<128x320xf32>
    %56 = tpu.matmul %53, %55, %cst_30 {dimension_numbers = #tpu.dot_dimension_numbers<[1], [0], [0], [1], [0, 0, 1, 1], [], []>} : vector<128x640xbf16>, vector<640x320xbf16>, vector<128x320xf32> -> vector<128x320xf32>
    %57 = arith.addf %51, %56 : vector<128x320xf32>
    %c0_31 = arith.constant 0 : index
    %c0_32 = arith.constant 0 : index
    %58 = vector.load %arg7[%c0_31, %c0_32] : memref<1x320xf32, #tpu.memory_space<vmem>>, vector<1x320xf32>
    %59 = vector.broadcast %58 : vector<1x320xf32> to vector<128x320xf32>
    %60 = arith.addf %57, %59 : vector<128x320xf32>
    %cst_33 = arith.constant 0.000000e+00 : f32
    %61 = vector.broadcast %cst_33 : f32 to vector<128x320xf32>
    %62 = arith.maximumf %60, %61 : vector<128x320xf32>
    %c0_34 = arith.constant 0 : index
    %c0_35 = arith.constant 0 : index
    %63 = vector.load %arg8[%c0_34, %c0_35] : memref<1x320xf32, #tpu.memory_space<vmem>>, vector<1x320xf32>
    %64 = vector.broadcast %63 : vector<1x320xf32> to vector<128x320xf32>
    %65 = arith.mulf %62, %64 : vector<128x320xf32>
    %c0_36 = arith.constant 0 : index
    %c0_37 = arith.constant 0 : index
    %66 = vector.load %arg9[%c0_36, %c0_37] : memref<1x320xf32, #tpu.memory_space<vmem>>, vector<1x320xf32>
    %67 = vector.broadcast %66 : vector<1x320xf32> to vector<128x320xf32>
    %68 = arith.addf %65, %67 : vector<128x320xf32>
    %69 = vector.shape_cast %68 : vector<128x320xf32> to vector<16x8x320xf32>
    %70 = vector.extract_strided_slice %69 {offsets = [0, 0, 0], sizes = [15, 8, 320], strides = [1, 1, 1]} : vector<16x8x320xf32> to vector<15x8x320xf32>
    %71 = vector.shape_cast %70 : vector<15x8x320xf32> to vector<5x3x8x320xf32>
    %72 = vector.extract_strided_slice %71 {offsets = [0, 0, 0, 0], sizes = [5, 1, 8, 320], strides = [1, 1, 1, 1]} : vector<5x3x8x320xf32> to vector<5x1x8x320xf32>
    %73 = vector.shape_cast %72 : vector<5x1x8x320xf32> to vector<5x8x320xf32>
    %74 = vector.extract_strided_slice %71 {offsets = [0, 1, 0, 0], sizes = [5, 1, 8, 320], strides = [1, 1, 1, 1]} : vector<5x3x8x320xf32> to vector<5x1x8x320xf32>
    %75 = vector.shape_cast %74 : vector<5x1x8x320xf32> to vector<5x8x320xf32>
    %76 = arith.maximumf %73, %75 : vector<5x8x320xf32>
    %77 = vector.extract_strided_slice %71 {offsets = [0, 2, 0, 0], sizes = [5, 1, 8, 320], strides = [1, 1, 1, 1]} : vector<5x3x8x320xf32> to vector<5x1x8x320xf32>
    %78 = vector.shape_cast %77 : vector<5x1x8x320xf32> to vector<5x8x320xf32>
    %79 = arith.maximumf %76, %78 : vector<5x8x320xf32>
    %80 = arith.truncf %79 : vector<5x8x320xf32> to vector<5x8x320xbf16>
    %81 = vector.extract_strided_slice %80 {offsets = [0, 0, 0], sizes = [3, 8, 320], strides = [1, 1, 1]} : vector<5x8x320xbf16> to vector<3x8x320xbf16>
    %82 = vector.shape_cast %81 : vector<3x8x320xbf16> to vector<24x320xbf16>
    %c0_38 = arith.constant 0 : index
    %c0_39 = arith.constant 0 : index
    %c0_40 = arith.constant 0 : index
    %83 = vector.load %arg10[%c0_38, %c0_39, %c0_40] : memref<3x320x160xbf16, #tpu.memory_space<vmem>>, vector<1x320x160xbf16>
    %84 = vector.shape_cast %83 : vector<1x320x160xbf16> to vector<320x160xbf16>
    %cst_41 = arith.constant dense<0.000000e+00> : vector<24x160xf32>
    %85 = tpu.matmul %82, %84, %cst_41 {dimension_numbers = #tpu.dot_dimension_numbers<[1], [0], [0], [1], [0, 0, 1, 1], [], []>} : vector<24x320xbf16>, vector<320x160xbf16>, vector<24x160xf32> -> vector<24x160xf32>
    %86 = vector.extract_strided_slice %80 {offsets = [1, 0, 0], sizes = [3, 8, 320], strides = [1, 1, 1]} : vector<5x8x320xbf16> to vector<3x8x320xbf16>
    %87 = vector.shape_cast %86 : vector<3x8x320xbf16> to vector<24x320xbf16>
    %c1_42 = arith.constant 1 : index
    %c0_43 = arith.constant 0 : index
    %c0_44 = arith.constant 0 : index
    %88 = vector.load %arg10[%c1_42, %c0_43, %c0_44] : memref<3x320x160xbf16, #tpu.memory_space<vmem>>, vector<1x320x160xbf16>
    %89 = vector.shape_cast %88 : vector<1x320x160xbf16> to vector<320x160xbf16>
    %cst_45 = arith.constant dense<0.000000e+00> : vector<24x160xf32>
    %90 = tpu.matmul %87, %89, %cst_45 {dimension_numbers = #tpu.dot_dimension_numbers<[1], [0], [0], [1], [0, 0, 1, 1], [], []>} : vector<24x320xbf16>, vector<320x160xbf16>, vector<24x160xf32> -> vector<24x160xf32>
    %91 = arith.addf %85, %90 : vector<24x160xf32>
    %92 = vector.extract_strided_slice %80 {offsets = [2, 0, 0], sizes = [3, 8, 320], strides = [1, 1, 1]} : vector<5x8x320xbf16> to vector<3x8x320xbf16>
    %93 = vector.shape_cast %92 : vector<3x8x320xbf16> to vector<24x320xbf16>
    %c2_46 = arith.constant 2 : index
    %c0_47 = arith.constant 0 : index
    %c0_48 = arith.constant 0 : index
    %94 = vector.load %arg10[%c2_46, %c0_47, %c0_48] : memref<3x320x160xbf16, #tpu.memory_space<vmem>>, vector<1x320x160xbf16>
    %95 = vector.shape_cast %94 : vector<1x320x160xbf16> to vector<320x160xbf16>
    %cst_49 = arith.constant dense<0.000000e+00> : vector<24x160xf32>
    %96 = tpu.matmul %93, %95, %cst_49 {dimension_numbers = #tpu.dot_dimension_numbers<[1], [0], [0], [1], [0, 0, 1, 1], [], []>} : vector<24x320xbf16>, vector<320x160xbf16>, vector<24x160xf32> -> vector<24x160xf32>
    %97 = arith.addf %91, %96 : vector<24x160xf32>
    %c0_50 = arith.constant 0 : index
    %c0_51 = arith.constant 0 : index
    %98 = vector.load %arg11[%c0_50, %c0_51] : memref<1x160xf32, #tpu.memory_space<vmem>>, vector<1x160xf32>
    %99 = vector.broadcast %98 : vector<1x160xf32> to vector<24x160xf32>
    %100 = arith.addf %97, %99 : vector<24x160xf32>
    %cst_52 = arith.constant 0.000000e+00 : f32
    %101 = vector.broadcast %cst_52 : f32 to vector<24x160xf32>
    %102 = arith.maximumf %100, %101 : vector<24x160xf32>
    %c0_53 = arith.constant 0 : index
    %c0_54 = arith.constant 0 : index
    %103 = vector.load %arg12[%c0_53, %c0_54] : memref<1x160xf32, #tpu.memory_space<vmem>>, vector<1x160xf32>
    %104 = vector.broadcast %103 : vector<1x160xf32> to vector<24x160xf32>
    %105 = arith.mulf %102, %104 : vector<24x160xf32>
    %c0_55 = arith.constant 0 : index
    %c0_56 = arith.constant 0 : index
    %106 = vector.load %arg13[%c0_55, %c0_56] : memref<1x160xf32, #tpu.memory_space<vmem>>, vector<1x160xf32>
    %107 = vector.broadcast %106 : vector<1x160xf32> to vector<24x160xf32>
    %108 = arith.addf %105, %107 : vector<24x160xf32>
    %109 = vector.shape_cast %108 : vector<24x160xf32> to vector<3x8x160xf32>
    %110 = vector.shape_cast %109 : vector<3x8x160xf32> to vector<1x3x8x160xf32>
    %111 = vector.extract_strided_slice %110 {offsets = [0, 0, 0, 0], sizes = [1, 1, 8, 160], strides = [1, 1, 1, 1]} : vector<1x3x8x160xf32> to vector<1x1x8x160xf32>
    %112 = vector.shape_cast %111 : vector<1x1x8x160xf32> to vector<1x8x160xf32>
    %113 = vector.extract_strided_slice %110 {offsets = [0, 1, 0, 0], sizes = [1, 1, 8, 160], strides = [1, 1, 1, 1]} : vector<1x3x8x160xf32> to vector<1x1x8x160xf32>
    %114 = vector.shape_cast %113 : vector<1x1x8x160xf32> to vector<1x8x160xf32>
    %115 = arith.maximumf %112, %114 : vector<1x8x160xf32>
    %116 = vector.extract_strided_slice %110 {offsets = [0, 2, 0, 0], sizes = [1, 1, 8, 160], strides = [1, 1, 1, 1]} : vector<1x3x8x160xf32> to vector<1x1x8x160xf32>
    %117 = vector.shape_cast %116 : vector<1x1x8x160xf32> to vector<1x8x160xf32>
    %118 = arith.maximumf %115, %117 : vector<1x8x160xf32>
    %119 = arith.truncf %118 : vector<1x8x160xf32> to vector<1x8x160xbf16>
    %120 = vector.shape_cast %119 : vector<1x8x160xbf16> to vector<8x160xbf16>
    %c0_57 = arith.constant 0 : index
    %c0_58 = arith.constant 0 : index
    %c0_59 = arith.constant 0 : index
    %121 = vector.load %arg14[%c0_57, %c0_58, %c0_59] : memref<1x160x128xbf16, #tpu.memory_space<vmem>>, vector<1x160x128xbf16>
    %122 = vector.shape_cast %121 : vector<1x160x128xbf16> to vector<160x128xbf16>
    %cst_60 = arith.constant dense<0.000000e+00> : vector<8x128xf32>
    %123 = tpu.matmul %120, %122, %cst_60 {dimension_numbers = #tpu.dot_dimension_numbers<[1], [0], [0], [1], [0, 0, 1, 1], [], []>} : vector<8x160xbf16>, vector<160x128xbf16>, vector<8x128xf32> -> vector<8x128xf32>
    %c0_61 = arith.constant 0 : index
    %c0_62 = arith.constant 0 : index
    %124 = vector.load %arg15[%c0_61, %c0_62] : memref<1x128xf32, #tpu.memory_space<vmem>>, vector<1x128xf32>
    %125 = vector.broadcast %124 : vector<1x128xf32> to vector<8x128xf32>
    %126 = arith.addf %123, %125 : vector<8x128xf32>
    %127 = math.tanh %126 : vector<8x128xf32>
    %c0_63 = arith.constant 0 : index
    %c0_64 = arith.constant 0 : index
    %128 = vector.load %arg19[%c0_63, %c0_64] : memref<8x128xf32, #tpu.memory_space<vmem>>, vector<8x128xf32>
    tpu.vector_store %arg19[%c0_63, %c0_64], %127 {strides = array<i32>} : memref<8x128xf32, #tpu.memory_space<vmem>>, vector<8x128xf32>,
    %129 = arith.truncf %127 : vector<8x128xf32> to vector<8x128xbf16>
    %c0_65 = arith.constant 0 : index
    %c0_66 = arith.constant 0 : index
    %130 = vector.load %arg16[%c0_65, %c0_66] : memref<128x128xbf16, #tpu.memory_space<vmem>>, vector<128x128xbf16>
    %cst_67 = arith.constant dense<0.000000e+00> : vector<8x128xf32>
    %131 = tpu.matmul %129, %130, %cst_67 {dimension_numbers = #tpu.dot_dimension_numbers<[1], [0], [0], [1], [0, 0, 1, 1], [], []>} : vector<8x128xbf16>, vector<128x128xbf16>, vector<8x128xf32> -> vector<8x128xf32>
    %c0_68 = arith.constant 0 : index
    %c0_69 = arith.constant 0 : index
    %132 = vector.load %arg17[%c0_68, %c0_69] : memref<1x128xf32, #tpu.memory_space<vmem>>, vector<1x128xf32>
    %133 = vector.broadcast %132 : vector<1x128xf32> to vector<8x128xf32>
    %134 = arith.addf %131, %133 : vector<8x128xf32>
    %c0_70 = arith.constant 0 : index
    %c0_71 = arith.constant 0 : index
    %135 = vector.load %arg18[%c0_70, %c0_71] : memref<8x128xf32, #tpu.memory_space<vmem>>, vector<8x128xf32>
    tpu.vector_store %arg18[%c0_70, %c0_71], %134 {strides = array<i32>} : memref<8x128xf32, #tpu.memory_space<vmem>>, vector<8x128xf32>,
    return
  }
  func.func @transform_0(%arg0: i32) -> (i32, i32, i32, i32) {
    %c0_i32 = arith.constant 0 : i32
    %c0_i32_0 = arith.constant 0 : i32
    %c0_i32_1 = arith.constant 0 : i32
    %c0_i32_2 = arith.constant 0 : i32
    return %arg0, %c0_i32, %c0_i32_0, %c0_i32_1 : i32, i32, i32, i32
  }
  func.func @transform_1(%arg0: i32) -> (i32, i32, i32) {
    %c0_i32 = arith.constant 0 : i32
    %c0_i32_0 = arith.constant 0 : i32
    %c0_i32_1 = arith.constant 0 : i32
    %c0_i32_2 = arith.constant 0 : i32
    return %c0_i32, %c0_i32_0, %c0_i32_1 : i32, i32, i32
  }
  func.func @transform_2(%arg0: i32) -> (i32, i32) {
    %c0_i32 = arith.constant 0 : i32
    %c0_i32_0 = arith.constant 0 : i32
    %c0_i32_1 = arith.constant 0 : i32
    return %c0_i32, %c0_i32_0 : i32, i32
  }
  func.func @transform_3(%arg0: i32) -> (i32, i32) {
    %c0_i32 = arith.constant 0 : i32
    %c0_i32_0 = arith.constant 0 : i32
    %c0_i32_1 = arith.constant 0 : i32
    return %c0_i32, %c0_i32_0 : i32, i32
  }
  func.func @transform_4(%arg0: i32) -> (i32, i32) {
    %c0_i32 = arith.constant 0 : i32
    %c0_i32_0 = arith.constant 0 : i32
    %c0_i32_1 = arith.constant 0 : i32
    return %c0_i32, %c0_i32_0 : i32, i32
  }
  func.func @transform_5(%arg0: i32) -> (i32, i32, i32) {
    %c0_i32 = arith.constant 0 : i32
    %c0_i32_0 = arith.constant 0 : i32
    %c0_i32_1 = arith.constant 0 : i32
    %c0_i32_2 = arith.constant 0 : i32
    return %c0_i32, %c0_i32_0, %c0_i32_1 : i32, i32, i32
  }
  func.func @transform_6(%arg0: i32) -> (i32, i32) {
    %c0_i32 = arith.constant 0 : i32
    %c0_i32_0 = arith.constant 0 : i32
    %c0_i32_1 = arith.constant 0 : i32
    return %c0_i32, %c0_i32_0 : i32, i32
  }
  func.func @transform_7(%arg0: i32) -> (i32, i32) {
    %c0_i32 = arith.constant 0 : i32
    %c0_i32_0 = arith.constant 0 : i32
    %c0_i32_1 = arith.constant 0 : i32
    return %c0_i32, %c0_i32_0 : i32, i32
  }
  func.func @transform_8(%arg0: i32) -> (i32, i32) {
    %c0_i32 = arith.constant 0 : i32
    %c0_i32_0 = arith.constant 0 : i32
    %c0_i32_1 = arith.constant 0 : i32
    return %c0_i32, %c0_i32_0 : i32, i32
  }
  func.func @transform_9(%arg0: i32) -> (i32, i32, i32) {
    %c0_i32 = arith.constant 0 : i32
    %c0_i32_0 = arith.constant 0 : i32
    %c0_i32_1 = arith.constant 0 : i32
    %c0_i32_2 = arith.constant 0 : i32
    return %c0_i32, %c0_i32_0, %c0_i32_1 : i32, i32, i32
  }
  func.func @transform_10(%arg0: i32) -> (i32, i32) {
    %c0_i32 = arith.constant 0 : i32
    %c0_i32_0 = arith.constant 0 : i32
    %c0_i32_1 = arith.constant 0 : i32
    return %c0_i32, %c0_i32_0 : i32, i32
  }
  func.func @transform_11(%arg0: i32) -> (i32, i32) {
    %c0_i32 = arith.constant 0 : i32
    %c0_i32_0 = arith.constant 0 : i32
    %c0_i32_1 = arith.constant 0 : i32
    return %c0_i32, %c0_i32_0 : i32, i32
  }
  func.func @transform_12(%arg0: i32) -> (i32, i32) {
    %c0_i32 = arith.constant 0 : i32
    %c0_i32_0 = arith.constant 0 : i32
    %c0_i32_1 = arith.constant 0 : i32
    return %c0_i32, %c0_i32_0 : i32, i32
  }
  func.func @transform_13(%arg0: i32) -> (i32, i32, i32) {
    %c0_i32 = arith.constant 0 : i32
    %c0_i32_0 = arith.constant 0 : i32
    %c0_i32_1 = arith.constant 0 : i32
    %c0_i32_2 = arith.constant 0 : i32
    return %c0_i32, %c0_i32_0, %c0_i32_1 : i32, i32, i32
  }
  func.func @transform_14(%arg0: i32) -> (i32, i32) {
    %c0_i32 = arith.constant 0 : i32
    %c0_i32_0 = arith.constant 0 : i32
    %c0_i32_1 = arith.constant 0 : i32
    return %c0_i32, %c0_i32_0 : i32, i32
  }
  func.func @transform_15(%arg0: i32) -> (i32, i32) {
    %c0_i32 = arith.constant 0 : i32
    %c0_i32_0 = arith.constant 0 : i32
    %c0_i32_1 = arith.constant 0 : i32
    return %c0_i32, %c0_i32_0 : i32, i32
  }
  func.func @transform_16(%arg0: i32) -> (i32, i32) {
    %c0_i32 = arith.constant 0 : i32
    %c0_i32_0 = arith.constant 0 : i32
    %c0_i32_1 = arith.constant 0 : i32
    return %c0_i32, %c0_i32_0 : i32, i32
  }
  func.func @transform_17(%arg0: i32) -> (i32, i32) {
    %c0_i32 = arith.constant 0 : i32
    %c0_i32_0 = arith.constant 0 : i32
    return %arg0, %c0_i32 : i32, i32
  }
  func.func @transform_18(%arg0: i32) -> (i32, i32) {
    %c0_i32 = arith.constant 0 : i32
    %c0_i32_0 = arith.constant 0 : i32
    return %arg0, %c0_i32 : i32, i32
  }
}

</mosaic_0001>

<llo_original>
// kernel: forward.1
$region0: #{forward.1}
  #allocation0 [shape = 'u32[]', space=smem, size = 0x4, offset = 0x4, fixed_abs, tag = 'smem constant byte address 0x4 - core index']
  #allocation1 [shape = 'u32[144,128]{1,0:T(1,128)}', space=vmem, size = 0x12000, scoped, tag = 'internal scratch']
  %s0 = inlined_call_operand.vmem [shape: bf16[2,56,8,40], index: 0, kind: input, shape index: {}]
  %s1 = inlined_call_operand.vmem [shape: bf16[3,40,640], index: 1, kind: input, shape index: {}]
  %s2 = inlined_call_operand.vmem [shape: f32[1,640], index: 2, kind: input, shape index: {}]
  %s3 = inlined_call_operand.vmem [shape: f32[1,640], index: 3, kind: input, shape index: {}]
  %s4 = inlined_call_operand.vmem [shape: f32[1,640], index: 4, kind: input, shape index: {}]
  %s5 = inlined_call_operand.vmem [shape: bf16[3,640,320], index: 5, kind: input, shape index: {}]
  %s6 = inlined_call_operand.vmem [shape: f32[1,320], index: 6, kind: input, shape index: {}]
  %s7 = inlined_call_operand.vmem [shape: f32[1,320], index: 7, kind: input, shape index: {}]
  %s8 = inlined_call_operand.vmem [shape: f32[1,320], index: 8, kind: input, shape index: {}]
  %s9 = inlined_call_operand.vmem [shape: bf16[3,320,160], index: 9, kind: input, shape index: {}]
  %s10 = inlined_call_operand.vmem [shape: f32[1,160], index: 10, kind: input, shape index: {}]
  %s11 = inlined_call_operand.vmem [shape: f32[1,160], index: 11, kind: input, shape index: {}]
  %s12 = inlined_call_operand.vmem [shape: f32[1,160], index: 12, kind: input, shape index: {}]
  %s13 = inlined_call_operand.vmem [shape: bf16[1,160,128], index: 13, kind: input, shape index: {}]
  %s14 = inlined_call_operand.vmem [shape: f32[1,128], index: 14, kind: input, shape index: {}]
  %s15 = inlined_call_operand.vmem [shape: bf16[128,128], index: 15, kind: input, shape index: {}]
  %s16 = inlined_call_operand.vmem [shape: f32[1,128], index: 16, kind: input, shape index: {}]
  %s17 = inlined_call_operand.hbm [shape: f32[16,128], index: 17, kind: output, shape index: {0}]
  %s18 = inlined_call_operand.hbm [shape: f32[16,128], index: 18, kind: output, shape index: {1}]
  %19 = xla_tuple %s17, %s18
  %s20 = sld [smem:[#allocation0]]
  $region109: #{forward.1} parent=0
    _
  %s22 = ssub.s32 1, %s20
  %s23 = scalar_select 0, %s22, %s20
  $region1: #{forward.1} parent=0
    #allocation2 [shape = 'u8[8192]{0}', space=vmem, size = 0x2000, scoped, tag = 'output window, operand 0']
    #allocation3 [shape = 's32[2]{0}', space=sflag, size = 0x8, scoped, tag = 'scoped memory for forward.1']
    #allocation4 [shape = 'u8[8192]{0}', space=vmem, size = 0x2000, scoped, tag = 'output window, operand 1']
    #allocation5 [shape = 's32[2]{0}', space=sflag, size = 0x8, scoped, tag = 'scoped memory for forward.1']
    %24 = vsyncpa [#allocation3], 0
    %s25 = scalar_lea.sflag [#allocation3], 1
    %26 = vsyncpa %s25, 0
    %27 = vsyncpa [#allocation5], 0
    %s28 = scalar_lea.sflag [#allocation5], 1
    %29 = vsyncpa %s28, 0
    loop: start=0, step=1, limit=4
    $region2: #{forward.1} parent=1 // loop_pre_header
      _
    $region3: #{forward.1} parent=1 // loop_header
      %s31 = sphi 0, %s35
      %p32 = scmp.ge.s32.totalorder %s31, 4
      %s41 = sphi 0, %s43
      %s44 = sphi 0, %s41
      %s45 = sphi 0, %s44
      %s61 = sphi 0, %s45
      %s65 = sphi 0, %s65
      %s67 = sphi 0, %s65
      %s68 = sphi 0, %s67
      %s82 = sphi 0, %s68
      %s86 = sphi 0, %s86
      %s88 = sphi 0, %s86
      %s89 = sphi 0, %s88
      %s103 = sphi 0, %s89
      %s107 = sphi 0, %s107
      %s109 = sphi 0, %s107
      %s110 = sphi 0, %s109
      %s124 = sphi 0, %s110
      %s128 = sphi 0, %s128
      %s130 = sphi 0, %s128
      %s131 = sphi 0, %s130
      %s145 = sphi 0, %s131
      %s149 = sphi 0, %s149
      %s151 = sphi 0, %s149
      %s152 = sphi 0, %s151
      %s166 = sphi 0, %s152
      %s170 = sphi 0, %s170
      %s172 = sphi 0, %s170
      %s173 = sphi 0, %s172
      %s187 = sphi 0, %s173
      %s191 = sphi 0, %s191
      %s193 = sphi 0, %s191
      %s194 = sphi 0, %s193
      %s208 = sphi 0, %s194
      %s212 = sphi 0, %s212
      %s214 = sphi 0, %s212
      %s215 = sphi 0, %s214
      %s229 = sphi 0, %s215
      %s233 = sphi 0, %s233
      %s235 = sphi 0, %s233
      %s236 = sphi 0, %s235
      %s250 = sphi 0, %s236
      %s254 = sphi 0, %s254
      %s256 = sphi 0, %s254
      %s257 = sphi 0, %s256
      %s271 = sphi 0, %s257
      %s275 = sphi 0, %s275
      %s277 = sphi 0, %s275
      %s278 = sphi 0, %s277
      %s292 = sphi 0, %s278
      %s296 = sphi 0, %s296
      %s298 = sphi 0, %s296
      %s299 = sphi 0, %s298
      %s313 = sphi 0, %s299
      %s317 = sphi 0, %s317
      %s319 = sphi 0, %s317
      %s320 = sphi 0, %s319
      %s334 = sphi 0, %s320
      %s338 = sphi 0, %s338
      %s340 = sphi 0, %s338
      %s341 = sphi 0, %s340
      %s355 = sphi 0, %s341
      %s359 = sphi 0, %s359
      %s361 = sphi 0, %s359
      %s362 = sphi 0, %s361
      %s376 = sphi 0, %s362
      %s380 = sphi 0, %s380
      %s382 = sphi 0, %s380
      %s383 = sphi 0, %s382
      %s397 = sphi 0, %s383
      %s403 = sphi 0, %s405
      %s406 = sphi 0, %s403
      %s407 = sphi 0, %s406
      %s423 = sphi 0, %s407
      %s429 = sphi 0, %s431
      %s432 = sphi 0, %s429
      %s433 = sphi 0, %s432
      %s449 = sphi 0, %s433
    $region4: #{forward.1} parent=1 // loop_header_branch
      %34 = sbr.rel (%p32) target = $region8
    $region5: #{forward.1} parent=1 // loop_body
      %s36 = ssub.s32 %s31, 1
      %s37 = ssub.s32 %s31, 2
      %s38 = sadd.s32 %s31, 1
      %s39 = ssub.s32 %s31, %s38
      %p40 = scmp.eq.s32.totalorder %s39, 0
      %s42 = sadd.s32 %s41, 1
      %s43 = scalar_select %p40, %s41, %s42
      %p46 = pneg %p40
      %p47 = scmp.eq.s32.totalorder %s31, 1
      %p48 = por %p46, %p47
      %p49 = scmp.ne.s32.totalorder %s41, %s44
      %p50 = scmp.eq.s32.totalorder %s31, 0
      %p51 = por %p49, %p50
      %p52 = scmp.ne.s32.totalorder %s41, %s44
      %p53 = scmp.eq.s32.totalorder %s36, 1
      %p54 = por %p52, %p53
      %p55 = scmp.ne.s32.totalorder %s44, %s45
      %p56 = scmp.eq.s32.totalorder %s36, 0
      %p57 = por %p55, %p56
      %p58 = scmp.ne.s32.totalorder %s44, %s45
      %p59 = scmp.eq.s32.totalorder %s37, 1
      %p60 = por %p58, %p59
      %p62 = scmp.ne.s32.totalorder %s45, %s61
      %p63 = scmp.eq.s32.totalorder %s37, 0
      %p64 = por %p62, %p63
      %s66 = sadd.s32 %s65, 1
      %p69 = scmp.eq.s32.totalorder %s31, 1
      %p70 = scmp.ne.s32.totalorder %s65, %s67
      %p71 = scmp.eq.s32.totalorder %s31, 0
      %p72 = por %p70, %p71
      %p73 = scmp.ne.s32.totalorder %s65, %s67
      %p74 = scmp.eq.s32.totalorder %s36, 1
      %p75 = por %p73, %p74
      %p76 = scmp.ne.s32.totalorder %s67, %s68
      %p77 = scmp.eq.s32.totalorder %s36, 0
      %p78 = por %p76, %p77
      %p79 = scmp.ne.s32.totalorder %s67, %s68
      %p80 = scmp.eq.s32.totalorder %s37, 1
      %p81 = por %p79, %p80
      %p83 = scmp.ne.s32.totalorder %s68, %s82
      %p84 = scmp.eq.s32.totalorder %s37, 0
      %p85 = por %p83, %p84
      %s87 = sadd.s32 %s86, 1
      %p90 = scmp.eq.s32.totalorder %s31, 1
      %p91 = scmp.ne.s32.totalorder %s86, %s88
      %p92 = scmp.eq.s32.totalorder %s31, 0
      %p93 = por %p91, %p92
      %p94 = scmp.ne.s32.totalorder %s86, %s88
      %p95 = scmp.eq.s32.totalorder %s36, 1
      %p96 = por %p94, %p95
      %p97 = scmp.ne.s32.totalorder %s88, %s89
      %p98 = scmp.eq.s32.totalorder %s36, 0
      %p99 = por %p97, %p98
      %p100 = scmp.ne.s32.totalorder %s88, %s89
      %p101 = scmp.eq.s32.totalorder %s37, 1
      %p102 = por %p100, %p101
      %p104 = scmp.ne.s32.totalorder %s89, %s103
      %p105 = scmp.eq.s32.totalorder %s37, 0
      %p106 = por %p104, %p105
      %s108 = sadd.s32 %s107, 1
      %p111 = scmp.eq.s32.totalorder %s31, 1
      %p112 = scmp.ne.s32.totalorder %s107, %s109
      %p113 = scmp.eq.s32.totalorder %s31, 0
      %p114 = por %p112, %p113
      %p115 = scmp.ne.s32.totalorder %s107, %s109
      %p116 = scmp.eq.s32.totalorder %s36, 1
      %p117 = por %p115, %p116
      %p118 = scmp.ne.s32.totalorder %s109, %s110
      %p119 = scmp.eq.s32.totalorder %s36, 0
      %p120 = por %p118, %p119
      %p121 = scmp.ne.s32.totalorder %s109, %s110
      %p122 = scmp.eq.s32.totalorder %s37, 1
      %p123 = por %p121, %p122
      %p125 = scmp.ne.s32.totalorder %s110, %s124
      %p126 = scmp.eq.s32.totalorder %s37, 0
      %p127 = por %p125, %p126
      %s129 = sadd.s32 %s128, 1
      %p132 = scmp.eq.s32.totalorder %s31, 1
      %p133 = scmp.ne.s32.totalorder %s128, %s130
      %p134 = scmp.eq.s32.totalorder %s31, 0
      %p135 = por %p133, %p134
      %p136 = scmp.ne.s32.totalorder %s128, %s130
      %p137 = scmp.eq.s32.totalorder %s36, 1
      %p138 = por %p136, %p137
      %p139 = scmp.ne.s32.totalorder %s130, %s131
      %p140 = scmp.eq.s32.totalorder %s36, 0
      %p141 = por %p139, %p140
      %p142 = scmp.ne.s32.totalorder %s130, %s131
      %p143 = scmp.eq.s32.totalorder %s37, 1
      %p144 = por %p142, %p143
      %p146 = scmp.ne.s32.totalorder %s131, %s145
      %p147 = scmp.eq.s32.totalorder %s37, 0
      %p148 = por %p146, %p147
      %s150 = sadd.s32 %s149, 1
      %p153 = scmp.eq.s32.totalorder %s31, 1
      %p154 = scmp.ne.s32.totalorder %s149, %s151
      %p155 = scmp.eq.s32.totalorder %s31, 0
      %p156 = por %p154, %p155
      %p157 = scmp.ne.s32.totalorder %s149, %s151
      %p158 = scmp.eq.s32.totalorder %s36, 1
      %p159 = por %p157, %p158
      %p160 = scmp.ne.s32.totalorder %s151, %s152
      %p161 = scmp.eq.s32.totalorder %s36, 0
      %p162 = por %p160, %p161
      %p163 = scmp.ne.s32.totalorder %s151, %s152
      %p164 = scmp.eq.s32.totalorder %s37, 1
      %p165 = por %p163, %p164
      %p167 = scmp.ne.s32.totalorder %s152, %s166
      %p168 = scmp.eq.s32.totalorder %s37, 0
      %p169 = por %p167, %p168
      %s171 = sadd.s32 %s170, 1
      %p174 = scmp.eq.s32.totalorder %s31, 1
      %p175 = scmp.ne.s32.totalorder %s170, %s172
      %p176 = scmp.eq.s32.totalorder %s31, 0
      %p177 = por %p175, %p176
      %p178 = scmp.ne.s32.totalorder %s170, %s172
      %p179 = scmp.eq.s32.totalorder %s36, 1
      %p180 = por %p178, %p179
      %p181 = scmp.ne.s32.totalorder %s172, %s173
      %p182 = scmp.eq.s32.totalorder %s36, 0
      %p183 = por %p181, %p182
      %p184 = scmp.ne.s32.totalorder %s172, %s173
      %p185 = scmp.eq.s32.totalorder %s37, 1
      %p186 = por %p184, %p185
      %p188 = scmp.ne.s32.totalorder %s173, %s187
      %p189 = scmp.eq.s32.totalorder %s37, 0
      %p190 = por %p188, %p189
      %s192 = sadd.s32 %s191, 1
      %p195 = scmp.eq.s32.totalorder %s31, 1
      %p196 = scmp.ne.s32.totalorder %s191, %s193
      %p197 = scmp.eq.s32.totalorder %s31, 0
      %p198 = por %p196, %p197
      %p199 = scmp.ne.s32.totalorder %s191, %s193
      %p200 = scmp.eq.s32.totalorder %s36, 1
      %p201 = por %p199, %p200
      %p202 = scmp.ne.s32.totalorder %s193, %s194
      %p203 = scmp.eq.s32.totalorder %s36, 0
      %p204 = por %p202, %p203
      %p205 = scmp.ne.s32.totalorder %s193, %s194
      %p206 = scmp.eq.s32.totalorder %s37, 1
      %p207 = por %p205, %p206
      %p209 = scmp.ne.s32.totalorder %s194, %s208
      %p210 = scmp.eq.s32.totalorder %s37, 0
      %p211 = por %p209, %p210
      %s213 = sadd.s32 %s212, 1
      %p216 = scmp.eq.s32.totalorder %s31, 1
      %p217 = scmp.ne.s32.totalorder %s212, %s214
      %p218 = scmp.eq.s32.totalorder %s31, 0
      %p219 = por %p217, %p218
      %p220 = scmp.ne.s32.totalorder %s212, %s214
      %p221 = scmp.eq.s32.totalorder %s36, 1
      %p222 = por %p220, %p221
      %p223 = scmp.ne.s32.totalorder %s214, %s215
      %p224 = scmp.eq.s32.totalorder %s36, 0
      %p225 = por %p223, %p224
      %p226 = scmp.ne.s32.totalorder %s214, %s215
      %p227 = scmp.eq.s32.totalorder %s37, 1
      %p228 = por %p226, %p227
      %p230 = scmp.ne.s32.totalorder %s215, %s229
      %p231 = scmp.eq.s32.totalorder %s37, 0
      %p232 = por %p230, %p231
      %s234 = sadd.s32 %s233, 1
      %p237 = scmp.eq.s32.totalorder %s31, 1
      %p238 = scmp.ne.s32.totalorder %s233, %s235
      %p239 = scmp.eq.s32.totalorder %s31, 0
      %p240 = por %p238, %p239
      %p241 = scmp.ne.s32.totalorder %s233, %s235
      %p242 = scmp.eq.s32.totalorder %s36, 1
      %p243 = por %p241, %p242
      %p244 = scmp.ne.s32.totalorder %s235, %s236
      %p245 = scmp.eq.s32.totalorder %s36, 0
      %p246 = por %p244, %p245
      %p247 = scmp.ne.s32.totalorder %s235, %s236
      %p248 = scmp.eq.s32.totalorder %s37, 1
      %p249 = por %p247, %p248
      %p251 = scmp.ne.s32.totalorder %s236, %s250
      %p252 = scmp.eq.s32.totalorder %s37, 0
      %p253 = por %p251, %p252
      %s255 = sadd.s32 %s254, 1
      %p258 = scmp.eq.s32.totalorder %s31, 1
      %p259 = scmp.ne.s32.totalorder %s254, %s256
      %p260 = scmp.eq.s32.totalorder %s31, 0
      %p261 = por %p259, %p260
      %p262 = scmp.ne.s32.totalorder %s254, %s256
      %p263 = scmp.eq.s32.totalorder %s36, 1
      %p264 = por %p262, %p263
      %p265 = scmp.ne.s32.totalorder %s256, %s257
      %p266 = scmp.eq.s32.totalorder %s36, 0
      %p267 = por %p265, %p266
      %p268 = scmp.ne.s32.totalorder %s256, %s257
      %p269 = scmp.eq.s32.totalorder %s37, 1
      %p270 = por %p268, %p269
      %p272 = scmp.ne.s32.totalorder %s257, %s271
      %p273 = scmp.eq.s32.totalorder %s37, 0
      %p274 = por %p272, %p273
      %s276 = sadd.s32 %s275, 1
      %p279 = scmp.eq.s32.totalorder %s31, 1
      %p280 = scmp.ne.s32.totalorder %s275, %s277
      %p281 = scmp.eq.s32.totalorder %s31, 0
      %p282 = por %p280, %p281
      %p283 = scmp.ne.s32.totalorder %s275, %s277
      %p284 = scmp.eq.s32.totalorder %s36, 1
      %p285 = por %p283, %p284
      %p286 = scmp.ne.s32.totalorder %s277, %s278
      %p287 = scmp.eq.s32.totalorder %s36, 0
      %p288 = por %p286, %p287
      %p289 = scmp.ne.s32.totalorder %s277, %s278
      %p290 = scmp.eq.s32.totalorder %s37, 1
      %p291 = por %p289, %p290
      %p293 = scmp.ne.s32.totalorder %s278, %s292
      %p294 = scmp.eq.s32.totalorder %s37, 0
      %p295 = por %p293, %p294
      %s297 = sadd.s32 %s296, 1
      %p300 = scmp.eq.s32.totalorder %s31, 1
      %p301 = scmp.ne.s32.totalorder %s296, %s298
      %p302 = scmp.eq.s32.totalorder %s31, 0
      %p303 = por %p301, %p302
      %p304 = scmp.ne.s32.totalorder %s296, %s298
      %p305 = scmp.eq.s32.totalorder %s36, 1
      %p306 = por %p304, %p305
      %p307 = scmp.ne.s32.totalorder %s298, %s299
      %p308 = scmp.eq.s32.totalorder %s36, 0
      %p309 = por %p307, %p308
      %p310 = scmp.ne.s32.totalorder %s298, %s299
      %p311 = scmp.eq.s32.totalorder %s37, 1
      %p312 = por %p310, %p311
      %p314 = scmp.ne.s32.totalorder %s299, %s313
      %p315 = scmp.eq.s32.totalorder %s37, 0
      %p316 = por %p314, %p315
      %s318 = sadd.s32 %s317, 1
      %p321 = scmp.eq.s32.totalorder %s31, 1
      %p322 = scmp.ne.s32.totalorder %s317, %s319
      %p323 = scmp.eq.s32.totalorder %s31, 0
      %p324 = por %p322, %p323
      %p325 = scmp.ne.s32.totalorder %s317, %s319
      %p326 = scmp.eq.s32.totalorder %s36, 1
      %p327 = por %p325, %p326
      %p328 = scmp.ne.s32.totalorder %s319, %s320
      %p329 = scmp.eq.s32.totalorder %s36, 0
      %p330 = por %p328, %p329
      %p331 = scmp.ne.s32.totalorder %s319, %s320
      %p332 = scmp.eq.s32.totalorder %s37, 1
      %p333 = por %p331, %p332
      %p335 = scmp.ne.s32.totalorder %s320, %s334
      %p336 = scmp.eq.s32.totalorder %s37, 0
      %p337 = por %p335, %p336
      %s339 = sadd.s32 %s338, 1
      %p342 = scmp.eq.s32.totalorder %s31, 1
      %p343 = scmp.ne.s32.totalorder %s338, %s340
      %p344 = scmp.eq.s32.totalorder %s31, 0
      %p345 = por %p343, %p344
      %p346 = scmp.ne.s32.totalorder %s338, %s340
      %p347 = scmp.eq.s32.totalorder %s36, 1
      %p348 = por %p346, %p347
      %p349 = scmp.ne.s32.totalorder %s340, %s341
      %p350 = scmp.eq.s32.totalorder %s36, 0
      %p351 = por %p349, %p350
      %p352 = scmp.ne.s32.totalorder %s340, %s341
      %p353 = scmp.eq.s32.totalorder %s37, 1
      %p354 = por %p352, %p353
      %p356 = scmp.ne.s32.totalorder %s341, %s355
      %p357 = scmp.eq.s32.totalorder %s37, 0
      %p358 = por %p356, %p357
      %s360 = sadd.s32 %s359, 1
      %p363 = scmp.eq.s32.totalorder %s31, 1
      %p364 = scmp.ne.s32.totalorder %s359, %s361
      %p365 = scmp.eq.s32.totalorder %s31, 0
      %p366 = por %p364, %p365
      %p367 = scmp.ne.s32.totalorder %s359, %s361
      %p368 = scmp.eq.s32.totalorder %s36, 1
      %p369 = por %p367, %p368
      %p370 = scmp.ne.s32.totalorder %s361, %s362
      %p371 = scmp.eq.s32.totalorder %s36, 0
      %p372 = por %p370, %p371
      %p373 = scmp.ne.s32.totalorder %s361, %s362
      %p374 = scmp.eq.s32.totalorder %s37, 1
      %p375 = por %p373, %p374
      %p377 = scmp.ne.s32.totalorder %s362, %s376
      %p378 = scmp.eq.s32.totalorder %s37, 0
      %p379 = por %p377, %p378
      %s381 = sadd.s32 %s380, 1
      %p384 = scmp.eq.s32.totalorder %s31, 1
      %p385 = scmp.ne.s32.totalorder %s380, %s382
      %p386 = scmp.eq.s32.totalorder %s31, 0
      %p387 = por %p385, %p386
      %p388 = scmp.ne.s32.totalorder %s380, %s382
      %p389 = scmp.eq.s32.totalorder %s36, 1
      %p390 = por %p388, %p389
      %p391 = scmp.ne.s32.totalorder %s382, %s383
      %p392 = scmp.eq.s32.totalorder %s36, 0
      %p393 = por %p391, %p392
      %p394 = scmp.ne.s32.totalorder %s382, %s383
      %p395 = scmp.eq.s32.totalorder %s37, 1
      %p396 = por %p394, %p395
      %p398 = scmp.ne.s32.totalorder %s383, %s397
      %p399 = scmp.eq.s32.totalorder %s37, 0
      %p400 = por %p398, %p399
      %s401 = ssub.s32 %s31, %s38
      %p402 = scmp.eq.s32.totalorder %s401, 0
      %s404 = sadd.s32 %s403, 1
      %s405 = scalar_select %p402, %s403, %s404
      %p408 = pneg %p402
      %p409 = scmp.eq.s32.totalorder %s31, 1
      %p410 = por %p408, %p409
      %p411 = scmp.ne.s32.totalorder %s403, %s406
      %p412 = scmp.eq.s32.totalorder %s31, 0
      %p413 = por %p411, %p412
      %p414 = scmp.ne.s32.totalorder %s403, %s406
      %p415 = scmp.eq.s32.totalorder %s36, 1
      %p416 = por %p414, %p415
      %p417 = scmp.ne.s32.totalorder %s406, %s407
      %p418 = scmp.eq.s32.totalorder %s36, 0
      %p419 = por %p417, %p418
      %p420 = scmp.ne.s32.totalorder %s406, %s407
      %p421 = scmp.eq.s32.totalorder %s37, 1
      %p422 = por %p420, %p421
      %p424 = scmp.ne.s32.totalorder %s407, %s423
      %p425 = scmp.eq.s32.totalorder %s37, 0
      %p426 = por %p424, %p425
      %s427 = ssub.s32 %s31, %s38
      %p428 = scmp.eq.s32.totalorder %s427, 0
      %s430 = sadd.s32 %s429, 1
      %s431 = scalar_select %p428, %s429, %s430
      %p434 = pneg %p428
      %p435 = scmp.eq.s32.totalorder %s31, 1
      %p436 = por %p434, %p435
      %p437 = scmp.ne.s32.totalorder %s429, %s432
      %p438 = scmp.eq.s32.totalorder %s31, 0
      %p439 = por %p437, %p438
      %p440 = scmp.ne.s32.totalorder %s429, %s432
      %p441 = scmp.eq.s32.totalorder %s36, 1
      %p442 = por %p440, %p441
      %p443 = scmp.ne.s32.totalorder %s432, %s433
      %p444 = scmp.eq.s32.totalorder %s36, 0
      %p445 = por %p443, %p444
      %p446 = scmp.ne.s32.totalorder %s432, %s433
      %p447 = scmp.eq.s32.totalorder %s37, 1
      %p448 = por %p446, %p447
      %p450 = scmp.ne.s32.totalorder %s433, %s449
      %p451 = scmp.eq.s32.totalorder %s37, 0
      %p452 = por %p450, %p451
      %p453 = scmp.le.s32.totalorder 1, %s31
      %p454 = scmp.lt.s32.totalorder %s31, 3
      %p455 = pnand %p453, %p454
      %p456 = pneg %p455
      // Predicated region
      $region9: #{forward.1} parent=5 // pred_check
        _
      $region10: #{forward.1} parent=5 // pred_check_branch
        %458 = sbr.rel (%p455) target = $region12
      $region11: #{forward.1} parent=5 // pred_region
        %s459 = ssub.s32 %s31, 1
        // Predicated region
        $region13: #{forward.1} parent=11 // pred_check
          %p460 = pneg %p78
        $region14: #{forward.1} parent=11 // pred_check_branch
          %462 = sbr.rel (%p460) target = $region16
        $region15: #{forward.1} parent=11 // pred_region
          _
        $region16: #{forward.1} parent=11 // pred_fallthru
          _
        // Predicated region
        $region17: #{forward.1} parent=11 // pred_check
          %p463 = pneg %p99
        $region18: #{forward.1} parent=11 // pred_check_branch
          %465 = sbr.rel (%p463) target = $region20
        $region19: #{forward.1} parent=11 // pred_region
          _
        $region20: #{forward.1} parent=11 // pred_fallthru
          _
        // Predicated region
        $region21: #{forward.1} parent=11 // pred_check
          %p466 = pneg %p120
        $region22: #{forward.1} parent=11 // pred_check_branch
          %468 = sbr.rel (%p466) target = $region24
        $region23: #{forward.1} parent=11 // pred_region
          _
        $region24: #{forward.1} parent=11 // pred_fallthru
          _
        // Predicated region
        $region25: #{forward.1} parent=11 // pred_check
          %p469 = pneg %p141
        $region26: #{forward.1} parent=11 // pred_check_branch
          %471 = sbr.rel (%p469) target = $region28
        $region27: #{forward.1} parent=11 // pred_region
          _
        $region28: #{forward.1} parent=11 // pred_fallthru
          _
        // Predicated region
        $region29: #{forward.1} parent=11 // pred_check
          %p472 = pneg %p162
        $region30: #{forward.1} parent=11 // pred_check_branch
          %474 = sbr.rel (%p472) target = $region32
        $region31: #{forward.1} parent=11 // pred_region
          _
        $region32: #{forward.1} parent=11 // pred_fallthru
          _
        // Predicated region
        $region33: #{forward.1} parent=11 // pred_check
          %p475 = pneg %p183
        $region34: #{forward.1} parent=11 // pred_check_branch
          %477 = sbr.rel (%p475) target = $region36
        $region35: #{forward.1} parent=11 // pred_region
          _
        $region36: #{forward.1} parent=11 // pred_fallthru
          _
        // Predicated region
        $region37: #{forward.1} parent=11 // pred_check
          %p478 = pneg %p204
        $region38: #{forward.1} parent=11 // pred_check_branch
          %480 = sbr.rel (%p478) target = $region40
        $region39: #{forward.1} parent=11 // pred_region
          _
        $region40: #{forward.1} parent=11 // pred_fallthru
          _
        // Predicated region
        $region41: #{forward.1} parent=11 // pred_check
          %p481 = pneg %p225
        $region42: #{forward.1} parent=11 // pred_check_branch
          %483 = sbr.rel (%p481) target = $region44
        $region43: #{forward.1} parent=11 // pred_region
          _
        $region44: #{forward.1} parent=11 // pred_fallthru
          _
        // Predicated region
        $region45: #{forward.1} parent=11 // pred_check
          %p484 = pneg %p246
        $region46: #{forward.1} parent=11 // pred_check_branch
          %486 = sbr.rel (%p484) target = $region48
        $region47: #{forward.1} parent=11 // pred_region
          _
        $region48: #{forward.1} parent=11 // pred_fallthru
          _
        // Predicated region
        $region49: #{forward.1} parent=11 // pred_check
          %p487 = pneg %p267
        $region50: #{forward.1} parent=11 // pred_check_branch
          %489 = sbr.rel (%p487) target = $region52
        $region51: #{forward.1} parent=11 // pred_region
          _
        $region52: #{forward.1} parent=11 // pred_fallthru
          _
        // Predicated region
        $region53: #{forward.1} parent=11 // pred_check
          %p490 = pneg %p288
        $region54: #{forward.1} parent=11 // pred_check_branch
          %492 = sbr.rel (%p490) target = $region56
        $region55: #{forward.1} parent=11 // pred_region
          _
        $region56: #{forward.1} parent=11 // pred_fallthru
          _
        // Predicated region
        $region57: #{forward.1} parent=11 // pred_check
          %p493 = pneg %p309
        $region58: #{forward.1} parent=11 // pred_check_branch
          %495 = sbr.rel (%p493) target = $region60
        $region59: #{forward.1} parent=11 // pred_region
          _
        $region60: #{forward.1} parent=11 // pred_fallthru
          _
        // Predicated region
        $region61: #{forward.1} parent=11 // pred_check
          %p496 = pneg %p330
        $region62: #{forward.1} parent=11 // pred_check_branch
          %498 = sbr.rel (%p496) target = $region64
        $region63: #{forward.1} parent=11 // pred_region
          _
        $region64: #{forward.1} parent=11 // pred_fallthru
          _
        // Predicated region
        $region65: #{forward.1} parent=11 // pred_check
          %p499 = pneg %p351
        $region66: #{forward.1} parent=11 // pred_check_branch
          %501 = sbr.rel (%p499) target = $region68
        $region67: #{forward.1} parent=11 // pred_region
          _
        $region68: #{forward.1} parent=11 // pred_fallthru
          _
        // Predicated region
        $region69: #{forward.1} parent=11 // pred_check
          %p502 = pneg %p372
        $region70: #{forward.1} parent=11 // pred_check_branch
          %504 = sbr.rel (%p502) target = $region72
        $region71: #{forward.1} parent=11 // pred_region
          _
        $region72: #{forward.1} parent=11 // pred_fallthru
          _
        // Predicated region
        $region73: #{forward.1} parent=11 // pred_check
          %p505 = pneg %p393
        $region74: #{forward.1} parent=11 // pred_check_branch
          %507 = sbr.rel (%p505) target = $region76
        $region75: #{forward.1} parent=11 // pred_region
          _
        $region76: #{forward.1} parent=11 // pred_fallthru
          _
      $region12: #{forward.1} parent=5 // pred_fallthru
        _
      %p508 = scmp.lt.s32.totalorder %s31, 2
      // Predicated region
      $region77: #{forward.1} parent=5 // pred_check
        %p509 = pneg %p508
      $region78: #{forward.1} parent=5 // pred_check_branch
        %511 = sbr.rel (%p509) target = $region80
      $region79: #{forward.1} parent=5 // pred_region
        // Predicated region
        $region81: #{forward.1} parent=79 // pred_check
          %p512 = pneg %p51
        $region82: #{forward.1} parent=79 // pred_check_branch
          %514 = sbr.rel (%p512) target = $region84
        $region83: #{forward.1} parent=79 // pred_region
          %p515 = scmp.lt.s32.totalorder %s31, 1
          %s516 = scalar_select %p515, %s31, 1
          %s517 = smul.addr %s516, 56
          %s518 = smul.addr %s517, 4
          %s519 = scalar_lea.vmem %s0, %s518
        $region84: #{forward.1} parent=79 // pred_fallthru
          _
      $region80: #{forward.1} parent=5 // pred_fallthru
        _
      %p520 = scmp.le.s32.totalorder 1, %s31
      %p521 = scmp.lt.s32.totalorder %s31, 3
      %p522 = pnand %p520, %p521
      %p523 = pneg %p522
      // Predicated region
      $region85: #{forward.1} parent=5 // pred_check
        _
      $region86: #{forward.1} parent=5 // pred_check_branch
        %525 = sbr.rel (%p522) target = $region88
      $region87: #{forward.1} parent=5 // pred_region
        %s526 = ssub.s32 %s31, 1
        %p527 = scmp.lt.s32.totalorder %s36, 1
        %s528 = scalar_select %p527, %s36, 1
        %s529 = smul.addr %s528, 56
        %s530 = smul.addr %s529, 4
        %s531 = scalar_lea.vmem %s0, %s530
        %p532 = pneg %p57
        %p533 = pneg %p54
        %p534 = pneg %p78
        %p535 = pneg %p75
        %p536 = pneg %p99
        %p537 = pneg %p96
        %p538 = pneg %p120
        %p539 = pneg %p117
        %p540 = pneg %p141
        %p541 = pneg %p138
        %p542 = pneg %p162
        %p543 = pneg %p159
        %p544 = pneg %p183
        %p545 = pneg %p180
        %p546 = pneg %p204
        %p547 = pneg %p201
        %p548 = pneg %p225
        %p549 = pneg %p222
        %p550 = pneg %p246
        %p551 = pneg %p243
        %p552 = pneg %p267
        %p553 = pneg %p264
        %p554 = pneg %p288
        %p555 = pneg %p285
        %p556 = pneg %p309
        %p557 = pneg %p306
        %p558 = pneg %p330
        %p559 = pneg %p327
        %p560 = pneg %p351
        %p561 = pneg %p348
        %p562 = pneg %p372
        %p563 = pneg %p369
        %p564 = pneg %p393
        %p565 = pneg %p390
        %p566 = pneg %p419
        %p567 = pneg %p416
        %s568 = sand.u32 %s406, 1
        %s569 = scalar_lea.sflag [#allocation3], %s568
        %s570 = sand.u32 %s406, 1
        %s571 = smul.addr %s570, 8
        %s572 = scalar_lea.vmem [#allocation2], %s571
        %p573 = pneg %p445
        %p574 = pneg %p442
        %s575 = sand.u32 %s432, 1
        %s576 = scalar_lea.sflag [#allocation5], %s575
        %s577 = sand.u32 %s432, 1
        %s578 = smul.addr %s577, 8
        %s579 = scalar_lea.vmem [#allocation4], %s578
        %p580 = scmp.lt.s32.totalorder %s36, 1
        %s581 = scalar_select %p580, %s36, 1
        %s582 = smul.addr %s581, 56
        %s583 = smul.addr %s582, 4
        %s584 = scalar_lea.vmem %s0, %s583
        %v586 = vld [vmem:[%s584] sm:$0xf]
        %v587 = vld [vmem:[%s584 + $0x4] sm:$0xf]
        %v588 = vld [vmem:[%s584 + $0x8] sm:$0xf]
        %v589 = vld [vmem:[%s584 + $0xc] sm:$0xf]
        %v590 = vld [vmem:[%s584 + $0x10] sm:$0xf]
        %v591 = vld [vmem:[%s584 + $0x14] sm:$0xf]
        %v592 = vld [vmem:[%s584 + $0x18] sm:$0xf]
        %v593 = vld [vmem:[%s584 + $0x1c] sm:$0xf]
        %v594 = vld [vmem:[%s584 + $0x20] sm:$0xf]
        %v595 = vld [vmem:[%s584 + $0x24] sm:$0xf]
        %v596 = vld [vmem:[%s584 + $0x28] sm:$0xf]
        %v597 = vld [vmem:[%s584 + $0x2c] sm:$0xf]
        %v598 = vld [vmem:[%s584 + $0x30] sm:$0xf]
        %v599 = vld [vmem:[%s584 + $0x34] sm:$0xf]
        %v600 = vld [vmem:[%s584 + $0x38] sm:$0xf]
        %v601 = vld [vmem:[%s584 + $0x3c] sm:$0xf]
        %v602 = vld [vmem:[%s584 + $0x40] sm:$0xf]
        %v603 = vld [vmem:[%s584 + $0x44] sm:$0xf]
        %v604 = vld [vmem:[%s584 + $0x48] sm:$0xf]
        %v605 = vld [vmem:[%s584 + $0x4c] sm:$0xf]
        %v606 = vld [vmem:[%s584 + $0x50] sm:$0xf]
        %v607 = vld [vmem:[%s584 + $0x54] sm:$0xf]
        %v608 = vld [vmem:[%s584 + $0x58] sm:$0xf]
        %v609 = vld [vmem:[%s584 + $0x5c] sm:$0xf]
        %v610 = vld [vmem:[%s584 + $0x60] sm:$0xf]
        %v611 = vld [vmem:[%s584 + $0x64] sm:$0xf]
        %v612 = vld [vmem:[%s584 + $0x68] sm:$0xf]
        %v613 = vld [vmem:[%s584 + $0x6c] sm:$0xf]
        %v614 = vld [vmem:[%s584 + $0x70] sm:$0xf]
        %v615 = vld [vmem:[%s584 + $0x74] sm:$0xf]
        %v616 = vld [vmem:[%s584 + $0x78] sm:$0xf]
        %v617 = vld [vmem:[%s584 + $0x7c] sm:$0xf]
        %v618 = vld [vmem:[%s584 + $0x80] sm:$0xf]
        %v619 = vld [vmem:[%s584 + $0x84] sm:$0xf]
        %v620 = vld [vmem:[%s584 + $0x88] sm:$0xf]
        %v621 = vld [vmem:[%s584 + $0x8c] sm:$0xf]
        %v622 = vld [vmem:[%s584 + $0x90] sm:$0xf]
        %v623 = vld [vmem:[%s584 + $0x94] sm:$0xf]
        %v624 = vld [vmem:[%s584 + $0x98] sm:$0xf]
        %v625 = vld [vmem:[%s584 + $0x9c] sm:$0xf]
        %v626 = vld [vmem:[%s584 + $0xa0] sm:$0xf]
        %v627 = vld [vmem:[%s584 + $0xa4] sm:$0xf]
        %v628 = vld [vmem:[%s584 + $0xa8] sm:$0xf]
        %v629 = vld [vmem:[%s584 + $0xac] sm:$0xf]
        %v630 = vld [vmem:[%s584 + $0xb0] sm:$0xf]
        %v631 = vld [vmem:[%s584 + $0xb4] sm:$0xf]
        %v632 = vld [vmem:[%s584 + $0xb8] sm:$0xf]
        %v633 = vld [vmem:[%s584 + $0xbc] sm:$0xf]
        %v634 = vld [vmem:[%s584 + $0xc0] sm:$0xf]
        %v635 = vld [vmem:[%s584 + $0xc4] sm:$0xf]
        %v636 = vld [vmem:[%s584 + $0xc8] sm:$0xf]
        %v637 = vld [vmem:[%s584 + $0xcc] sm:$0xf]
        %v638 = vld [vmem:[%s584 + $0xd0] sm:$0xf]
        %v639 = vld [vmem:[%s584 + $0xd4] sm:$0xf]
        %v640 = vld [vmem:[%s584 + $0xd8] sm:$0xf]
        %v641 = vld [vmem:[%s584 + $0xdc] sm:$0xf]
        %v642 = vld [vmem:[%s1] sm:$0xff]
        %v643 = vld [vmem:[%s1 + $0x8] sm:$0xff]
        %v644 = vld [vmem:[%s1 + $0x10] sm:$0xf]
        %v645 = vld [vmem:[%s1 + $0x14] sm:$0xff]
        %v646 = vld [vmem:[%s1 + $0x1c] sm:$0xff]
        %v647 = vld [vmem:[%s1 + $0x24] sm:$0xf]
        %v648 = vld [vmem:[%s1 + $0x28] sm:$0xff]
        %v649 = vld [vmem:[%s1 + $0x30] sm:$0xff]
        %v650 = vld [vmem:[%s1 + $0x38] sm:$0xf]
        %v651 = vld [vmem:[%s1 + $0x3c] sm:$0xff]
        %v652 = vld [vmem:[%s1 + $0x44] sm:$0xff]
        %v653 = vld [vmem:[%s1 + $0x4c] sm:$0xf]
        %v654 = vld [vmem:[%s1 + $0x50] sm:$0xff]
        %v655 = vld [vmem:[%s1 + $0x58] sm:$0xff]
        %v656 = vld [vmem:[%s1 + $0x60] sm:$0xf]
        %s657 = scalar_lea.vmem %s1, 100
        %v658 = vld [vmem:[%s657] sm:$0xff]
        %v659 = vld [vmem:[%s657 + $0x8] sm:$0xff]
        %v660 = vld [vmem:[%s657 + $0x10] sm:$0xf]
        %v661 = vld [vmem:[%s657 + $0x14] sm:$0xff]
        %v662 = vld [vmem:[%s657 + $0x1c] sm:$0xff]
        %v663 = vld [vmem:[%s657 + $0x24] sm:$0xf]
        %v664 = vld [vmem:[%s657 + $0x28] sm:$0xff]
        %v665 = vld [vmem:[%s657 + $0x30] sm:$0xff]
        %v666 = vld [vmem:[%s657 + $0x38] sm:$0xf]
        %v667 = vld [vmem:[%s657 + $0x3c] sm:$0xff]
        %v668 = vld [vmem:[%s657 + $0x44] sm:$0xff]
        %v669 = vld [vmem:[%s657 + $0x4c] sm:$0xf]
        %v670 = vld [vmem:[%s657 + $0x50] sm:$0xff]
        %v671 = vld [vmem:[%s657 + $0x58] sm:$0xff]
        %v672 = vld [vmem:[%s657 + $0x60] sm:$0xf]
        %v727 = vunpack.c.l.b16 %v587
        %v728 = vunpack.c.l.b16 %v588
        %v729 = vunpack.c.l.b16 %v589
        %v730 = vunpack.c.l.b16 %v590
        %v731 = vunpack.c.l.b16 %v591
        %v732 = vunpack.c.l.b16 %v592
        %v733 = vunpack.c.l.b16 %v593
        %v734 = vunpack.c.l.b16 %v594
        %v735 = vunpack.c.l.b16 %v595
        %v736 = vunpack.c.l.b16 %v596
        %v737 = vunpack.c.l.b16 %v597
        %v738 = vunpack.c.l.b16 %v598
        %v739 = vunpack.c.l.b16 %v599
        %v740 = vunpack.c.l.b16 %v600
        %v741 = vunpack.c.l.b16 %v601
        %v742 = vunpack.c.l.b16 %v602
        %v743 = vunpack.c.l.b16 %v603
        %v744 = vunpack.c.l.b16 %v604
        %v745 = vunpack.c.l.b16 %v605
        %v746 = vunpack.c.l.b16 %v606
        %v747 = vunpack.c.l.b16 %v607
        %v748 = vunpack.c.l.b16 %v608
        %v749 = vunpack.c.l.b16 %v609
        %v750 = vunpack.c.l.b16 %v610
        %v751 = vunpack.c.l.b16 %v611
        %v752 = vunpack.c.l.b16 %v612
        %v753 = vunpack.c.l.b16 %v613
        %v754 = vunpack.c.l.b16 %v614
        %v755 = vunpack.c.l.b16 %v615
        %v756 = vunpack.c.l.b16 %v616
        %v757 = vunpack.c.l.b16 %v617
        %v758 = vunpack.c.l.b16 %v618
        %v759 = vunpack.c.l.b16 %v619
        %v760 = vunpack.c.l.b16 %v620
        %v761 = vunpack.c.l.b16 %v621
        %v762 = vunpack.c.l.b16 %v622
        %v763 = vunpack.c.l.b16 %v623
        %v764 = vunpack.c.l.b16 %v624
        %v765 = vunpack.c.l.b16 %v625
        %v766 = vunpack.c.l.b16 %v626
        %v767 = vunpack.c.l.b16 %v627
        %v768 = vunpack.c.l.b16 %v628
        %v769 = vunpack.c.l.b16 %v629
        %v770 = vunpack.c.l.b16 %v630
        %v771 = vunpack.c.l.b16 %v631
        %v772 = vunpack.c.l.b16 %v632
        %v773 = vunpack.c.l.b16 %v633
        %v774 = vunpack.c.l.b16 %v634
        %v775 = vunpack.c.l.b16 %v635
        %v776 = vunpack.c.l.b16 %v636
        %v777 = vunpack.c.l.b16 %v637
        %v778 = vunpack.c.l.b16 %v638
        %v779 = vunpack.c.l.b16 %v639
        %v780 = vunpack.c.l.b16 %v640
        %v781 = vpack.c.b16 %v728, %v727
        %v782 = vpack.c.b16 %v730, %v729
        %v783 = vpack.c.b16 %v732, %v731
        %v784 = vpack.c.b16 %v734, %v733
        %v785 = vpack.c.b16 %v736, %v735
        %v786 = vpack.c.b16 %v738, %v737
        %v787 = vpack.c.b16 %v740, %v739
        %v788 = vpack.c.b16 %v742, %v741
        %v789 = vpack.c.b16 %v744, %v743
        %v790 = vpack.c.b16 %v746, %v745
        %v791 = vpack.c.b16 %v748, %v747
        %v792 = vpack.c.b16 %v750, %v749
        %v793 = vpack.c.b16 %v752, %v751
        %v794 = vpack.c.b16 %v754, %v753
        %v795 = vpack.c.b16 %v756, %v755
        %v796 = vpack.c.b16 %v758, %v757
        %v797 = vpack.c.b16 %v760, %v759
        %v798 = vpack.c.b16 %v762, %v761
        %v799 = vpack.c.b16 %v764, %v763
        %v800 = vpack.c.b16 %v766, %v765
        %v801 = vpack.c.b16 %v768, %v767
        %v802 = vpack.c.b16 %v770, %v769
        %v803 = vpack.c.b16 %v772, %v771
        %v804 = vpack.c.b16 %v774, %v773
        %v805 = vpack.c.b16 %v776, %v775
        %v806 = vpack.c.b16 %v778, %v777
        %v807 = vpack.c.b16 %v780, %v779
        %v823 = vunpack.c.l.b16 %v658
        %v824 = vunpack.c.h.b16 %v658
        %v825 = vunpack.c.l.b16 %v659
        %v826 = vunpack.c.h.b16 %v659
        %v827 = vunpack.c.l.b16 %v660
        %v828 = vunpack.c.l.b16 %v661
        %v829 = vunpack.c.h.b16 %v661
        %v830 = vunpack.c.l.b16 %v662
        %v831 = vunpack.c.h.b16 %v662
        %v832 = vunpack.c.l.b16 %v663
        %v833 = vunpack.c.l.b16 %v664
        %v834 = vunpack.c.h.b16 %v664
        %v835 = vunpack.c.l.b16 %v665
        %v836 = vunpack.c.h.b16 %v665
        %v837 = vunpack.c.l.b16 %v666
        %v838 = vunpack.c.l.b16 %v667
        %v839 = vunpack.c.h.b16 %v667
        %v840 = vunpack.c.l.b16 %v668
        %v841 = vunpack.c.h.b16 %v668
        %v842 = vunpack.c.l.b16 %v669
        %v843 = vunpack.c.l.b16 %v670
        %v844 = vunpack.c.h.b16 %v670
        %v845 = vunpack.c.l.b16 %v671
        %v846 = vunpack.c.h.b16 %v671
        %v847 = vunpack.c.l.b16 %v672
        %v848 = vpack.c.b16 %v828, %v823
        %v849 = vpack.c.b16 %v829, %v824
        %v850 = vpack.c.b16 %v830, %v825
        %v851 = vpack.c.b16 %v831, %v826
        %v852 = vpack.c.b16 %v832, %v827
        %v853 = vpack.c.b16 %v838, %v833
        %v854 = vpack.c.b16 %v839, %v834
        %v855 = vpack.c.b16 %v840, %v835
        %v856 = vpack.c.b16 %v841, %v836
        %v857 = vpack.c.b16 %v842, %v837
        %v858 = vpack.c.b16 %v843, %v843
        %v859 = vpack.c.b16 %v844, %v844
        %v860 = vpack.c.b16 %v845, %v845
        %v861 = vpack.c.b16 %v846, %v846
        %v862 = vpack.c.b16 %v847, %v847
        %vm873 = vcmask 326656
        %v875 = vsel %vm873, %v781, 0
        %v878 = vsel %vm873, %v782, 0
        %v881 = vsel %vm873, %v783, 0
        %v884 = vsel %vm873, %v784, 0
        %v887 = vsel %vm873, %v785, 0
        %v890 = vsel %vm873, %v786, 0
        %v893 = vsel %vm873, %v787, 0
        %v896 = vsel %vm873, %v788, 0
        %v899 = vsel %vm873, %v789, 0
        %v902 = vsel %vm873, %v790, 0
        %v905 = vsel %vm873, %v791, 0
        %v908 = vsel %vm873, %v792, 0
        %v911 = vsel %vm873, %v793, 0
        %v914 = vsel %vm873, %v794, 0
        %v917 = vsel %vm873, %v795, 0
        %v920 = vsel %vm873, %v796, 0
        %v923 = vsel %vm873, %v797, 0
        %v926 = vsel %vm873, %v798, 0
        %v929 = vsel %vm873, %v799, 0
        %v932 = vsel %vm873, %v800, 0
        %v935 = vsel %vm873, %v801, 0
        %v938 = vsel %vm873, %v802, 0
        %v941 = vsel %vm873, %v803, 0
        %v944 = vsel %vm873, %v804, 0
        %v947 = vsel %vm873, %v805, 0
        %v950 = vsel %vm873, %v806, 0
        %v953 = vsel %vm873, %v807, 0
        %vm955 = vcmask 1043456
        %v957 = vsel %vm955, %v858, 0
        %v960 = vsel %vm955, %v859, 0
        %v963 = vsel %vm955, %v860, 0
        %v966 = vsel %vm955, %v861, 0
        %v969 = vsel %vm955, %v862, 0
        %971 = vmatprep.subr.bf16.mxu0 0
        %972 = vmatpush1.bf16.msra.mxu0 0
        %973 = vmatprep.subr.bf16.mxu0 0
        %974 = vmatpush1.bf16.msra.mxu0 0
        %975 = vmatprep.subr.bf16.mxu0 0
        %976 = vmatpush1.bf16.msra.mxu0 0
        %977 = vmatprep.subr.bf16.mxu0 0
        %978 = vmatpush1.bf16.msra.mxu0 0
        %979 = vmatprep.subr.bf16.mxu0 0
        %980 = vmatpush1.bf16.msra.mxu0 0
        %981 = vmatprep.subr.bf16.mxu0 %v960
        %982 = vmatpush1.bf16.msra.mxu0 %v957
        %983 = vmatprep.subr.bf16.mxu0 %v854
        %984 = vmatpush1.bf16.msra.mxu0 %v853
        %985 = vmatprep.subr.bf16.mxu0 %v849
        %986 = vmatpush1.bf16.msra.mxu0 %v848
        %987 = vmatprep.subr.bf16.mxu0 0
        %988 = vmatpush2.bf16.msra.mxu0 0
        %989 = vmatprep.subr.bf16.mxu0 0
        %990 = vmatpush2.bf16.msra.mxu0 0
        %991 = vmatprep.subr.bf16.mxu0 0
        %992 = vmatpush2.bf16.msra.mxu0 0
        %993 = vmatprep.subr.bf16.mxu0 0
        %994 = vmatpush2.bf16.msra.mxu0 0
        %995 = vmatprep.subr.bf16.mxu0 0
        %996 = vmatpush2.bf16.msra.mxu0 0
        %997 = vmatprep.subr.bf16.mxu0 0
        %998 = vmatpush2.bf16.msra.mxu0 0
        %999 = vmatprep.subr.bf16.mxu0 0
        %1000 = vmatpush2.bf16.msra.mxu0 0
        %1001 = vmatprep.subr.bf16.mxu0 0
        %1002 = vmatpush2.bf16.msra.mxu0 0
        %1003 = vmatprep.mubr.bf16.mxu0 0
        %1004 = vmatmul.mubr.bf16.gmra.mxu0 %v875
        %v1005 = vpop.f32.mrf.mxu0
        %v1006 = vadd.f32 0.0, %v1005
        %v1007 = vpop.f32.mrf.mxu0
        %v1008 = vadd.f32 0.0, %v1007
        %v1009 = vpop.f32.mrf.mxu0
        %v1010 = vadd.f32 0.0, %v1009
        %v1011 = vpop.f32.mrf.mxu0
        %v1012 = vadd.f32 0.0, %v1011
        %1013 = vmatprep.mubr.bf16.mxu0 0
        %1014 = vmatmul.mubr.bf16.gmra.mxu0 %v878
        %v1015 = vpop.f32.mrf.mxu0
        %v1016 = vadd.f32 0.0, %v1015
        %v1017 = vpop.f32.mrf.mxu0
        %v1018 = vadd.f32 0.0, %v1017
        %v1019 = vpop.f32.mrf.mxu0
        %v1020 = vadd.f32 0.0, %v1019
        %v1021 = vpop.f32.mrf.mxu0
        %v1022 = vadd.f32 0.0, %v1021
        %1023 = vmatprep.mubr.bf16.mxu0 0
        %1024 = vmatmul.mubr.bf16.gmra.mxu0 %v881
        %v1025 = vpop.f32.mrf.mxu0
        %v1026 = vadd.f32 0.0, %v1025
        %v1027 = vpop.f32.mrf.mxu0
        %v1028 = vadd.f32 0.0, %v1027
        %v1029 = vpop.f32.mrf.mxu0
        %v1030 = vadd.f32 0.0, %v1029
        %v1031 = vpop.f32.mrf.mxu0
        %v1032 = vadd.f32 0.0, %v1031
        %1033 = vmatprep.mubr.bf16.mxu0 0
        %1034 = vmatmul.mubr.bf16.gmra.mxu0 %v884
        %v1035 = vpop.f32.mrf.mxu0
        %v1036 = vadd.f32 0.0, %v1035
        %v1037 = vpop.f32.mrf.mxu0
        %v1038 = vadd.f32 0.0, %v1037
        %v1039 = vpop.f32.mrf.mxu0
        %v1040 = vadd.f32 0.0, %v1039
        %v1041 = vpop.f32.mrf.mxu0
        %v1042 = vadd.f32 0.0, %v1041
        %1043 = vmatprep.mubr.bf16.mxu0 0
        %1044 = vmatmul.mubr.bf16.gmra.mxu0 %v887
        %v1045 = vpop.f32.mrf.mxu0
        %v1046 = vadd.f32 0.0, %v1045
        %v1047 = vpop.f32.mrf.mxu0
        %v1048 = vadd.f32 0.0, %v1047
        %v1049 = vpop.f32.mrf.mxu0
        %v1050 = vadd.f32 0.0, %v1049
        %v1051 = vpop.f32.mrf.mxu0
        %v1052 = vadd.f32 0.0, %v1051
        %1053 = vmatprep.mubr.bf16.mxu0 0
        %1054 = vmatmul.mubr.bf16.gmra.mxu0 %v890
        %v1055 = vpop.f32.mrf.mxu0
        %v1056 = vadd.f32 0.0, %v1055
        %v1057 = vpop.f32.mrf.mxu0
        %v1058 = vadd.f32 0.0, %v1057
        %v1059 = vpop.f32.mrf.mxu0
        %v1060 = vadd.f32 0.0, %v1059
        %v1061 = vpop.f32.mrf.mxu0
        %v1062 = vadd.f32 0.0, %v1061
        %1063 = vmatprep.mubr.bf16.mxu0 0
        %1064 = vmatmul.mubr.bf16.gmra.mxu0 %v893
        %v1065 = vpop.f32.mrf.mxu0
        %v1066 = vadd.f32 0.0, %v1065
        %v1067 = vpop.f32.mrf.mxu0
        %v1068 = vadd.f32 0.0, %v1067
        %v1069 = vpop.f32.mrf.mxu0
        %v1070 = vadd.f32 0.0, %v1069
        %v1071 = vpop.f32.mrf.mxu0
        %v1072 = vadd.f32 0.0, %v1071
        %1073 = vmatprep.mubr.bf16.mxu0 0
        %1074 = vmatmul.mubr.bf16.gmra.mxu0 %v896
        %v1075 = vpop.f32.mrf.mxu0
        %v1076 = vadd.f32 0.0, %v1075
        %v1077 = vpop.f32.mrf.mxu0
        %v1078 = vadd.f32 0.0, %v1077
        %v1079 = vpop.f32.mrf.mxu0
        %v1080 = vadd.f32 0.0, %v1079
        %v1081 = vpop.f32.mrf.mxu0
        %v1082 = vadd.f32 0.0, %v1081
        %1083 = vmatprep.mubr.bf16.mxu0 0
        %1084 = vmatmul.mubr.bf16.gmra.mxu0 %v899
        %v1085 = vpop.f32.mrf.mxu0
        %v1086 = vadd.f32 0.0, %v1085
        %v1087 = vpop.f32.mrf.mxu0
        %v1088 = vadd.f32 0.0, %v1087
        %v1089 = vpop.f32.mrf.mxu0
        %v1090 = vadd.f32 0.0, %v1089
        %v1091 = vpop.f32.mrf.mxu0
        %v1092 = vadd.f32 0.0, %v1091
        %1093 = vmatprep.mubr.bf16.mxu0 0
        %1094 = vmatmul.mubr.bf16.gmra.mxu0 %v902
        %v1095 = vpop.f32.mrf.mxu0
        %v1096 = vadd.f32 0.0, %v1095
        %v1097 = vpop.f32.mrf.mxu0
        %v1098 = vadd.f32 0.0, %v1097
        %v1099 = vpop.f32.mrf.mxu0
        %v1100 = vadd.f32 0.0, %v1099
        %v1101 = vpop.f32.mrf.mxu0
        %v1102 = vadd.f32 0.0, %v1101
        %1103 = vmatprep.mubr.bf16.mxu0 0
        %1104 = vmatmul.mubr.bf16.gmra.mxu0 %v905
        %v1105 = vpop.f32.mrf.mxu0
        %v1106 = vadd.f32 0.0, %v1105
        %v1107 = vpop.f32.mrf.mxu0
        %v1108 = vadd.f32 0.0, %v1107
        %v1109 = vpop.f32.mrf.mxu0
        %v1110 = vadd.f32 0.0, %v1109
        %v1111 = vpop.f32.mrf.mxu0
        %v1112 = vadd.f32 0.0, %v1111
        %1113 = vmatprep.mubr.bf16.mxu0 0
        %1114 = vmatmul.mubr.bf16.gmra.mxu0 %v908
        %v1115 = vpop.f32.mrf.mxu0
        %v1116 = vadd.f32 0.0, %v1115
        %v1117 = vpop.f32.mrf.mxu0
        %v1118 = vadd.f32 0.0, %v1117
        %v1119 = vpop.f32.mrf.mxu0
        %v1120 = vadd.f32 0.0, %v1119
        %v1121 = vpop.f32.mrf.mxu0
        %v1122 = vadd.f32 0.0, %v1121
        %1123 = vmatprep.mubr.bf16.mxu0 0
        %1124 = vmatmul.mubr.bf16.gmra.mxu0 %v911
        %v1125 = vpop.f32.mrf.mxu0
        %v1126 = vadd.f32 0.0, %v1125
        %v1127 = vpop.f32.mrf.mxu0
        %v1128 = vadd.f32 0.0, %v1127
        %v1129 = vpop.f32.mrf.mxu0
        %v1130 = vadd.f32 0.0, %v1129
        %v1131 = vpop.f32.mrf.mxu0
        %v1132 = vadd.f32 0.0, %v1131
        %1133 = vmatprep.mubr.bf16.mxu0 0
        %1134 = vmatmul.mubr.bf16.gmra.mxu0 %v914
        %v1135 = vpop.f32.mrf.mxu0
        %v1136 = vadd.f32 0.0, %v1135
        %v1137 = vpop.f32.mrf.mxu0
        %v1138 = vadd.f32 0.0, %v1137
        %v1139 = vpop.f32.mrf.mxu0
        %v1140 = vadd.f32 0.0, %v1139
        %v1141 = vpop.f32.mrf.mxu0
        %v1142 = vadd.f32 0.0, %v1141
        %1143 = vmatprep.mubr.bf16.mxu0 0
        %1144 = vmatmul.mubr.bf16.gmra.mxu0 %v917
        %v1145 = vpop.f32.mrf.mxu0
        %v1146 = vadd.f32 0.0, %v1145
        %v1147 = vpop.f32.mrf.mxu0
        %v1148 = vadd.f32 0.0, %v1147
        %v1149 = vpop.f32.mrf.mxu0
        %v1150 = vadd.f32 0.0, %v1149
        %v1151 = vpop.f32.mrf.mxu0
        %v1152 = vadd.f32 0.0, %v1151
        %1153 = vmatprep.mubr.bf16.mxu0 0
        %1154 = vmatmul.mubr.bf16.gmra.mxu0 %v920
        %v1155 = vpop.f32.mrf.mxu0
        %v1156 = vadd.f32 0.0, %v1155
        %v1157 = vpop.f32.mrf.mxu0
        %v1158 = vadd.f32 0.0, %v1157
        %v1159 = vpop.f32.mrf.mxu0
        %v1160 = vadd.f32 0.0, %v1159
        %v1161 = vpop.f32.mrf.mxu0
        %v1162 = vadd.f32 0.0, %v1161
        %1163 = vmatprep.mubr.bf16.mxu0 0
        %1164 = vmatmul.mubr.bf16.gmra.mxu0 %v923
        %v1165 = vpop.f32.mrf.mxu0
        %v1166 = vadd.f32 0.0, %v1165
        %v1167 = vpop.f32.mrf.mxu0
        %v1168 = vadd.f32 0.0, %v1167
        %v1169 = vpop.f32.mrf.mxu0
        %v1170 = vadd.f32 0.0, %v1169
        %v1171 = vpop.f32.mrf.mxu0
        %v1172 = vadd.f32 0.0, %v1171
        %1173 = vmatprep.mubr.bf16.mxu0 0
        %1174 = vmatmul.mubr.bf16.gmra.mxu0 %v926
        %v1175 = vpop.f32.mrf.mxu0
        %v1176 = vadd.f32 0.0, %v1175
        %v1177 = vpop.f32.mrf.mxu0
        %v1178 = vadd.f32 0.0, %v1177
        %v1179 = vpop.f32.mrf.mxu0
        %v1180 = vadd.f32 0.0, %v1179
        %v1181 = vpop.f32.mrf.mxu0
        %v1182 = vadd.f32 0.0, %v1181
        %1183 = vmatprep.mubr.bf16.mxu0 0
        %1184 = vmatmul.mubr.bf16.gmra.mxu0 %v929
        %v1185 = vpop.f32.mrf.mxu0
        %v1186 = vadd.f32 0.0, %v1185
        %v1187 = vpop.f32.mrf.mxu0
        %v1188 = vadd.f32 0.0, %v1187
        %v1189 = vpop.f32.mrf.mxu0
        %v1190 = vadd.f32 0.0, %v1189
        %v1191 = vpop.f32.mrf.mxu0
        %v1192 = vadd.f32 0.0, %v1191
        %1193 = vmatprep.mubr.bf16.mxu0 0
        %1194 = vmatmul.mubr.bf16.gmra.mxu0 %v932
        %v1195 = vpop.f32.mrf.mxu0
        %v1196 = vadd.f32 0.0, %v1195
        %v1197 = vpop.f32.mrf.mxu0
        %v1198 = vadd.f32 0.0, %v1197
        %v1199 = vpop.f32.mrf.mxu0
        %v1200 = vadd.f32 0.0, %v1199
        %v1201 = vpop.f32.mrf.mxu0
        %v1202 = vadd.f32 0.0, %v1201
        %1203 = vmatprep.mubr.bf16.mxu0 0
        %1204 = vmatmul.mubr.bf16.gmra.mxu0 %v935
        %v1205 = vpop.f32.mrf.mxu0
        %v1206 = vadd.f32 0.0, %v1205
        %v1207 = vpop.f32.mrf.mxu0
        %v1208 = vadd.f32 0.0, %v1207
        %v1209 = vpop.f32.mrf.mxu0
        %v1210 = vadd.f32 0.0, %v1209
        %v1211 = vpop.f32.mrf.mxu0
        %v1212 = vadd.f32 0.0, %v1211
        %1213 = vmatprep.mubr.bf16.mxu0 0
        %1214 = vmatmul.mubr.bf16.gmra.mxu0 %v938
        %v1215 = vpop.f32.mrf.mxu0
        %v1216 = vadd.f32 0.0, %v1215
        %v1217 = vpop.f32.mrf.mxu0
        %v1218 = vadd.f32 0.0, %v1217
        %v1219 = vpop.f32.mrf.mxu0
        %v1220 = vadd.f32 0.0, %v1219
        %v1221 = vpop.f32.mrf.mxu0
        %v1222 = vadd.f32 0.0, %v1221
        %1223 = vmatprep.mubr.bf16.mxu0 0
        %1224 = vmatmul.mubr.bf16.gmra.mxu0 %v941
        %v1225 = vpop.f32.mrf.mxu0
        %v1226 = vadd.f32 0.0, %v1225
        %v1227 = vpop.f32.mrf.mxu0
        %v1228 = vadd.f32 0.0, %v1227
        %v1229 = vpop.f32.mrf.mxu0
        %v1230 = vadd.f32 0.0, %v1229
        %v1231 = vpop.f32.mrf.mxu0
        %v1232 = vadd.f32 0.0, %v1231
        %1233 = vmatprep.mubr.bf16.mxu0 0
        %1234 = vmatmul.mubr.bf16.gmra.mxu0 %v944
        %v1235 = vpop.f32.mrf.mxu0
        %v1236 = vadd.f32 0.0, %v1235
        %v1237 = vpop.f32.mrf.mxu0
        %v1238 = vadd.f32 0.0, %v1237
        %v1239 = vpop.f32.mrf.mxu0
        %v1240 = vadd.f32 0.0, %v1239
        %v1241 = vpop.f32.mrf.mxu0
        %v1242 = vadd.f32 0.0, %v1241
        %1243 = vmatprep.mubr.bf16.mxu0 0
        %1244 = vmatmul.mubr.bf16.gmra.mxu0 %v947
        %v1245 = vpop.f32.mrf.mxu0
        %v1246 = vadd.f32 0.0, %v1245
        %v1247 = vpop.f32.mrf.mxu0
        %v1248 = vadd.f32 0.0, %v1247
        %v1249 = vpop.f32.mrf.mxu0
        %v1250 = vadd.f32 0.0, %v1249
        %v1251 = vpop.f32.mrf.mxu0
        %v1252 = vadd.f32 0.0, %v1251
        %1253 = vmatprep.mubr.bf16.mxu0 0
        %1254 = vmatmul.mubr.bf16.gmra.mxu0 %v950
        %v1255 = vpop.f32.mrf.mxu0
        %v1256 = vadd.f32 0.0, %v1255
        %v1257 = vpop.f32.mrf.mxu0
        %v1258 = vadd.f32 0.0, %v1257
        %v1259 = vpop.f32.mrf.mxu0
        %v1260 = vadd.f32 0.0, %v1259
        %v1261 = vpop.f32.mrf.mxu0
        %v1262 = vadd.f32 0.0, %v1261
        %1263 = vmatprep.mubr.bf16.mxu0 0
        %1264 = vmatmul.mubr.bf16.gmra.mxu0 %v953
        %v1265 = vpop.f32.mrf.mxu0
        %v1266 = vadd.f32 0.0, %v1265
        %v1267 = vpop.f32.mrf.mxu0
        %v1268 = vadd.f32 0.0, %v1267
        %v1269 = vpop.f32.mrf.mxu0
        %v1270 = vadd.f32 0.0, %v1269
        %v1271 = vpop.f32.mrf.mxu0
        %v1272 = vadd.f32 0.0, %v1271
        %1273 = vdwg.mxu0
        %1274 = vmatprep.subr.bf16.mxu0 0
        %1275 = vmatpush1.bf16.msra.mxu0 0
        %1276 = vmatprep.subr.bf16.mxu0 0
        %1277 = vmatpush1.bf16.msra.mxu0 0
        %1278 = vmatprep.subr.bf16.mxu0 0
        %1279 = vmatpush1.bf16.msra.mxu0 0
        %1280 = vmatprep.subr.bf16.mxu0 0
        %1281 = vmatpush1.bf16.msra.mxu0 0
        %1282 = vmatprep.subr.bf16.mxu0 0
        %1283 = vmatpush1.bf16.msra.mxu0 0
        %1284 = vmatprep.subr.bf16.mxu0 %v966
        %1285 = vmatpush1.bf16.msra.mxu0 %v963
        %1286 = vmatprep.subr.bf16.mxu0 %v856
        %1287 = vmatpush1.bf16.msra.mxu0 %v855
        %1288 = vmatprep.subr.bf16.mxu0 %v851
        %1289 = vmatpush1.bf16.msra.mxu0 %v850
        %1290 = vmatprep.subr.bf16.mxu0 0
        %1291 = vmatpush2.bf16.msra.mxu0 0
        %1292 = vmatprep.subr.bf16.mxu0 0
        %1293 = vmatpush2.bf16.msra.mxu0 0
        %1294 = vmatprep.subr.bf16.mxu0 0
        %1295 = vmatpush2.bf16.msra.mxu0 0
        %1296 = vmatprep.subr.bf16.mxu0 0
        %1297 = vmatpush2.bf16.msra.mxu0 0
        %1298 = vmatprep.subr.bf16.mxu0 0
        %1299 = vmatpush2.bf16.msra.mxu0 0
        %1300 = vmatprep.subr.bf16.mxu0 0
        %1301 = vmatpush2.bf16.msra.mxu0 0
        %1302 = vmatprep.subr.bf16.mxu0 0
        %1303 = vmatpush2.bf16.msra.mxu0 0
        %1304 = vmatprep.subr.bf16.mxu0 0
        %1305 = vmatpush2.bf16.msra.mxu0 0
        %1306 = vmatprep.mubr.bf16.mxu0 0
        %1307 = vmatmul.mubr.bf16.gmra.mxu0 %v875
        %v1308 = vpop.f32.mrf.mxu0
        %v1309 = vadd.f32 0.0, %v1308
        %v1310 = vpop.f32.mrf.mxu0
        %v1311 = vadd.f32 0.0, %v1310
        %v1312 = vpop.f32.mrf.mxu0
        %v1313 = vadd.f32 0.0, %v1312
        %v1314 = vpop.f32.mrf.mxu0
        %v1315 = vadd.f32 0.0, %v1314
        %1316 = vmatprep.mubr.bf16.mxu0 0
        %1317 = vmatmul.mubr.bf16.gmra.mxu0 %v878
        %v1318 = vpop.f32.mrf.mxu0
        %v1319 = vadd.f32 0.0, %v1318
        %v1320 = vpop.f32.mrf.mxu0
        %v1321 = vadd.f32 0.0, %v1320
        %v1322 = vpop.f32.mrf.mxu0
        %v1323 = vadd.f32 0.0, %v1322
        %v1324 = vpop.f32.mrf.mxu0
        %v1325 = vadd.f32 0.0, %v1324
        %1326 = vmatprep.mubr.bf16.mxu0 0
        %1327 = vmatmul.mubr.bf16.gmra.mxu0 %v881
        %v1328 = vpop.f32.mrf.mxu0
        %v1329 = vadd.f32 0.0, %v1328
        %v1330 = vpop.f32.mrf.mxu0
        %v1331 = vadd.f32 0.0, %v1330
        %v1332 = vpop.f32.mrf.mxu0
        %v1333 = vadd.f32 0.0, %v1332
        %v1334 = vpop.f32.mrf.mxu0
        %v1335 = vadd.f32 0.0, %v1334
        %1336 = vmatprep.mubr.bf16.mxu0 0
        %1337 = vmatmul.mubr.bf16.gmra.mxu0 %v884
        %v1338 = vpop.f32.mrf.mxu0
        %v1339 = vadd.f32 0.0, %v1338
        %v1340 = vpop.f32.mrf.mxu0
        %v1341 = vadd.f32 0.0, %v1340
        %v1342 = vpop.f32.mrf.mxu0
        %v1343 = vadd.f32 0.0, %v1342
        %v1344 = vpop.f32.mrf.mxu0
        %v1345 = vadd.f32 0.0, %v1344
        %1346 = vmatprep.mubr.bf16.mxu0 0
        %1347 = vmatmul.mubr.bf16.gmra.mxu0 %v887
        %v1348 = vpop.f32.mrf.mxu0
        %v1349 = vadd.f32 0.0, %v1348
        %v1350 = vpop.f32.mrf.mxu0
        %v1351 = vadd.f32 0.0, %v1350
        %v1352 = vpop.f32.mrf.mxu0
        %v1353 = vadd.f32 0.0, %v1352
        %v1354 = vpop.f32.mrf.mxu0
        %v1355 = vadd.f32 0.0, %v1354
        %1356 = vmatprep.mubr.bf16.mxu0 0
        %1357 = vmatmul.mubr.bf16.gmra.mxu0 %v890
        %v1358 = vpop.f32.mrf.mxu0
        %v1359 = vadd.f32 0.0, %v1358
        %v1360 = vpop.f32.mrf.mxu0
        %v1361 = vadd.f32 0.0, %v1360
        %v1362 = vpop.f32.mrf.mxu0
        %v1363 = vadd.f32 0.0, %v1362
        %v1364 = vpop.f32.mrf.mxu0
        %v1365 = vadd.f32 0.0, %v1364
        %1366 = vmatprep.mubr.bf16.mxu0 0
        %1367 = vmatmul.mubr.bf16.gmra.mxu0 %v893
        %v1368 = vpop.f32.mrf.mxu0
        %v1369 = vadd.f32 0.0, %v1368
        %v1370 = vpop.f32.mrf.mxu0
        %v1371 = vadd.f32 0.0, %v1370
        %v1372 = vpop.f32.mrf.mxu0
        %v1373 = vadd.f32 0.0, %v1372
        %v1374 = vpop.f32.mrf.mxu0
        %v1375 = vadd.f32 0.0, %v1374
        %1376 = vmatprep.mubr.bf16.mxu0 0
        %1377 = vmatmul.mubr.bf16.gmra.mxu0 %v896
        %v1378 = vpop.f32.mrf.mxu0
        %v1379 = vadd.f32 0.0, %v1378
        %v1380 = vpop.f32.mrf.mxu0
        %v1381 = vadd.f32 0.0, %v1380
        %v1382 = vpop.f32.mrf.mxu0
        %v1383 = vadd.f32 0.0, %v1382
        %v1384 = vpop.f32.mrf.mxu0
        %v1385 = vadd.f32 0.0, %v1384
        %1386 = vmatprep.mubr.bf16.mxu0 0
        %1387 = vmatmul.mubr.bf16.gmra.mxu0 %v899
        %v1388 = vpop.f32.mrf.mxu0
        %v1389 = vadd.f32 0.0, %v1388
        %v1390 = vpop.f32.mrf.mxu0
        %v1391 = vadd.f32 0.0, %v1390
        %v1392 = vpop.f32.mrf.mxu0
        %v1393 = vadd.f32 0.0, %v1392
        %v1394 = vpop.f32.mrf.mxu0
        %v1395 = vadd.f32 0.0, %v1394
        %1396 = vmatprep.mubr.bf16.mxu0 0
        %1397 = vmatmul.mubr.bf16.gmra.mxu0 %v902
        %v1398 = vpop.f32.mrf.mxu0
        %v1399 = vadd.f32 0.0, %v1398
        %v1400 = vpop.f32.mrf.mxu0
        %v1401 = vadd.f32 0.0, %v1400
        %v1402 = vpop.f32.mrf.mxu0
        %v1403 = vadd.f32 0.0, %v1402
        %v1404 = vpop.f32.mrf.mxu0
        %v1405 = vadd.f32 0.0, %v1404
        %1406 = vmatprep.mubr.bf16.mxu0 0
        %1407 = vmatmul.mubr.bf16.gmra.mxu0 %v905
        %v1408 = vpop.f32.mrf.mxu0
        %v1409 = vadd.f32 0.0, %v1408
        %v1410 = vpop.f32.mrf.mxu0
        %v1411 = vadd.f32 0.0, %v1410
        %v1412 = vpop.f32.mrf.mxu0
        %v1413 = vadd.f32 0.0, %v1412
        %v1414 = vpop.f32.mrf.mxu0
        %v1415 = vadd.f32 0.0, %v1414
        %1416 = vmatprep.mubr.bf16.mxu0 0
        %1417 = vmatmul.mubr.bf16.gmra.mxu0 %v908
        %v1418 = vpop.f32.mrf.mxu0
        %v1419 = vadd.f32 0.0, %v1418
        %v1420 = vpop.f32.mrf.mxu0
        %v1421 = vadd.f32 0.0, %v1420
        %v1422 = vpop.f32.mrf.mxu0
        %v1423 = vadd.f32 0.0, %v1422
        %v1424 = vpop.f32.mrf.mxu0
        %v1425 = vadd.f32 0.0, %v1424
        %1426 = vmatprep.mubr.bf16.mxu0 0
        %1427 = vmatmul.mubr.bf16.gmra.mxu0 %v911
        %v1428 = vpop.f32.mrf.mxu0
        %v1429 = vadd.f32 0.0, %v1428
        %v1430 = vpop.f32.mrf.mxu0
        %v1431 = vadd.f32 0.0, %v1430
        %v1432 = vpop.f32.mrf.mxu0
        %v1433 = vadd.f32 0.0, %v1432
        %v1434 = vpop.f32.mrf.mxu0
        %v1435 = vadd.f32 0.0, %v1434
        %1436 = vmatprep.mubr.bf16.mxu0 0
        %1437 = vmatmul.mubr.bf16.gmra.mxu0 %v914
        %v1438 = vpop.f32.mrf.mxu0
        %v1439 = vadd.f32 0.0, %v1438
        %v1440 = vpop.f32.mrf.mxu0
        %v1441 = vadd.f32 0.0, %v1440
        %v1442 = vpop.f32.mrf.mxu0
        %v1443 = vadd.f32 0.0, %v1442
        %v1444 = vpop.f32.mrf.mxu0
        %v1445 = vadd.f32 0.0, %v1444
        %1446 = vmatprep.mubr.bf16.mxu0 0
        %1447 = vmatmul.mubr.bf16.gmra.mxu0 %v917
        %v1448 = vpop.f32.mrf.mxu0
        %v1449 = vadd.f32 0.0, %v1448
        %v1450 = vpop.f32.mrf.mxu0
        %v1451 = vadd.f32 0.0, %v1450
        %v1452 = vpop.f32.mrf.mxu0
        %v1453 = vadd.f32 0.0, %v1452
        %v1454 = vpop.f32.mrf.mxu0
        %v1455 = vadd.f32 0.0, %v1454
        %1456 = vmatprep.mubr.bf16.mxu0 0
        %1457 = vmatmul.mubr.bf16.gmra.mxu0 %v920
        %v1458 = vpop.f32.mrf.mxu0
        %v1459 = vadd.f32 0.0, %v1458
        %v1460 = vpop.f32.mrf.mxu0
        %v1461 = vadd.f32 0.0, %v1460
        %v1462 = vpop.f32.mrf.mxu0
        %v1463 = vadd.f32 0.0, %v1462
        %v1464 = vpop.f32.mrf.mxu0
        %v1465 = vadd.f32 0.0, %v1464
        %1466 = vmatprep.mubr.bf16.mxu0 0
        %1467 = vmatmul.mubr.bf16.gmra.mxu0 %v923
        %v1468 = vpop.f32.mrf.mxu0
        %v1469 = vadd.f32 0.0, %v1468
        %v1470 = vpop.f32.mrf.mxu0
        %v1471 = vadd.f32 0.0, %v1470
        %v1472 = vpop.f32.mrf.mxu0
        %v1473 = vadd.f32 0.0, %v1472
        %v1474 = vpop.f32.mrf.mxu0
        %v1475 = vadd.f32 0.0, %v1474
        %1476 = vmatprep.mubr.bf16.mxu0 0
        %1477 = vmatmul.mubr.bf16.gmra.mxu0 %v926
        %v1478 = vpop.f32.mrf.mxu0
        %v1479 = vadd.f32 0.0, %v1478
        %v1480 = vpop.f32.mrf.mxu0
        %v1481 = vadd.f32 0.0, %v1480
        %v1482 = vpop.f32.mrf.mxu0
        %v1483 = vadd.f32 0.0, %v1482
        %v1484 = vpop.f32.mrf.mxu0
        %v1485 = vadd.f32 0.0, %v1484
        %1486 = vmatprep.mubr.bf16.mxu0 0
        %1487 = vmatmul.mubr.bf16.gmra.mxu0 %v929
        %v1488 = vpop.f32.mrf.mxu0
        %v1489 = vadd.f32 0.0, %v1488
        %v1490 = vpop.f32.mrf.mxu0
        %v1491 = vadd.f32 0.0, %v1490
        %v1492 = vpop.f32.mrf.mxu0
        %v1493 = vadd.f32 0.0, %v1492
        %v1494 = vpop.f32.mrf.mxu0
        %v1495 = vadd.f32 0.0, %v1494
        %1496 = vmatprep.mubr.bf16.mxu0 0
        %1497 = vmatmul.mubr.bf16.gmra.mxu0 %v932
        %v1498 = vpop.f32.mrf.mxu0
        %v1499 = vadd.f32 0.0, %v1498
        %v1500 = vpop.f32.mrf.mxu0
        %v1501 = vadd.f32 0.0, %v1500
        %v1502 = vpop.f32.mrf.mxu0
        %v1503 = vadd.f32 0.0, %v1502
        %v1504 = vpop.f32.mrf.mxu0
        %v1505 = vadd.f32 0.0, %v1504
        %1506 = vmatprep.mubr.bf16.mxu0 0
        %1507 = vmatmul.mubr.bf16.gmra.mxu0 %v935
        %v1508 = vpop.f32.mrf.mxu0
        %v1509 = vadd.f32 0.0, %v1508
        %v1510 = vpop.f32.mrf.mxu0
        %v1511 = vadd.f32 0.0, %v1510
        %v1512 = vpop.f32.mrf.mxu0
        %v1513 = vadd.f32 0.0, %v1512
        %v1514 = vpop.f32.mrf.mxu0
        %v1515 = vadd.f32 0.0, %v1514
        %1516 = vmatprep.mubr.bf16.mxu0 0
        %1517 = vmatmul.mubr.bf16.gmra.mxu0 %v938
        %v1518 = vpop.f32.mrf.mxu0
        %v1519 = vadd.f32 0.0, %v1518
        %v1520 = vpop.f32.mrf.mxu0
        %v1521 = vadd.f32 0.0, %v1520
        %v1522 = vpop.f32.mrf.mxu0
        %v1523 = vadd.f32 0.0, %v1522
        %v1524 = vpop.f32.mrf.mxu0
        %v1525 = vadd.f32 0.0, %v1524
        %1526 = vmatprep.mubr.bf16.mxu0 0
        %1527 = vmatmul.mubr.bf16.gmra.mxu0 %v941
        %v1528 = vpop.f32.mrf.mxu0
        %v1529 = vadd.f32 0.0, %v1528
        %v1530 = vpop.f32.mrf.mxu0
        %v1531 = vadd.f32 0.0, %v1530
        %v1532 = vpop.f32.mrf.mxu0
        %v1533 = vadd.f32 0.0, %v1532
        %v1534 = vpop.f32.mrf.mxu0
        %v1535 = vadd.f32 0.0, %v1534
        %1536 = vmatprep.mubr.bf16.mxu0 0
        %1537 = vmatmul.mubr.bf16.gmra.mxu0 %v944
        %v1538 = vpop.f32.mrf.mxu0
        %v1539 = vadd.f32 0.0, %v1538
        %v1540 = vpop.f32.mrf.mxu0
        %v1541 = vadd.f32 0.0, %v1540
        %v1542 = vpop.f32.mrf.mxu0
        %v1543 = vadd.f32 0.0, %v1542
        %v1544 = vpop.f32.mrf.mxu0
        %v1545 = vadd.f32 0.0, %v1544
        %1546 = vmatprep.mubr.bf16.mxu0 0
        %1547 = vmatmul.mubr.bf16.gmra.mxu0 %v947
        %v1548 = vpop.f32.mrf.mxu0
        %v1549 = vadd.f32 0.0, %v1548
        %v1550 = vpop.f32.mrf.mxu0
        %v1551 = vadd.f32 0.0, %v1550
        %v1552 = vpop.f32.mrf.mxu0
        %v1553 = vadd.f32 0.0, %v1552
        %v1554 = vpop.f32.mrf.mxu0
        %v1555 = vadd.f32 0.0, %v1554
        %1556 = vmatprep.mubr.bf16.mxu0 0
        %1557 = vmatmul.mubr.bf16.gmra.mxu0 %v950
        %v1558 = vpop.f32.mrf.mxu0
        %v1559 = vadd.f32 0.0, %v1558
        %v1560 = vpop.f32.mrf.mxu0
        %v1561 = vadd.f32 0.0, %v1560
        %v1562 = vpop.f32.mrf.mxu0
        %v1563 = vadd.f32 0.0, %v1562
        %v1564 = vpop.f32.mrf.mxu0
        %v1565 = vadd.f32 0.0, %v1564
        %1566 = vmatprep.mubr.bf16.mxu0 0
        %1567 = vmatmul.mubr.bf16.gmra.mxu0 %v953
        %v1568 = vpop.f32.mrf.mxu0
        %v1569 = vadd.f32 0.0, %v1568
        %v1570 = vpop.f32.mrf.mxu0
        %v1571 = vadd.f32 0.0, %v1570
        %v1572 = vpop.f32.mrf.mxu0
        %v1573 = vadd.f32 0.0, %v1572
        %v1574 = vpop.f32.mrf.mxu0
        %v1575 = vadd.f32 0.0, %v1574
        %1576 = vdwg.mxu0
        %1577 = vmatprep.subr.bf16.mxu0 0
        %1578 = vmatpush1.bf16.msra.mxu0 0
        %1579 = vmatprep.subr.bf16.mxu0 0
        %1580 = vmatpush1.bf16.msra.mxu0 0
        %1581 = vmatprep.subr.bf16.mxu0 0
        %1582 = vmatpush1.bf16.msra.mxu0 0
        %1583 = vmatprep.subr.bf16.mxu0 0
        %1584 = vmatpush1.bf16.msra.mxu0 0
        %1585 = vmatprep.subr.bf16.mxu0 0
        %1586 = vmatpush1.bf16.msra.mxu0 0
        %1587 = vmatprep.subr.bf16.mxu0 0
        %1588 = vmatpush1.bf16.msra.mxu0 %v969
        %1589 = vmatprep.subr.bf16.mxu0 0
        %1590 = vmatpush1.bf16.msra.mxu0 %v857
        %1591 = vmatprep.subr.bf16.mxu0 0
        %1592 = vmatpush1.bf16.msra.mxu0 %v852
        %1593 = vmatprep.subr.bf16.mxu0 0
        %1594 = vmatpush2.bf16.msra.mxu0 0
        %1595 = vmatprep.subr.bf16.mxu0 0
        %1596 = vmatpush2.bf16.msra.mxu0 0
        %1597 = vmatprep.subr.bf16.mxu0 0
        %1598 = vmatpush2.bf16.msra.mxu0 0
        %1599 = vmatprep.subr.bf16.mxu0 0
        %1600 = vmatpush2.bf16.msra.mxu0 0
        %1601 = vmatprep.subr.bf16.mxu0 0
        %1602 = vmatpush2.bf16.msra.mxu0 0
        %1603 = vmatprep.subr.bf16.mxu0 0
        %1604 = vmatpush2.bf16.msra.mxu0 0
        %1605 = vmatprep.subr.bf16.mxu0 0
        %1606 = vmatpush2.bf16.msra.mxu0 0
        %1607 = vmatprep.subr.bf16.mxu0 0
        %1608 = vmatpush2.bf16.msra.mxu0 0
        %1609 = vmatprep.mubr.bf16.mxu0 0
        %1610 = vmatmul.mubr.bf16.gmra.mxu0 %v875
        %v1611 = vpop.f32.mrf.mxu0
        %v1612 = vadd.f32 0.0, %v1611
        %v1613 = vpop.f32.mrf.mxu0
        %v1614 = vpop.f32.mrf.mxu0
        %v1615 = vadd.f32 0.0, %v1614
        %v1616 = vpop.f32.mrf.mxu0
        %1617 = vmatprep.mubr.bf16.mxu0 0
        %1618 = vmatmul.mubr.bf16.gmra.mxu0 %v878
        %v1619 = vpop.f32.mrf.mxu0
        %v1620 = vadd.f32 0.0, %v1619
        %v1621 = vpop.f32.mrf.mxu0
        %v1622 = vpop.f32.mrf.mxu0
        %v1623 = vadd.f32 0.0, %v1622
        %v1624 = vpop.f32.mrf.mxu0
        %1625 = vmatprep.mubr.bf16.mxu0 0
        %1626 = vmatmul.mubr.bf16.gmra.mxu0 %v881
        %v1627 = vpop.f32.mrf.mxu0
        %v1628 = vadd.f32 0.0, %v1627
        %v1629 = vpop.f32.mrf.mxu0
        %v1630 = vpop.f32.mrf.mxu0
        %v1631 = vadd.f32 0.0, %v1630
        %v1632 = vpop.f32.mrf.mxu0
        %1633 = vmatprep.mubr.bf16.mxu0 0
        %1634 = vmatmul.mubr.bf16.gmra.mxu0 %v884
        %v1635 = vpop.f32.mrf.mxu0
        %v1636 = vadd.f32 0.0, %v1635
        %v1637 = vpop.f32.mrf.mxu0
        %v1638 = vpop.f32.mrf.mxu0
        %v1639 = vadd.f32 0.0, %v1638
        %v1640 = vpop.f32.mrf.mxu0
        %1641 = vmatprep.mubr.bf16.mxu0 0
        %1642 = vmatmul.mubr.bf16.gmra.mxu0 %v887
        %v1643 = vpop.f32.mrf.mxu0
        %v1644 = vadd.f32 0.0, %v1643
        %v1645 = vpop.f32.mrf.mxu0
        %v1646 = vpop.f32.mrf.mxu0
        %v1647 = vadd.f32 0.0, %v1646
        %v1648 = vpop.f32.mrf.mxu0
        %1649 = vmatprep.mubr.bf16.mxu0 0
        %1650 = vmatmul.mubr.bf16.gmra.mxu0 %v890
        %v1651 = vpop.f32.mrf.mxu0
        %v1652 = vadd.f32 0.0, %v1651
        %v1653 = vpop.f32.mrf.mxu0
        %v1654 = vpop.f32.mrf.mxu0
        %v1655 = vadd.f32 0.0, %v1654
        %v1656 = vpop.f32.mrf.mxu0
        %1657 = vmatprep.mubr.bf16.mxu0 0
        %1658 = vmatmul.mubr.bf16.gmra.mxu0 %v893
        %v1659 = vpop.f32.mrf.mxu0
        %v1660 = vadd.f32 0.0, %v1659
        %v1661 = vpop.f32.mrf.mxu0
        %v1662 = vpop.f32.mrf.mxu0
        %v1663 = vadd.f32 0.0, %v1662
        %v1664 = vpop.f32.mrf.mxu0
        %1665 = vmatprep.mubr.bf16.mxu0 0
        %1666 = vmatmul.mubr.bf16.gmra.mxu0 %v896
        %v1667 = vpop.f32.mrf.mxu0
        %v1668 = vadd.f32 0.0, %v1667
        %v1669 = vpop.f32.mrf.mxu0
        %v1670 = vpop.f32.mrf.mxu0
        %v1671 = vadd.f32 0.0, %v1670
        %v1672 = vpop.f32.mrf.mxu0
        %1673 = vmatprep.mubr.bf16.mxu0 0
        %1674 = vmatmul.mubr.bf16.gmra.mxu0 %v899
        %v1675 = vpop.f32.mrf.mxu0
        %v1676 = vadd.f32 0.0, %v1675
        %v1677 = vpop.f32.mrf.mxu0
        %v1678 = vpop.f32.mrf.mxu0
        %v1679 = vadd.f32 0.0, %v1678
        %v1680 = vpop.f32.mrf.mxu0
        %1681 = vmatprep.mubr.bf16.mxu0 0
        %1682 = vmatmul.mubr.bf16.gmra.mxu0 %v902
        %v1683 = vpop.f32.mrf.mxu0
        %v1684 = vadd.f32 0.0, %v1683
        %v1685 = vpop.f32.mrf.mxu0
        %v1686 = vpop.f32.mrf.mxu0
        %v1687 = vadd.f32 0.0, %v1686
        %v1688 = vpop.f32.mrf.mxu0
        %1689 = vmatprep.mubr.bf16.mxu0 0
        %1690 = vmatmul.mubr.bf16.gmra.mxu0 %v905
        %v1691 = vpop.f32.mrf.mxu0
        %v1692 = vadd.f32 0.0, %v1691
        %v1693 = vpop.f32.mrf.mxu0
        %v1694 = vpop.f32.mrf.mxu0
        %v1695 = vadd.f32 0.0, %v1694
        %v1696 = vpop.f32.mrf.mxu0
        %1697 = vmatprep.mubr.bf16.mxu0 0
        %1698 = vmatmul.mubr.bf16.gmra.mxu0 %v908
        %v1699 = vpop.f32.mrf.mxu0
        %v1700 = vadd.f32 0.0, %v1699
        %v1701 = vpop.f32.mrf.mxu0
        %v1702 = vpop.f32.mrf.mxu0
        %v1703 = vadd.f32 0.0, %v1702
        %v1704 = vpop.f32.mrf.mxu0
        %1705 = vmatprep.mubr.bf16.mxu0 0
        %1706 = vmatmul.mubr.bf16.gmra.mxu0 %v911
        %v1707 = vpop.f32.mrf.mxu0
        %v1708 = vadd.f32 0.0, %v1707
        %v1709 = vpop.f32.mrf.mxu0
        %v1710 = vpop.f32.mrf.mxu0
        %v1711 = vadd.f32 0.0, %v1710
        %v1712 = vpop.f32.mrf.mxu0
        %1713 = vmatprep.mubr.bf16.mxu0 0
        %1714 = vmatmul.mubr.bf16.gmra.mxu0 %v914
        %v1715 = vpop.f32.mrf.mxu0
        %v1716 = vadd.f32 0.0, %v1715
        %v1717 = vpop.f32.mrf.mxu0
        %v1718 = vpop.f32.mrf.mxu0
        %v1719 = vadd.f32 0.0, %v1718
        %v1720 = vpop.f32.mrf.mxu0
        %1721 = vmatprep.mubr.bf16.mxu0 0
        %1722 = vmatmul.mubr.bf16.gmra.mxu0 %v917
        %v1723 = vpop.f32.mrf.mxu0
        %v1724 = vadd.f32 0.0, %v1723
        %v1725 = vpop.f32.mrf.mxu0
        %v1726 = vpop.f32.mrf.mxu0
        %v1727 = vadd.f32 0.0, %v1726
        %v1728 = vpop.f32.mrf.mxu0
        %1729 = vmatprep.mubr.bf16.mxu0 0
        %1730 = vmatmul.mubr.bf16.gmra.mxu0 %v920
        %v1731 = vpop.f32.mrf.mxu0
        %v1732 = vadd.f32 0.0, %v1731
        %v1733 = vpop.f32.mrf.mxu0
        %v1734 = vpop.f32.mrf.mxu0
        %v1735 = vadd.f32 0.0, %v1734
        %v1736 = vpop.f32.mrf.mxu0
        %1737 = vmatprep.mubr.bf16.mxu0 0
        %1738 = vmatmul.mubr.bf16.gmra.mxu0 %v923
        %v1739 = vpop.f32.mrf.mxu0
        %v1740 = vadd.f32 0.0, %v1739
        %v1741 = vpop.f32.mrf.mxu0
        %v1742 = vpop.f32.mrf.mxu0
        %v1743 = vadd.f32 0.0, %v1742
        %v1744 = vpop.f32.mrf.mxu0
        %1745 = vmatprep.mubr.bf16.mxu0 0
        %1746 = vmatmul.mubr.bf16.gmra.mxu0 %v926
        %v1747 = vpop.f32.mrf.mxu0
        %v1748 = vadd.f32 0.0, %v1747
        %v1749 = vpop.f32.mrf.mxu0
        %v1750 = vpop.f32.mrf.mxu0
        %v1751 = vadd.f32 0.0, %v1750
        %v1752 = vpop.f32.mrf.mxu0
        %1753 = vmatprep.mubr.bf16.mxu0 0
        %1754 = vmatmul.mubr.bf16.gmra.mxu0 %v929
        %v1755 = vpop.f32.mrf.mxu0
        %v1756 = vadd.f32 0.0, %v1755
        %v1757 = vpop.f32.mrf.mxu0
        %v1758 = vpop.f32.mrf.mxu0
        %v1759 = vadd.f32 0.0, %v1758
        %v1760 = vpop.f32.mrf.mxu0
        %1761 = vmatprep.mubr.bf16.mxu0 0
        %1762 = vmatmul.mubr.bf16.gmra.mxu0 %v932
        %v1763 = vpop.f32.mrf.mxu0
        %v1764 = vadd.f32 0.0, %v1763
        %v1765 = vpop.f32.mrf.mxu0
        %v1766 = vpop.f32.mrf.mxu0
        %v1767 = vadd.f32 0.0, %v1766
        %v1768 = vpop.f32.mrf.mxu0
        %1769 = vmatprep.mubr.bf16.mxu0 0
        %1770 = vmatmul.mubr.bf16.gmra.mxu0 %v935
        %v1771 = vpop.f32.mrf.mxu0
        %v1772 = vadd.f32 0.0, %v1771
        %v1773 = vpop.f32.mrf.mxu0
        %v1774 = vpop.f32.mrf.mxu0
        %v1775 = vadd.f32 0.0, %v1774
        %v1776 = vpop.f32.mrf.mxu0
        %1777 = vmatprep.mubr.bf16.mxu0 0
        %1778 = vmatmul.mubr.bf16.gmra.mxu0 %v938
        %v1779 = vpop.f32.mrf.mxu0
        %v1780 = vadd.f32 0.0, %v1779
        %v1781 = vpop.f32.mrf.mxu0
        %v1782 = vpop.f32.mrf.mxu0
        %v1783 = vadd.f32 0.0, %v1782
        %v1784 = vpop.f32.mrf.mxu0
        %1785 = vmatprep.mubr.bf16.mxu0 0
        %1786 = vmatmul.mubr.bf16.gmra.mxu0 %v941
        %v1787 = vpop.f32.mrf.mxu0
        %v1788 = vadd.f32 0.0, %v1787
        %v1789 = vpop.f32.mrf.mxu0
        %v1790 = vpop.f32.mrf.mxu0
        %v1791 = vadd.f32 0.0, %v1790
        %v1792 = vpop.f32.mrf.mxu0
        %1793 = vmatprep.mubr.bf16.mxu0 0
        %1794 = vmatmul.mubr.bf16.gmra.mxu0 %v944
        %v1795 = vpop.f32.mrf.mxu0
        %v1796 = vadd.f32 0.0, %v1795
        %v1797 = vpop.f32.mrf.mxu0
        %v1798 = vpop.f32.mrf.mxu0
        %v1799 = vadd.f32 0.0, %v1798
        %v1800 = vpop.f32.mrf.mxu0
        %1801 = vmatprep.mubr.bf16.mxu0 0
        %1802 = vmatmul.mubr.bf16.gmra.mxu0 %v947
        %v1803 = vpop.f32.mrf.mxu0
        %v1804 = vadd.f32 0.0, %v1803
        %v1805 = vpop.f32.mrf.mxu0
        %v1806 = vpop.f32.mrf.mxu0
        %v1807 = vadd.f32 0.0, %v1806
        %v1808 = vpop.f32.mrf.mxu0
        %1809 = vmatprep.mubr.bf16.mxu0 0
        %1810 = vmatmul.mubr.bf16.gmra.mxu0 %v950
        %v1811 = vpop.f32.mrf.mxu0
        %v1812 = vadd.f32 0.0, %v1811
        %v1813 = vpop.f32.mrf.mxu0
        %v1814 = vpop.f32.mrf.mxu0
        %v1815 = vadd.f32 0.0, %v1814
        %v1816 = vpop.f32.mrf.mxu0
        %1817 = vmatprep.mubr.bf16.mxu0 0
        %1818 = vmatmul.mubr.bf16.gmra.mxu0 %v953
        %v1819 = vpop.f32.mrf.mxu0
        %v1820 = vadd.f32 0.0, %v1819
        %v1821 = vpop.f32.mrf.mxu0
        %v1822 = vpop.f32.mrf.mxu0
        %v1823 = vadd.f32 0.0, %v1822
        %v1824 = vpop.f32.mrf.mxu0
        %1825 = vdwg.mxu0
        %v1827 = vunpack.c.l.b16 %v586
        %v1828 = vpack.c.b16 %v727, %v1827
        %v1829 = vpack.c.b16 %v729, %v728
        %v1830 = vpack.c.b16 %v731, %v730
        %v1831 = vpack.c.b16 %v733, %v732
        %v1832 = vpack.c.b16 %v735, %v734
        %v1833 = vpack.c.b16 %v737, %v736
        %v1834 = vpack.c.b16 %v739, %v738
        %v1835 = vpack.c.b16 %v741, %v740
        %v1836 = vpack.c.b16 %v743, %v742
        %v1837 = vpack.c.b16 %v745, %v744
        %v1838 = vpack.c.b16 %v747, %v746
        %v1839 = vpack.c.b16 %v749, %v748
        %v1840 = vpack.c.b16 %v751, %v750
        %v1841 = vpack.c.b16 %v753, %v752
        %v1842 = vpack.c.b16 %v755, %v754
        %v1843 = vpack.c.b16 %v757, %v756
        %v1844 = vpack.c.b16 %v759, %v758
        %v1845 = vpack.c.b16 %v761, %v760
        %v1846 = vpack.c.b16 %v763, %v762
        %v1847 = vpack.c.b16 %v765, %v764
        %v1848 = vpack.c.b16 %v767, %v766
        %v1849 = vpack.c.b16 %v769, %v768
        %v1850 = vpack.c.b16 %v771, %v770
        %v1851 = vpack.c.b16 %v773, %v772
        %v1852 = vpack.c.b16 %v775, %v774
        %v1853 = vpack.c.b16 %v777, %v776
        %v1854 = vpack.c.b16 %v779, %v778
        %v1870 = vunpack.c.l.b16 %v642
        %v1871 = vunpack.c.h.b16 %v642
        %v1872 = vunpack.c.l.b16 %v643
        %v1873 = vunpack.c.h.b16 %v643
        %v1874 = vunpack.c.l.b16 %v644
        %v1875 = vunpack.c.l.b16 %v645
        %v1876 = vunpack.c.h.b16 %v645
        %v1877 = vunpack.c.l.b16 %v646
        %v1878 = vunpack.c.h.b16 %v646
        %v1879 = vunpack.c.l.b16 %v647
        %v1880 = vunpack.c.l.b16 %v648
        %v1881 = vunpack.c.h.b16 %v648
        %v1882 = vunpack.c.l.b16 %v649
        %v1883 = vunpack.c.h.b16 %v649
        %v1884 = vunpack.c.l.b16 %v650
        %v1885 = vunpack.c.l.b16 %v651
        %v1886 = vunpack.c.h.b16 %v651
        %v1887 = vunpack.c.l.b16 %v652
        %v1888 = vunpack.c.h.b16 %v652
        %v1889 = vunpack.c.l.b16 %v653
        %v1890 = vunpack.c.l.b16 %v654
        %v1891 = vunpack.c.h.b16 %v654
        %v1892 = vunpack.c.l.b16 %v655
        %v1893 = vunpack.c.h.b16 %v655
        %v1894 = vunpack.c.l.b16 %v656
        %v1895 = vpack.c.b16 %v1875, %v1870
        %v1896 = vpack.c.b16 %v1876, %v1871
        %v1897 = vpack.c.b16 %v1877, %v1872
        %v1898 = vpack.c.b16 %v1878, %v1873
        %v1899 = vpack.c.b16 %v1879, %v1874
        %v1900 = vpack.c.b16 %v1885, %v1880
        %v1901 = vpack.c.b16 %v1886, %v1881
        %v1902 = vpack.c.b16 %v1887, %v1882
        %v1903 = vpack.c.b16 %v1888, %v1883
        %v1904 = vpack.c.b16 %v1889, %v1884
        %v1905 = vpack.c.b16 %v1890, %v1890
        %v1906 = vpack.c.b16 %v1891, %v1891
        %v1907 = vpack.c.b16 %v1892, %v1892
        %v1908 = vpack.c.b16 %v1893, %v1893
        %v1909 = vpack.c.b16 %v1894, %v1894
        %v1921 = vsel %vm873, %v1828, 0
        %v1924 = vsel %vm873, %v1829, 0
        %v1927 = vsel %vm873, %v1830, 0
        %v1930 = vsel %vm873, %v1831, 0
        %v1933 = vsel %vm873, %v1832, 0
        %v1936 = vsel %vm873, %v1833, 0
        %v1939 = vsel %vm873, %v1834, 0
        %v1942 = vsel %vm873, %v1835, 0
        %v1945 = vsel %vm873, %v1836, 0
        %v1948 = vsel %vm873, %v1837, 0
        %v1951 = vsel %vm873, %v1838, 0
        %v1954 = vsel %vm873, %v1839, 0
        %v1957 = vsel %vm873, %v1840, 0
        %v1960 = vsel %vm873, %v1841, 0
        %v1963 = vsel %vm873, %v1842, 0
        %v1966 = vsel %vm873, %v1843, 0
        %v1969 = vsel %vm873, %v1844, 0
        %v1972 = vsel %vm873, %v1845, 0
        %v1975 = vsel %vm873, %v1846, 0
        %v1978 = vsel %vm873, %v1847, 0
        %v1981 = vsel %vm873, %v1848, 0
        %v1984 = vsel %vm873, %v1849, 0
        %v1987 = vsel %vm873, %v1850, 0
        %v1990 = vsel %vm873, %v1851, 0
        %v1993 = vsel %vm873, %v1852, 0
        %v1996 = vsel %vm873, %v1853, 0
        %v1999 = vsel %vm873, %v1854, 0
        %v2002 = vsel %vm955, %v1905, 0
        %v2005 = vsel %vm955, %v1906, 0
        %v2008 = vsel %vm955, %v1907, 0
        %v2011 = vsel %vm955, %v1908, 0
        %v2014 = vsel %vm955, %v1909, 0
        %2016 = vmatprep.subr.bf16.mxu0 0
        %2017 = vmatpush1.bf16.msra.mxu0 0
        %2018 = vmatprep.subr.bf16.mxu0 0
        %2019 = vmatpush1.bf16.msra.mxu0 0
        %2020 = vmatprep.subr.bf16.mxu0 0
        %2021 = vmatpush1.bf16.msra.mxu0 0
        %2022 = vmatprep.subr.bf16.mxu0 0
        %2023 = vmatpush1.bf16.msra.mxu0 0
        %2024 = vmatprep.subr.bf16.mxu0 0
        %2025 = vmatpush1.bf16.msra.mxu0 0
        %2026 = vmatprep.subr.bf16.mxu0 %v2005
        %2027 = vmatpush1.bf16.msra.mxu0 %v2002
        %2028 = vmatprep.subr.bf16.mxu0 %v1901
        %2029 = vmatpush1.bf16.msra.mxu0 %v1900
        %2030 = vmatprep.subr.bf16.mxu0 %v1896
        %2031 = vmatpush1.bf16.msra.mxu0 %v1895
        %2032 = vmatprep.subr.bf16.mxu0 0
        %2033 = vmatpush2.bf16.msra.mxu0 0
        %2034 = vmatprep.subr.bf16.mxu0 0
        %2035 = vmatpush2.bf16.msra.mxu0 0
        %2036 = vmatprep.subr.bf16.mxu0 0
        %2037 = vmatpush2.bf16.msra.mxu0 0
        %2038 = vmatprep.subr.bf16.mxu0 0
        %2039 = vmatpush2.bf16.msra.mxu0 0
        %2040 = vmatprep.subr.bf16.mxu0 0
        %2041 = vmatpush2.bf16.msra.mxu0 0
        %2042 = vmatprep.subr.bf16.mxu0 0
        %2043 = vmatpush2.bf16.msra.mxu0 0
        %2044 = vmatprep.subr.bf16.mxu0 0
        %2045 = vmatpush2.bf16.msra.mxu0 0
        %2046 = vmatprep.subr.bf16.mxu0 0
        %2047 = vmatpush2.bf16.msra.mxu0 0
        %2048 = vmatprep.mubr.bf16.mxu0 0
        %2049 = vmatmul.mubr.bf16.gmra.mxu0 %v1921
        %v2050 = vpop.f32.mrf.mxu0
        %v2051 = vadd.f32 %v1006, %v2050
        %v2052 = vpop.f32.mrf.mxu0
        %v2053 = vadd.f32 %v1008, %v2052
        %v2054 = vpop.f32.mrf.mxu0
        %v2055 = vadd.f32 %v1010, %v2054
        %v2056 = vpop.f32.mrf.mxu0
        %v2057 = vadd.f32 %v1012, %v2056
        %2058 = vmatprep.mubr.bf16.mxu0 0
        %2059 = vmatmul.mubr.bf16.gmra.mxu0 %v1924
        %v2060 = vpop.f32.mrf.mxu0
        %v2061 = vadd.f32 %v1016, %v2060
        %v2062 = vpop.f32.mrf.mxu0
        %v2063 = vadd.f32 %v1018, %v2062
        %v2064 = vpop.f32.mrf.mxu0
        %v2065 = vadd.f32 %v1020, %v2064
        %v2066 = vpop.f32.mrf.mxu0
        %v2067 = vadd.f32 %v1022, %v2066
        %2068 = vmatprep.mubr.bf16.mxu0 0
        %2069 = vmatmul.mubr.bf16.gmra.mxu0 %v1927
        %v2070 = vpop.f32.mrf.mxu0
        %v2071 = vadd.f32 %v1026, %v2070
        %v2072 = vpop.f32.mrf.mxu0
        %v2073 = vadd.f32 %v1028, %v2072
        %v2074 = vpop.f32.mrf.mxu0
        %v2075 = vadd.f32 %v1030, %v2074
        %v2076 = vpop.f32.mrf.mxu0
        %v2077 = vadd.f32 %v1032, %v2076
        %2078 = vmatprep.mubr.bf16.mxu0 0
        %2079 = vmatmul.mubr.bf16.gmra.mxu0 %v1930
        %v2080 = vpop.f32.mrf.mxu0
        %v2081 = vadd.f32 %v1036, %v2080
        %v2082 = vpop.f32.mrf.mxu0
        %v2083 = vadd.f32 %v1038, %v2082
        %v2084 = vpop.f32.mrf.mxu0
        %v2085 = vadd.f32 %v1040, %v2084
        %v2086 = vpop.f32.mrf.mxu0
        %v2087 = vadd.f32 %v1042, %v2086
        %2088 = vmatprep.mubr.bf16.mxu0 0
        %2089 = vmatmul.mubr.bf16.gmra.mxu0 %v1933
        %v2090 = vpop.f32.mrf.mxu0
        %v2091 = vadd.f32 %v1046, %v2090
        %v2092 = vpop.f32.mrf.mxu0
        %v2093 = vadd.f32 %v1048, %v2092
        %v2094 = vpop.f32.mrf.mxu0
        %v2095 = vadd.f32 %v1050, %v2094
        %v2096 = vpop.f32.mrf.mxu0
        %v2097 = vadd.f32 %v1052, %v2096
        %2098 = vmatprep.mubr.bf16.mxu0 0
        %2099 = vmatmul.mubr.bf16.gmra.mxu0 %v1936
        %v2100 = vpop.f32.mrf.mxu0
        %v2101 = vadd.f32 %v1056, %v2100
        %v2102 = vpop.f32.mrf.mxu0
        %v2103 = vadd.f32 %v1058, %v2102
        %v2104 = vpop.f32.mrf.mxu0
        %v2105 = vadd.f32 %v1060, %v2104
        %v2106 = vpop.f32.mrf.mxu0
        %v2107 = vadd.f32 %v1062, %v2106
        %2108 = vmatprep.mubr.bf16.mxu0 0
        %2109 = vmatmul.mubr.bf16.gmra.mxu0 %v1939
        %v2110 = vpop.f32.mrf.mxu0
        %v2111 = vadd.f32 %v1066, %v2110
        %v2112 = vpop.f32.mrf.mxu0
        %v2113 = vadd.f32 %v1068, %v2112
        %v2114 = vpop.f32.mrf.mxu0
        %v2115 = vadd.f32 %v1070, %v2114
        %v2116 = vpop.f32.mrf.mxu0
        %v2117 = vadd.f32 %v1072, %v2116
        %2118 = vmatprep.mubr.bf16.mxu0 0
        %2119 = vmatmul.mubr.bf16.gmra.mxu0 %v1942
        %v2120 = vpop.f32.mrf.mxu0
        %v2121 = vadd.f32 %v1076, %v2120
        %v2122 = vpop.f32.mrf.mxu0
        %v2123 = vadd.f32 %v1078, %v2122
        %v2124 = vpop.f32.mrf.mxu0
        %v2125 = vadd.f32 %v1080, %v2124
        %v2126 = vpop.f32.mrf.mxu0
        %v2127 = vadd.f32 %v1082, %v2126
        %2128 = vmatprep.mubr.bf16.mxu0 0
        %2129 = vmatmul.mubr.bf16.gmra.mxu0 %v1945
        %v2130 = vpop.f32.mrf.mxu0
        %v2131 = vadd.f32 %v1086, %v2130
        %v2132 = vpop.f32.mrf.mxu0
        %v2133 = vadd.f32 %v1088, %v2132
        %v2134 = vpop.f32.mrf.mxu0
        %v2135 = vadd.f32 %v1090, %v2134
        %v2136 = vpop.f32.mrf.mxu0
        %v2137 = vadd.f32 %v1092, %v2136
        %2138 = vmatprep.mubr.bf16.mxu0 0
        %2139 = vmatmul.mubr.bf16.gmra.mxu0 %v1948
        %v2140 = vpop.f32.mrf.mxu0
        %v2141 = vadd.f32 %v1096, %v2140
        %v2142 = vpop.f32.mrf.mxu0
        %v2143 = vadd.f32 %v1098, %v2142
        %v2144 = vpop.f32.mrf.mxu0
        %v2145 = vadd.f32 %v1100, %v2144
        %v2146 = vpop.f32.mrf.mxu0
        %v2147 = vadd.f32 %v1102, %v2146
        %2148 = vmatprep.mubr.bf16.mxu0 0
        %2149 = vmatmul.mubr.bf16.gmra.mxu0 %v1951
        %v2150 = vpop.f32.mrf.mxu0
        %v2151 = vadd.f32 %v1106, %v2150
        %v2152 = vpop.f32.mrf.mxu0
        %v2153 = vadd.f32 %v1108, %v2152
        %v2154 = vpop.f32.mrf.mxu0
        %v2155 = vadd.f32 %v1110, %v2154
        %v2156 = vpop.f32.mrf.mxu0
        %v2157 = vadd.f32 %v1112, %v2156
        %2158 = vmatprep.mubr.bf16.mxu0 0
        %2159 = vmatmul.mubr.bf16.gmra.mxu0 %v1954
        %v2160 = vpop.f32.mrf.mxu0
        %v2161 = vadd.f32 %v1116, %v2160
        %v2162 = vpop.f32.mrf.mxu0
        %v2163 = vadd.f32 %v1118, %v2162
        %v2164 = vpop.f32.mrf.mxu0
        %v2165 = vadd.f32 %v1120, %v2164
        %v2166 = vpop.f32.mrf.mxu0
        %v2167 = vadd.f32 %v1122, %v2166
        %2168 = vmatprep.mubr.bf16.mxu0 0
        %2169 = vmatmul.mubr.bf16.gmra.mxu0 %v1957
        %v2170 = vpop.f32.mrf.mxu0
        %v2171 = vadd.f32 %v1126, %v2170
        %v2172 = vpop.f32.mrf.mxu0
        %v2173 = vadd.f32 %v1128, %v2172
        %v2174 = vpop.f32.mrf.mxu0
        %v2175 = vadd.f32 %v1130, %v2174
        %v2176 = vpop.f32.mrf.mxu0
        %v2177 = vadd.f32 %v1132, %v2176
        %2178 = vmatprep.mubr.bf16.mxu0 0
        %2179 = vmatmul.mubr.bf16.gmra.mxu0 %v1960
        %v2180 = vpop.f32.mrf.mxu0
        %v2181 = vadd.f32 %v1136, %v2180
        %v2182 = vpop.f32.mrf.mxu0
        %v2183 = vadd.f32 %v1138, %v2182
        %v2184 = vpop.f32.mrf.mxu0
        %v2185 = vadd.f32 %v1140, %v2184
        %v2186 = vpop.f32.mrf.mxu0
        %v2187 = vadd.f32 %v1142, %v2186
        %2188 = vmatprep.mubr.bf16.mxu0 0
        %2189 = vmatmul.mubr.bf16.gmra.mxu0 %v1963
        %v2190 = vpop.f32.mrf.mxu0
        %v2191 = vadd.f32 %v1146, %v2190
        %v2192 = vpop.f32.mrf.mxu0
        %v2193 = vadd.f32 %v1148, %v2192
        %v2194 = vpop.f32.mrf.mxu0
        %v2195 = vadd.f32 %v1150, %v2194
        %v2196 = vpop.f32.mrf.mxu0
        %v2197 = vadd.f32 %v1152, %v2196
        %2198 = vmatprep.mubr.bf16.mxu0 0
        %2199 = vmatmul.mubr.bf16.gmra.mxu0 %v1966
        %v2200 = vpop.f32.mrf.mxu0
        %v2201 = vadd.f32 %v1156, %v2200
        %v2202 = vpop.f32.mrf.mxu0
        %v2203 = vadd.f32 %v1158, %v2202
        %v2204 = vpop.f32.mrf.mxu0
        %v2205 = vadd.f32 %v1160, %v2204
        %v2206 = vpop.f32.mrf.mxu0
        %v2207 = vadd.f32 %v1162, %v2206
        %2208 = vmatprep.mubr.bf16.mxu0 0
        %2209 = vmatmul.mubr.bf16.gmra.mxu0 %v1969
        %v2210 = vpop.f32.mrf.mxu0
        %v2211 = vadd.f32 %v1166, %v2210
        %v2212 = vpop.f32.mrf.mxu0
        %v2213 = vadd.f32 %v1168, %v2212
        %v2214 = vpop.f32.mrf.mxu0
        %v2215 = vadd.f32 %v1170, %v2214
        %v2216 = vpop.f32.mrf.mxu0
        %v2217 = vadd.f32 %v1172, %v2216
        %2218 = vmatprep.mubr.bf16.mxu0 0
        %2219 = vmatmul.mubr.bf16.gmra.mxu0 %v1972
        %v2220 = vpop.f32.mrf.mxu0
        %v2221 = vadd.f32 %v1176, %v2220
        %v2222 = vpop.f32.mrf.mxu0
        %v2223 = vadd.f32 %v1178, %v2222
        %v2224 = vpop.f32.mrf.mxu0
        %v2225 = vadd.f32 %v1180, %v2224
        %v2226 = vpop.f32.mrf.mxu0
        %v2227 = vadd.f32 %v1182, %v2226
        %2228 = vmatprep.mubr.bf16.mxu0 0
        %2229 = vmatmul.mubr.bf16.gmra.mxu0 %v1975
        %v2230 = vpop.f32.mrf.mxu0
        %v2231 = vadd.f32 %v1186, %v2230
        %v2232 = vpop.f32.mrf.mxu0
        %v2233 = vadd.f32 %v1188, %v2232
        %v2234 = vpop.f32.mrf.mxu0
        %v2235 = vadd.f32 %v1190, %v2234
        %v2236 = vpop.f32.mrf.mxu0
        %v2237 = vadd.f32 %v1192, %v2236
        %2238 = vmatprep.mubr.bf16.mxu0 0
        %2239 = vmatmul.mubr.bf16.gmra.mxu0 %v1978
        %v2240 = vpop.f32.mrf.mxu0
        %v2241 = vadd.f32 %v1196, %v2240
        %v2242 = vpop.f32.mrf.mxu0
        %v2243 = vadd.f32 %v1198, %v2242
        %v2244 = vpop.f32.mrf.mxu0
        %v2245 = vadd.f32 %v1200, %v2244
        %v2246 = vpop.f32.mrf.mxu0
        %v2247 = vadd.f32 %v1202, %v2246
        %2248 = vmatprep.mubr.bf16.mxu0 0
        %2249 = vmatmul.mubr.bf16.gmra.mxu0 %v1981
        %v2250 = vpop.f32.mrf.mxu0
        %v2251 = vadd.f32 %v1206, %v2250
        %v2252 = vpop.f32.mrf.mxu0
        %v2253 = vadd.f32 %v1208, %v2252
        %v2254 = vpop.f32.mrf.mxu0
        %v2255 = vadd.f32 %v1210, %v2254
        %v2256 = vpop.f32.mrf.mxu0
        %v2257 = vadd.f32 %v1212, %v2256
        %2258 = vmatprep.mubr.bf16.mxu0 0
        %2259 = vmatmul.mubr.bf16.gmra.mxu0 %v1984
        %v2260 = vpop.f32.mrf.mxu0
        %v2261 = vadd.f32 %v1216, %v2260
        %v2262 = vpop.f32.mrf.mxu0
        %v2263 = vadd.f32 %v1218, %v2262
        %v2264 = vpop.f32.mrf.mxu0
        %v2265 = vadd.f32 %v1220, %v2264
        %v2266 = vpop.f32.mrf.mxu0
        %v2267 = vadd.f32 %v1222, %v2266
        %2268 = vmatprep.mubr.bf16.mxu0 0
        %2269 = vmatmul.mubr.bf16.gmra.mxu0 %v1987
        %v2270 = vpop.f32.mrf.mxu0
        %v2271 = vadd.f32 %v1226, %v2270
        %v2272 = vpop.f32.mrf.mxu0
        %v2273 = vadd.f32 %v1228, %v2272
        %v2274 = vpop.f32.mrf.mxu0
        %v2275 = vadd.f32 %v1230, %v2274
        %v2276 = vpop.f32.mrf.mxu0
        %v2277 = vadd.f32 %v1232, %v2276
        %2278 = vmatprep.mubr.bf16.mxu0 0
        %2279 = vmatmul.mubr.bf16.gmra.mxu0 %v1990
        %v2280 = vpop.f32.mrf.mxu0
        %v2281 = vadd.f32 %v1236, %v2280
        %v2282 = vpop.f32.mrf.mxu0
        %v2283 = vadd.f32 %v1238, %v2282
        %v2284 = vpop.f32.mrf.mxu0
        %v2285 = vadd.f32 %v1240, %v2284
        %v2286 = vpop.f32.mrf.mxu0
        %v2287 = vadd.f32 %v1242, %v2286
        %2288 = vmatprep.mubr.bf16.mxu0 0
        %2289 = vmatmul.mubr.bf16.gmra.mxu0 %v1993
        %v2290 = vpop.f32.mrf.mxu0
        %v2291 = vadd.f32 %v1246, %v2290
        %v2292 = vpop.f32.mrf.mxu0
        %v2293 = vadd.f32 %v1248, %v2292
        %v2294 = vpop.f32.mrf.mxu0
        %v2295 = vadd.f32 %v1250, %v2294
        %v2296 = vpop.f32.mrf.mxu0
        %v2297 = vadd.f32 %v1252, %v2296
        %2298 = vmatprep.mubr.bf16.mxu0 0
        %2299 = vmatmul.mubr.bf16.gmra.mxu0 %v1996
        %v2300 = vpop.f32.mrf.mxu0
        %v2301 = vadd.f32 %v1256, %v2300
        %v2302 = vpop.f32.mrf.mxu0
        %v2303 = vadd.f32 %v1258, %v2302
        %v2304 = vpop.f32.mrf.mxu0
        %v2305 = vadd.f32 %v1260, %v2304
        %v2306 = vpop.f32.mrf.mxu0
        %v2307 = vadd.f32 %v1262, %v2306
        %2308 = vmatprep.mubr.bf16.mxu0 0
        %2309 = vmatmul.mubr.bf16.gmra.mxu0 %v1999
        %v2310 = vpop.f32.mrf.mxu0
        %v2311 = vadd.f32 %v1266, %v2310
        %v2312 = vpop.f32.mrf.mxu0
        %v2313 = vadd.f32 %v1268, %v2312
        %v2314 = vpop.f32.mrf.mxu0
        %v2315 = vadd.f32 %v1270, %v2314
        %v2316 = vpop.f32.mrf.mxu0
        %v2317 = vadd.f32 %v1272, %v2316
        %2318 = vdwg.mxu0
        %2319 = vmatprep.subr.bf16.mxu0 0
        %2320 = vmatpush1.bf16.msra.mxu0 0
        %2321 = vmatprep.subr.bf16.mxu0 0
        %2322 = vmatpush1.bf16.msra.mxu0 0
        %2323 = vmatprep.subr.bf16.mxu0 0
        %2324 = vmatpush1.bf16.msra.mxu0 0
        %2325 = vmatprep.subr.bf16.mxu0 0
        %2326 = vmatpush1.bf16.msra.mxu0 0
        %2327 = vmatprep.subr.bf16.mxu0 0
        %2328 = vmatpush1.bf16.msra.mxu0 0
        %2329 = vmatprep.subr.bf16.mxu0 %v2011
        %2330 = vmatpush1.bf16.msra.mxu0 %v2008
        %2331 = vmatprep.subr.bf16.mxu0 %v1903
        %2332 = vmatpush1.bf16.msra.mxu0 %v1902
        %2333 = vmatprep.subr.bf16.mxu0 %v1898
        %2334 = vmatpush1.bf16.msra.mxu0 %v1897
        %2335 = vmatprep.subr.bf16.mxu0 0
        %2336 = vmatpush2.bf16.msra.mxu0 0
        %2337 = vmatprep.subr.bf16.mxu0 0
        %2338 = vmatpush2.bf16.msra.mxu0 0
        %2339 = vmatprep.subr.bf16.mxu0 0
        %2340 = vmatpush2.bf16.msra.mxu0 0
        %2341 = vmatprep.subr.bf16.mxu0 0
        %2342 = vmatpush2.bf16.msra.mxu0 0
        %2343 = vmatprep.subr.bf16.mxu0 0
        %2344 = vmatpush2.bf16.msra.mxu0 0
        %2345 = vmatprep.subr.bf16.mxu0 0
        %2346 = vmatpush2.bf16.msra.mxu0 0
        %2347 = vmatprep.subr.bf16.mxu0 0
        %2348 = vmatpush2.bf16.msra.mxu0 0
        %2349 = vmatprep.subr.bf16.mxu0 0
        %2350 = vmatpush2.bf16.msra.mxu0 0
        %2351 = vmatprep.mubr.bf16.mxu0 0
        %2352 = vmatmul.mubr.bf16.gmra.mxu0 %v1921
        %v2353 = vpop.f32.mrf.mxu0
        %v2354 = vadd.f32 %v1309, %v2353
        %v2355 = vpop.f32.mrf.mxu0
        %v2356 = vadd.f32 %v1311, %v2355
        %v2357 = vpop.f32.mrf.mxu0
        %v2358 = vadd.f32 %v1313, %v2357
        %v2359 = vpop.f32.mrf.mxu0
        %v2360 = vadd.f32 %v1315, %v2359
        %2361 = vmatprep.mubr.bf16.mxu0 0
        %2362 = vmatmul.mubr.bf16.gmra.mxu0 %v1924
        %v2363 = vpop.f32.mrf.mxu0
        %v2364 = vadd.f32 %v1319, %v2363
        %v2365 = vpop.f32.mrf.mxu0
        %v2366 = vadd.f32 %v1321, %v2365
        %v2367 = vpop.f32.mrf.mxu0
        %v2368 = vadd.f32 %v1323, %v2367
        %v2369 = vpop.f32.mrf.mxu0
        %v2370 = vadd.f32 %v1325, %v2369
        %2371 = vmatprep.mubr.bf16.mxu0 0
        %2372 = vmatmul.mubr.bf16.gmra.mxu0 %v1927
        %v2373 = vpop.f32.mrf.mxu0
        %v2374 = vadd.f32 %v1329, %v2373
        %v2375 = vpop.f32.mrf.mxu0
        %v2376 = vadd.f32 %v1331, %v2375
        %v2377 = vpop.f32.mrf.mxu0
        %v2378 = vadd.f32 %v1333, %v2377
        %v2379 = vpop.f32.mrf.mxu0
        %v2380 = vadd.f32 %v1335, %v2379
        %2381 = vmatprep.mubr.bf16.mxu0 0
        %2382 = vmatmul.mubr.bf16.gmra.mxu0 %v1930
        %v2383 = vpop.f32.mrf.mxu0
        %v2384 = vadd.f32 %v1339, %v2383
        %v2385 = vpop.f32.mrf.mxu0
        %v2386 = vadd.f32 %v1341, %v2385
        %v2387 = vpop.f32.mrf.mxu0
        %v2388 = vadd.f32 %v1343, %v2387
        %v2389 = vpop.f32.mrf.mxu0
        %v2390 = vadd.f32 %v1345, %v2389
        %2391 = vmatprep.mubr.bf16.mxu0 0
        %2392 = vmatmul.mubr.bf16.gmra.mxu0 %v1933
        %v2393 = vpop.f32.mrf.mxu0
        %v2394 = vadd.f32 %v1349, %v2393
        %v2395 = vpop.f32.mrf.mxu0
        %v2396 = vadd.f32 %v1351, %v2395
        %v2397 = vpop.f32.mrf.mxu0
        %v2398 = vadd.f32 %v1353, %v2397
        %v2399 = vpop.f32.mrf.mxu0
        %v2400 = vadd.f32 %v1355, %v2399
        %2401 = vmatprep.mubr.bf16.mxu0 0
        %2402 = vmatmul.mubr.bf16.gmra.mxu0 %v1936
        %v2403 = vpop.f32.mrf.mxu0
        %v2404 = vadd.f32 %v1359, %v2403
        %v2405 = vpop.f32.mrf.mxu0
        %v2406 = vadd.f32 %v1361, %v2405
        %v2407 = vpop.f32.mrf.mxu0
        %v2408 = vadd.f32 %v1363, %v2407
        %v2409 = vpop.f32.mrf.mxu0
        %v2410 = vadd.f32 %v1365, %v2409
        %2411 = vmatprep.mubr.bf16.mxu0 0
        %2412 = vmatmul.mubr.bf16.gmra.mxu0 %v1939
        %v2413 = vpop.f32.mrf.mxu0
        %v2414 = vadd.f32 %v1369, %v2413
        %v2415 = vpop.f32.mrf.mxu0
        %v2416 = vadd.f32 %v1371, %v2415
        %v2417 = vpop.f32.mrf.mxu0
        %v2418 = vadd.f32 %v1373, %v2417
        %v2419 = vpop.f32.mrf.mxu0
        %v2420 = vadd.f32 %v1375, %v2419
        %2421 = vmatprep.mubr.bf16.mxu0 0
        %2422 = vmatmul.mubr.bf16.gmra.mxu0 %v1942
        %v2423 = vpop.f32.mrf.mxu0
        %v2424 = vadd.f32 %v1379, %v2423
        %v2425 = vpop.f32.mrf.mxu0
        %v2426 = vadd.f32 %v1381, %v2425
        %v2427 = vpop.f32.mrf.mxu0
        %v2428 = vadd.f32 %v1383, %v2427
        %v2429 = vpop.f32.mrf.mxu0
        %v2430 = vadd.f32 %v1385, %v2429
        %2431 = vmatprep.mubr.bf16.mxu0 0
        %2432 = vmatmul.mubr.bf16.gmra.mxu0 %v1945
        %v2433 = vpop.f32.mrf.mxu0
        %v2434 = vadd.f32 %v1389, %v2433
        %v2435 = vpop.f32.mrf.mxu0
        %v2436 = vadd.f32 %v1391, %v2435
        %v2437 = vpop.f32.mrf.mxu0
        %v2438 = vadd.f32 %v1393, %v2437
        %v2439 = vpop.f32.mrf.mxu0
        %v2440 = vadd.f32 %v1395, %v2439
        %2441 = vmatprep.mubr.bf16.mxu0 0
        %2442 = vmatmul.mubr.bf16.gmra.mxu0 %v1948
        %v2443 = vpop.f32.mrf.mxu0
        %v2444 = vadd.f32 %v1399, %v2443
        %v2445 = vpop.f32.mrf.mxu0
        %v2446 = vadd.f32 %v1401, %v2445
        %v2447 = vpop.f32.mrf.mxu0
        %v2448 = vadd.f32 %v1403, %v2447
        %v2449 = vpop.f32.mrf.mxu0
        %v2450 = vadd.f32 %v1405, %v2449
        %2451 = vmatprep.mubr.bf16.mxu0 0
        %2452 = vmatmul.mubr.bf16.gmra.mxu0 %v1951
        %v2453 = vpop.f32.mrf.mxu0
        %v2454 = vadd.f32 %v1409, %v2453
        %v2455 = vpop.f32.mrf.mxu0
        %v2456 = vadd.f32 %v1411, %v2455
        %v2457 = vpop.f32.mrf.mxu0
        %v2458 = vadd.f32 %v1413, %v2457
        %v2459 = vpop.f32.mrf.mxu0
        %v2460 = vadd.f32 %v1415, %v2459
        %2461 = vmatprep.mubr.bf16.mxu0 0
        %2462 = vmatmul.mubr.bf16.gmra.mxu0 %v1954
        %v2463 = vpop.f32.mrf.mxu0
        %v2464 = vadd.f32 %v1419, %v2463
        %v2465 = vpop.f32.mrf.mxu0
        %v2466 = vadd.f32 %v1421, %v2465
        %v2467 = vpop.f32.mrf.mxu0
        %v2468 = vadd.f32 %v1423, %v2467
        %v2469 = vpop.f32.mrf.mxu0
        %v2470 = vadd.f32 %v1425, %v2469
        %2471 = vmatprep.mubr.bf16.mxu0 0
        %2472 = vmatmul.mubr.bf16.gmra.mxu0 %v1957
        %v2473 = vpop.f32.mrf.mxu0
        %v2474 = vadd.f32 %v1429, %v2473
        %v2475 = vpop.f32.mrf.mxu0
        %v2476 = vadd.f32 %v1431, %v2475
        %v2477 = vpop.f32.mrf.mxu0
        %v2478 = vadd.f32 %v1433, %v2477
        %v2479 = vpop.f32.mrf.mxu0
        %v2480 = vadd.f32 %v1435, %v2479
        %2481 = vmatprep.mubr.bf16.mxu0 0
        %2482 = vmatmul.mubr.bf16.gmra.mxu0 %v1960
        %v2483 = vpop.f32.mrf.mxu0
        %v2484 = vadd.f32 %v1439, %v2483
        %v2485 = vpop.f32.mrf.mxu0
        %v2486 = vadd.f32 %v1441, %v2485
        %v2487 = vpop.f32.mrf.mxu0
        %v2488 = vadd.f32 %v1443, %v2487
        %v2489 = vpop.f32.mrf.mxu0
        %v2490 = vadd.f32 %v1445, %v2489
        %2491 = vmatprep.mubr.bf16.mxu0 0
        %2492 = vmatmul.mubr.bf16.gmra.mxu0 %v1963
        %v2493 = vpop.f32.mrf.mxu0
        %v2494 = vadd.f32 %v1449, %v2493
        %v2495 = vpop.f32.mrf.mxu0
        %v2496 = vadd.f32 %v1451, %v2495
        %v2497 = vpop.f32.mrf.mxu0
        %v2498 = vadd.f32 %v1453, %v2497
        %v2499 = vpop.f32.mrf.mxu0
        %v2500 = vadd.f32 %v1455, %v2499
        %2501 = vmatprep.mubr.bf16.mxu0 0
        %2502 = vmatmul.mubr.bf16.gmra.mxu0 %v1966
        %v2503 = vpop.f32.mrf.mxu0
        %v2504 = vadd.f32 %v1459, %v2503
        %v2505 = vpop.f32.mrf.mxu0
        %v2506 = vadd.f32 %v1461, %v2505
        %v2507 = vpop.f32.mrf.mxu0
        %v2508 = vadd.f32 %v1463, %v2507
        %v2509 = vpop.f32.mrf.mxu0
        %v2510 = vadd.f32 %v1465, %v2509
        %2511 = vmatprep.mubr.bf16.mxu0 0
        %2512 = vmatmul.mubr.bf16.gmra.mxu0 %v1969
        %v2513 = vpop.f32.mrf.mxu0
        %v2514 = vadd.f32 %v1469, %v2513
        %v2515 = vpop.f32.mrf.mxu0
        %v2516 = vadd.f32 %v1471, %v2515
        %v2517 = vpop.f32.mrf.mxu0
        %v2518 = vadd.f32 %v1473, %v2517
        %v2519 = vpop.f32.mrf.mxu0
        %v2520 = vadd.f32 %v1475, %v2519
        %2521 = vmatprep.mubr.bf16.mxu0 0
        %2522 = vmatmul.mubr.bf16.gmra.mxu0 %v1972
        %v2523 = vpop.f32.mrf.mxu0
        %v2524 = vadd.f32 %v1479, %v2523
        %v2525 = vpop.f32.mrf.mxu0
        %v2526 = vadd.f32 %v1481, %v2525
        %v2527 = vpop.f32.mrf.mxu0
        %v2528 = vadd.f32 %v1483, %v2527
        %v2529 = vpop.f32.mrf.mxu0
        %v2530 = vadd.f32 %v1485, %v2529
        %2531 = vmatprep.mubr.bf16.mxu0 0
        %2532 = vmatmul.mubr.bf16.gmra.mxu0 %v1975
        %v2533 = vpop.f32.mrf.mxu0
        %v2534 = vadd.f32 %v1489, %v2533
        %v2535 = vpop.f32.mrf.mxu0
        %v2536 = vadd.f32 %v1491, %v2535
        %v2537 = vpop.f32.mrf.mxu0
        %v2538 = vadd.f32 %v1493, %v2537
        %v2539 = vpop.f32.mrf.mxu0
        %v2540 = vadd.f32 %v1495, %v2539
        %2541 = vmatprep.mubr.bf16.mxu0 0
        %2542 = vmatmul.mubr.bf16.gmra.mxu0 %v1978
        %v2543 = vpop.f32.mrf.mxu0
        %v2544 = vadd.f32 %v1499, %v2543
        %v2545 = vpop.f32.mrf.mxu0
        %v2546 = vadd.f32 %v1501, %v2545
        %v2547 = vpop.f32.mrf.mxu0
        %v2548 = vadd.f32 %v1503, %v2547
        %v2549 = vpop.f32.mrf.mxu0
        %v2550 = vadd.f32 %v1505, %v2549
        %2551 = vmatprep.mubr.bf16.mxu0 0
        %2552 = vmatmul.mubr.bf16.gmra.mxu0 %v1981
        %v2553 = vpop.f32.mrf.mxu0
        %v2554 = vadd.f32 %v1509, %v2553
        %v2555 = vpop.f32.mrf.mxu0
        %v2556 = vadd.f32 %v1511, %v2555
        %v2557 = vpop.f32.mrf.mxu0
        %v2558 = vadd.f32 %v1513, %v2557
        %v2559 = vpop.f32.mrf.mxu0
        %v2560 = vadd.f32 %v1515, %v2559
        %2561 = vmatprep.mubr.bf16.mxu0 0
        %2562 = vmatmul.mubr.bf16.gmra.mxu0 %v1984
        %v2563 = vpop.f32.mrf.mxu0
        %v2564 = vadd.f32 %v1519, %v2563
        %v2565 = vpop.f32.mrf.mxu0
        %v2566 = vadd.f32 %v1521, %v2565
        %v2567 = vpop.f32.mrf.mxu0
        %v2568 = vadd.f32 %v1523, %v2567
        %v2569 = vpop.f32.mrf.mxu0
        %v2570 = vadd.f32 %v1525, %v2569
        %2571 = vmatprep.mubr.bf16.mxu0 0
        %2572 = vmatmul.mubr.bf16.gmra.mxu0 %v1987
        %v2573 = vpop.f32.mrf.mxu0
        %v2574 = vadd.f32 %v1529, %v2573
        %v2575 = vpop.f32.mrf.mxu0
        %v2576 = vadd.f32 %v1531, %v2575
        %v2577 = vpop.f32.mrf.mxu0
        %v2578 = vadd.f32 %v1533, %v2577
        %v2579 = vpop.f32.mrf.mxu0
        %v2580 = vadd.f32 %v1535, %v2579
        %2581 = vmatprep.mubr.bf16.mxu0 0
        %2582 = vmatmul.mubr.bf16.gmra.mxu0 %v1990
        %v2583 = vpop.f32.mrf.mxu0
        %v2584 = vadd.f32 %v1539, %v2583
        %v2585 = vpop.f32.mrf.mxu0
        %v2586 = vadd.f32 %v1541, %v2585
        %v2587 = vpop.f32.mrf.mxu0
        %v2588 = vadd.f32 %v1543, %v2587
        %v2589 = vpop.f32.mrf.mxu0
        %v2590 = vadd.f32 %v1545, %v2589
        %2591 = vmatprep.mubr.bf16.mxu0 0
        %2592 = vmatmul.mubr.bf16.gmra.mxu0 %v1993
        %v2593 = vpop.f32.mrf.mxu0
        %v2594 = vadd.f32 %v1549, %v2593
        %v2595 = vpop.f32.mrf.mxu0
        %v2596 = vadd.f32 %v1551, %v2595
        %v2597 = vpop.f32.mrf.mxu0
        %v2598 = vadd.f32 %v1553, %v2597
        %v2599 = vpop.f32.mrf.mxu0
        %v2600 = vadd.f32 %v1555, %v2599
        %2601 = vmatprep.mubr.bf16.mxu0 0
        %2602 = vmatmul.mubr.bf16.gmra.mxu0 %v1996
        %v2603 = vpop.f32.mrf.mxu0
        %v2604 = vadd.f32 %v1559, %v2603
        %v2605 = vpop.f32.mrf.mxu0
        %v2606 = vadd.f32 %v1561, %v2605
        %v2607 = vpop.f32.mrf.mxu0
        %v2608 = vadd.f32 %v1563, %v2607
        %v2609 = vpop.f32.mrf.mxu0
        %v2610 = vadd.f32 %v1565, %v2609
        %2611 = vmatprep.mubr.bf16.mxu0 0
        %2612 = vmatmul.mubr.bf16.gmra.mxu0 %v1999
        %v2613 = vpop.f32.mrf.mxu0
        %v2614 = vadd.f32 %v1569, %v2613
        %v2615 = vpop.f32.mrf.mxu0
        %v2616 = vadd.f32 %v1571, %v2615
        %v2617 = vpop.f32.mrf.mxu0
        %v2618 = vadd.f32 %v1573, %v2617
        %v2619 = vpop.f32.mrf.mxu0
        %v2620 = vadd.f32 %v1575, %v2619
        %2621 = vdwg.mxu0
        %2622 = vmatprep.subr.bf16.mxu0 0
        %2623 = vmatpush1.bf16.msra.mxu0 0
        %2624 = vmatprep.subr.bf16.mxu0 0
        %2625 = vmatpush1.bf16.msra.mxu0 0
        %2626 = vmatprep.subr.bf16.mxu0 0
        %2627 = vmatpush1.bf16.msra.mxu0 0
        %2628 = vmatprep.subr.bf16.mxu0 0
        %2629 = vmatpush1.bf16.msra.mxu0 0
        %2630 = vmatprep.subr.bf16.mxu0 0
        %2631 = vmatpush1.bf16.msra.mxu0 0
        %2632 = vmatprep.subr.bf16.mxu0 0
        %2633 = vmatpush1.bf16.msra.mxu0 %v2014
        %2634 = vmatprep.subr.bf16.mxu0 0
        %2635 = vmatpush1.bf16.msra.mxu0 %v1904
        %2636 = vmatprep.subr.bf16.mxu0 0
        %2637 = vmatpush1.bf16.msra.mxu0 %v1899
        %2638 = vmatprep.subr.bf16.mxu0 0
        %2639 = vmatpush2.bf16.msra.mxu0 0
        %2640 = vmatprep.subr.bf16.mxu0 0
        %2641 = vmatpush2.bf16.msra.mxu0 0
        %2642 = vmatprep.subr.bf16.mxu0 0
        %2643 = vmatpush2.bf16.msra.mxu0 0
        %2644 = vmatprep.subr.bf16.mxu0 0
        %2645 = vmatpush2.bf16.msra.mxu0 0
        %2646 = vmatprep.subr.bf16.mxu0 0
        %2647 = vmatpush2.bf16.msra.mxu0 0
        %2648 = vmatprep.subr.bf16.mxu0 0
        %2649 = vmatpush2.bf16.msra.mxu0 0
        %2650 = vmatprep.subr.bf16.mxu0 0
        %2651 = vmatpush2.bf16.msra.mxu0 0
        %2652 = vmatprep.subr.bf16.mxu0 0
        %2653 = vmatpush2.bf16.msra.mxu0 0
        %2654 = vmatprep.mubr.bf16.mxu0 0
        %2655 = vmatmul.mubr.bf16.gmra.mxu0 %v1921
        %v2656 = vpop.f32.mrf.mxu0
        %v2657 = vadd.f32 %v1612, %v2656
        %v2658 = vpop.f32.mrf.mxu0
        %v2659 = vpop.f32.mrf.mxu0
        %v2660 = vadd.f32 %v1615, %v2659
        %v2661 = vpop.f32.mrf.mxu0
        %2662 = vmatprep.mubr.bf16.mxu0 0
        %2663 = vmatmul.mubr.bf16.gmra.mxu0 %v1924
        %v2664 = vpop.f32.mrf.mxu0
        %v2665 = vadd.f32 %v1620, %v2664
        %v2666 = vpop.f32.mrf.mxu0
        %v2667 = vpop.f32.mrf.mxu0
        %v2668 = vadd.f32 %v1623, %v2667
        %v2669 = vpop.f32.mrf.mxu0
        %2670 = vmatprep.mubr.bf16.mxu0 0
        %2671 = vmatmul.mubr.bf16.gmra.mxu0 %v1927
        %v2672 = vpop.f32.mrf.mxu0
        %v2673 = vadd.f32 %v1628, %v2672
        %v2674 = vpop.f32.mrf.mxu0
        %v2675 = vpop.f32.mrf.mxu0
        %v2676 = vadd.f32 %v1631, %v2675
        %v2677 = vpop.f32.mrf.mxu0
        %2678 = vmatprep.mubr.bf16.mxu0 0
        %2679 = vmatmul.mubr.bf16.gmra.mxu0 %v1930
        %v2680 = vpop.f32.mrf.mxu0
        %v2681 = vadd.f32 %v1636, %v2680
        %v2682 = vpop.f32.mrf.mxu0
        %v2683 = vpop.f32.mrf.mxu0
        %v2684 = vadd.f32 %v1639, %v2683
        %v2685 = vpop.f32.mrf.mxu0
        %2686 = vmatprep.mubr.bf16.mxu0 0
        %2687 = vmatmul.mubr.bf16.gmra.mxu0 %v1933
        %v2688 = vpop.f32.mrf.mxu0
        %v2689 = vadd.f32 %v1644, %v2688
        %v2690 = vpop.f32.mrf.mxu0
        %v2691 = vpop.f32.mrf.mxu0
        %v2692 = vadd.f32 %v1647, %v2691
        %v2693 = vpop.f32.mrf.mxu0
        %2694 = vmatprep.mubr.bf16.mxu0 0
        %2695 = vmatmul.mubr.bf16.gmra.mxu0 %v1936
        %v2696 = vpop.f32.mrf.mxu0
        %v2697 = vadd.f32 %v1652, %v2696
        %v2698 = vpop.f32.mrf.mxu0
        %v2699 = vpop.f32.mrf.mxu0
        %v2700 = vadd.f32 %v1655, %v2699
        %v2701 = vpop.f32.mrf.mxu0
        %2702 = vmatprep.mubr.bf16.mxu0 0
        %2703 = vmatmul.mubr.bf16.gmra.mxu0 %v1939
        %v2704 = vpop.f32.mrf.mxu0
        %v2705 = vadd.f32 %v1660, %v2704
        %v2706 = vpop.f32.mrf.mxu0
        %v2707 = vpop.f32.mrf.mxu0
        %v2708 = vadd.f32 %v1663, %v2707
        %v2709 = vpop.f32.mrf.mxu0
        %2710 = vmatprep.mubr.bf16.mxu0 0
        %2711 = vmatmul.mubr.bf16.gmra.mxu0 %v1942
        %v2712 = vpop.f32.mrf.mxu0
        %v2713 = vadd.f32 %v1668, %v2712
        %v2714 = vpop.f32.mrf.mxu0
        %v2715 = vpop.f32.mrf.mxu0
        %v2716 = vadd.f32 %v1671, %v2715
        %v2717 = vpop.f32.mrf.mxu0
        %2718 = vmatprep.mubr.bf16.mxu0 0
        %2719 = vmatmul.mubr.bf16.gmra.mxu0 %v1945
        %v2720 = vpop.f32.mrf.mxu0
        %v2721 = vadd.f32 %v1676, %v2720
        %v2722 = vpop.f32.mrf.mxu0
        %v2723 = vpop.f32.mrf.mxu0
        %v2724 = vadd.f32 %v1679, %v2723
        %v2725 = vpop.f32.mrf.mxu0
        %2726 = vmatprep.mubr.bf16.mxu0 0
        %2727 = vmatmul.mubr.bf16.gmra.mxu0 %v1948
        %v2728 = vpop.f32.mrf.mxu0
        %v2729 = vadd.f32 %v1684, %v2728
        %v2730 = vpop.f32.mrf.mxu0
        %v2731 = vpop.f32.mrf.mxu0
        %v2732 = vadd.f32 %v1687, %v2731
        %v2733 = vpop.f32.mrf.mxu0
        %2734 = vmatprep.mubr.bf16.mxu0 0
        %2735 = vmatmul.mubr.bf16.gmra.mxu0 %v1951
        %v2736 = vpop.f32.mrf.mxu0
        %v2737 = vadd.f32 %v1692, %v2736
        %v2738 = vpop.f32.mrf.mxu0
        %v2739 = vpop.f32.mrf.mxu0
        %v2740 = vadd.f32 %v1695, %v2739
        %v2741 = vpop.f32.mrf.mxu0
        %2742 = vmatprep.mubr.bf16.mxu0 0
        %2743 = vmatmul.mubr.bf16.gmra.mxu0 %v1954
        %v2744 = vpop.f32.mrf.mxu0
        %v2745 = vadd.f32 %v1700, %v2744
        %v2746 = vpop.f32.mrf.mxu0
        %v2747 = vpop.f32.mrf.mxu0
        %v2748 = vadd.f32 %v1703, %v2747
        %v2749 = vpop.f32.mrf.mxu0
        %2750 = vmatprep.mubr.bf16.mxu0 0
        %2751 = vmatmul.mubr.bf16.gmra.mxu0 %v1957
        %v2752 = vpop.f32.mrf.mxu0
        %v2753 = vadd.f32 %v1708, %v2752
        %v2754 = vpop.f32.mrf.mxu0
        %v2755 = vpop.f32.mrf.mxu0
        %v2756 = vadd.f32 %v1711, %v2755
        %v2757 = vpop.f32.mrf.mxu0
        %2758 = vmatprep.mubr.bf16.mxu0 0
        %2759 = vmatmul.mubr.bf16.gmra.mxu0 %v1960
        %v2760 = vpop.f32.mrf.mxu0
        %v2761 = vadd.f32 %v1716, %v2760
        %v2762 = vpop.f32.mrf.mxu0
        %v2763 = vpop.f32.mrf.mxu0
        %v2764 = vadd.f32 %v1719, %v2763
        %v2765 = vpop.f32.mrf.mxu0
        %2766 = vmatprep.mubr.bf16.mxu0 0
        %2767 = vmatmul.mubr.bf16.gmra.mxu0 %v1963
        %v2768 = vpop.f32.mrf.mxu0
        %v2769 = vadd.f32 %v1724, %v2768
        %v2770 = vpop.f32.mrf.mxu0
        %v2771 = vpop.f32.mrf.mxu0
        %v2772 = vadd.f32 %v1727, %v2771
        %v2773 = vpop.f32.mrf.mxu0
        %2774 = vmatprep.mubr.bf16.mxu0 0
        %2775 = vmatmul.mubr.bf16.gmra.mxu0 %v1966
        %v2776 = vpop.f32.mrf.mxu0
        %v2777 = vadd.f32 %v1732, %v2776
        %v2778 = vpop.f32.mrf.mxu0
        %v2779 = vpop.f32.mrf.mxu0
        %v2780 = vadd.f32 %v1735, %v2779
        %v2781 = vpop.f32.mrf.mxu0
        %2782 = vmatprep.mubr.bf16.mxu0 0
        %2783 = vmatmul.mubr.bf16.gmra.mxu0 %v1969
        %v2784 = vpop.f32.mrf.mxu0
        %v2785 = vadd.f32 %v1740, %v2784
        %v2786 = vpop.f32.mrf.mxu0
        %v2787 = vpop.f32.mrf.mxu0
        %v2788 = vadd.f32 %v1743, %v2787
        %v2789 = vpop.f32.mrf.mxu0
        %2790 = vmatprep.mubr.bf16.mxu0 0
        %2791 = vmatmul.mubr.bf16.gmra.mxu0 %v1972
        %v2792 = vpop.f32.mrf.mxu0
        %v2793 = vadd.f32 %v1748, %v2792
        %v2794 = vpop.f32.mrf.mxu0
        %v2795 = vpop.f32.mrf.mxu0
        %v2796 = vadd.f32 %v1751, %v2795
        %v2797 = vpop.f32.mrf.mxu0
        %2798 = vmatprep.mubr.bf16.mxu0 0
        %2799 = vmatmul.mubr.bf16.gmra.mxu0 %v1975
        %v2800 = vpop.f32.mrf.mxu0
        %v2801 = vadd.f32 %v1756, %v2800
        %v2802 = vpop.f32.mrf.mxu0
        %v2803 = vpop.f32.mrf.mxu0
        %v2804 = vadd.f32 %v1759, %v2803
        %v2805 = vpop.f32.mrf.mxu0
        %2806 = vmatprep.mubr.bf16.mxu0 0
        %2807 = vmatmul.mubr.bf16.gmra.mxu0 %v1978
        %v2808 = vpop.f32.mrf.mxu0
        %v2809 = vadd.f32 %v1764, %v2808
        %v2810 = vpop.f32.mrf.mxu0
        %v2811 = vpop.f32.mrf.mxu0
        %v2812 = vadd.f32 %v1767, %v2811
        %v2813 = vpop.f32.mrf.mxu0
        %2814 = vmatprep.mubr.bf16.mxu0 0
        %2815 = vmatmul.mubr.bf16.gmra.mxu0 %v1981
        %v2816 = vpop.f32.mrf.mxu0
        %v2817 = vadd.f32 %v1772, %v2816
        %v2818 = vpop.f32.mrf.mxu0
        %v2819 = vpop.f32.mrf.mxu0
        %v2820 = vadd.f32 %v1775, %v2819
        %v2821 = vpop.f32.mrf.mxu0
        %2822 = vmatprep.mubr.bf16.mxu0 0
        %2823 = vmatmul.mubr.bf16.gmra.mxu0 %v1984
        %v2824 = vpop.f32.mrf.mxu0
        %v2825 = vadd.f32 %v1780, %v2824
        %v2826 = vpop.f32.mrf.mxu0
        %v2827 = vpop.f32.mrf.mxu0
        %v2828 = vadd.f32 %v1783, %v2827
        %v2829 = vpop.f32.mrf.mxu0
        %2830 = vmatprep.mubr.bf16.mxu0 0
        %2831 = vmatmul.mubr.bf16.gmra.mxu0 %v1987
        %v2832 = vpop.f32.mrf.mxu0
        %v2833 = vadd.f32 %v1788, %v2832
        %v2834 = vpop.f32.mrf.mxu0
        %v2835 = vpop.f32.mrf.mxu0
        %v2836 = vadd.f32 %v1791, %v2835
        %v2837 = vpop.f32.mrf.mxu0
        %2838 = vmatprep.mubr.bf16.mxu0 0
        %2839 = vmatmul.mubr.bf16.gmra.mxu0 %v1990
        %v2840 = vpop.f32.mrf.mxu0
        %v2841 = vadd.f32 %v1796, %v2840
        %v2842 = vpop.f32.mrf.mxu0
        %v2843 = vpop.f32.mrf.mxu0
        %v2844 = vadd.f32 %v1799, %v2843
        %v2845 = vpop.f32.mrf.mxu0
        %2846 = vmatprep.mubr.bf16.mxu0 0
        %2847 = vmatmul.mubr.bf16.gmra.mxu0 %v1993
        %v2848 = vpop.f32.mrf.mxu0
        %v2849 = vadd.f32 %v1804, %v2848
        %v2850 = vpop.f32.mrf.mxu0
        %v2851 = vpop.f32.mrf.mxu0
        %v2852 = vadd.f32 %v1807, %v2851
        %v2853 = vpop.f32.mrf.mxu0
        %2854 = vmatprep.mubr.bf16.mxu0 0
        %2855 = vmatmul.mubr.bf16.gmra.mxu0 %v1996
        %v2856 = vpop.f32.mrf.mxu0
        %v2857 = vadd.f32 %v1812, %v2856
        %v2858 = vpop.f32.mrf.mxu0
        %v2859 = vpop.f32.mrf.mxu0
        %v2860 = vadd.f32 %v1815, %v2859
        %v2861 = vpop.f32.mrf.mxu0
        %2862 = vmatprep.mubr.bf16.mxu0 0
        %2863 = vmatmul.mubr.bf16.gmra.mxu0 %v1999
        %v2864 = vpop.f32.mrf.mxu0
        %v2865 = vadd.f32 %v1820, %v2864
        %v2866 = vpop.f32.mrf.mxu0
        %v2867 = vpop.f32.mrf.mxu0
        %v2868 = vadd.f32 %v1823, %v2867
        %v2869 = vpop.f32.mrf.mxu0
        %2870 = vdwg.mxu0
        %s2871 = scalar_lea.vmem %s1, 200
        %v2872 = vld [vmem:[%s2871] sm:$0xff]
        %v2873 = vld [vmem:[%s2871 + $0x8] sm:$0xff]
        %v2874 = vld [vmem:[%s2871 + $0x10] sm:$0xf]
        %v2875 = vld [vmem:[%s2871 + $0x14] sm:$0xff]
        %v2876 = vld [vmem:[%s2871 + $0x1c] sm:$0xff]
        %v2877 = vld [vmem:[%s2871 + $0x24] sm:$0xf]
        %v2878 = vld [vmem:[%s2871 + $0x28] sm:$0xff]
        %v2879 = vld [vmem:[%s2871 + $0x30] sm:$0xff]
        %v2880 = vld [vmem:[%s2871 + $0x38] sm:$0xf]
        %v2881 = vld [vmem:[%s2871 + $0x3c] sm:$0xff]
        %v2882 = vld [vmem:[%s2871 + $0x44] sm:$0xff]
        %v2883 = vld [vmem:[%s2871 + $0x4c] sm:$0xf]
        %v2884 = vld [vmem:[%s2871 + $0x50] sm:$0xff]
        %v2885 = vld [vmem:[%s2871 + $0x58] sm:$0xff]
        %v2886 = vld [vmem:[%s2871 + $0x60] sm:$0xf]
        %v2888 = vunpack.c.l.b16 %v641
        %v2889 = vpack.c.b16 %v2888, %v780
        %v2905 = vunpack.c.l.b16 %v2872
        %v2906 = vunpack.c.h.b16 %v2872
        %v2907 = vunpack.c.l.b16 %v2873
        %v2908 = vunpack.c.h.b16 %v2873
        %v2909 = vunpack.c.l.b16 %v2874
        %v2910 = vunpack.c.l.b16 %v2875
        %v2911 = vunpack.c.h.b16 %v2875
        %v2912 = vunpack.c.l.b16 %v2876
        %v2913 = vunpack.c.h.b16 %v2876
        %v2914 = vunpack.c.l.b16 %v2877
        %v2915 = vunpack.c.l.b16 %v2878
        %v2916 = vunpack.c.h.b16 %v2878
        %v2917 = vunpack.c.l.b16 %v2879
        %v2918 = vunpack.c.h.b16 %v2879
        %v2919 = vunpack.c.l.b16 %v2880
        %v2920 = vunpack.c.l.b16 %v2881
        %v2921 = vunpack.c.h.b16 %v2881
        %v2922 = vunpack.c.l.b16 %v2882
        %v2923 = vunpack.c.h.b16 %v2882
        %v2924 = vunpack.c.l.b16 %v2883
        %v2925 = vunpack.c.l.b16 %v2884
        %v2926 = vunpack.c.h.b16 %v2884
        %v2927 = vunpack.c.l.b16 %v2885
        %v2928 = vunpack.c.h.b16 %v2885
        %v2929 = vunpack.c.l.b16 %v2886
        %v2930 = vpack.c.b16 %v2910, %v2905
        %v2931 = vpack.c.b16 %v2911, %v2906
        %v2932 = vpack.c.b16 %v2912, %v2907
        %v2933 = vpack.c.b16 %v2913, %v2908
        %v2934 = vpack.c.b16 %v2914, %v2909
        %v2935 = vpack.c.b16 %v2920, %v2915
        %v2936 = vpack.c.b16 %v2921, %v2916
        %v2937 = vpack.c.b16 %v2922, %v2917
        %v2938 = vpack.c.b16 %v2923, %v2918
        %v2939 = vpack.c.b16 %v2924, %v2919
        %v2940 = vpack.c.b16 %v2925, %v2925
        %v2941 = vpack.c.b16 %v2926, %v2926
        %v2942 = vpack.c.b16 %v2927, %v2927
        %v2943 = vpack.c.b16 %v2928, %v2928
        %v2944 = vpack.c.b16 %v2929, %v2929
        %v2956 = vsel %vm873, %v2889, 0
        %v2959 = vsel %vm955, %v2940, 0
        %v2962 = vsel %vm955, %v2941, 0
        %v2965 = vsel %vm955, %v2942, 0
        %v2968 = vsel %vm955, %v2943, 0
        %v2971 = vsel %vm955, %v2944, 0
        %2973 = vmatprep.subr.bf16.mxu0 0
        %2974 = vmatpush1.bf16.msra.mxu0 0
        %2975 = vmatprep.subr.bf16.mxu0 0
        %2976 = vmatpush1.bf16.msra.mxu0 0
        %2977 = vmatprep.subr.bf16.mxu0 0
        %2978 = vmatpush1.bf16.msra.mxu0 0
        %2979 = vmatprep.subr.bf16.mxu0 0
        %2980 = vmatpush1.bf16.msra.mxu0 0
        %2981 = vmatprep.subr.bf16.mxu0 0
        %2982 = vmatpush1.bf16.msra.mxu0 0
        %2983 = vmatprep.subr.bf16.mxu0 %v2962
        %2984 = vmatpush1.bf16.msra.mxu0 %v2959
        %2985 = vmatprep.subr.bf16.mxu0 %v2936
        %2986 = vmatpush1.bf16.msra.mxu0 %v2935
        %2987 = vmatprep.subr.bf16.mxu0 %v2931
        %2988 = vmatpush1.bf16.msra.mxu0 %v2930
        %2989 = vmatprep.subr.bf16.mxu0 0
        %2990 = vmatpush2.bf16.msra.mxu0 0
        %2991 = vmatprep.subr.bf16.mxu0 0
        %2992 = vmatpush2.bf16.msra.mxu0 0
        %2993 = vmatprep.subr.bf16.mxu0 0
        %2994 = vmatpush2.bf16.msra.mxu0 0
        %2995 = vmatprep.subr.bf16.mxu0 0
        %2996 = vmatpush2.bf16.msra.mxu0 0
        %2997 = vmatprep.subr.bf16.mxu0 0
        %2998 = vmatpush2.bf16.msra.mxu0 0
        %2999 = vmatprep.subr.bf16.mxu0 0
        %3000 = vmatpush2.bf16.msra.mxu0 0
        %3001 = vmatprep.subr.bf16.mxu0 0
        %3002 = vmatpush2.bf16.msra.mxu0 0
        %3003 = vmatprep.subr.bf16.mxu0 0
        %3004 = vmatpush2.bf16.msra.mxu0 0
        %3005 = vmatprep.mubr.bf16.mxu0 0
        %3006 = vmatmul.mubr.bf16.gmra.mxu0 %v1924
        %v3007 = vpop.f32.mrf.mxu0
        %v3008 = vadd.f32 0.0, %v3007
        %v3009 = vpop.f32.mrf.mxu0
        %v3010 = vadd.f32 0.0, %v3009
        %v3011 = vpop.f32.mrf.mxu0
        %v3012 = vadd.f32 0.0, %v3011
        %v3013 = vpop.f32.mrf.mxu0
        %v3014 = vadd.f32 0.0, %v3013
        %3015 = vmatprep.mubr.bf16.mxu0 0
        %3016 = vmatmul.mubr.bf16.gmra.mxu0 %v1927
        %v3017 = vpop.f32.mrf.mxu0
        %v3018 = vadd.f32 0.0, %v3017
        %v3019 = vpop.f32.mrf.mxu0
        %v3020 = vadd.f32 0.0, %v3019
        %v3021 = vpop.f32.mrf.mxu0
        %v3022 = vadd.f32 0.0, %v3021
        %v3023 = vpop.f32.mrf.mxu0
        %v3024 = vadd.f32 0.0, %v3023
        %3025 = vmatprep.mubr.bf16.mxu0 0
        %3026 = vmatmul.mubr.bf16.gmra.mxu0 %v1930
        %v3027 = vpop.f32.mrf.mxu0
        %v3028 = vadd.f32 0.0, %v3027
        %v3029 = vpop.f32.mrf.mxu0
        %v3030 = vadd.f32 0.0, %v3029
        %v3031 = vpop.f32.mrf.mxu0
        %v3032 = vadd.f32 0.0, %v3031
        %v3033 = vpop.f32.mrf.mxu0
        %v3034 = vadd.f32 0.0, %v3033
        %3035 = vmatprep.mubr.bf16.mxu0 0
        %3036 = vmatmul.mubr.bf16.gmra.mxu0 %v1933
        %v3037 = vpop.f32.mrf.mxu0
        %v3038 = vadd.f32 0.0, %v3037
        %v3039 = vpop.f32.mrf.mxu0
        %v3040 = vadd.f32 0.0, %v3039
        %v3041 = vpop.f32.mrf.mxu0
        %v3042 = vadd.f32 0.0, %v3041
        %v3043 = vpop.f32.mrf.mxu0
        %v3044 = vadd.f32 0.0, %v3043
        %3045 = vmatprep.mubr.bf16.mxu0 0
        %3046 = vmatmul.mubr.bf16.gmra.mxu0 %v1936
        %v3047 = vpop.f32.mrf.mxu0
        %v3048 = vadd.f32 0.0, %v3047
        %v3049 = vpop.f32.mrf.mxu0
        %v3050 = vadd.f32 0.0, %v3049
        %v3051 = vpop.f32.mrf.mxu0
        %v3052 = vadd.f32 0.0, %v3051
        %v3053 = vpop.f32.mrf.mxu0
        %v3054 = vadd.f32 0.0, %v3053
        %3055 = vmatprep.mubr.bf16.mxu0 0
        %3056 = vmatmul.mubr.bf16.gmra.mxu0 %v1939
        %v3057 = vpop.f32.mrf.mxu0
        %v3058 = vadd.f32 0.0, %v3057
        %v3059 = vpop.f32.mrf.mxu0
        %v3060 = vadd.f32 0.0, %v3059
        %v3061 = vpop.f32.mrf.mxu0
        %v3062 = vadd.f32 0.0, %v3061
        %v3063 = vpop.f32.mrf.mxu0
        %v3064 = vadd.f32 0.0, %v3063
        %3065 = vmatprep.mubr.bf16.mxu0 0
        %3066 = vmatmul.mubr.bf16.gmra.mxu0 %v1942
        %v3067 = vpop.f32.mrf.mxu0
        %v3068 = vadd.f32 0.0, %v3067
        %v3069 = vpop.f32.mrf.mxu0
        %v3070 = vadd.f32 0.0, %v3069
        %v3071 = vpop.f32.mrf.mxu0
        %v3072 = vadd.f32 0.0, %v3071
        %v3073 = vpop.f32.mrf.mxu0
        %v3074 = vadd.f32 0.0, %v3073
        %3075 = vmatprep.mubr.bf16.mxu0 0
        %3076 = vmatmul.mubr.bf16.gmra.mxu0 %v1945
        %v3077 = vpop.f32.mrf.mxu0
        %v3078 = vadd.f32 0.0, %v3077
        %v3079 = vpop.f32.mrf.mxu0
        %v3080 = vadd.f32 0.0, %v3079
        %v3081 = vpop.f32.mrf.mxu0
        %v3082 = vadd.f32 0.0, %v3081
        %v3083 = vpop.f32.mrf.mxu0
        %v3084 = vadd.f32 0.0, %v3083
        %3085 = vmatprep.mubr.bf16.mxu0 0
        %3086 = vmatmul.mubr.bf16.gmra.mxu0 %v1948
        %v3087 = vpop.f32.mrf.mxu0
        %v3088 = vadd.f32 0.0, %v3087
        %v3089 = vpop.f32.mrf.mxu0
        %v3090 = vadd.f32 0.0, %v3089
        %v3091 = vpop.f32.mrf.mxu0
        %v3092 = vadd.f32 0.0, %v3091
        %v3093 = vpop.f32.mrf.mxu0
        %v3094 = vadd.f32 0.0, %v3093
        %3095 = vmatprep.mubr.bf16.mxu0 0
        %3096 = vmatmul.mubr.bf16.gmra.mxu0 %v1951
        %v3097 = vpop.f32.mrf.mxu0
        %v3098 = vadd.f32 0.0, %v3097
        %v3099 = vpop.f32.mrf.mxu0
        %v3100 = vadd.f32 0.0, %v3099
        %v3101 = vpop.f32.mrf.mxu0
        %v3102 = vadd.f32 0.0, %v3101
        %v3103 = vpop.f32.mrf.mxu0
        %v3104 = vadd.f32 0.0, %v3103
        %3105 = vmatprep.mubr.bf16.mxu0 0
        %3106 = vmatmul.mubr.bf16.gmra.mxu0 %v1954
        %v3107 = vpop.f32.mrf.mxu0
        %v3108 = vadd.f32 0.0, %v3107
        %v3109 = vpop.f32.mrf.mxu0
        %v3110 = vadd.f32 0.0, %v3109
        %v3111 = vpop.f32.mrf.mxu0
        %v3112 = vadd.f32 0.0, %v3111
        %v3113 = vpop.f32.mrf.mxu0
        %v3114 = vadd.f32 0.0, %v3113
        %3115 = vmatprep.mubr.bf16.mxu0 0
        %3116 = vmatmul.mubr.bf16.gmra.mxu0 %v1957
        %v3117 = vpop.f32.mrf.mxu0
        %v3118 = vadd.f32 0.0, %v3117
        %v3119 = vpop.f32.mrf.mxu0
        %v3120 = vadd.f32 0.0, %v3119
        %v3121 = vpop.f32.mrf.mxu0
        %v3122 = vadd.f32 0.0, %v3121
        %v3123 = vpop.f32.mrf.mxu0
        %v3124 = vadd.f32 0.0, %v3123
        %3125 = vmatprep.mubr.bf16.mxu0 0
        %3126 = vmatmul.mubr.bf16.gmra.mxu0 %v1960
        %v3127 = vpop.f32.mrf.mxu0
        %v3128 = vadd.f32 0.0, %v3127
        %v3129 = vpop.f32.mrf.mxu0
        %v3130 = vadd.f32 0.0, %v3129
        %v3131 = vpop.f32.mrf.mxu0
        %v3132 = vadd.f32 0.0, %v3131
        %v3133 = vpop.f32.mrf.mxu0
        %v3134 = vadd.f32 0.0, %v3133
        %3135 = vmatprep.mubr.bf16.mxu0 0
        %3136 = vmatmul.mubr.bf16.gmra.mxu0 %v1963
        %v3137 = vpop.f32.mrf.mxu0
        %v3138 = vadd.f32 0.0, %v3137
        %v3139 = vpop.f32.mrf.mxu0
        %v3140 = vadd.f32 0.0, %v3139
        %v3141 = vpop.f32.mrf.mxu0
        %v3142 = vadd.f32 0.0, %v3141
        %v3143 = vpop.f32.mrf.mxu0
        %v3144 = vadd.f32 0.0, %v3143
        %3145 = vmatprep.mubr.bf16.mxu0 0
        %3146 = vmatmul.mubr.bf16.gmra.mxu0 %v1966
        %v3147 = vpop.f32.mrf.mxu0
        %v3148 = vadd.f32 0.0, %v3147
        %v3149 = vpop.f32.mrf.mxu0
        %v3150 = vadd.f32 0.0, %v3149
        %v3151 = vpop.f32.mrf.mxu0
        %v3152 = vadd.f32 0.0, %v3151
        %v3153 = vpop.f32.mrf.mxu0
        %v3154 = vadd.f32 0.0, %v3153
        %3155 = vmatprep.mubr.bf16.mxu0 0
        %3156 = vmatmul.mubr.bf16.gmra.mxu0 %v1969
        %v3157 = vpop.f32.mrf.mxu0
        %v3158 = vadd.f32 0.0, %v3157
        %v3159 = vpop.f32.mrf.mxu0
        %v3160 = vadd.f32 0.0, %v3159
        %v3161 = vpop.f32.mrf.mxu0
        %v3162 = vadd.f32 0.0, %v3161
        %v3163 = vpop.f32.mrf.mxu0
        %v3164 = vadd.f32 0.0, %v3163
        %3165 = vmatprep.mubr.bf16.mxu0 0
        %3166 = vmatmul.mubr.bf16.gmra.mxu0 %v1972
        %v3167 = vpop.f32.mrf.mxu0
        %v3168 = vadd.f32 0.0, %v3167
        %v3169 = vpop.f32.mrf.mxu0
        %v3170 = vadd.f32 0.0, %v3169
        %v3171 = vpop.f32.mrf.mxu0
        %v3172 = vadd.f32 0.0, %v3171
        %v3173 = vpop.f32.mrf.mxu0
        %v3174 = vadd.f32 0.0, %v3173
        %3175 = vmatprep.mubr.bf16.mxu0 0
        %3176 = vmatmul.mubr.bf16.gmra.mxu0 %v1975
        %v3177 = vpop.f32.mrf.mxu0
        %v3178 = vadd.f32 0.0, %v3177
        %v3179 = vpop.f32.mrf.mxu0
        %v3180 = vadd.f32 0.0, %v3179
        %v3181 = vpop.f32.mrf.mxu0
        %v3182 = vadd.f32 0.0, %v3181
        %v3183 = vpop.f32.mrf.mxu0
        %v3184 = vadd.f32 0.0, %v3183
        %3185 = vmatprep.mubr.bf16.mxu0 0
        %3186 = vmatmul.mubr.bf16.gmra.mxu0 %v1978
        %v3187 = vpop.f32.mrf.mxu0
        %v3188 = vadd.f32 0.0, %v3187
        %v3189 = vpop.f32.mrf.mxu0
        %v3190 = vadd.f32 0.0, %v3189
        %v3191 = vpop.f32.mrf.mxu0
        %v3192 = vadd.f32 0.0, %v3191
        %v3193 = vpop.f32.mrf.mxu0
        %v3194 = vadd.f32 0.0, %v3193
        %3195 = vmatprep.mubr.bf16.mxu0 0
        %3196 = vmatmul.mubr.bf16.gmra.mxu0 %v1981
        %v3197 = vpop.f32.mrf.mxu0
        %v3198 = vadd.f32 0.0, %v3197
        %v3199 = vpop.f32.mrf.mxu0
        %v3200 = vadd.f32 0.0, %v3199
        %v3201 = vpop.f32.mrf.mxu0
        %v3202 = vadd.f32 0.0, %v3201
        %v3203 = vpop.f32.mrf.mxu0
        %v3204 = vadd.f32 0.0, %v3203
        %3205 = vmatprep.mubr.bf16.mxu0 0
        %3206 = vmatmul.mubr.bf16.gmra.mxu0 %v1984
        %v3207 = vpop.f32.mrf.mxu0
        %v3208 = vadd.f32 0.0, %v3207
        %v3209 = vpop.f32.mrf.mxu0
        %v3210 = vadd.f32 0.0, %v3209
        %v3211 = vpop.f32.mrf.mxu0
        %v3212 = vadd.f32 0.0, %v3211
        %v3213 = vpop.f32.mrf.mxu0
        %v3214 = vadd.f32 0.0, %v3213
        %3215 = vmatprep.mubr.bf16.mxu0 0
        %3216 = vmatmul.mubr.bf16.gmra.mxu0 %v1987
        %v3217 = vpop.f32.mrf.mxu0
        %v3218 = vadd.f32 0.0, %v3217
        %v3219 = vpop.f32.mrf.mxu0
        %v3220 = vadd.f32 0.0, %v3219
        %v3221 = vpop.f32.mrf.mxu0
        %v3222 = vadd.f32 0.0, %v3221
        %v3223 = vpop.f32.mrf.mxu0
        %v3224 = vadd.f32 0.0, %v3223
        %3225 = vmatprep.mubr.bf16.mxu0 0
        %3226 = vmatmul.mubr.bf16.gmra.mxu0 %v1990
        %v3227 = vpop.f32.mrf.mxu0
        %v3228 = vadd.f32 0.0, %v3227
        %v3229 = vpop.f32.mrf.mxu0
        %v3230 = vadd.f32 0.0, %v3229
        %v3231 = vpop.f32.mrf.mxu0
        %v3232 = vadd.f32 0.0, %v3231
        %v3233 = vpop.f32.mrf.mxu0
        %v3234 = vadd.f32 0.0, %v3233
        %3235 = vmatprep.mubr.bf16.mxu0 0
        %3236 = vmatmul.mubr.bf16.gmra.mxu0 %v1993
        %v3237 = vpop.f32.mrf.mxu0
        %v3238 = vadd.f32 0.0, %v3237
        %v3239 = vpop.f32.mrf.mxu0
        %v3240 = vadd.f32 0.0, %v3239
        %v3241 = vpop.f32.mrf.mxu0
        %v3242 = vadd.f32 0.0, %v3241
        %v3243 = vpop.f32.mrf.mxu0
        %v3244 = vadd.f32 0.0, %v3243
        %3245 = vmatprep.mubr.bf16.mxu0 0
        %3246 = vmatmul.mubr.bf16.gmra.mxu0 %v1996
        %v3247 = vpop.f32.mrf.mxu0
        %v3248 = vadd.f32 0.0, %v3247
        %v3249 = vpop.f32.mrf.mxu0
        %v3250 = vadd.f32 0.0, %v3249
        %v3251 = vpop.f32.mrf.mxu0
        %v3252 = vadd.f32 0.0, %v3251
        %v3253 = vpop.f32.mrf.mxu0
        %v3254 = vadd.f32 0.0, %v3253
        %3255 = vmatprep.mubr.bf16.mxu0 0
        %3256 = vmatmul.mubr.bf16.gmra.mxu0 %v1999
        %v3257 = vpop.f32.mrf.mxu0
        %v3258 = vadd.f32 0.0, %v3257
        %v3259 = vpop.f32.mrf.mxu0
        %v3260 = vadd.f32 0.0, %v3259
        %v3261 = vpop.f32.mrf.mxu0
        %v3262 = vadd.f32 0.0, %v3261
        %v3263 = vpop.f32.mrf.mxu0
        %v3264 = vadd.f32 0.0, %v3263
        %3265 = vmatprep.mubr.bf16.mxu0 0
        %3266 = vmatmul.mubr.bf16.gmra.mxu0 %v2956
        %v3267 = vpop.f32.mrf.mxu0
        %v3268 = vadd.f32 0.0, %v3267
        %v3269 = vpop.f32.mrf.mxu0
        %v3270 = vadd.f32 0.0, %v3269
        %v3271 = vpop.f32.mrf.mxu0
        %v3272 = vadd.f32 0.0, %v3271
        %v3273 = vpop.f32.mrf.mxu0
        %v3274 = vadd.f32 0.0, %v3273
        %3275 = vdwg.mxu0
        %3276 = vmatprep.subr.bf16.mxu0 0
        %3277 = vmatpush1.bf16.msra.mxu0 0
        %3278 = vmatprep.subr.bf16.mxu0 0
        %3279 = vmatpush1.bf16.msra.mxu0 0
        %3280 = vmatprep.subr.bf16.mxu0 0
        %3281 = vmatpush1.bf16.msra.mxu0 0
        %3282 = vmatprep.subr.bf16.mxu0 0
        %3283 = vmatpush1.bf16.msra.mxu0 0
        %3284 = vmatprep.subr.bf16.mxu0 0
        %3285 = vmatpush1.bf16.msra.mxu0 0
        %3286 = vmatprep.subr.bf16.mxu0 %v2968
        %3287 = vmatpush1.bf16.msra.mxu0 %v2965
        %3288 = vmatprep.subr.bf16.mxu0 %v2938
        %3289 = vmatpush1.bf16.msra.mxu0 %v2937
        %3290 = vmatprep.subr.bf16.mxu0 %v2933
        %3291 = vmatpush1.bf16.msra.mxu0 %v2932
        %3292 = vmatprep.subr.bf16.mxu0 0
        %3293 = vmatpush2.bf16.msra.mxu0 0
        %3294 = vmatprep.subr.bf16.mxu0 0
        %3295 = vmatpush2.bf16.msra.mxu0 0
        %3296 = vmatprep.subr.bf16.mxu0 0
        %3297 = vmatpush2.bf16.msra.mxu0 0
        %3298 = vmatprep.subr.bf16.mxu0 0
        %3299 = vmatpush2.bf16.msra.mxu0 0
        %3300 = vmatprep.subr.bf16.mxu0 0
        %3301 = vmatpush2.bf16.msra.mxu0 0
        %3302 = vmatprep.subr.bf16.mxu0 0
        %3303 = vmatpush2.bf16.msra.mxu0 0
        %3304 = vmatprep.subr.bf16.mxu0 0
        %3305 = vmatpush2.bf16.msra.mxu0 0
        %3306 = vmatprep.subr.bf16.mxu0 0
        %3307 = vmatpush2.bf16.msra.mxu0 0
        %3308 = vmatprep.mubr.bf16.mxu0 0
        %3309 = vmatmul.mubr.bf16.gmra.mxu0 %v1924
        %v3310 = vpop.f32.mrf.mxu0
        %v3311 = vadd.f32 0.0, %v3310
        %v3312 = vpop.f32.mrf.mxu0
        %v3313 = vadd.f32 0.0, %v3312
        %v3314 = vpop.f32.mrf.mxu0
        %v3315 = vadd.f32 0.0, %v3314
        %v3316 = vpop.f32.mrf.mxu0
        %v3317 = vadd.f32 0.0, %v3316
        %3318 = vmatprep.mubr.bf16.mxu0 0
        %3319 = vmatmul.mubr.bf16.gmra.mxu0 %v1927
        %v3320 = vpop.f32.mrf.mxu0
        %v3321 = vadd.f32 0.0, %v3320
        %v3322 = vpop.f32.mrf.mxu0
        %v3323 = vadd.f32 0.0, %v3322
        %v3324 = vpop.f32.mrf.mxu0
        %v3325 = vadd.f32 0.0, %v3324
        %v3326 = vpop.f32.mrf.mxu0
        %v3327 = vadd.f32 0.0, %v3326
        %3328 = vmatprep.mubr.bf16.mxu0 0
        %3329 = vmatmul.mubr.bf16.gmra.mxu0 %v1930
        %v3330 = vpop.f32.mrf.mxu0
        %v3331 = vadd.f32 0.0, %v3330
        %v3332 = vpop.f32.mrf.mxu0
        %v3333 = vadd.f32 0.0, %v3332
        %v3334 = vpop.f32.mrf.mxu0
        %v3335 = vadd.f32 0.0, %v3334
        %v3336 = vpop.f32.mrf.mxu0
        %v3337 = vadd.f32 0.0, %v3336
        %3338 = vmatprep.mubr.bf16.mxu0 0
        %3339 = vmatmul.mubr.bf16.gmra.mxu0 %v1933
        %v3340 = vpop.f32.mrf.mxu0
        %v3341 = vadd.f32 0.0, %v3340
        %v3342 = vpop.f32.mrf.mxu0
        %v3343 = vadd.f32 0.0, %v3342
        %v3344 = vpop.f32.mrf.mxu0
        %v3345 = vadd.f32 0.0, %v3344
        %v3346 = vpop.f32.mrf.mxu0
        %v3347 = vadd.f32 0.0, %v3346
        %3348 = vmatprep.mubr.bf16.mxu0 0
        %3349 = vmatmul.mubr.bf16.gmra.mxu0 %v1936
        %v3350 = vpop.f32.mrf.mxu0
        %v3351 = vadd.f32 0.0, %v3350
        %v3352 = vpop.f32.mrf.mxu0
        %v3353 = vadd.f32 0.0, %v3352
        %v3354 = vpop.f32.mrf.mxu0
        %v3355 = vadd.f32 0.0, %v3354
        %v3356 = vpop.f32.mrf.mxu0
        %v3357 = vadd.f32 0.0, %v3356
        %3358 = vmatprep.mubr.bf16.mxu0 0
        %3359 = vmatmul.mubr.bf16.gmra.mxu0 %v1939
        %v3360 = vpop.f32.mrf.mxu0
        %v3361 = vadd.f32 0.0, %v3360
        %v3362 = vpop.f32.mrf.mxu0
        %v3363 = vadd.f32 0.0, %v3362
        %v3364 = vpop.f32.mrf.mxu0
        %v3365 = vadd.f32 0.0, %v3364
        %v3366 = vpop.f32.mrf.mxu0
        %v3367 = vadd.f32 0.0, %v3366
        %3368 = vmatprep.mubr.bf16.mxu0 0
        %3369 = vmatmul.mubr.bf16.gmra.mxu0 %v1942
        %v3370 = vpop.f32.mrf.mxu0
        %v3371 = vadd.f32 0.0, %v3370
        %v3372 = vpop.f32.mrf.mxu0
        %v3373 = vadd.f32 0.0, %v3372
        %v3374 = vpop.f32.mrf.mxu0
        %v3375 = vadd.f32 0.0, %v3374
        %v3376 = vpop.f32.mrf.mxu0
        %v3377 = vadd.f32 0.0, %v3376
        %3378 = vmatprep.mubr.bf16.mxu0 0
        %3379 = vmatmul.mubr.bf16.gmra.mxu0 %v1945
        %v3380 = vpop.f32.mrf.mxu0
        %v3381 = vadd.f32 0.0, %v3380
        %v3382 = vpop.f32.mrf.mxu0
        %v3383 = vadd.f32 0.0, %v3382
        %v3384 = vpop.f32.mrf.mxu0
        %v3385 = vadd.f32 0.0, %v3384
        %v3386 = vpop.f32.mrf.mxu0
        %v3387 = vadd.f32 0.0, %v3386
        %3388 = vmatprep.mubr.bf16.mxu0 0
        %3389 = vmatmul.mubr.bf16.gmra.mxu0 %v1948
        %v3390 = vpop.f32.mrf.mxu0
        %v3391 = vadd.f32 0.0, %v3390
        %v3392 = vpop.f32.mrf.mxu0
        %v3393 = vadd.f32 0.0, %v3392
        %v3394 = vpop.f32.mrf.mxu0
        %v3395 = vadd.f32 0.0, %v3394
        %v3396 = vpop.f32.mrf.mxu0
        %v3397 = vadd.f32 0.0, %v3396
        %3398 = vmatprep.mubr.bf16.mxu0 0
        %3399 = vmatmul.mubr.bf16.gmra.mxu0 %v1951
        %v3400 = vpop.f32.mrf.mxu0
        %v3401 = vadd.f32 0.0, %v3400
        %v3402 = vpop.f32.mrf.mxu0
        %v3403 = vadd.f32 0.0, %v3402
        %v3404 = vpop.f32.mrf.mxu0
        %v3405 = vadd.f32 0.0, %v3404
        %v3406 = vpop.f32.mrf.mxu0
        %v3407 = vadd.f32 0.0, %v3406
        %3408 = vmatprep.mubr.bf16.mxu0 0
        %3409 = vmatmul.mubr.bf16.gmra.mxu0 %v1954
        %v3410 = vpop.f32.mrf.mxu0
        %v3411 = vadd.f32 0.0, %v3410
        %v3412 = vpop.f32.mrf.mxu0
        %v3413 = vadd.f32 0.0, %v3412
        %v3414 = vpop.f32.mrf.mxu0
        %v3415 = vadd.f32 0.0, %v3414
        %v3416 = vpop.f32.mrf.mxu0
        %v3417 = vadd.f32 0.0, %v3416
        %3418 = vmatprep.mubr.bf16.mxu0 0
        %3419 = vmatmul.mubr.bf16.gmra.mxu0 %v1957
        %v3420 = vpop.f32.mrf.mxu0
        %v3421 = vadd.f32 0.0, %v3420
        %v3422 = vpop.f32.mrf.mxu0
        %v3423 = vadd.f32 0.0, %v3422
        %v3424 = vpop.f32.mrf.mxu0
        %v3425 = vadd.f32 0.0, %v3424
        %v3426 = vpop.f32.mrf.mxu0
        %v3427 = vadd.f32 0.0, %v3426
        %3428 = vmatprep.mubr.bf16.mxu0 0
        %3429 = vmatmul.mubr.bf16.gmra.mxu0 %v1960
        %v3430 = vpop.f32.mrf.mxu0
        %v3431 = vadd.f32 0.0, %v3430
        %v3432 = vpop.f32.mrf.mxu0
        %v3433 = vadd.f32 0.0, %v3432
        %v3434 = vpop.f32.mrf.mxu0
        %v3435 = vadd.f32 0.0, %v3434
        %v3436 = vpop.f32.mrf.mxu0
        %v3437 = vadd.f32 0.0, %v3436
        %3438 = vmatprep.mubr.bf16.mxu0 0
        %3439 = vmatmul.mubr.bf16.gmra.mxu0 %v1963
        %v3440 = vpop.f32.mrf.mxu0
        %v3441 = vadd.f32 0.0, %v3440
        %v3442 = vpop.f32.mrf.mxu0
        %v3443 = vadd.f32 0.0, %v3442
        %v3444 = vpop.f32.mrf.mxu0
        %v3445 = vadd.f32 0.0, %v3444
        %v3446 = vpop.f32.mrf.mxu0
        %v3447 = vadd.f32 0.0, %v3446
        %3448 = vmatprep.mubr.bf16.mxu0 0
        %3449 = vmatmul.mubr.bf16.gmra.mxu0 %v1966
        %v3450 = vpop.f32.mrf.mxu0
        %v3451 = vadd.f32 0.0, %v3450
        %v3452 = vpop.f32.mrf.mxu0
        %v3453 = vadd.f32 0.0, %v3452
        %v3454 = vpop.f32.mrf.mxu0
        %v3455 = vadd.f32 0.0, %v3454
        %v3456 = vpop.f32.mrf.mxu0
        %v3457 = vadd.f32 0.0, %v3456
        %3458 = vmatprep.mubr.bf16.mxu0 0
        %3459 = vmatmul.mubr.bf16.gmra.mxu0 %v1969
        %v3460 = vpop.f32.mrf.mxu0
        %v3461 = vadd.f32 0.0, %v3460
        %v3462 = vpop.f32.mrf.mxu0
        %v3463 = vadd.f32 0.0, %v3462
        %v3464 = vpop.f32.mrf.mxu0
        %v3465 = vadd.f32 0.0, %v3464
        %v3466 = vpop.f32.mrf.mxu0
        %v3467 = vadd.f32 0.0, %v3466
        %3468 = vmatprep.mubr.bf16.mxu0 0
        %3469 = vmatmul.mubr.bf16.gmra.mxu0 %v1972
        %v3470 = vpop.f32.mrf.mxu0
        %v3471 = vadd.f32 0.0, %v3470
        %v3472 = vpop.f32.mrf.mxu0
        %v3473 = vadd.f32 0.0, %v3472
        %v3474 = vpop.f32.mrf.mxu0
        %v3475 = vadd.f32 0.0, %v3474
        %v3476 = vpop.f32.mrf.mxu0
        %v3477 = vadd.f32 0.0, %v3476
        %3478 = vmatprep.mubr.bf16.mxu0 0
        %3479 = vmatmul.mubr.bf16.gmra.mxu0 %v1975
        %v3480 = vpop.f32.mrf.mxu0
        %v3481 = vadd.f32 0.0, %v3480
        %v3482 = vpop.f32.mrf.mxu0
        %v3483 = vadd.f32 0.0, %v3482
        %v3484 = vpop.f32.mrf.mxu0
        %v3485 = vadd.f32 0.0, %v3484
        %v3486 = vpop.f32.mrf.mxu0
        %v3487 = vadd.f32 0.0, %v3486
        %3488 = vmatprep.mubr.bf16.mxu0 0
        %3489 = vmatmul.mubr.bf16.gmra.mxu0 %v1978
        %v3490 = vpop.f32.mrf.mxu0
        %v3491 = vadd.f32 0.0, %v3490
        %v3492 = vpop.f32.mrf.mxu0
        %v3493 = vadd.f32 0.0, %v3492
        %v3494 = vpop.f32.mrf.mxu0
        %v3495 = vadd.f32 0.0, %v3494
        %v3496 = vpop.f32.mrf.mxu0
        %v3497 = vadd.f32 0.0, %v3496
        %3498 = vmatprep.mubr.bf16.mxu0 0
        %3499 = vmatmul.mubr.bf16.gmra.mxu0 %v1981
        %v3500 = vpop.f32.mrf.mxu0
        %v3501 = vadd.f32 0.0, %v3500
        %v3502 = vpop.f32.mrf.mxu0
        %v3503 = vadd.f32 0.0, %v3502
        %v3504 = vpop.f32.mrf.mxu0
        %v3505 = vadd.f32 0.0, %v3504
        %v3506 = vpop.f32.mrf.mxu0
        %v3507 = vadd.f32 0.0, %v3506
        %3508 = vmatprep.mubr.bf16.mxu0 0
        %3509 = vmatmul.mubr.bf16.gmra.mxu0 %v1984
        %v3510 = vpop.f32.mrf.mxu0
        %v3511 = vadd.f32 0.0, %v3510
        %v3512 = vpop.f32.mrf.mxu0
        %v3513 = vadd.f32 0.0, %v3512
        %v3514 = vpop.f32.mrf.mxu0
        %v3515 = vadd.f32 0.0, %v3514
        %v3516 = vpop.f32.mrf.mxu0
        %v3517 = vadd.f32 0.0, %v3516
        %3518 = vmatprep.mubr.bf16.mxu0 0
        %3519 = vmatmul.mubr.bf16.gmra.mxu0 %v1987
        %v3520 = vpop.f32.mrf.mxu0
        %v3521 = vadd.f32 0.0, %v3520
        %v3522 = vpop.f32.mrf.mxu0
        %v3523 = vadd.f32 0.0, %v3522
        %v3524 = vpop.f32.mrf.mxu0
        %v3525 = vadd.f32 0.0, %v3524
        %v3526 = vpop.f32.mrf.mxu0
        %v3527 = vadd.f32 0.0, %v3526
        %3528 = vmatprep.mubr.bf16.mxu0 0
        %3529 = vmatmul.mubr.bf16.gmra.mxu0 %v1990
        %v3530 = vpop.f32.mrf.mxu0
        %v3531 = vadd.f32 0.0, %v3530
        %v3532 = vpop.f32.mrf.mxu0
        %v3533 = vadd.f32 0.0, %v3532
        %v3534 = vpop.f32.mrf.mxu0
        %v3535 = vadd.f32 0.0, %v3534
        %v3536 = vpop.f32.mrf.mxu0
        %v3537 = vadd.f32 0.0, %v3536
        %3538 = vmatprep.mubr.bf16.mxu0 0
        %3539 = vmatmul.mubr.bf16.gmra.mxu0 %v1993
        %v3540 = vpop.f32.mrf.mxu0
        %v3541 = vadd.f32 0.0, %v3540
        %v3542 = vpop.f32.mrf.mxu0
        %v3543 = vadd.f32 0.0, %v3542
        %v3544 = vpop.f32.mrf.mxu0
        %v3545 = vadd.f32 0.0, %v3544
        %v3546 = vpop.f32.mrf.mxu0
        %v3547 = vadd.f32 0.0, %v3546
        %3548 = vmatprep.mubr.bf16.mxu0 0
        %3549 = vmatmul.mubr.bf16.gmra.mxu0 %v1996
        %v3550 = vpop.f32.mrf.mxu0
        %v3551 = vadd.f32 0.0, %v3550
        %v3552 = vpop.f32.mrf.mxu0
        %v3553 = vadd.f32 0.0, %v3552
        %v3554 = vpop.f32.mrf.mxu0
        %v3555 = vadd.f32 0.0, %v3554
        %v3556 = vpop.f32.mrf.mxu0
        %v3557 = vadd.f32 0.0, %v3556
        %3558 = vmatprep.mubr.bf16.mxu0 0
        %3559 = vmatmul.mubr.bf16.gmra.mxu0 %v1999
        %v3560 = vpop.f32.mrf.mxu0
        %v3561 = vadd.f32 0.0, %v3560
        %v3562 = vpop.f32.mrf.mxu0
        %v3563 = vadd.f32 0.0, %v3562
        %v3564 = vpop.f32.mrf.mxu0
        %v3565 = vadd.f32 0.0, %v3564
        %v3566 = vpop.f32.mrf.mxu0
        %v3567 = vadd.f32 0.0, %v3566
        %3568 = vmatprep.mubr.bf16.mxu0 0
        %3569 = vmatmul.mubr.bf16.gmra.mxu0 %v2956
        %v3570 = vpop.f32.mrf.mxu0
        %v3571 = vadd.f32 0.0, %v3570
        %v3572 = vpop.f32.mrf.mxu0
        %v3573 = vadd.f32 0.0, %v3572
        %v3574 = vpop.f32.mrf.mxu0
        %v3575 = vadd.f32 0.0, %v3574
        %v3576 = vpop.f32.mrf.mxu0
        %v3577 = vadd.f32 0.0, %v3576
        %3578 = vdwg.mxu0
        %3579 = vmatprep.subr.bf16.mxu0 0
        %3580 = vmatpush1.bf16.msra.mxu0 0
        %3581 = vmatprep.subr.bf16.mxu0 0
        %3582 = vmatpush1.bf16.msra.mxu0 0
        %3583 = vmatprep.subr.bf16.mxu0 0
        %3584 = vmatpush1.bf16.msra.mxu0 0
        %3585 = vmatprep.subr.bf16.mxu0 0
        %3586 = vmatpush1.bf16.msra.mxu0 0
        %3587 = vmatprep.subr.bf16.mxu0 0
        %3588 = vmatpush1.bf16.msra.mxu0 0
        %3589 = vmatprep.subr.bf16.mxu0 0
        %3590 = vmatpush1.bf16.msra.mxu0 %v2971
        %3591 = vmatprep.subr.bf16.mxu0 0
        %3592 = vmatpush1.bf16.msra.mxu0 %v2939
        %3593 = vmatprep.subr.bf16.mxu0 0
        %3594 = vmatpush1.bf16.msra.mxu0 %v2934
        %3595 = vmatprep.subr.bf16.mxu0 0
        %3596 = vmatpush2.bf16.msra.mxu0 0
        %3597 = vmatprep.subr.bf16.mxu0 0
        %3598 = vmatpush2.bf16.msra.mxu0 0
        %3599 = vmatprep.subr.bf16.mxu0 0
        %3600 = vmatpush2.bf16.msra.mxu0 0
        %3601 = vmatprep.subr.bf16.mxu0 0
        %3602 = vmatpush2.bf16.msra.mxu0 0
        %3603 = vmatprep.subr.bf16.mxu0 0
        %3604 = vmatpush2.bf16.msra.mxu0 0
        %3605 = vmatprep.subr.bf16.mxu0 0
        %3606 = vmatpush2.bf16.msra.mxu0 0
        %3607 = vmatprep.subr.bf16.mxu0 0
        %3608 = vmatpush2.bf16.msra.mxu0 0
        %3609 = vmatprep.subr.bf16.mxu0 0
        %3610 = vmatpush2.bf16.msra.mxu0 0
        %3611 = vmatprep.mubr.bf16.mxu0 0
        %3612 = vmatmul.mubr.bf16.gmra.mxu0 %v1924
        %v3613 = vpop.f32.mrf.mxu0
        %v3614 = vadd.f32 0.0, %v3613
        %v3615 = vpop.f32.mrf.mxu0
        %v3616 = vpop.f32.mrf.mxu0
        %v3617 = vadd.f32 0.0, %v3616
        %v3618 = vpop.f32.mrf.mxu0
        %3619 = vmatprep.mubr.bf16.mxu0 0
        %3620 = vmatmul.mubr.bf16.gmra.mxu0 %v1927
        %v3621 = vpop.f32.mrf.mxu0
        %v3622 = vadd.f32 0.0, %v3621
        %v3623 = vpop.f32.mrf.mxu0
        %v3624 = vpop.f32.mrf.mxu0
        %v3625 = vadd.f32 0.0, %v3624
        %v3626 = vpop.f32.mrf.mxu0
        %3627 = vmatprep.mubr.bf16.mxu0 0
        %3628 = vmatmul.mubr.bf16.gmra.mxu0 %v1930
        %v3629 = vpop.f32.mrf.mxu0
        %v3630 = vadd.f32 0.0, %v3629
        %v3631 = vpop.f32.mrf.mxu0
        %v3632 = vpop.f32.mrf.mxu0
        %v3633 = vadd.f32 0.0, %v3632
        %v3634 = vpop.f32.mrf.mxu0
        %3635 = vmatprep.mubr.bf16.mxu0 0
        %3636 = vmatmul.mubr.bf16.gmra.mxu0 %v1933
        %v3637 = vpop.f32.mrf.mxu0
        %v3638 = vadd.f32 0.0, %v3637
        %v3639 = vpop.f32.mrf.mxu0
        %v3640 = vpop.f32.mrf.mxu0
        %v3641 = vadd.f32 0.0, %v3640
        %v3642 = vpop.f32.mrf.mxu0
        %3643 = vmatprep.mubr.bf16.mxu0 0
        %3644 = vmatmul.mubr.bf16.gmra.mxu0 %v1936
        %v3645 = vpop.f32.mrf.mxu0
        %v3646 = vadd.f32 0.0, %v3645
        %v3647 = vpop.f32.mrf.mxu0
        %v3648 = vpop.f32.mrf.mxu0
        %v3649 = vadd.f32 0.0, %v3648
        %v3650 = vpop.f32.mrf.mxu0
        %3651 = vmatprep.mubr.bf16.mxu0 0
        %3652 = vmatmul.mubr.bf16.gmra.mxu0 %v1939
        %v3653 = vpop.f32.mrf.mxu0
        %v3654 = vadd.f32 0.0, %v3653
        %v3655 = vpop.f32.mrf.mxu0
        %v3656 = vpop.f32.mrf.mxu0
        %v3657 = vadd.f32 0.0, %v3656
        %v3658 = vpop.f32.mrf.mxu0
        %3659 = vmatprep.mubr.bf16.mxu0 0
        %3660 = vmatmul.mubr.bf16.gmra.mxu0 %v1942
        %v3661 = vpop.f32.mrf.mxu0
        %v3662 = vadd.f32 0.0, %v3661
        %v3663 = vpop.f32.mrf.mxu0
        %v3664 = vpop.f32.mrf.mxu0
        %v3665 = vadd.f32 0.0, %v3664
        %v3666 = vpop.f32.mrf.mxu0
        %3667 = vmatprep.mubr.bf16.mxu0 0
        %3668 = vmatmul.mubr.bf16.gmra.mxu0 %v1945
        %v3669 = vpop.f32.mrf.mxu0
        %v3670 = vadd.f32 0.0, %v3669
        %v3671 = vpop.f32.mrf.mxu0
        %v3672 = vpop.f32.mrf.mxu0
        %v3673 = vadd.f32 0.0, %v3672
        %v3674 = vpop.f32.mrf.mxu0
        %3675 = vmatprep.mubr.bf16.mxu0 0
        %3676 = vmatmul.mubr.bf16.gmra.mxu0 %v1948
        %v3677 = vpop.f32.mrf.mxu0
        %v3678 = vadd.f32 0.0, %v3677
        %v3679 = vpop.f32.mrf.mxu0
        %v3680 = vpop.f32.mrf.mxu0
        %v3681 = vadd.f32 0.0, %v3680
        %v3682 = vpop.f32.mrf.mxu0
        %3683 = vmatprep.mubr.bf16.mxu0 0
        %3684 = vmatmul.mubr.bf16.gmra.mxu0 %v1951
        %v3685 = vpop.f32.mrf.mxu0
        %v3686 = vadd.f32 0.0, %v3685
        %v3687 = vpop.f32.mrf.mxu0
        %v3688 = vpop.f32.mrf.mxu0
        %v3689 = vadd.f32 0.0, %v3688
        %v3690 = vpop.f32.mrf.mxu0
        %3691 = vmatprep.mubr.bf16.mxu0 0
        %3692 = vmatmul.mubr.bf16.gmra.mxu0 %v1954
        %v3693 = vpop.f32.mrf.mxu0
        %v3694 = vadd.f32 0.0, %v3693
        %v3695 = vpop.f32.mrf.mxu0
        %v3696 = vpop.f32.mrf.mxu0
        %v3697 = vadd.f32 0.0, %v3696
        %v3698 = vpop.f32.mrf.mxu0
        %3699 = vmatprep.mubr.bf16.mxu0 0
        %3700 = vmatmul.mubr.bf16.gmra.mxu0 %v1957
        %v3701 = vpop.f32.mrf.mxu0
        %v3702 = vadd.f32 0.0, %v3701
        %v3703 = vpop.f32.mrf.mxu0
        %v3704 = vpop.f32.mrf.mxu0
        %v3705 = vadd.f32 0.0, %v3704
        %v3706 = vpop.f32.mrf.mxu0
        %3707 = vmatprep.mubr.bf16.mxu0 0
        %3708 = vmatmul.mubr.bf16.gmra.mxu0 %v1960
        %v3709 = vpop.f32.mrf.mxu0
        %v3710 = vadd.f32 0.0, %v3709
        %v3711 = vpop.f32.mrf.mxu0
        %v3712 = vpop.f32.mrf.mxu0
        %v3713 = vadd.f32 0.0, %v3712
        %v3714 = vpop.f32.mrf.mxu0
        %3715 = vmatprep.mubr.bf16.mxu0 0
        %3716 = vmatmul.mubr.bf16.gmra.mxu0 %v1963
        %v3717 = vpop.f32.mrf.mxu0
        %v3718 = vadd.f32 0.0, %v3717
        %v3719 = vpop.f32.mrf.mxu0
        %v3720 = vpop.f32.mrf.mxu0
        %v3721 = vadd.f32 0.0, %v3720
        %v3722 = vpop.f32.mrf.mxu0
        %3723 = vmatprep.mubr.bf16.mxu0 0
        %3724 = vmatmul.mubr.bf16.gmra.mxu0 %v1966
        %v3725 = vpop.f32.mrf.mxu0
        %v3726 = vadd.f32 0.0, %v3725
        %v3727 = vpop.f32.mrf.mxu0
        %v3728 = vpop.f32.mrf.mxu0
        %v3729 = vadd.f32 0.0, %v3728
        %v3730 = vpop.f32.mrf.mxu0
        %3731 = vmatprep.mubr.bf16.mxu0 0
        %3732 = vmatmul.mubr.bf16.gmra.mxu0 %v1969
        %v3733 = vpop.f32.mrf.mxu0
        %v3734 = vadd.f32 0.0, %v3733
        %v3735 = vpop.f32.mrf.mxu0
        %v3736 = vpop.f32.mrf.mxu0
        %v3737 = vadd.f32 0.0, %v3736
        %v3738 = vpop.f32.mrf.mxu0
        %3739 = vmatprep.mubr.bf16.mxu0 0
        %3740 = vmatmul.mubr.bf16.gmra.mxu0 %v1972
        %v3741 = vpop.f32.mrf.mxu0
        %v3742 = vadd.f32 0.0, %v3741
        %v3743 = vpop.f32.mrf.mxu0
        %v3744 = vpop.f32.mrf.mxu0
        %v3745 = vadd.f32 0.0, %v3744
        %v3746 = vpop.f32.mrf.mxu0
        %3747 = vmatprep.mubr.bf16.mxu0 0
        %3748 = vmatmul.mubr.bf16.gmra.mxu0 %v1975
        %v3749 = vpop.f32.mrf.mxu0
        %v3750 = vadd.f32 0.0, %v3749
        %v3751 = vpop.f32.mrf.mxu0
        %v3752 = vpop.f32.mrf.mxu0
        %v3753 = vadd.f32 0.0, %v3752
        %v3754 = vpop.f32.mrf.mxu0
        %3755 = vmatprep.mubr.bf16.mxu0 0
        %3756 = vmatmul.mubr.bf16.gmra.mxu0 %v1978
        %v3757 = vpop.f32.mrf.mxu0
        %v3758 = vadd.f32 0.0, %v3757
        %v3759 = vpop.f32.mrf.mxu0
        %v3760 = vpop.f32.mrf.mxu0
        %v3761 = vadd.f32 0.0, %v3760
        %v3762 = vpop.f32.mrf.mxu0
        %3763 = vmatprep.mubr.bf16.mxu0 0
        %3764 = vmatmul.mubr.bf16.gmra.mxu0 %v1981
        %v3765 = vpop.f32.mrf.mxu0
        %v3766 = vadd.f32 0.0, %v3765
        %v3767 = vpop.f32.mrf.mxu0
        %v3768 = vpop.f32.mrf.mxu0
        %v3769 = vadd.f32 0.0, %v3768
        %v3770 = vpop.f32.mrf.mxu0
        %3771 = vmatprep.mubr.bf16.mxu0 0
        %3772 = vmatmul.mubr.bf16.gmra.mxu0 %v1984
        %v3773 = vpop.f32.mrf.mxu0
        %v3774 = vadd.f32 0.0, %v3773
        %v3775 = vpop.f32.mrf.mxu0
        %v3776 = vpop.f32.mrf.mxu0
        %v3777 = vadd.f32 0.0, %v3776
        %v3778 = vpop.f32.mrf.mxu0
        %3779 = vmatprep.mubr.bf16.mxu0 0
        %3780 = vmatmul.mubr.bf16.gmra.mxu0 %v1987
        %v3781 = vpop.f32.mrf.mxu0
        %v3782 = vadd.f32 0.0, %v3781
        %v3783 = vpop.f32.mrf.mxu0
        %v3784 = vpop.f32.mrf.mxu0
        %v3785 = vadd.f32 0.0, %v3784
        %v3786 = vpop.f32.mrf.mxu0
        %3787 = vmatprep.mubr.bf16.mxu0 0
        %3788 = vmatmul.mubr.bf16.gmra.mxu0 %v1990
        %v3789 = vpop.f32.mrf.mxu0
        %v3790 = vadd.f32 0.0, %v3789
        %v3791 = vpop.f32.mrf.mxu0
        %v3792 = vpop.f32.mrf.mxu0
        %v3793 = vadd.f32 0.0, %v3792
        %v3794 = vpop.f32.mrf.mxu0
        %3795 = vmatprep.mubr.bf16.mxu0 0
        %3796 = vmatmul.mubr.bf16.gmra.mxu0 %v1993
        %v3797 = vpop.f32.mrf.mxu0
        %v3798 = vadd.f32 0.0, %v3797
        %v3799 = vpop.f32.mrf.mxu0
        %v3800 = vpop.f32.mrf.mxu0
        %v3801 = vadd.f32 0.0, %v3800
        %v3802 = vpop.f32.mrf.mxu0
        %3803 = vmatprep.mubr.bf16.mxu0 0
        %3804 = vmatmul.mubr.bf16.gmra.mxu0 %v1996
        %v3805 = vpop.f32.mrf.mxu0
        %v3806 = vadd.f32 0.0, %v3805
        %v3807 = vpop.f32.mrf.mxu0
        %v3808 = vpop.f32.mrf.mxu0
        %v3809 = vadd.f32 0.0, %v3808
        %v3810 = vpop.f32.mrf.mxu0
        %3811 = vmatprep.mubr.bf16.mxu0 0
        %3812 = vmatmul.mubr.bf16.gmra.mxu0 %v1999
        %v3813 = vpop.f32.mrf.mxu0
        %v3814 = vadd.f32 0.0, %v3813
        %v3815 = vpop.f32.mrf.mxu0
        %v3816 = vpop.f32.mrf.mxu0
        %v3817 = vadd.f32 0.0, %v3816
        %v3818 = vpop.f32.mrf.mxu0
        %3819 = vmatprep.mubr.bf16.mxu0 0
        %3820 = vmatmul.mubr.bf16.gmra.mxu0 %v2956
        %v3821 = vpop.f32.mrf.mxu0
        %v3822 = vadd.f32 0.0, %v3821
        %v3823 = vpop.f32.mrf.mxu0
        %v3824 = vpop.f32.mrf.mxu0
        %v3825 = vadd.f32 0.0, %v3824
        %v3826 = vpop.f32.mrf.mxu0
        %3827 = vdwg.mxu0
        %v3828 = vadd.f32 %v2051, %v3008
        %v3829 = vadd.f32 %v2053, %v3010
        %v3830 = vadd.f32 %v2354, %v3311
        %v3831 = vadd.f32 %v2356, %v3313
        %v3832 = vadd.f32 %v2657, %v3614
        %v3833 = vadd.f32 %v2055, %v3012
        %v3834 = vadd.f32 %v2057, %v3014
        %v3835 = vadd.f32 %v2358, %v3315
        %v3836 = vadd.f32 %v2360, %v3317
        %v3837 = vadd.f32 %v2660, %v3617
        %v3838 = vadd.f32 %v2061, %v3018
        %v3839 = vadd.f32 %v2063, %v3020
        %v3840 = vadd.f32 %v2364, %v3321
        %v3841 = vadd.f32 %v2366, %v3323
        %v3842 = vadd.f32 %v2665, %v3622
        %v3843 = vadd.f32 %v2065, %v3022
        %v3844 = vadd.f32 %v2067, %v3024
        %v3845 = vadd.f32 %v2368, %v3325
        %v3846 = vadd.f32 %v2370, %v3327
        %v3847 = vadd.f32 %v2668, %v3625
        %v3848 = vadd.f32 %v2071, %v3028
        %v3849 = vadd.f32 %v2073, %v3030
        %v3850 = vadd.f32 %v2374, %v3331
        %v3851 = vadd.f32 %v2376, %v3333
        %v3852 = vadd.f32 %v2673, %v3630
        %v3853 = vadd.f32 %v2075, %v3032
        %v3854 = vadd.f32 %v2077, %v3034
        %v3855 = vadd.f32 %v2378, %v3335
        %v3856 = vadd.f32 %v2380, %v3337
        %v3857 = vadd.f32 %v2676, %v3633
        %v3858 = vadd.f32 %v2081, %v3038
        %v3859 = vadd.f32 %v2083, %v3040
        %v3860 = vadd.f32 %v2384, %v3341
        %v3861 = vadd.f32 %v2386, %v3343
        %v3862 = vadd.f32 %v2681, %v3638
        %v3863 = vadd.f32 %v2085, %v3042
        %v3864 = vadd.f32 %v2087, %v3044
        %v3865 = vadd.f32 %v2388, %v3345
        %v3866 = vadd.f32 %v2390, %v3347
        %v3867 = vadd.f32 %v2684, %v3641
        %v3868 = vadd.f32 %v2091, %v3048
        %v3869 = vadd.f32 %v2093, %v3050
        %v3870 = vadd.f32 %v2394, %v3351
        %v3871 = vadd.f32 %v2396, %v3353
        %v3872 = vadd.f32 %v2689, %v3646
        %v3873 = vadd.f32 %v2095, %v3052
        %v3874 = vadd.f32 %v2097, %v3054
        %v3875 = vadd.f32 %v2398, %v3355
        %v3876 = vadd.f32 %v2400, %v3357
        %v3877 = vadd.f32 %v2692, %v3649
        %v3878 = vadd.f32 %v2101, %v3058
        %v3879 = vadd.f32 %v2103, %v3060
        %v3880 = vadd.f32 %v2404, %v3361
        %v3881 = vadd.f32 %v2406, %v3363
        %v3882 = vadd.f32 %v2697, %v3654
        %v3883 = vadd.f32 %v2105, %v3062
        %v3884 = vadd.f32 %v2107, %v3064
        %v3885 = vadd.f32 %v2408, %v3365
        %v3886 = vadd.f32 %v2410, %v3367
        %v3887 = vadd.f32 %v2700, %v3657
        %v3888 = vadd.f32 %v2111, %v3068
        %v3889 = vadd.f32 %v2113, %v3070
        %v3890 = vadd.f32 %v2414, %v3371
        %v3891 = vadd.f32 %v2416, %v3373
        %v3892 = vadd.f32 %v2705, %v3662
        %v3893 = vadd.f32 %v2115, %v3072
        %v3894 = vadd.f32 %v2117, %v3074
        %v3895 = vadd.f32 %v2418, %v3375
        %v3896 = vadd.f32 %v2420, %v3377
        %v3897 = vadd.f32 %v2708, %v3665
        %v3898 = vadd.f32 %v2121, %v3078
        %v3899 = vadd.f32 %v2123, %v3080
        %v3900 = vadd.f32 %v2424, %v3381
        %v3901 = vadd.f32 %v2426, %v3383
        %v3902 = vadd.f32 %v2713, %v3670
        %v3903 = vadd.f32 %v2125, %v3082
        %v3904 = vadd.f32 %v2127, %v3084
        %v3905 = vadd.f32 %v2428, %v3385
        %v3906 = vadd.f32 %v2430, %v3387
        %v3907 = vadd.f32 %v2716, %v3673
        %v3908 = vadd.f32 %v2131, %v3088
        %v3909 = vadd.f32 %v2133, %v3090
        %v3910 = vadd.f32 %v2434, %v3391
        %v3911 = vadd.f32 %v2436, %v3393
        %v3912 = vadd.f32 %v2721, %v3678
        %v3913 = vadd.f32 %v2135, %v3092
        %v3914 = vadd.f32 %v2137, %v3094
        %v3915 = vadd.f32 %v2438, %v3395
        %v3916 = vadd.f32 %v2440, %v3397
        %v3917 = vadd.f32 %v2724, %v3681
        %v3918 = vadd.f32 %v2141, %v3098
        %v3919 = vadd.f32 %v2143, %v3100
        %v3920 = vadd.f32 %v2444, %v3401
        %v3921 = vadd.f32 %v2446, %v3403
        %v3922 = vadd.f32 %v2729, %v3686
        %v3923 = vadd.f32 %v2145, %v3102
        %v3924 = vadd.f32 %v2147, %v3104
        %v3925 = vadd.f32 %v2448, %v3405
        %v3926 = vadd.f32 %v2450, %v3407
        %v3927 = vadd.f32 %v2732, %v3689
        %v3928 = vadd.f32 %v2151, %v3108
        %v3929 = vadd.f32 %v2153, %v3110
        %v3930 = vadd.f32 %v2454, %v3411
        %v3931 = vadd.f32 %v2456, %v3413
        %v3932 = vadd.f32 %v2737, %v3694
        %v3933 = vadd.f32 %v2155, %v3112
        %v3934 = vadd.f32 %v2157, %v3114
        %v3935 = vadd.f32 %v2458, %v3415
        %v3936 = vadd.f32 %v2460, %v3417
        %v3937 = vadd.f32 %v2740, %v3697
        %v3938 = vadd.f32 %v2161, %v3118
        %v3939 = vadd.f32 %v2163, %v3120
        %v3940 = vadd.f32 %v2464, %v3421
        %v3941 = vadd.f32 %v2466, %v3423
        %v3942 = vadd.f32 %v2745, %v3702
        %v3943 = vadd.f32 %v2165, %v3122
        %v3944 = vadd.f32 %v2167, %v3124
        %v3945 = vadd.f32 %v2468, %v3425
        %v3946 = vadd.f32 %v2470, %v3427
        %v3947 = vadd.f32 %v2748, %v3705
        %v3948 = vadd.f32 %v2171, %v3128
        %v3949 = vadd.f32 %v2173, %v3130
        %v3950 = vadd.f32 %v2474, %v3431
        %v3951 = vadd.f32 %v2476, %v3433
        %v3952 = vadd.f32 %v2753, %v3710
        %v3953 = vadd.f32 %v2175, %v3132
        %v3954 = vadd.f32 %v2177, %v3134
        %v3955 = vadd.f32 %v2478, %v3435
        %v3956 = vadd.f32 %v2480, %v3437
        %v3957 = vadd.f32 %v2756, %v3713
        %v3958 = vadd.f32 %v2181, %v3138
        %v3959 = vadd.f32 %v2183, %v3140
        %v3960 = vadd.f32 %v2484, %v3441
        %v3961 = vadd.f32 %v2486, %v3443
        %v3962 = vadd.f32 %v2761, %v3718
        %v3963 = vadd.f32 %v2185, %v3142
        %v3964 = vadd.f32 %v2187, %v3144
        %v3965 = vadd.f32 %v2488, %v3445
        %v3966 = vadd.f32 %v2490, %v3447
        %v3967 = vadd.f32 %v2764, %v3721
        %v3968 = vadd.f32 %v2191, %v3148
        %v3969 = vadd.f32 %v2193, %v3150
        %v3970 = vadd.f32 %v2494, %v3451
        %v3971 = vadd.f32 %v2496, %v3453
        %v3972 = vadd.f32 %v2769, %v3726
        %v3973 = vadd.f32 %v2195, %v3152
        %v3974 = vadd.f32 %v2197, %v3154
        %v3975 = vadd.f32 %v2498, %v3455
        %v3976 = vadd.f32 %v2500, %v3457
        %v3977 = vadd.f32 %v2772, %v3729
        %v3978 = vadd.f32 %v2201, %v3158
        %v3979 = vadd.f32 %v2203, %v3160
        %v3980 = vadd.f32 %v2504, %v3461
        %v3981 = vadd.f32 %v2506, %v3463
        %v3982 = vadd.f32 %v2777, %v3734
        %v3983 = vadd.f32 %v2205, %v3162
        %v3984 = vadd.f32 %v2207, %v3164
        %v3985 = vadd.f32 %v2508, %v3465
        %v3986 = vadd.f32 %v2510, %v3467
        %v3987 = vadd.f32 %v2780, %v3737
        %v3988 = vadd.f32 %v2211, %v3168
        %v3989 = vadd.f32 %v2213, %v3170
        %v3990 = vadd.f32 %v2514, %v3471
        %v3991 = vadd.f32 %v2516, %v3473
        %v3992 = vadd.f32 %v2785, %v3742
        %v3993 = vadd.f32 %v2215, %v3172
        %v3994 = vadd.f32 %v2217, %v3174
        %v3995 = vadd.f32 %v2518, %v3475
        %v3996 = vadd.f32 %v2520, %v3477
        %v3997 = vadd.f32 %v2788, %v3745
        %v3998 = vadd.f32 %v2221, %v3178
        %v3999 = vadd.f32 %v2223, %v3180
        %v4000 = vadd.f32 %v2524, %v3481
        %v4001 = vadd.f32 %v2526, %v3483
        %v4002 = vadd.f32 %v2793, %v3750
        %v4003 = vadd.f32 %v2225, %v3182
        %v4004 = vadd.f32 %v2227, %v3184
        %v4005 = vadd.f32 %v2528, %v3485
        %v4006 = vadd.f32 %v2530, %v3487
        %v4007 = vadd.f32 %v2796, %v3753
        %v4008 = vadd.f32 %v2231, %v3188
        %v4009 = vadd.f32 %v2233, %v3190
        %v4010 = vadd.f32 %v2534, %v3491
        %v4011 = vadd.f32 %v2536, %v3493
        %v4012 = vadd.f32 %v2801, %v3758
        %v4013 = vadd.f32 %v2235, %v3192
        %v4014 = vadd.f32 %v2237, %v3194
        %v4015 = vadd.f32 %v2538, %v3495
        %v4016 = vadd.f32 %v2540, %v3497
        %v4017 = vadd.f32 %v2804, %v3761
        %v4018 = vadd.f32 %v2241, %v3198
        %v4019 = vadd.f32 %v2243, %v3200
        %v4020 = vadd.f32 %v2544, %v3501
        %v4021 = vadd.f32 %v2546, %v3503
        %v4022 = vadd.f32 %v2809, %v3766
        %v4023 = vadd.f32 %v2245, %v3202
        %v4024 = vadd.f32 %v2247, %v3204
        %v4025 = vadd.f32 %v2548, %v3505
        %v4026 = vadd.f32 %v2550, %v3507
        %v4027 = vadd.f32 %v2812, %v3769
        %v4028 = vadd.f32 %v2251, %v3208
        %v4029 = vadd.f32 %v2253, %v3210
        %v4030 = vadd.f32 %v2554, %v3511
        %v4031 = vadd.f32 %v2556, %v3513
        %v4032 = vadd.f32 %v2817, %v3774
        %v4033 = vadd.f32 %v2255, %v3212
        %v4034 = vadd.f32 %v2257, %v3214
        %v4035 = vadd.f32 %v2558, %v3515
        %v4036 = vadd.f32 %v2560, %v3517
        %v4037 = vadd.f32 %v2820, %v3777
        %v4038 = vadd.f32 %v2261, %v3218
        %v4039 = vadd.f32 %v2263, %v3220
        %v4040 = vadd.f32 %v2564, %v3521
        %v4041 = vadd.f32 %v2566, %v3523
        %v4042 = vadd.f32 %v2825, %v3782
        %v4043 = vadd.f32 %v2265, %v3222
        %v4044 = vadd.f32 %v2267, %v3224
        %v4045 = vadd.f32 %v2568, %v3525
        %v4046 = vadd.f32 %v2570, %v3527
        %v4047 = vadd.f32 %v2828, %v3785
        %v4048 = vadd.f32 %v2271, %v3228
        %v4049 = vadd.f32 %v2273, %v3230
        %v4050 = vadd.f32 %v2574, %v3531
        %v4051 = vadd.f32 %v2576, %v3533
        %v4052 = vadd.f32 %v2833, %v3790
        %v4053 = vadd.f32 %v2275, %v3232
        %v4054 = vadd.f32 %v2277, %v3234
        %v4055 = vadd.f32 %v2578, %v3535
        %v4056 = vadd.f32 %v2580, %v3537
        %v4057 = vadd.f32 %v2836, %v3793
        %v4058 = vadd.f32 %v2281, %v3238
        %v4059 = vadd.f32 %v2283, %v3240
        %v4060 = vadd.f32 %v2584, %v3541
        %v4061 = vadd.f32 %v2586, %v3543
        %v4062 = vadd.f32 %v2841, %v3798
        %v4063 = vadd.f32 %v2285, %v3242
        %v4064 = vadd.f32 %v2287, %v3244
        %v4065 = vadd.f32 %v2588, %v3545
        %v4066 = vadd.f32 %v2590, %v3547
        %v4067 = vadd.f32 %v2844, %v3801
        %v4068 = vadd.f32 %v2291, %v3248
        %v4069 = vadd.f32 %v2293, %v3250
        %v4070 = vadd.f32 %v2594, %v3551
        %v4071 = vadd.f32 %v2596, %v3553
        %v4072 = vadd.f32 %v2849, %v3806
        %v4073 = vadd.f32 %v2295, %v3252
        %v4074 = vadd.f32 %v2297, %v3254
        %v4075 = vadd.f32 %v2598, %v3555
        %v4076 = vadd.f32 %v2600, %v3557
        %v4077 = vadd.f32 %v2852, %v3809
        %v4078 = vadd.f32 %v2301, %v3258
        %v4079 = vadd.f32 %v2303, %v3260
        %v4080 = vadd.f32 %v2604, %v3561
        %v4081 = vadd.f32 %v2606, %v3563
        %v4082 = vadd.f32 %v2857, %v3814
        %v4083 = vadd.f32 %v2305, %v3262
        %v4084 = vadd.f32 %v2307, %v3264
        %v4085 = vadd.f32 %v2608, %v3565
        %v4086 = vadd.f32 %v2610, %v3567
        %v4087 = vadd.f32 %v2860, %v3817
        %v4088 = vadd.f32 %v2311, %v3268
        %v4089 = vadd.f32 %v2313, %v3270
        %v4090 = vadd.f32 %v2614, %v3571
        %v4091 = vadd.f32 %v2616, %v3573
        %v4092 = vadd.f32 %v2865, %v3822
        %v4093 = vadd.f32 %v2315, %v3272
        %v4094 = vadd.f32 %v2317, %v3274
        %v4095 = vadd.f32 %v2618, %v3575
        %v4096 = vadd.f32 %v2620, %v3577
        %v4097 = vadd.f32 %v2868, %v3825
        %v4098 = vld [vmem:[%s2] sm:$0x1f]
        %v4100 = vlaneseq
        %v4101 = vshrl.u32 %v4100, 7
        %v4102 = vsub.s32 0, %v4101
        %v4103 = vrot.slane %v4098, %v4102
        %v4104 = vlaneseq
        %v4105 = vshrl.u32 %v4104, 7
        %v4106 = vsub.s32 1, %v4105
        %v4107 = vrot.slane %v4098, %v4106
        %v4108 = vlaneseq
        %v4109 = vshrl.u32 %v4108, 7
        %v4110 = vsub.s32 2, %v4109
        %v4111 = vrot.slane %v4098, %v4110
        %v4112 = vlaneseq
        %v4113 = vshrl.u32 %v4112, 7
        %v4114 = vsub.s32 3, %v4113
        %v4115 = vrot.slane %v4098, %v4114
        %v4116 = vlaneseq
        %v4117 = vshrl.u32 %v4116, 7
        %v4118 = vsub.s32 4, %v4117
        %v4119 = vrot.slane %v4098, %v4118
        %v4125 = vadd.f32 %v3828, %v4103
        %v4126 = vadd.f32 %v3829, %v4107
        %v4127 = vadd.f32 %v3830, %v4111
        %v4128 = vadd.f32 %v3831, %v4115
        %v4129 = vadd.f32 %v3832, %v4119
        %v4130 = vadd.f32 %v3833, %v4103
        %v4131 = vadd.f32 %v3834, %v4107
        %v4132 = vadd.f32 %v3835, %v4111
        %v4133 = vadd.f32 %v3836, %v4115
        %v4134 = vadd.f32 %v3837, %v4119
        %v4135 = vadd.f32 %v3838, %v4103
        %v4136 = vadd.f32 %v3839, %v4107
        %v4137 = vadd.f32 %v3840, %v4111
        %v4138 = vadd.f32 %v3841, %v4115
        %v4139 = vadd.f32 %v3842, %v4119
        %v4140 = vadd.f32 %v3843, %v4103
        %v4141 = vadd.f32 %v3844, %v4107
        %v4142 = vadd.f32 %v3845, %v4111
        %v4143 = vadd.f32 %v3846, %v4115
        %v4144 = vadd.f32 %v3847, %v4119
        %v4145 = vadd.f32 %v3848, %v4103
        %v4146 = vadd.f32 %v3849, %v4107
        %v4147 = vadd.f32 %v3850, %v4111
        %v4148 = vadd.f32 %v3851, %v4115
        %v4149 = vadd.f32 %v3852, %v4119
        %v4150 = vadd.f32 %v3853, %v4103
        %v4151 = vadd.f32 %v3854, %v4107
        %v4152 = vadd.f32 %v3855, %v4111
        %v4153 = vadd.f32 %v3856, %v4115
        %v4154 = vadd.f32 %v3857, %v4119
        %v4155 = vadd.f32 %v3858, %v4103
        %v4156 = vadd.f32 %v3859, %v4107
        %v4157 = vadd.f32 %v3860, %v4111
        %v4158 = vadd.f32 %v3861, %v4115
        %v4159 = vadd.f32 %v3862, %v4119
        %v4160 = vadd.f32 %v3863, %v4103
        %v4161 = vadd.f32 %v3864, %v4107
        %v4162 = vadd.f32 %v3865, %v4111
        %v4163 = vadd.f32 %v3866, %v4115
        %v4164 = vadd.f32 %v3867, %v4119
        %v4165 = vadd.f32 %v3868, %v4103
        %v4166 = vadd.f32 %v3869, %v4107
        %v4167 = vadd.f32 %v3870, %v4111
        %v4168 = vadd.f32 %v3871, %v4115
        %v4169 = vadd.f32 %v3872, %v4119
        %v4170 = vadd.f32 %v3873, %v4103
        %v4171 = vadd.f32 %v3874, %v4107
        %v4172 = vadd.f32 %v3875, %v4111
        %v4173 = vadd.f32 %v3876, %v4115
        %v4174 = vadd.f32 %v3877, %v4119
        %v4175 = vadd.f32 %v3878, %v4103
        %v4176 = vadd.f32 %v3879, %v4107
        %v4177 = vadd.f32 %v3880, %v4111
        %v4178 = vadd.f32 %v3881, %v4115
        %v4179 = vadd.f32 %v3882, %v4119
        %v4180 = vadd.f32 %v3883, %v4103
        %v4181 = vadd.f32 %v3884, %v4107
        %v4182 = vadd.f32 %v3885, %v4111
        %v4183 = vadd.f32 %v3886, %v4115
        %v4184 = vadd.f32 %v3887, %v4119
        %v4185 = vadd.f32 %v3888, %v4103
        %v4186 = vadd.f32 %v3889, %v4107
        %v4187 = vadd.f32 %v3890, %v4111
        %v4188 = vadd.f32 %v3891, %v4115
        %v4189 = vadd.f32 %v3892, %v4119
        %v4190 = vadd.f32 %v3893, %v4103
        %v4191 = vadd.f32 %v3894, %v4107
        %v4192 = vadd.f32 %v3895, %v4111
        %v4193 = vadd.f32 %v3896, %v4115
        %v4194 = vadd.f32 %v3897, %v4119
        %v4195 = vadd.f32 %v3898, %v4103
        %v4196 = vadd.f32 %v3899, %v4107
        %v4197 = vadd.f32 %v3900, %v4111
        %v4198 = vadd.f32 %v3901, %v4115
        %v4199 = vadd.f32 %v3902, %v4119
        %v4200 = vadd.f32 %v3903, %v4103
        %v4201 = vadd.f32 %v3904, %v4107
        %v4202 = vadd.f32 %v3905, %v4111
        %v4203 = vadd.f32 %v3906, %v4115
        %v4204 = vadd.f32 %v3907, %v4119
        %v4205 = vadd.f32 %v3908, %v4103
        %v4206 = vadd.f32 %v3909, %v4107
        %v4207 = vadd.f32 %v3910, %v4111
        %v4208 = vadd.f32 %v3911, %v4115
        %v4209 = vadd.f32 %v3912, %v4119
        %v4210 = vadd.f32 %v3913, %v4103
        %v4211 = vadd.f32 %v3914, %v4107
        %v4212 = vadd.f32 %v3915, %v4111
        %v4213 = vadd.f32 %v3916, %v4115
        %v4214 = vadd.f32 %v3917, %v4119
        %v4215 = vadd.f32 %v3918, %v4103
        %v4216 = vadd.f32 %v3919, %v4107
        %v4217 = vadd.f32 %v3920, %v4111
        %v4218 = vadd.f32 %v3921, %v4115
        %v4219 = vadd.f32 %v3922, %v4119
        %v4220 = vadd.f32 %v3923, %v4103
        %v4221 = vadd.f32 %v3924, %v4107
        %v4222 = vadd.f32 %v3925, %v4111
        %v4223 = vadd.f32 %v3926, %v4115
        %v4224 = vadd.f32 %v3927, %v4119
        %v4225 = vadd.f32 %v3928, %v4103
        %v4226 = vadd.f32 %v3929, %v4107
        %v4227 = vadd.f32 %v3930, %v4111
        %v4228 = vadd.f32 %v3931, %v4115
        %v4229 = vadd.f32 %v3932, %v4119
        %v4230 = vadd.f32 %v3933, %v4103
        %v4231 = vadd.f32 %v3934, %v4107
        %v4232 = vadd.f32 %v3935, %v4111
        %v4233 = vadd.f32 %v3936, %v4115
        %v4234 = vadd.f32 %v3937, %v4119
        %v4235 = vadd.f32 %v3938, %v4103
        %v4236 = vadd.f32 %v3939, %v4107
        %v4237 = vadd.f32 %v3940, %v4111
        %v4238 = vadd.f32 %v3941, %v4115
        %v4239 = vadd.f32 %v3942, %v4119
        %v4240 = vadd.f32 %v3943, %v4103
        %v4241 = vadd.f32 %v3944, %v4107
        %v4242 = vadd.f32 %v3945, %v4111
        %v4243 = vadd.f32 %v3946, %v4115
        %v4244 = vadd.f32 %v3947, %v4119
        %v4245 = vadd.f32 %v3948, %v4103
        %v4246 = vadd.f32 %v3949, %v4107
        %v4247 = vadd.f32 %v3950, %v4111
        %v4248 = vadd.f32 %v3951, %v4115
        %v4249 = vadd.f32 %v3952, %v4119
        %v4250 = vadd.f32 %v3953, %v4103
        %v4251 = vadd.f32 %v3954, %v4107
        %v4252 = vadd.f32 %v3955, %v4111
        %v4253 = vadd.f32 %v3956, %v4115
        %v4254 = vadd.f32 %v3957, %v4119
        %v4255 = vadd.f32 %v3958, %v4103
        %v4256 = vadd.f32 %v3959, %v4107
        %v4257 = vadd.f32 %v3960, %v4111
        %v4258 = vadd.f32 %v3961, %v4115
        %v4259 = vadd.f32 %v3962, %v4119
        %v4260 = vadd.f32 %v3963, %v4103
        %v4261 = vadd.f32 %v3964, %v4107
        %v4262 = vadd.f32 %v3965, %v4111
        %v4263 = vadd.f32 %v3966, %v4115
        %v4264 = vadd.f32 %v3967, %v4119
        %v4265 = vadd.f32 %v3968, %v4103
        %v4266 = vadd.f32 %v3969, %v4107
        %v4267 = vadd.f32 %v3970, %v4111
        %v4268 = vadd.f32 %v3971, %v4115
        %v4269 = vadd.f32 %v3972, %v4119
        %v4270 = vadd.f32 %v3973, %v4103
        %v4271 = vadd.f32 %v3974, %v4107
        %v4272 = vadd.f32 %v3975, %v4111
        %v4273 = vadd.f32 %v3976, %v4115
        %v4274 = vadd.f32 %v3977, %v4119
        %v4275 = vadd.f32 %v3978, %v4103
        %v4276 = vadd.f32 %v3979, %v4107
        %v4277 = vadd.f32 %v3980, %v4111
        %v4278 = vadd.f32 %v3981, %v4115
        %v4279 = vadd.f32 %v3982, %v4119
        %v4280 = vadd.f32 %v3983, %v4103
        %v4281 = vadd.f32 %v3984, %v4107
        %v4282 = vadd.f32 %v3985, %v4111
        %v4283 = vadd.f32 %v3986, %v4115
        %v4284 = vadd.f32 %v3987, %v4119
        %v4285 = vadd.f32 %v3988, %v4103
        %v4286 = vadd.f32 %v3989, %v4107
        %v4287 = vadd.f32 %v3990, %v4111
        %v4288 = vadd.f32 %v3991, %v4115
        %v4289 = vadd.f32 %v3992, %v4119
        %v4290 = vadd.f32 %v3993, %v4103
        %v4291 = vadd.f32 %v3994, %v4107
        %v4292 = vadd.f32 %v3995, %v4111
        %v4293 = vadd.f32 %v3996, %v4115
        %v4294 = vadd.f32 %v3997, %v4119
        %v4295 = vadd.f32 %v3998, %v4103
        %v4296 = vadd.f32 %v3999, %v4107
        %v4297 = vadd.f32 %v4000, %v4111
        %v4298 = vadd.f32 %v4001, %v4115
        %v4299 = vadd.f32 %v4002, %v4119
        %v4300 = vadd.f32 %v4003, %v4103
        %v4301 = vadd.f32 %v4004, %v4107
        %v4302 = vadd.f32 %v4005, %v4111
        %v4303 = vadd.f32 %v4006, %v4115
        %v4304 = vadd.f32 %v4007, %v4119
        %v4305 = vadd.f32 %v4008, %v4103
        %v4306 = vadd.f32 %v4009, %v4107
        %v4307 = vadd.f32 %v4010, %v4111
        %v4308 = vadd.f32 %v4011, %v4115
        %v4309 = vadd.f32 %v4012, %v4119
        %v4310 = vadd.f32 %v4013, %v4103
        %v4311 = vadd.f32 %v4014, %v4107
        %v4312 = vadd.f32 %v4015, %v4111
        %v4313 = vadd.f32 %v4016, %v4115
        %v4314 = vadd.f32 %v4017, %v4119
        %v4315 = vadd.f32 %v4018, %v4103
        %v4316 = vadd.f32 %v4019, %v4107
        %v4317 = vadd.f32 %v4020, %v4111
        %v4318 = vadd.f32 %v4021, %v4115
        %v4319 = vadd.f32 %v4022, %v4119
        %v4320 = vadd.f32 %v4023, %v4103
        %v4321 = vadd.f32 %v4024, %v4107
        %v4322 = vadd.f32 %v4025, %v4111
        %v4323 = vadd.f32 %v4026, %v4115
        %v4324 = vadd.f32 %v4027, %v4119
        %v4325 = vadd.f32 %v4028, %v4103
        %v4326 = vadd.f32 %v4029, %v4107
        %v4327 = vadd.f32 %v4030, %v4111
        %v4328 = vadd.f32 %v4031, %v4115
        %v4329 = vadd.f32 %v4032, %v4119
        %v4330 = vadd.f32 %v4033, %v4103
        %v4331 = vadd.f32 %v4034, %v4107
        %v4332 = vadd.f32 %v4035, %v4111
        %v4333 = vadd.f32 %v4036, %v4115
        %v4334 = vadd.f32 %v4037, %v4119
        %v4335 = vadd.f32 %v4038, %v4103
        %v4336 = vadd.f32 %v4039, %v4107
        %v4337 = vadd.f32 %v4040, %v4111
        %v4338 = vadd.f32 %v4041, %v4115
        %v4339 = vadd.f32 %v4042, %v4119
        %v4340 = vadd.f32 %v4043, %v4103
        %v4341 = vadd.f32 %v4044, %v4107
        %v4342 = vadd.f32 %v4045, %v4111
        %v4343 = vadd.f32 %v4046, %v4115
        %v4344 = vadd.f32 %v4047, %v4119
        %v4345 = vadd.f32 %v4048, %v4103
        %v4346 = vadd.f32 %v4049, %v4107
        %v4347 = vadd.f32 %v4050, %v4111
        %v4348 = vadd.f32 %v4051, %v4115
        %v4349 = vadd.f32 %v4052, %v4119
        %v4350 = vadd.f32 %v4053, %v4103
        %v4351 = vadd.f32 %v4054, %v4107
        %v4352 = vadd.f32 %v4055, %v4111
        %v4353 = vadd.f32 %v4056, %v4115
        %v4354 = vadd.f32 %v4057, %v4119
        %v4355 = vadd.f32 %v4058, %v4103
        %v4356 = vadd.f32 %v4059, %v4107
        %v4357 = vadd.f32 %v4060, %v4111
        %v4358 = vadd.f32 %v4061, %v4115
        %v4359 = vadd.f32 %v4062, %v4119
        %v4360 = vadd.f32 %v4063, %v4103
        %v4361 = vadd.f32 %v4064, %v4107
        %v4362 = vadd.f32 %v4065, %v4111
        %v4363 = vadd.f32 %v4066, %v4115
        %v4364 = vadd.f32 %v4067, %v4119
        %v4365 = vadd.f32 %v4068, %v4103
        %v4366 = vadd.f32 %v4069, %v4107
        %v4367 = vadd.f32 %v4070, %v4111
        %v4368 = vadd.f32 %v4071, %v4115
        %v4369 = vadd.f32 %v4072, %v4119
        %v4370 = vadd.f32 %v4073, %v4103
        %v4371 = vadd.f32 %v4074, %v4107
        %v4372 = vadd.f32 %v4075, %v4111
        %v4373 = vadd.f32 %v4076, %v4115
        %v4374 = vadd.f32 %v4077, %v4119
        %v4375 = vadd.f32 %v4078, %v4103
        %v4376 = vadd.f32 %v4079, %v4107
        %v4377 = vadd.f32 %v4080, %v4111
        %v4378 = vadd.f32 %v4081, %v4115
        %v4379 = vadd.f32 %v4082, %v4119
        %v4380 = vadd.f32 %v4083, %v4103
        %v4381 = vadd.f32 %v4084, %v4107
        %v4382 = vadd.f32 %v4085, %v4111
        %v4383 = vadd.f32 %v4086, %v4115
        %v4384 = vadd.f32 %v4087, %v4119
        %v4385 = vadd.f32 %v4088, %v4103
        %v4386 = vadd.f32 %v4089, %v4107
        %v4387 = vadd.f32 %v4090, %v4111
        %v4388 = vadd.f32 %v4091, %v4115
        %v4389 = vadd.f32 %v4092, %v4119
        %v4390 = vadd.f32 %v4093, %v4103
        %v4391 = vadd.f32 %v4094, %v4107
        %v4392 = vadd.f32 %v4095, %v4111
        %v4393 = vadd.f32 %v4096, %v4115
        %v4394 = vadd.f32 %v4097, %v4119
        %v4395 = vmax.f32 %v4125, 0.0
        %v4396 = vmax.f32 %v4126, 0.0
        %v4397 = vmax.f32 %v4127, 0.0
        %v4398 = vmax.f32 %v4128, 0.0
        %v4399 = vmax.f32 %v4129, 0.0
        %v4400 = vmax.f32 %v4130, 0.0
        %v4401 = vmax.f32 %v4131, 0.0
        %v4402 = vmax.f32 %v4132, 0.0
        %v4403 = vmax.f32 %v4133, 0.0
        %v4404 = vmax.f32 %v4134, 0.0
        %v4405 = vmax.f32 %v4135, 0.0
        %v4406 = vmax.f32 %v4136, 0.0
        %v4407 = vmax.f32 %v4137, 0.0
        %v4408 = vmax.f32 %v4138, 0.0
        %v4409 = vmax.f32 %v4139, 0.0
        %v4410 = vmax.f32 %v4140, 0.0
        %v4411 = vmax.f32 %v4141, 0.0
        %v4412 = vmax.f32 %v4142, 0.0
        %v4413 = vmax.f32 %v4143, 0.0
        %v4414 = vmax.f32 %v4144, 0.0
        %v4415 = vmax.f32 %v4145, 0.0
        %v4416 = vmax.f32 %v4146, 0.0
        %v4417 = vmax.f32 %v4147, 0.0
        %v4418 = vmax.f32 %v4148, 0.0
        %v4419 = vmax.f32 %v4149, 0.0
        %v4420 = vmax.f32 %v4150, 0.0
        %v4421 = vmax.f32 %v4151, 0.0
        %v4422 = vmax.f32 %v4152, 0.0
        %v4423 = vmax.f32 %v4153, 0.0
        %v4424 = vmax.f32 %v4154, 0.0
        %v4425 = vmax.f32 %v4155, 0.0
        %v4426 = vmax.f32 %v4156, 0.0
        %v4427 = vmax.f32 %v4157, 0.0
        %v4428 = vmax.f32 %v4158, 0.0
        %v4429 = vmax.f32 %v4159, 0.0
        %v4430 = vmax.f32 %v4160, 0.0
        %v4431 = vmax.f32 %v4161, 0.0
        %v4432 = vmax.f32 %v4162, 0.0
        %v4433 = vmax.f32 %v4163, 0.0
        %v4434 = vmax.f32 %v4164, 0.0
        %v4435 = vmax.f32 %v4165, 0.0
        %v4436 = vmax.f32 %v4166, 0.0
        %v4437 = vmax.f32 %v4167, 0.0
        %v4438 = vmax.f32 %v4168, 0.0
        %v4439 = vmax.f32 %v4169, 0.0
        %v4440 = vmax.f32 %v4170, 0.0
        %v4441 = vmax.f32 %v4171, 0.0
        %v4442 = vmax.f32 %v4172, 0.0
        %v4443 = vmax.f32 %v4173, 0.0
        %v4444 = vmax.f32 %v4174, 0.0
        %v4445 = vmax.f32 %v4175, 0.0
        %v4446 = vmax.f32 %v4176, 0.0
        %v4447 = vmax.f32 %v4177, 0.0
        %v4448 = vmax.f32 %v4178, 0.0
        %v4449 = vmax.f32 %v4179, 0.0
        %v4450 = vmax.f32 %v4180, 0.0
        %v4451 = vmax.f32 %v4181, 0.0
        %v4452 = vmax.f32 %v4182, 0.0
        %v4453 = vmax.f32 %v4183, 0.0
        %v4454 = vmax.f32 %v4184, 0.0
        %v4455 = vmax.f32 %v4185, 0.0
        %v4456 = vmax.f32 %v4186, 0.0
        %v4457 = vmax.f32 %v4187, 0.0
        %v4458 = vmax.f32 %v4188, 0.0
        %v4459 = vmax.f32 %v4189, 0.0
        %v4460 = vmax.f32 %v4190, 0.0
        %v4461 = vmax.f32 %v4191, 0.0
        %v4462 = vmax.f32 %v4192, 0.0
        %v4463 = vmax.f32 %v4193, 0.0
        %v4464 = vmax.f32 %v4194, 0.0
        %v4465 = vmax.f32 %v4195, 0.0
        %v4466 = vmax.f32 %v4196, 0.0
        %v4467 = vmax.f32 %v4197, 0.0
        %v4468 = vmax.f32 %v4198, 0.0
        %v4469 = vmax.f32 %v4199, 0.0
        %v4470 = vmax.f32 %v4200, 0.0
        %v4471 = vmax.f32 %v4201, 0.0
        %v4472 = vmax.f32 %v4202, 0.0
        %v4473 = vmax.f32 %v4203, 0.0
        %v4474 = vmax.f32 %v4204, 0.0
        %v4475 = vmax.f32 %v4205, 0.0
        %v4476 = vmax.f32 %v4206, 0.0
        %v4477 = vmax.f32 %v4207, 0.0
        %v4478 = vmax.f32 %v4208, 0.0
        %v4479 = vmax.f32 %v4209, 0.0
        %v4480 = vmax.f32 %v4210, 0.0
        %v4481 = vmax.f32 %v4211, 0.0
        %v4482 = vmax.f32 %v4212, 0.0
        %v4483 = vmax.f32 %v4213, 0.0
        %v4484 = vmax.f32 %v4214, 0.0
        %v4485 = vmax.f32 %v4215, 0.0
        %v4486 = vmax.f32 %v4216, 0.0
        %v4487 = vmax.f32 %v4217, 0.0
        %v4488 = vmax.f32 %v4218, 0.0
        %v4489 = vmax.f32 %v4219, 0.0
        %v4490 = vmax.f32 %v4220, 0.0
        %v4491 = vmax.f32 %v4221, 0.0
        %v4492 = vmax.f32 %v4222, 0.0
        %v4493 = vmax.f32 %v4223, 0.0
        %v4494 = vmax.f32 %v4224, 0.0
        %v4495 = vmax.f32 %v4225, 0.0
        %v4496 = vmax.f32 %v4226, 0.0
        %v4497 = vmax.f32 %v4227, 0.0
        %v4498 = vmax.f32 %v4228, 0.0
        %v4499 = vmax.f32 %v4229, 0.0
        %v4500 = vmax.f32 %v4230, 0.0
        %v4501 = vmax.f32 %v4231, 0.0
        %v4502 = vmax.f32 %v4232, 0.0
        %v4503 = vmax.f32 %v4233, 0.0
        %v4504 = vmax.f32 %v4234, 0.0
        %v4505 = vmax.f32 %v4235, 0.0
        %v4506 = vmax.f32 %v4236, 0.0
        %v4507 = vmax.f32 %v4237, 0.0
        %v4508 = vmax.f32 %v4238, 0.0
        %v4509 = vmax.f32 %v4239, 0.0
        %v4510 = vmax.f32 %v4240, 0.0
        %v4511 = vmax.f32 %v4241, 0.0
        %v4512 = vmax.f32 %v4242, 0.0
        %v4513 = vmax.f32 %v4243, 0.0
        %v4514 = vmax.f32 %v4244, 0.0
        %v4515 = vmax.f32 %v4245, 0.0
        %v4516 = vmax.f32 %v4246, 0.0
        %v4517 = vmax.f32 %v4247, 0.0
        %v4518 = vmax.f32 %v4248, 0.0
        %v4519 = vmax.f32 %v4249, 0.0
        %v4520 = vmax.f32 %v4250, 0.0
        %v4521 = vmax.f32 %v4251, 0.0
        %v4522 = vmax.f32 %v4252, 0.0
        %v4523 = vmax.f32 %v4253, 0.0
        %v4524 = vmax.f32 %v4254, 0.0
        %v4525 = vmax.f32 %v4255, 0.0
        %v4526 = vmax.f32 %v4256, 0.0
        %v4527 = vmax.f32 %v4257, 0.0
        %v4528 = vmax.f32 %v4258, 0.0
        %v4529 = vmax.f32 %v4259, 0.0
        %v4530 = vmax.f32 %v4260, 0.0
        %v4531 = vmax.f32 %v4261, 0.0
        %v4532 = vmax.f32 %v4262, 0.0
        %v4533 = vmax.f32 %v4263, 0.0
        %v4534 = vmax.f32 %v4264, 0.0
        %v4535 = vmax.f32 %v4265, 0.0
        %v4536 = vmax.f32 %v4266, 0.0
        %v4537 = vmax.f32 %v4267, 0.0
        %v4538 = vmax.f32 %v4268, 0.0
        %v4539 = vmax.f32 %v4269, 0.0
        %v4540 = vmax.f32 %v4270, 0.0
        %v4541 = vmax.f32 %v4271, 0.0
        %v4542 = vmax.f32 %v4272, 0.0
        %v4543 = vmax.f32 %v4273, 0.0
        %v4544 = vmax.f32 %v4274, 0.0
        %v4545 = vmax.f32 %v4275, 0.0
        %v4546 = vmax.f32 %v4276, 0.0
        %v4547 = vmax.f32 %v4277, 0.0
        %v4548 = vmax.f32 %v4278, 0.0
        %v4549 = vmax.f32 %v4279, 0.0
        %v4550 = vmax.f32 %v4280, 0.0
        %v4551 = vmax.f32 %v4281, 0.0
        %v4552 = vmax.f32 %v4282, 0.0
        %v4553 = vmax.f32 %v4283, 0.0
        %v4554 = vmax.f32 %v4284, 0.0
        %v4555 = vmax.f32 %v4285, 0.0
        %v4556 = vmax.f32 %v4286, 0.0
        %v4557 = vmax.f32 %v4287, 0.0
        %v4558 = vmax.f32 %v4288, 0.0
        %v4559 = vmax.f32 %v4289, 0.0
        %v4560 = vmax.f32 %v4290, 0.0
        %v4561 = vmax.f32 %v4291, 0.0
        %v4562 = vmax.f32 %v4292, 0.0
        %v4563 = vmax.f32 %v4293, 0.0
        %v4564 = vmax.f32 %v4294, 0.0
        %v4565 = vmax.f32 %v4295, 0.0
        %v4566 = vmax.f32 %v4296, 0.0
        %v4567 = vmax.f32 %v4297, 0.0
        %v4568 = vmax.f32 %v4298, 0.0
        %v4569 = vmax.f32 %v4299, 0.0
        %v4570 = vmax.f32 %v4300, 0.0
        %v4571 = vmax.f32 %v4301, 0.0
        %v4572 = vmax.f32 %v4302, 0.0
        %v4573 = vmax.f32 %v4303, 0.0
        %v4574 = vmax.f32 %v4304, 0.0
        %v4575 = vmax.f32 %v4305, 0.0
        %v4576 = vmax.f32 %v4306, 0.0
        %v4577 = vmax.f32 %v4307, 0.0
        %v4578 = vmax.f32 %v4308, 0.0
        %v4579 = vmax.f32 %v4309, 0.0
        %v4580 = vmax.f32 %v4310, 0.0
        %v4581 = vmax.f32 %v4311, 0.0
        %v4582 = vmax.f32 %v4312, 0.0
        %v4583 = vmax.f32 %v4313, 0.0
        %v4584 = vmax.f32 %v4314, 0.0
        %v4585 = vmax.f32 %v4315, 0.0
        %v4586 = vmax.f32 %v4316, 0.0
        %v4587 = vmax.f32 %v4317, 0.0
        %v4588 = vmax.f32 %v4318, 0.0
        %v4589 = vmax.f32 %v4319, 0.0
        %v4590 = vmax.f32 %v4320, 0.0
        %v4591 = vmax.f32 %v4321, 0.0
        %v4592 = vmax.f32 %v4322, 0.0
        %v4593 = vmax.f32 %v4323, 0.0
        %v4594 = vmax.f32 %v4324, 0.0
        %v4595 = vmax.f32 %v4325, 0.0
        %v4596 = vmax.f32 %v4326, 0.0
        %v4597 = vmax.f32 %v4327, 0.0
        %v4598 = vmax.f32 %v4328, 0.0
        %v4599 = vmax.f32 %v4329, 0.0
        %v4600 = vmax.f32 %v4330, 0.0
        %v4601 = vmax.f32 %v4331, 0.0
        %v4602 = vmax.f32 %v4332, 0.0
        %v4603 = vmax.f32 %v4333, 0.0
        %v4604 = vmax.f32 %v4334, 0.0
        %v4605 = vmax.f32 %v4335, 0.0
        %v4606 = vmax.f32 %v4336, 0.0
        %v4607 = vmax.f32 %v4337, 0.0
        %v4608 = vmax.f32 %v4338, 0.0
        %v4609 = vmax.f32 %v4339, 0.0
        %v4610 = vmax.f32 %v4340, 0.0
        %v4611 = vmax.f32 %v4341, 0.0
        %v4612 = vmax.f32 %v4342, 0.0
        %v4613 = vmax.f32 %v4343, 0.0
        %v4614 = vmax.f32 %v4344, 0.0
        %v4615 = vmax.f32 %v4345, 0.0
        %v4616 = vmax.f32 %v4346, 0.0
        %v4617 = vmax.f32 %v4347, 0.0
        %v4618 = vmax.f32 %v4348, 0.0
        %v4619 = vmax.f32 %v4349, 0.0
        %v4620 = vmax.f32 %v4350, 0.0
        %v4621 = vmax.f32 %v4351, 0.0
        %v4622 = vmax.f32 %v4352, 0.0
        %v4623 = vmax.f32 %v4353, 0.0
        %v4624 = vmax.f32 %v4354, 0.0
        %v4625 = vmax.f32 %v4355, 0.0
        %v4626 = vmax.f32 %v4356, 0.0
        %v4627 = vmax.f32 %v4357, 0.0
        %v4628 = vmax.f32 %v4358, 0.0
        %v4629 = vmax.f32 %v4359, 0.0
        %v4630 = vmax.f32 %v4360, 0.0
        %v4631 = vmax.f32 %v4361, 0.0
        %v4632 = vmax.f32 %v4362, 0.0
        %v4633 = vmax.f32 %v4363, 0.0
        %v4634 = vmax.f32 %v4364, 0.0
        %v4635 = vmax.f32 %v4365, 0.0
        %v4636 = vmax.f32 %v4366, 0.0
        %v4637 = vmax.f32 %v4367, 0.0
        %v4638 = vmax.f32 %v4368, 0.0
        %v4639 = vmax.f32 %v4369, 0.0
        %v4640 = vmax.f32 %v4370, 0.0
        %v4641 = vmax.f32 %v4371, 0.0
        %v4642 = vmax.f32 %v4372, 0.0
        %v4643 = vmax.f32 %v4373, 0.0
        %v4644 = vmax.f32 %v4374, 0.0
        %v4645 = vmax.f32 %v4375, 0.0
        %v4646 = vmax.f32 %v4376, 0.0
        %v4647 = vmax.f32 %v4377, 0.0
        %v4648 = vmax.f32 %v4378, 0.0
        %v4649 = vmax.f32 %v4379, 0.0
        %v4650 = vmax.f32 %v4380, 0.0
        %v4651 = vmax.f32 %v4381, 0.0
        %v4652 = vmax.f32 %v4382, 0.0
        %v4653 = vmax.f32 %v4383, 0.0
        %v4654 = vmax.f32 %v4384, 0.0
        %v4655 = vmax.f32 %v4385, 0.0
        %v4656 = vmax.f32 %v4386, 0.0
        %v4657 = vmax.f32 %v4387, 0.0
        %v4658 = vmax.f32 %v4388, 0.0
        %v4659 = vmax.f32 %v4389, 0.0
        %v4660 = vmax.f32 %v4390, 0.0
        %v4661 = vmax.f32 %v4391, 0.0
        %v4662 = vmax.f32 %v4392, 0.0
        %v4663 = vmax.f32 %v4393, 0.0
        %v4664 = vmax.f32 %v4394, 0.0
        %v4665 = vld [vmem:[%s3] sm:$0x1f]
        %v4667 = vlaneseq
        %v4668 = vshrl.u32 %v4667, 7
        %v4669 = vsub.s32 0, %v4668
        %v4670 = vrot.slane %v4665, %v4669
        %v4671 = vlaneseq
        %v4672 = vshrl.u32 %v4671, 7
        %v4673 = vsub.s32 1, %v4672
        %v4674 = vrot.slane %v4665, %v4673
        %v4675 = vlaneseq
        %v4676 = vshrl.u32 %v4675, 7
        %v4677 = vsub.s32 2, %v4676
        %v4678 = vrot.slane %v4665, %v4677
        %v4679 = vlaneseq
        %v4680 = vshrl.u32 %v4679, 7
        %v4681 = vsub.s32 3, %v4680
        %v4682 = vrot.slane %v4665, %v4681
        %v4683 = vlaneseq
        %v4684 = vshrl.u32 %v4683, 7
        %v4685 = vsub.s32 4, %v4684
        %v4686 = vrot.slane %v4665, %v4685
        %v4692 = vmul.f32 %v4395, %v4670
        %v4693 = vmul.f32 %v4396, %v4674
        %v4694 = vmul.f32 %v4397, %v4678
        %v4695 = vmul.f32 %v4398, %v4682
        %v4696 = vmul.f32 %v4399, %v4686
        %v4697 = vmul.f32 %v4400, %v4670
        %v4698 = vmul.f32 %v4401, %v4674
        %v4699 = vmul.f32 %v4402, %v4678
        %v4700 = vmul.f32 %v4403, %v4682
        %v4701 = vmul.f32 %v4404, %v4686
        %v4702 = vmul.f32 %v4405, %v4670
        %v4703 = vmul.f32 %v4406, %v4674
        %v4704 = vmul.f32 %v4407, %v4678
        %v4705 = vmul.f32 %v4408, %v4682
        %v4706 = vmul.f32 %v4409, %v4686
        %v4707 = vmul.f32 %v4410, %v4670
        %v4708 = vmul.f32 %v4411, %v4674
        %v4709 = vmul.f32 %v4412, %v4678
        %v4710 = vmul.f32 %v4413, %v4682
        %v4711 = vmul.f32 %v4414, %v4686
        %v4712 = vmul.f32 %v4415, %v4670
        %v4713 = vmul.f32 %v4416, %v4674
        %v4714 = vmul.f32 %v4417, %v4678
        %v4715 = vmul.f32 %v4418, %v4682
        %v4716 = vmul.f32 %v4419, %v4686
        %v4717 = vmul.f32 %v4420, %v4670
        %v4718 = vmul.f32 %v4421, %v4674
        %v4719 = vmul.f32 %v4422, %v4678
        %v4720 = vmul.f32 %v4423, %v4682
        %v4721 = vmul.f32 %v4424, %v4686
        %v4722 = vmul.f32 %v4425, %v4670
        %v4723 = vmul.f32 %v4426, %v4674
        %v4724 = vmul.f32 %v4427, %v4678
        %v4725 = vmul.f32 %v4428, %v4682
        %v4726 = vmul.f32 %v4429, %v4686
        %v4727 = vmul.f32 %v4430, %v4670
        %v4728 = vmul.f32 %v4431, %v4674
        %v4729 = vmul.f32 %v4432, %v4678
        %v4730 = vmul.f32 %v4433, %v4682
        %v4731 = vmul.f32 %v4434, %v4686
        %v4732 = vmul.f32 %v4435, %v4670
        %v4733 = vmul.f32 %v4436, %v4674
        %v4734 = vmul.f32 %v4437, %v4678
        %v4735 = vmul.f32 %v4438, %v4682
        %v4736 = vmul.f32 %v4439, %v4686
        %v4737 = vmul.f32 %v4440, %v4670
        %v4738 = vmul.f32 %v4441, %v4674
        %v4739 = vmul.f32 %v4442, %v4678
        %v4740 = vmul.f32 %v4443, %v4682
        %v4741 = vmul.f32 %v4444, %v4686
        %v4742 = vmul.f32 %v4445, %v4670
        %v4743 = vmul.f32 %v4446, %v4674
        %v4744 = vmul.f32 %v4447, %v4678
        %v4745 = vmul.f32 %v4448, %v4682
        %v4746 = vmul.f32 %v4449, %v4686
        %v4747 = vmul.f32 %v4450, %v4670
        %v4748 = vmul.f32 %v4451, %v4674
        %v4749 = vmul.f32 %v4452, %v4678
        %v4750 = vmul.f32 %v4453, %v4682
        %v4751 = vmul.f32 %v4454, %v4686
        %v4752 = vmul.f32 %v4455, %v4670
        %v4753 = vmul.f32 %v4456, %v4674
        %v4754 = vmul.f32 %v4457, %v4678
        %v4755 = vmul.f32 %v4458, %v4682
        %v4756 = vmul.f32 %v4459, %v4686
        %v4757 = vmul.f32 %v4460, %v4670
        %v4758 = vmul.f32 %v4461, %v4674
        %v4759 = vmul.f32 %v4462, %v4678
        %v4760 = vmul.f32 %v4463, %v4682
        %v4761 = vmul.f32 %v4464, %v4686
        %v4762 = vmul.f32 %v4465, %v4670
        %v4763 = vmul.f32 %v4466, %v4674
        %v4764 = vmul.f32 %v4467, %v4678
        %v4765 = vmul.f32 %v4468, %v4682
        %v4766 = vmul.f32 %v4469, %v4686
        %v4767 = vmul.f32 %v4470, %v4670
        %v4768 = vmul.f32 %v4471, %v4674
        %v4769 = vmul.f32 %v4472, %v4678
        %v4770 = vmul.f32 %v4473, %v4682
        %v4771 = vmul.f32 %v4474, %v4686
        %v4772 = vmul.f32 %v4475, %v4670
        %v4773 = vmul.f32 %v4476, %v4674
        %v4774 = vmul.f32 %v4477, %v4678
        %v4775 = vmul.f32 %v4478, %v4682
        %v4776 = vmul.f32 %v4479, %v4686
        %v4777 = vmul.f32 %v4480, %v4670
        %v4778 = vmul.f32 %v4481, %v4674
        %v4779 = vmul.f32 %v4482, %v4678
        %v4780 = vmul.f32 %v4483, %v4682
        %v4781 = vmul.f32 %v4484, %v4686
        %v4782 = vmul.f32 %v4485, %v4670
        %v4783 = vmul.f32 %v4486, %v4674
        %v4784 = vmul.f32 %v4487, %v4678
        %v4785 = vmul.f32 %v4488, %v4682
        %v4786 = vmul.f32 %v4489, %v4686
        %v4787 = vmul.f32 %v4490, %v4670
        %v4788 = vmul.f32 %v4491, %v4674
        %v4789 = vmul.f32 %v4492, %v4678
        %v4790 = vmul.f32 %v4493, %v4682
        %v4791 = vmul.f32 %v4494, %v4686
        %v4792 = vmul.f32 %v4495, %v4670
        %v4793 = vmul.f32 %v4496, %v4674
        %v4794 = vmul.f32 %v4497, %v4678
        %v4795 = vmul.f32 %v4498, %v4682
        %v4796 = vmul.f32 %v4499, %v4686
        %v4797 = vmul.f32 %v4500, %v4670
        %v4798 = vmul.f32 %v4501, %v4674
        %v4799 = vmul.f32 %v4502, %v4678
        %v4800 = vmul.f32 %v4503, %v4682
        %v4801 = vmul.f32 %v4504, %v4686
        %v4802 = vmul.f32 %v4505, %v4670
        %v4803 = vmul.f32 %v4506, %v4674
        %v4804 = vmul.f32 %v4507, %v4678
        %v4805 = vmul.f32 %v4508, %v4682
        %v4806 = vmul.f32 %v4509, %v4686
        %v4807 = vmul.f32 %v4510, %v4670
        %v4808 = vmul.f32 %v4511, %v4674
        %v4809 = vmul.f32 %v4512, %v4678
        %v4810 = vmul.f32 %v4513, %v4682
        %v4811 = vmul.f32 %v4514, %v4686
        %v4812 = vmul.f32 %v4515, %v4670
        %v4813 = vmul.f32 %v4516, %v4674
        %v4814 = vmul.f32 %v4517, %v4678
        %v4815 = vmul.f32 %v4518, %v4682
        %v4816 = vmul.f32 %v4519, %v4686
        %v4817 = vmul.f32 %v4520, %v4670
        %v4818 = vmul.f32 %v4521, %v4674
        %v4819 = vmul.f32 %v4522, %v4678
        %v4820 = vmul.f32 %v4523, %v4682
        %v4821 = vmul.f32 %v4524, %v4686
        %v4822 = vmul.f32 %v4525, %v4670
        %v4823 = vmul.f32 %v4526, %v4674
        %v4824 = vmul.f32 %v4527, %v4678
        %v4825 = vmul.f32 %v4528, %v4682
        %v4826 = vmul.f32 %v4529, %v4686
        %v4827 = vmul.f32 %v4530, %v4670
        %v4828 = vmul.f32 %v4531, %v4674
        %v4829 = vmul.f32 %v4532, %v4678
        %v4830 = vmul.f32 %v4533, %v4682
        %v4831 = vmul.f32 %v4534, %v4686
        %v4832 = vmul.f32 %v4535, %v4670
        %v4833 = vmul.f32 %v4536, %v4674
        %v4834 = vmul.f32 %v4537, %v4678
        %v4835 = vmul.f32 %v4538, %v4682
        %v4836 = vmul.f32 %v4539, %v4686
        %v4837 = vmul.f32 %v4540, %v4670
        %v4838 = vmul.f32 %v4541, %v4674
        %v4839 = vmul.f32 %v4542, %v4678
        %v4840 = vmul.f32 %v4543, %v4682
        %v4841 = vmul.f32 %v4544, %v4686
        %v4842 = vmul.f32 %v4545, %v4670
        %v4843 = vmul.f32 %v4546, %v4674
        %v4844 = vmul.f32 %v4547, %v4678
        %v4845 = vmul.f32 %v4548, %v4682
        %v4846 = vmul.f32 %v4549, %v4686
        %v4847 = vmul.f32 %v4550, %v4670
        %v4848 = vmul.f32 %v4551, %v4674
        %v4849 = vmul.f32 %v4552, %v4678
        %v4850 = vmul.f32 %v4553, %v4682
        %v4851 = vmul.f32 %v4554, %v4686
        %v4852 = vmul.f32 %v4555, %v4670
        %v4853 = vmul.f32 %v4556, %v4674
        %v4854 = vmul.f32 %v4557, %v4678
        %v4855 = vmul.f32 %v4558, %v4682
        %v4856 = vmul.f32 %v4559, %v4686
        %v4857 = vmul.f32 %v4560, %v4670
        %v4858 = vmul.f32 %v4561, %v4674
        %v4859 = vmul.f32 %v4562, %v4678
        %v4860 = vmul.f32 %v4563, %v4682
        %v4861 = vmul.f32 %v4564, %v4686
        %v4862 = vmul.f32 %v4565, %v4670
        %v4863 = vmul.f32 %v4566, %v4674
        %v4864 = vmul.f32 %v4567, %v4678
        %v4865 = vmul.f32 %v4568, %v4682
        %v4866 = vmul.f32 %v4569, %v4686
        %v4867 = vmul.f32 %v4570, %v4670
        %v4868 = vmul.f32 %v4571, %v4674
        %v4869 = vmul.f32 %v4572, %v4678
        %v4870 = vmul.f32 %v4573, %v4682
        %v4871 = vmul.f32 %v4574, %v4686
        %v4872 = vmul.f32 %v4575, %v4670
        %v4873 = vmul.f32 %v4576, %v4674
        %v4874 = vmul.f32 %v4577, %v4678
        %v4875 = vmul.f32 %v4578, %v4682
        %v4876 = vmul.f32 %v4579, %v4686
        %v4877 = vmul.f32 %v4580, %v4670
        %v4878 = vmul.f32 %v4581, %v4674
        %v4879 = vmul.f32 %v4582, %v4678
        %v4880 = vmul.f32 %v4583, %v4682
        %v4881 = vmul.f32 %v4584, %v4686
        %v4882 = vmul.f32 %v4585, %v4670
        %v4883 = vmul.f32 %v4586, %v4674
        %v4884 = vmul.f32 %v4587, %v4678
        %v4885 = vmul.f32 %v4588, %v4682
        %v4886 = vmul.f32 %v4589, %v4686
        %v4887 = vmul.f32 %v4590, %v4670
        %v4888 = vmul.f32 %v4591, %v4674
        %v4889 = vmul.f32 %v4592, %v4678
        %v4890 = vmul.f32 %v4593, %v4682
        %v4891 = vmul.f32 %v4594, %v4686
        %v4892 = vmul.f32 %v4595, %v4670
        %v4893 = vmul.f32 %v4596, %v4674
        %v4894 = vmul.f32 %v4597, %v4678
        %v4895 = vmul.f32 %v4598, %v4682
        %v4896 = vmul.f32 %v4599, %v4686
        %v4897 = vmul.f32 %v4600, %v4670
        %v4898 = vmul.f32 %v4601, %v4674
        %v4899 = vmul.f32 %v4602, %v4678
        %v4900 = vmul.f32 %v4603, %v4682
        %v4901 = vmul.f32 %v4604, %v4686
        %v4902 = vmul.f32 %v4605, %v4670
        %v4903 = vmul.f32 %v4606, %v4674
        %v4904 = vmul.f32 %v4607, %v4678
        %v4905 = vmul.f32 %v4608, %v4682
        %v4906 = vmul.f32 %v4609, %v4686
        %v4907 = vmul.f32 %v4610, %v4670
        %v4908 = vmul.f32 %v4611, %v4674
        %v4909 = vmul.f32 %v4612, %v4678
        %v4910 = vmul.f32 %v4613, %v4682
        %v4911 = vmul.f32 %v4614, %v4686
        %v4912 = vmul.f32 %v4615, %v4670
        %v4913 = vmul.f32 %v4616, %v4674
        %v4914 = vmul.f32 %v4617, %v4678
        %v4915 = vmul.f32 %v4618, %v4682
        %v4916 = vmul.f32 %v4619, %v4686
        %v4917 = vmul.f32 %v4620, %v4670
        %v4918 = vmul.f32 %v4621, %v4674
        %v4919 = vmul.f32 %v4622, %v4678
        %v4920 = vmul.f32 %v4623, %v4682
        %v4921 = vmul.f32 %v4624, %v4686
        %v4922 = vmul.f32 %v4625, %v4670
        %v4923 = vmul.f32 %v4626, %v4674
        %v4924 = vmul.f32 %v4627, %v4678
        %v4925 = vmul.f32 %v4628, %v4682
        %v4926 = vmul.f32 %v4629, %v4686
        %v4927 = vmul.f32 %v4630, %v4670
        %v4928 = vmul.f32 %v4631, %v4674
        %v4929 = vmul.f32 %v4632, %v4678
        %v4930 = vmul.f32 %v4633, %v4682
        %v4931 = vmul.f32 %v4634, %v4686
        %v4932 = vmul.f32 %v4635, %v4670
        %v4933 = vmul.f32 %v4636, %v4674
        %v4934 = vmul.f32 %v4637, %v4678
        %v4935 = vmul.f32 %v4638, %v4682
        %v4936 = vmul.f32 %v4639, %v4686
        %v4937 = vmul.f32 %v4640, %v4670
        %v4938 = vmul.f32 %v4641, %v4674
        %v4939 = vmul.f32 %v4642, %v4678
        %v4940 = vmul.f32 %v4643, %v4682
        %v4941 = vmul.f32 %v4644, %v4686
        %v4942 = vmul.f32 %v4645, %v4670
        %v4943 = vmul.f32 %v4646, %v4674
        %v4944 = vmul.f32 %v4647, %v4678
        %v4945 = vmul.f32 %v4648, %v4682
        %v4946 = vmul.f32 %v4649, %v4686
        %v4947 = vmul.f32 %v4650, %v4670
        %v4948 = vmul.f32 %v4651, %v4674
        %v4949 = vmul.f32 %v4652, %v4678
        %v4950 = vmul.f32 %v4653, %v4682
        %v4951 = vmul.f32 %v4654, %v4686
        %v4952 = vmul.f32 %v4655, %v4670
        %v4953 = vmul.f32 %v4656, %v4674
        %v4954 = vmul.f32 %v4657, %v4678
        %v4955 = vmul.f32 %v4658, %v4682
        %v4956 = vmul.f32 %v4659, %v4686
        %v4957 = vmul.f32 %v4660, %v4670
        %v4958 = vmul.f32 %v4661, %v4674
        %v4959 = vmul.f32 %v4662, %v4678
        %v4960 = vmul.f32 %v4663, %v4682
        %v4961 = vmul.f32 %v4664, %v4686
        %v4962 = vld [vmem:[%s4] sm:$0x1f]
        %v4964 = vlaneseq
        %v4965 = vshrl.u32 %v4964, 7
        %v4966 = vsub.s32 0, %v4965
        %v4967 = vrot.slane %v4962, %v4966
        %v4968 = vlaneseq
        %v4969 = vshrl.u32 %v4968, 7
        %v4970 = vsub.s32 1, %v4969
        %v4971 = vrot.slane %v4962, %v4970
        %v4972 = vlaneseq
        %v4973 = vshrl.u32 %v4972, 7
        %v4974 = vsub.s32 2, %v4973
        %v4975 = vrot.slane %v4962, %v4974
        %v4976 = vlaneseq
        %v4977 = vshrl.u32 %v4976, 7
        %v4978 = vsub.s32 3, %v4977
        %v4979 = vrot.slane %v4962, %v4978
        %v4980 = vlaneseq
        %v4981 = vshrl.u32 %v4980, 7
        %v4982 = vsub.s32 4, %v4981
        %v4983 = vrot.slane %v4962, %v4982
        %v4989 = vadd.f32 %v4692, %v4967
        %v4990 = vadd.f32 %v4693, %v4971
        %v4991 = vadd.f32 %v4694, %v4975
        %v4992 = vadd.f32 %v4695, %v4979
        %v4993 = vadd.f32 %v4696, %v4983
        %v4994 = vadd.f32 %v4697, %v4967
        %v4995 = vadd.f32 %v4698, %v4971
        %v4996 = vadd.f32 %v4699, %v4975
        %v4997 = vadd.f32 %v4700, %v4979
        %v4998 = vadd.f32 %v4701, %v4983
        %v4999 = vadd.f32 %v4702, %v4967
        %v5000 = vadd.f32 %v4703, %v4971
        %v5001 = vadd.f32 %v4704, %v4975
        %v5002 = vadd.f32 %v4705, %v4979
        %v5003 = vadd.f32 %v4706, %v4983
        %v5004 = vadd.f32 %v4707, %v4967
        %v5005 = vadd.f32 %v4708, %v4971
        %v5006 = vadd.f32 %v4709, %v4975
        %v5007 = vadd.f32 %v4710, %v4979
        %v5008 = vadd.f32 %v4711, %v4983
        %v5009 = vadd.f32 %v4712, %v4967
        %v5010 = vadd.f32 %v4713, %v4971
        %v5011 = vadd.f32 %v4714, %v4975
        %v5012 = vadd.f32 %v4715, %v4979
        %v5013 = vadd.f32 %v4716, %v4983
        %v5014 = vadd.f32 %v4717, %v4967
        %v5015 = vadd.f32 %v4718, %v4971
        %v5016 = vadd.f32 %v4719, %v4975
        %v5017 = vadd.f32 %v4720, %v4979
        %v5018 = vadd.f32 %v4721, %v4983
        %v5019 = vadd.f32 %v4722, %v4967
        %v5020 = vadd.f32 %v4723, %v4971
        %v5021 = vadd.f32 %v4724, %v4975
        %v5022 = vadd.f32 %v4725, %v4979
        %v5023 = vadd.f32 %v4726, %v4983
        %v5024 = vadd.f32 %v4727, %v4967
        %v5025 = vadd.f32 %v4728, %v4971
        %v5026 = vadd.f32 %v4729, %v4975
        %v5027 = vadd.f32 %v4730, %v4979
        %v5028 = vadd.f32 %v4731, %v4983
        %v5029 = vadd.f32 %v4732, %v4967
        %v5030 = vadd.f32 %v4733, %v4971
        %v5031 = vadd.f32 %v4734, %v4975
        %v5032 = vadd.f32 %v4735, %v4979
        %v5033 = vadd.f32 %v4736, %v4983
        %v5034 = vadd.f32 %v4737, %v4967
        %v5035 = vadd.f32 %v4738, %v4971
        %v5036 = vadd.f32 %v4739, %v4975
        %v5037 = vadd.f32 %v4740, %v4979
        %v5038 = vadd.f32 %v4741, %v4983
        %v5039 = vadd.f32 %v4742, %v4967
        %v5040 = vadd.f32 %v4743, %v4971
        %v5041 = vadd.f32 %v4744, %v4975
        %v5042 = vadd.f32 %v4745, %v4979
        %v5043 = vadd.f32 %v4746, %v4983
        %v5044 = vadd.f32 %v4747, %v4967
        %v5045 = vadd.f32 %v4748, %v4971
        %v5046 = vadd.f32 %v4749, %v4975
        %v5047 = vadd.f32 %v4750, %v4979
        %v5048 = vadd.f32 %v4751, %v4983
        %v5049 = vadd.f32 %v4752, %v4967
        %v5050 = vadd.f32 %v4753, %v4971
        %v5051 = vadd.f32 %v4754, %v4975
        %v5052 = vadd.f32 %v4755, %v4979
        %v5053 = vadd.f32 %v4756, %v4983
        %v5054 = vadd.f32 %v4757, %v4967
        %v5055 = vadd.f32 %v4758, %v4971
        %v5056 = vadd.f32 %v4759, %v4975
        %v5057 = vadd.f32 %v4760, %v4979
        %v5058 = vadd.f32 %v4761, %v4983
        %v5059 = vadd.f32 %v4762, %v4967
        %v5060 = vadd.f32 %v4763, %v4971
        %v5061 = vadd.f32 %v4764, %v4975
        %v5062 = vadd.f32 %v4765, %v4979
        %v5063 = vadd.f32 %v4766, %v4983
        %v5064 = vadd.f32 %v4767, %v4967
        %v5065 = vadd.f32 %v4768, %v4971
        %v5066 = vadd.f32 %v4769, %v4975
        %v5067 = vadd.f32 %v4770, %v4979
        %v5068 = vadd.f32 %v4771, %v4983
        %v5069 = vadd.f32 %v4772, %v4967
        %v5070 = vadd.f32 %v4773, %v4971
        %v5071 = vadd.f32 %v4774, %v4975
        %v5072 = vadd.f32 %v4775, %v4979
        %v5073 = vadd.f32 %v4776, %v4983
        %v5074 = vadd.f32 %v4777, %v4967
        %v5075 = vadd.f32 %v4778, %v4971
        %v5076 = vadd.f32 %v4779, %v4975
        %v5077 = vadd.f32 %v4780, %v4979
        %v5078 = vadd.f32 %v4781, %v4983
        %v5079 = vadd.f32 %v4782, %v4967
        %v5080 = vadd.f32 %v4783, %v4971
        %v5081 = vadd.f32 %v4784, %v4975
        %v5082 = vadd.f32 %v4785, %v4979
        %v5083 = vadd.f32 %v4786, %v4983
        %v5084 = vadd.f32 %v4787, %v4967
        %v5085 = vadd.f32 %v4788, %v4971
        %v5086 = vadd.f32 %v4789, %v4975
        %v5087 = vadd.f32 %v4790, %v4979
        %v5088 = vadd.f32 %v4791, %v4983
        %v5089 = vadd.f32 %v4792, %v4967
        %v5090 = vadd.f32 %v4793, %v4971
        %v5091 = vadd.f32 %v4794, %v4975
        %v5092 = vadd.f32 %v4795, %v4979
        %v5093 = vadd.f32 %v4796, %v4983
        %v5094 = vadd.f32 %v4797, %v4967
        %v5095 = vadd.f32 %v4798, %v4971
        %v5096 = vadd.f32 %v4799, %v4975
        %v5097 = vadd.f32 %v4800, %v4979
        %v5098 = vadd.f32 %v4801, %v4983
        %v5099 = vadd.f32 %v4802, %v4967
        %v5100 = vadd.f32 %v4803, %v4971
        %v5101 = vadd.f32 %v4804, %v4975
        %v5102 = vadd.f32 %v4805, %v4979
        %v5103 = vadd.f32 %v4806, %v4983
        %v5104 = vadd.f32 %v4807, %v4967
        %v5105 = vadd.f32 %v4808, %v4971
        %v5106 = vadd.f32 %v4809, %v4975
        %v5107 = vadd.f32 %v4810, %v4979
        %v5108 = vadd.f32 %v4811, %v4983
        %v5109 = vadd.f32 %v4812, %v4967
        %v5110 = vadd.f32 %v4813, %v4971
        %v5111 = vadd.f32 %v4814, %v4975
        %v5112 = vadd.f32 %v4815, %v4979
        %v5113 = vadd.f32 %v4816, %v4983
        %v5114 = vadd.f32 %v4817, %v4967
        %v5115 = vadd.f32 %v4818, %v4971
        %v5116 = vadd.f32 %v4819, %v4975
        %v5117 = vadd.f32 %v4820, %v4979
        %v5118 = vadd.f32 %v4821, %v4983
        %v5119 = vadd.f32 %v4822, %v4967
        %v5120 = vadd.f32 %v4823, %v4971
        %v5121 = vadd.f32 %v4824, %v4975
        %v5122 = vadd.f32 %v4825, %v4979
        %v5123 = vadd.f32 %v4826, %v4983
        %v5124 = vadd.f32 %v4827, %v4967
        %v5125 = vadd.f32 %v4828, %v4971
        %v5126 = vadd.f32 %v4829, %v4975
        %v5127 = vadd.f32 %v4830, %v4979
        %v5128 = vadd.f32 %v4831, %v4983
        %v5129 = vadd.f32 %v4832, %v4967
        %v5130 = vadd.f32 %v4833, %v4971
        %v5131 = vadd.f32 %v4834, %v4975
        %v5132 = vadd.f32 %v4835, %v4979
        %v5133 = vadd.f32 %v4836, %v4983
        %v5134 = vadd.f32 %v4837, %v4967
        %v5135 = vadd.f32 %v4838, %v4971
        %v5136 = vadd.f32 %v4839, %v4975
        %v5137 = vadd.f32 %v4840, %v4979
        %v5138 = vadd.f32 %v4841, %v4983
        %v5139 = vadd.f32 %v4842, %v4967
        %v5140 = vadd.f32 %v4843, %v4971
        %v5141 = vadd.f32 %v4844, %v4975
        %v5142 = vadd.f32 %v4845, %v4979
        %v5143 = vadd.f32 %v4846, %v4983
        %v5144 = vadd.f32 %v4847, %v4967
        %v5145 = vadd.f32 %v4848, %v4971
        %v5146 = vadd.f32 %v4849, %v4975
        %v5147 = vadd.f32 %v4850, %v4979
        %v5148 = vadd.f32 %v4851, %v4983
        %v5149 = vadd.f32 %v4852, %v4967
        %v5150 = vadd.f32 %v4853, %v4971
        %v5151 = vadd.f32 %v4854, %v4975
        %v5152 = vadd.f32 %v4855, %v4979
        %v5153 = vadd.f32 %v4856, %v4983
        %v5154 = vadd.f32 %v4857, %v4967
        %v5155 = vadd.f32 %v4858, %v4971
        %v5156 = vadd.f32 %v4859, %v4975
        %v5157 = vadd.f32 %v4860, %v4979
        %v5158 = vadd.f32 %v4861, %v4983
        %v5159 = vadd.f32 %v4862, %v4967
        %v5160 = vadd.f32 %v4863, %v4971
        %v5161 = vadd.f32 %v4864, %v4975
        %v5162 = vadd.f32 %v4865, %v4979
        %v5163 = vadd.f32 %v4866, %v4983
        %v5164 = vadd.f32 %v4867, %v4967
        %v5165 = vadd.f32 %v4868, %v4971
        %v5166 = vadd.f32 %v4869, %v4975
        %v5167 = vadd.f32 %v4870, %v4979
        %v5168 = vadd.f32 %v4871, %v4983
        %v5169 = vadd.f32 %v4872, %v4967
        %v5170 = vadd.f32 %v4873, %v4971
        %v5171 = vadd.f32 %v4874, %v4975
        %v5172 = vadd.f32 %v4875, %v4979
        %v5173 = vadd.f32 %v4876, %v4983
        %v5174 = vadd.f32 %v4877, %v4967
        %v5175 = vadd.f32 %v4878, %v4971
        %v5176 = vadd.f32 %v4879, %v4975
        %v5177 = vadd.f32 %v4880, %v4979
        %v5178 = vadd.f32 %v4881, %v4983
        %v5179 = vadd.f32 %v4882, %v4967
        %v5180 = vadd.f32 %v4883, %v4971
        %v5181 = vadd.f32 %v4884, %v4975
        %v5182 = vadd.f32 %v4885, %v4979
        %v5183 = vadd.f32 %v4886, %v4983
        %v5184 = vadd.f32 %v4887, %v4967
        %v5185 = vadd.f32 %v4888, %v4971
        %v5186 = vadd.f32 %v4889, %v4975
        %v5187 = vadd.f32 %v4890, %v4979
        %v5188 = vadd.f32 %v4891, %v4983
        %v5189 = vadd.f32 %v4892, %v4967
        %v5190 = vadd.f32 %v4893, %v4971
        %v5191 = vadd.f32 %v4894, %v4975
        %v5192 = vadd.f32 %v4895, %v4979
        %v5193 = vadd.f32 %v4896, %v4983
        %v5194 = vadd.f32 %v4897, %v4967
        %v5195 = vadd.f32 %v4898, %v4971
        %v5196 = vadd.f32 %v4899, %v4975
        %v5197 = vadd.f32 %v4900, %v4979
        %v5198 = vadd.f32 %v4901, %v4983
        %v5199 = vadd.f32 %v4902, %v4967
        %v5200 = vadd.f32 %v4903, %v4971
        %v5201 = vadd.f32 %v4904, %v4975
        %v5202 = vadd.f32 %v4905, %v4979
        %v5203 = vadd.f32 %v4906, %v4983
        %v5204 = vadd.f32 %v4907, %v4967
        %v5205 = vadd.f32 %v4908, %v4971
        %v5206 = vadd.f32 %v4909, %v4975
        %v5207 = vadd.f32 %v4910, %v4979
        %v5208 = vadd.f32 %v4911, %v4983
        %v5209 = vadd.f32 %v4912, %v4967
        %v5210 = vadd.f32 %v4913, %v4971
        %v5211 = vadd.f32 %v4914, %v4975
        %v5212 = vadd.f32 %v4915, %v4979
        %v5213 = vadd.f32 %v4916, %v4983
        %v5214 = vadd.f32 %v4917, %v4967
        %v5215 = vadd.f32 %v4918, %v4971
        %v5216 = vadd.f32 %v4919, %v4975
        %v5217 = vadd.f32 %v4920, %v4979
        %v5218 = vadd.f32 %v4921, %v4983
        %v5219 = vadd.f32 %v4922, %v4967
        %v5220 = vadd.f32 %v4923, %v4971
        %v5221 = vadd.f32 %v4924, %v4975
        %v5222 = vadd.f32 %v4925, %v4979
        %v5223 = vadd.f32 %v4926, %v4983
        %v5224 = vadd.f32 %v4927, %v4967
        %v5225 = vadd.f32 %v4928, %v4971
        %v5226 = vadd.f32 %v4929, %v4975
        %v5227 = vadd.f32 %v4930, %v4979
        %v5228 = vadd.f32 %v4931, %v4983
        %v5229 = vadd.f32 %v4932, %v4967
        %v5230 = vadd.f32 %v4933, %v4971
        %v5231 = vadd.f32 %v4934, %v4975
        %v5232 = vadd.f32 %v4935, %v4979
        %v5233 = vadd.f32 %v4936, %v4983
        %v5234 = vadd.f32 %v4937, %v4967
        %v5235 = vadd.f32 %v4938, %v4971
        %v5236 = vadd.f32 %v4939, %v4975
        %v5237 = vadd.f32 %v4940, %v4979
        %v5238 = vadd.f32 %v4941, %v4983
        %v5239 = vadd.f32 %v4942, %v4967
        %v5240 = vadd.f32 %v4943, %v4971
        %v5241 = vadd.f32 %v4944, %v4975
        %v5242 = vadd.f32 %v4945, %v4979
        %v5243 = vadd.f32 %v4946, %v4983
        %v5244 = vadd.f32 %v4947, %v4967
        %v5245 = vadd.f32 %v4948, %v4971
        %v5246 = vadd.f32 %v4949, %v4975
        %v5247 = vadd.f32 %v4950, %v4979
        %v5248 = vadd.f32 %v4951, %v4983
        %v5249 = vadd.f32 %v4952, %v4967
        %v5250 = vadd.f32 %v4953, %v4971
        %v5251 = vadd.f32 %v4954, %v4975
        %v5252 = vadd.f32 %v4955, %v4979
        %v5253 = vadd.f32 %v4956, %v4983
        %v5254 = vadd.f32 %v4957, %v4967
        %v5255 = vadd.f32 %v4958, %v4971
        %v5256 = vadd.f32 %v4959, %v4975
        %v5257 = vadd.f32 %v4960, %v4979
        %v5258 = vadd.f32 %v4961, %v4983
        %v5259 = vmax.f32 %v4989, %v4994
        %v5260 = vmax.f32 %v4990, %v4995
        %v5261 = vmax.f32 %v4991, %v4996
        %v5262 = vmax.f32 %v4992, %v4997
        %v5263 = vmax.f32 %v4993, %v4998
        %v5264 = vmax.f32 %v5004, %v5009
        %v5265 = vmax.f32 %v5005, %v5010
        %v5266 = vmax.f32 %v5006, %v5011
        %v5267 = vmax.f32 %v5007, %v5012
        %v5268 = vmax.f32 %v5008, %v5013
        %v5269 = vmax.f32 %v5019, %v5024
        %v5270 = vmax.f32 %v5020, %v5025
        %v5271 = vmax.f32 %v5021, %v5026
        %v5272 = vmax.f32 %v5022, %v5027
        %v5273 = vmax.f32 %v5023, %v5028
        %v5274 = vmax.f32 %v5034, %v5039
        %v5275 = vmax.f32 %v5035, %v5040
        %v5276 = vmax.f32 %v5036, %v5041
        %v5277 = vmax.f32 %v5037, %v5042
        %v5278 = vmax.f32 %v5038, %v5043
        %v5279 = vmax.f32 %v5049, %v5054
        %v5280 = vmax.f32 %v5050, %v5055
        %v5281 = vmax.f32 %v5051, %v5056
        %v5282 = vmax.f32 %v5052, %v5057
        %v5283 = vmax.f32 %v5053, %v5058
        %v5284 = vmax.f32 %v5064, %v5069
        %v5285 = vmax.f32 %v5065, %v5070
        %v5286 = vmax.f32 %v5066, %v5071
        %v5287 = vmax.f32 %v5067, %v5072
        %v5288 = vmax.f32 %v5068, %v5073
        %v5289 = vmax.f32 %v5079, %v5084
        %v5290 = vmax.f32 %v5080, %v5085
        %v5291 = vmax.f32 %v5081, %v5086
        %v5292 = vmax.f32 %v5082, %v5087
        %v5293 = vmax.f32 %v5083, %v5088
        %v5294 = vmax.f32 %v5094, %v5099
        %v5295 = vmax.f32 %v5095, %v5100
        %v5296 = vmax.f32 %v5096, %v5101
        %v5297 = vmax.f32 %v5097, %v5102
        %v5298 = vmax.f32 %v5098, %v5103
        %v5299 = vmax.f32 %v5109, %v5114
        %v5300 = vmax.f32 %v5110, %v5115
        %v5301 = vmax.f32 %v5111, %v5116
        %v5302 = vmax.f32 %v5112, %v5117
        %v5303 = vmax.f32 %v5113, %v5118
        %v5304 = vmax.f32 %v5124, %v5129
        %v5305 = vmax.f32 %v5125, %v5130
        %v5306 = vmax.f32 %v5126, %v5131
        %v5307 = vmax.f32 %v5127, %v5132
        %v5308 = vmax.f32 %v5128, %v5133
        %v5309 = vmax.f32 %v5139, %v5144
        %v5310 = vmax.f32 %v5140, %v5145
        %v5311 = vmax.f32 %v5141, %v5146
        %v5312 = vmax.f32 %v5142, %v5147
        %v5313 = vmax.f32 %v5143, %v5148
        %v5314 = vmax.f32 %v5154, %v5159
        %v5315 = vmax.f32 %v5155, %v5160
        %v5316 = vmax.f32 %v5156, %v5161
        %v5317 = vmax.f32 %v5157, %v5162
        %v5318 = vmax.f32 %v5158, %v5163
        %v5319 = vmax.f32 %v5169, %v5174
        %v5320 = vmax.f32 %v5170, %v5175
        %v5321 = vmax.f32 %v5171, %v5176
        %v5322 = vmax.f32 %v5172, %v5177
        %v5323 = vmax.f32 %v5173, %v5178
        %v5324 = vmax.f32 %v5184, %v5189
        %v5325 = vmax.f32 %v5185, %v5190
        %v5326 = vmax.f32 %v5186, %v5191
        %v5327 = vmax.f32 %v5187, %v5192
        %v5328 = vmax.f32 %v5188, %v5193
        %v5329 = vmax.f32 %v5199, %v5204
        %v5330 = vmax.f32 %v5200, %v5205
        %v5331 = vmax.f32 %v5201, %v5206
        %v5332 = vmax.f32 %v5202, %v5207
        %v5333 = vmax.f32 %v5203, %v5208
        %v5334 = vmax.f32 %v5214, %v5219
        %v5335 = vmax.f32 %v5215, %v5220
        %v5336 = vmax.f32 %v5216, %v5221
        %v5337 = vmax.f32 %v5217, %v5222
        %v5338 = vmax.f32 %v5218, %v5223
        %v5339 = vmax.f32 %v5229, %v5234
        %v5340 = vmax.f32 %v5230, %v5235
        %v5341 = vmax.f32 %v5231, %v5236
        %v5342 = vmax.f32 %v5232, %v5237
        %v5343 = vmax.f32 %v5233, %v5238
        %v5344 = vmax.f32 %v5244, %v5249
        %v5345 = vmax.f32 %v5245, %v5250
        %v5346 = vmax.f32 %v5246, %v5251
        %v5347 = vmax.f32 %v5247, %v5252
        %v5348 = vmax.f32 %v5248, %v5253
        %v5349 = vmax.f32 %v5259, %v4999
        %v5350 = vmax.f32 %v5260, %v5000
        %v5351 = vmax.f32 %v5261, %v5001
        %v5352 = vmax.f32 %v5262, %v5002
        %v5353 = vmax.f32 %v5263, %v5003
        %v5354 = vmax.f32 %v5264, %v5014
        %v5355 = vmax.f32 %v5265, %v5015
        %v5356 = vmax.f32 %v5266, %v5016
        %v5357 = vmax.f32 %v5267, %v5017
        %v5358 = vmax.f32 %v5268, %v5018
        %v5359 = vmax.f32 %v5269, %v5029
        %v5360 = vmax.f32 %v5270, %v5030
        %v5361 = vmax.f32 %v5271, %v5031
        %v5362 = vmax.f32 %v5272, %v5032
        %v5363 = vmax.f32 %v5273, %v5033
        %v5364 = vmax.f32 %v5274, %v5044
        %v5365 = vmax.f32 %v5275, %v5045
        %v5366 = vmax.f32 %v5276, %v5046
        %v5367 = vmax.f32 %v5277, %v5047
        %v5368 = vmax.f32 %v5278, %v5048
        %v5369 = vmax.f32 %v5279, %v5059
        %v5370 = vmax.f32 %v5280, %v5060
        %v5371 = vmax.f32 %v5281, %v5061
        %v5372 = vmax.f32 %v5282, %v5062
        %v5373 = vmax.f32 %v5283, %v5063
        %v5374 = vmax.f32 %v5284, %v5074
        %v5375 = vmax.f32 %v5285, %v5075
        %v5376 = vmax.f32 %v5286, %v5076
        %v5377 = vmax.f32 %v5287, %v5077
        %v5378 = vmax.f32 %v5288, %v5078
        %v5379 = vmax.f32 %v5289, %v5089
        %v5380 = vmax.f32 %v5290, %v5090
        %v5381 = vmax.f32 %v5291, %v5091
        %v5382 = vmax.f32 %v5292, %v5092
        %v5383 = vmax.f32 %v5293, %v5093
        %v5384 = vmax.f32 %v5294, %v5104
        %v5385 = vmax.f32 %v5295, %v5105
        %v5386 = vmax.f32 %v5296, %v5106
        %v5387 = vmax.f32 %v5297, %v5107
        %v5388 = vmax.f32 %v5298, %v5108
        %v5389 = vmax.f32 %v5299, %v5119
        %v5390 = vmax.f32 %v5300, %v5120
        %v5391 = vmax.f32 %v5301, %v5121
        %v5392 = vmax.f32 %v5302, %v5122
        %v5393 = vmax.f32 %v5303, %v5123
        %v5394 = vmax.f32 %v5304, %v5134
        %v5395 = vmax.f32 %v5305, %v5135
        %v5396 = vmax.f32 %v5306, %v5136
        %v5397 = vmax.f32 %v5307, %v5137
        %v5398 = vmax.f32 %v5308, %v5138
        %v5399 = vmax.f32 %v5309, %v5149
        %v5400 = vmax.f32 %v5310, %v5150
        %v5401 = vmax.f32 %v5311, %v5151
        %v5402 = vmax.f32 %v5312, %v5152
        %v5403 = vmax.f32 %v5313, %v5153
        %v5404 = vmax.f32 %v5314, %v5164
        %v5405 = vmax.f32 %v5315, %v5165
        %v5406 = vmax.f32 %v5316, %v5166
        %v5407 = vmax.f32 %v5317, %v5167
        %v5408 = vmax.f32 %v5318, %v5168
        %v5409 = vmax.f32 %v5319, %v5179
        %v5410 = vmax.f32 %v5320, %v5180
        %v5411 = vmax.f32 %v5321, %v5181
        %v5412 = vmax.f32 %v5322, %v5182
        %v5413 = vmax.f32 %v5323, %v5183
        %v5414 = vmax.f32 %v5324, %v5194
        %v5415 = vmax.f32 %v5325, %v5195
        %v5416 = vmax.f32 %v5326, %v5196
        %v5417 = vmax.f32 %v5327, %v5197
        %v5418 = vmax.f32 %v5328, %v5198
        %v5419 = vmax.f32 %v5329, %v5209
        %v5420 = vmax.f32 %v5330, %v5210
        %v5421 = vmax.f32 %v5331, %v5211
        %v5422 = vmax.f32 %v5332, %v5212
        %v5423 = vmax.f32 %v5333, %v5213
        %v5424 = vmax.f32 %v5334, %v5224
        %v5425 = vmax.f32 %v5335, %v5225
        %v5426 = vmax.f32 %v5336, %v5226
        %v5427 = vmax.f32 %v5337, %v5227
        %v5428 = vmax.f32 %v5338, %v5228
        %v5429 = vmax.f32 %v5339, %v5239
        %v5430 = vmax.f32 %v5340, %v5240
        %v5431 = vmax.f32 %v5341, %v5241
        %v5432 = vmax.f32 %v5342, %v5242
        %v5433 = vmax.f32 %v5343, %v5243
        %v5434 = vmax.f32 %v5344, %v5254
        %v5435 = vmax.f32 %v5345, %v5255
        %v5436 = vmax.f32 %v5346, %v5256
        %v5437 = vmax.f32 %v5347, %v5257
        %v5438 = vmax.f32 %v5348, %v5258
        %v5439 = vpack.c.bf16 %v5349, %v5349
        %v5440 = vpack.c.bf16 %v5350, %v5350
        %v5441 = vpack.c.bf16 %v5351, %v5351
        %v5442 = vpack.c.bf16 %v5352, %v5352
        %v5443 = vpack.c.bf16 %v5353, %v5353
        %v5444 = vpack.c.bf16 %v5354, %v5354
        %v5445 = vpack.c.bf16 %v5355, %v5355
        %v5446 = vpack.c.bf16 %v5356, %v5356
        %v5447 = vpack.c.bf16 %v5357, %v5357
        %v5448 = vpack.c.bf16 %v5358, %v5358
        %v5449 = vpack.c.bf16 %v5359, %v5359
        %v5450 = vpack.c.bf16 %v5360, %v5360
        %v5451 = vpack.c.bf16 %v5361, %v5361
        %v5452 = vpack.c.bf16 %v5362, %v5362
        %v5453 = vpack.c.bf16 %v5363, %v5363
        %v5454 = vpack.c.bf16 %v5364, %v5364
        %v5455 = vpack.c.bf16 %v5365, %v5365
        %v5456 = vpack.c.bf16 %v5366, %v5366
        %v5457 = vpack.c.bf16 %v5367, %v5367
        %v5458 = vpack.c.bf16 %v5368, %v5368
        %v5459 = vpack.c.bf16 %v5369, %v5369
        %v5460 = vpack.c.bf16 %v5370, %v5370
        %v5461 = vpack.c.bf16 %v5371, %v5371
        %v5462 = vpack.c.bf16 %v5372, %v5372
        %v5463 = vpack.c.bf16 %v5373, %v5373
        %v5464 = vpack.c.bf16 %v5374, %v5374
        %v5465 = vpack.c.bf16 %v5375, %v5375
        %v5466 = vpack.c.bf16 %v5376, %v5376
        %v5467 = vpack.c.bf16 %v5377, %v5377
        %v5468 = vpack.c.bf16 %v5378, %v5378
        %v5469 = vpack.c.bf16 %v5379, %v5379
        %v5470 = vpack.c.bf16 %v5380, %v5380
        %v5471 = vpack.c.bf16 %v5381, %v5381
        %v5472 = vpack.c.bf16 %v5382, %v5382
        %v5473 = vpack.c.bf16 %v5383, %v5383
        %v5474 = vpack.c.bf16 %v5384, %v5384
        %v5475 = vpack.c.bf16 %v5385, %v5385
        %v5476 = vpack.c.bf16 %v5386, %v5386
        %v5477 = vpack.c.bf16 %v5387, %v5387
        %v5478 = vpack.c.bf16 %v5388, %v5388
        %v5479 = vpack.c.bf16 %v5389, %v5389
        %v5480 = vpack.c.bf16 %v5390, %v5390
        %v5481 = vpack.c.bf16 %v5391, %v5391
        %v5482 = vpack.c.bf16 %v5392, %v5392
        %v5483 = vpack.c.bf16 %v5393, %v5393
        %v5484 = vpack.c.bf16 %v5394, %v5394
        %v5485 = vpack.c.bf16 %v5395, %v5395
        %v5486 = vpack.c.bf16 %v5396, %v5396
        %v5487 = vpack.c.bf16 %v5397, %v5397
        %v5488 = vpack.c.bf16 %v5398, %v5398
        %v5489 = vpack.c.bf16 %v5399, %v5399
        %v5490 = vpack.c.bf16 %v5400, %v5400
        %v5491 = vpack.c.bf16 %v5401, %v5401
        %v5492 = vpack.c.bf16 %v5402, %v5402
        %v5493 = vpack.c.bf16 %v5403, %v5403
        %v5494 = vpack.c.bf16 %v5404, %v5404
        %v5495 = vpack.c.bf16 %v5405, %v5405
        %v5496 = vpack.c.bf16 %v5406, %v5406
        %v5497 = vpack.c.bf16 %v5407, %v5407
        %v5498 = vpack.c.bf16 %v5408, %v5408
        %v5499 = vpack.c.bf16 %v5409, %v5409
        %v5500 = vpack.c.bf16 %v5410, %v5410
        %v5501 = vpack.c.bf16 %v5411, %v5411
        %v5502 = vpack.c.bf16 %v5412, %v5412
        %v5503 = vpack.c.bf16 %v5413, %v5413
        %v5504 = vpack.c.bf16 %v5414, %v5414
        %v5505 = vpack.c.bf16 %v5415, %v5415
        %v5506 = vpack.c.bf16 %v5416, %v5416
        %v5507 = vpack.c.bf16 %v5417, %v5417
        %v5508 = vpack.c.bf16 %v5418, %v5418
        %v5509 = vpack.c.bf16 %v5419, %v5419
        %v5510 = vpack.c.bf16 %v5420, %v5420
        %v5511 = vpack.c.bf16 %v5421, %v5421
        %v5512 = vpack.c.bf16 %v5422, %v5422
        %v5513 = vpack.c.bf16 %v5423, %v5423
        %v5514 = vpack.c.bf16 %v5424, %v5424
        %v5515 = vpack.c.bf16 %v5425, %v5425
        %v5516 = vpack.c.bf16 %v5426, %v5426
        %v5517 = vpack.c.bf16 %v5427, %v5427
        %v5518 = vpack.c.bf16 %v5428, %v5428
        %v5519 = vpack.c.bf16 %v5429, %v5429
        %v5520 = vpack.c.bf16 %v5430, %v5430
        %v5521 = vpack.c.bf16 %v5431, %v5431
        %v5522 = vpack.c.bf16 %v5432, %v5432
        %v5523 = vpack.c.bf16 %v5433, %v5433
        %v5524 = vpack.c.bf16 %v5434, %v5434
        %v5525 = vpack.c.bf16 %v5435, %v5435
        %v5526 = vpack.c.bf16 %v5436, %v5436
        %v5527 = vpack.c.bf16 %v5437, %v5437
        %v5528 = vpack.c.bf16 %v5438, %v5438
        %v5609 = vunpack.c.l.b16 %v5439
        %v5610 = vunpack.c.l.b16 %v5440
        %v5611 = vunpack.c.l.b16 %v5441
        %v5612 = vunpack.c.l.b16 %v5442
        %v5613 = vunpack.c.l.b16 %v5443
        %v5614 = vunpack.c.l.b16 %v5444
        %v5615 = vunpack.c.l.b16 %v5445
        %v5616 = vunpack.c.l.b16 %v5446
        %v5617 = vunpack.c.l.b16 %v5447
        %v5618 = vunpack.c.l.b16 %v5448
        %v5619 = vunpack.c.l.b16 %v5449
        %v5620 = vunpack.c.l.b16 %v5450
        %v5621 = vunpack.c.l.b16 %v5451
        %v5622 = vunpack.c.l.b16 %v5452
        %v5623 = vunpack.c.l.b16 %v5453
        %v5624 = vunpack.c.l.b16 %v5454
        %v5625 = vunpack.c.l.b16 %v5455
        %v5626 = vunpack.c.l.b16 %v5456
        %v5627 = vunpack.c.l.b16 %v5457
        %v5628 = vunpack.c.l.b16 %v5458
        %v5629 = vunpack.c.l.b16 %v5459
        %v5630 = vunpack.c.l.b16 %v5460
        %v5631 = vunpack.c.l.b16 %v5461
        %v5632 = vunpack.c.l.b16 %v5462
        %v5633 = vunpack.c.l.b16 %v5463
        %v5634 = vunpack.c.l.b16 %v5464
        %v5635 = vunpack.c.l.b16 %v5465
        %v5636 = vunpack.c.l.b16 %v5466
        %v5637 = vunpack.c.l.b16 %v5467
        %v5638 = vunpack.c.l.b16 %v5468
        %v5639 = vunpack.c.l.b16 %v5469
        %v5640 = vunpack.c.l.b16 %v5470
        %v5641 = vunpack.c.l.b16 %v5471
        %v5642 = vunpack.c.l.b16 %v5472
        %v5643 = vunpack.c.l.b16 %v5473
        %v5644 = vunpack.c.l.b16 %v5474
        %v5645 = vunpack.c.l.b16 %v5475
        %v5646 = vunpack.c.l.b16 %v5476
        %v5647 = vunpack.c.l.b16 %v5477
        %v5648 = vunpack.c.l.b16 %v5478
        %v5649 = vunpack.c.l.b16 %v5479
        %v5650 = vunpack.c.l.b16 %v5480
        %v5651 = vunpack.c.l.b16 %v5481
        %v5652 = vunpack.c.l.b16 %v5482
        %v5653 = vunpack.c.l.b16 %v5483
        %v5654 = vunpack.c.l.b16 %v5484
        %v5655 = vunpack.c.l.b16 %v5485
        %v5656 = vunpack.c.l.b16 %v5486
        %v5657 = vunpack.c.l.b16 %v5487
        %v5658 = vunpack.c.l.b16 %v5488
        %v5659 = vunpack.c.l.b16 %v5489
        %v5660 = vunpack.c.l.b16 %v5490
        %v5661 = vunpack.c.l.b16 %v5491
        %v5662 = vunpack.c.l.b16 %v5492
        %v5663 = vunpack.c.l.b16 %v5493
        %v5664 = vunpack.c.l.b16 %v5494
        %v5665 = vunpack.c.l.b16 %v5495
        %v5666 = vunpack.c.l.b16 %v5496
        %v5667 = vunpack.c.l.b16 %v5497
        %v5668 = vunpack.c.l.b16 %v5498
        %v5669 = vunpack.c.l.b16 %v5499
        %v5670 = vunpack.c.l.b16 %v5500
        %v5671 = vunpack.c.l.b16 %v5501
        %v5672 = vunpack.c.l.b16 %v5502
        %v5673 = vunpack.c.l.b16 %v5503
        %v5674 = vunpack.c.l.b16 %v5504
        %v5675 = vunpack.c.l.b16 %v5505
        %v5676 = vunpack.c.l.b16 %v5506
        %v5677 = vunpack.c.l.b16 %v5507
        %v5678 = vunpack.c.l.b16 %v5508
        %v5679 = vunpack.c.l.b16 %v5509
        %v5680 = vunpack.c.l.b16 %v5510
        %v5681 = vunpack.c.l.b16 %v5511
        %v5682 = vunpack.c.l.b16 %v5512
        %v5683 = vunpack.c.l.b16 %v5513
        %v5684 = vunpack.c.l.b16 %v5514
        %v5685 = vunpack.c.l.b16 %v5515
        %v5686 = vunpack.c.l.b16 %v5516
        %v5687 = vunpack.c.l.b16 %v5517
        %v5688 = vunpack.c.l.b16 %v5518
        %v5689 = vld [vmem:[%s5] sm:$0xff]
        %v5690 = vld [vmem:[%s5 + $0x8] sm:$0xf]
        %v5691 = vld [vmem:[%s5 + $0xc] sm:$0xff]
        %v5692 = vld [vmem:[%s5 + $0x14] sm:$0xf]
        %v5693 = vld [vmem:[%s5 + $0x18] sm:$0xff]
        %v5694 = vld [vmem:[%s5 + $0x20] sm:$0xf]
        %v5695 = vld [vmem:[%s5 + $0x24] sm:$0xff]
        %v5696 = vld [vmem:[%s5 + $0x2c] sm:$0xf]
        %v5697 = vld [vmem:[%s5 + $0x30] sm:$0xff]
        %v5698 = vld [vmem:[%s5 + $0x38] sm:$0xf]
        %v5699 = vld [vmem:[%s5 + $0x3c] sm:$0xff]
        %v5700 = vld [vmem:[%s5 + $0x44] sm:$0xf]
        %v5701 = vld [vmem:[%s5 + $0x48] sm:$0xff]
        %v5702 = vld [vmem:[%s5 + $0x50] sm:$0xf]
        %v5703 = vld [vmem:[%s5 + $0x54] sm:$0xff]
        %v5704 = vld [vmem:[%s5 + $0x5c] sm:$0xf]
        %v5705 = vld [vmem:[%s5 + $0x60] sm:$0xff]
        %v5706 = vld [vmem:[%s5 + $0x68] sm:$0xf]
        %v5707 = vld [vmem:[%s5 + $0x6c] sm:$0xff]
        %v5708 = vld [vmem:[%s5 + $0x74] sm:$0xf]
        %v5709 = vld [vmem:[%s5 + $0x78] sm:$0xff]
        %v5710 = vld [vmem:[%s5 + $0x80] sm:$0xf]
        %v5711 = vld [vmem:[%s5 + $0x84] sm:$0xff]
        %v5712 = vld [vmem:[%s5 + $0x8c] sm:$0xf]
        %v5713 = vld [vmem:[%s5 + $0x90] sm:$0xff]
        %v5714 = vld [vmem:[%s5 + $0x98] sm:$0xf]
        %v5715 = vld [vmem:[%s5 + $0x9c] sm:$0xff]
        %v5716 = vld [vmem:[%s5 + $0xa4] sm:$0xf]
        %v5717 = vld [vmem:[%s5 + $0xa8] sm:$0xff]
        %v5718 = vld [vmem:[%s5 + $0xb0] sm:$0xf]
        %v5719 = vld [vmem:[%s5 + $0xb4] sm:$0xff]
        %v5720 = vld [vmem:[%s5 + $0xbc] sm:$0xf]
        %v5721 = vld [vmem:[%s5 + $0xc0] sm:$0xff]
        %v5722 = vld [vmem:[%s5 + $0xc8] sm:$0xf]
        %v5723 = vld [vmem:[%s5 + $0xcc] sm:$0xff]
        %v5724 = vld [vmem:[%s5 + $0xd4] sm:$0xf]
        %v5725 = vld [vmem:[%s5 + $0xd8] sm:$0xff]
        %v5726 = vld [vmem:[%s5 + $0xe0] sm:$0xf]
        %v5727 = vld [vmem:[%s5 + $0xe4] sm:$0xff]
        %v5728 = vld [vmem:[%s5 + $0xec] sm:$0xf]
        %v5729 = vld [vmem:[%s5 + $0xf0] sm:$0xff]
        %v5730 = vld [vmem:[%s5 + $0xf8] sm:$0xf]
        %v5731 = vld [vmem:[%s5 + $0xfc] sm:$0xff]
        %v5732 = vld [vmem:[%s5 + $0x104] sm:$0xf]
        %v5733 = vld [vmem:[%s5 + $0x108] sm:$0xff]
        %v5734 = vld [vmem:[%s5 + $0x110] sm:$0xf]
        %v5735 = vld [vmem:[%s5 + $0x114] sm:$0xff]
        %v5736 = vld [vmem:[%s5 + $0x11c] sm:$0xf]
        %v5737 = vld [vmem:[%s5 + $0x120] sm:$0xff]
        %v5738 = vld [vmem:[%s5 + $0x128] sm:$0xf]
        %v5739 = vld [vmem:[%s5 + $0x12c] sm:$0xff]
        %v5740 = vld [vmem:[%s5 + $0x134] sm:$0xf]
        %v5741 = vld [vmem:[%s5 + $0x138] sm:$0xff]
        %v5742 = vld [vmem:[%s5 + $0x140] sm:$0xf]
        %v5743 = vld [vmem:[%s5 + $0x144] sm:$0xff]
        %v5744 = vld [vmem:[%s5 + $0x14c] sm:$0xf]
        %v5745 = vld [vmem:[%s5 + $0x150] sm:$0xff]
        %v5746 = vld [vmem:[%s5 + $0x158] sm:$0xf]
        %v5747 = vld [vmem:[%s5 + $0x15c] sm:$0xff]
        %v5748 = vld [vmem:[%s5 + $0x164] sm:$0xf]
        %v5749 = vld [vmem:[%s5 + $0x168] sm:$0xff]
        %v5750 = vld [vmem:[%s5 + $0x170] sm:$0xf]
        %v5751 = vld [vmem:[%s5 + $0x174] sm:$0xff]
        %v5752 = vld [vmem:[%s5 + $0x17c] sm:$0xf]
        %v5753 = vld [vmem:[%s5 + $0x180] sm:$0xff]
        %v5754 = vld [vmem:[%s5 + $0x188] sm:$0xf]
        %v5755 = vld [vmem:[%s5 + $0x18c] sm:$0xff]
        %v5756 = vld [vmem:[%s5 + $0x194] sm:$0xf]
        %v5757 = vld [vmem:[%s5 + $0x198] sm:$0xff]
        %v5758 = vld [vmem:[%s5 + $0x1a0] sm:$0xf]
        %v5759 = vld [vmem:[%s5 + $0x1a4] sm:$0xff]
        %v5760 = vld [vmem:[%s5 + $0x1ac] sm:$0xf]
        %v5761 = vld [vmem:[%s5 + $0x1b0] sm:$0xff]
        %v5762 = vld [vmem:[%s5 + $0x1b8] sm:$0xf]
        %v5763 = vld [vmem:[%s5 + $0x1bc] sm:$0xff]
        %v5764 = vld [vmem:[%s5 + $0x1c4] sm:$0xf]
        %v5765 = vld [vmem:[%s5 + $0x1c8] sm:$0xff]
        %v5766 = vld [vmem:[%s5 + $0x1d0] sm:$0xf]
        %v5767 = vld [vmem:[%s5 + $0x1d4] sm:$0xff]
        %v5768 = vld [vmem:[%s5 + $0x1dc] sm:$0xf]
        %v5769 = vld [vmem:[%s5 + $0x1e0] sm:$0xff]
        %v5770 = vld [vmem:[%s5 + $0x1e8] sm:$0xf]
        %v5771 = vld [vmem:[%s5 + $0x1ec] sm:$0xff]
        %v5772 = vld [vmem:[%s5 + $0x1f4] sm:$0xf]
        %v5773 = vld [vmem:[%s5 + $0x1f8] sm:$0xff]
        %v5774 = vld [vmem:[%s5 + $0x200] sm:$0xf]
        %v5775 = vld [vmem:[%s5 + $0x204] sm:$0xff]
        %v5776 = vld [vmem:[%s5 + $0x20c] sm:$0xf]
        %v5777 = vld [vmem:[%s5 + $0x210] sm:$0xff]
        %v5778 = vld [vmem:[%s5 + $0x218] sm:$0xf]
        %v5779 = vld [vmem:[%s5 + $0x21c] sm:$0xff]
        %v5780 = vld [vmem:[%s5 + $0x224] sm:$0xf]
        %v5781 = vld [vmem:[%s5 + $0x228] sm:$0xff]
        %v5782 = vld [vmem:[%s5 + $0x230] sm:$0xf]
        %v5783 = vld [vmem:[%s5 + $0x234] sm:$0xff]
        %v5784 = vld [vmem:[%s5 + $0x23c] sm:$0xf]
        %v5785 = vld [vmem:[%s5 + $0x240] sm:$0xff]
        %v5786 = vld [vmem:[%s5 + $0x248] sm:$0xf]
        %v5787 = vld [vmem:[%s5 + $0x24c] sm:$0xff]
        %v5788 = vld [vmem:[%s5 + $0x254] sm:$0xf]
        %v5789 = vld [vmem:[%s5 + $0x258] sm:$0xff]
        %v5790 = vld [vmem:[%s5 + $0x260] sm:$0xf]
        %v5791 = vld [vmem:[%s5 + $0x264] sm:$0xff]
        %v5792 = vld [vmem:[%s5 + $0x26c] sm:$0xf]
        %v5793 = vld [vmem:[%s5 + $0x270] sm:$0xff]
        %v5794 = vld [vmem:[%s5 + $0x278] sm:$0xf]
        %v5795 = vld [vmem:[%s5 + $0x27c] sm:$0xff]
        %v5796 = vld [vmem:[%s5 + $0x284] sm:$0xf]
        %v5797 = vld [vmem:[%s5 + $0x288] sm:$0xff]
        %v5798 = vld [vmem:[%s5 + $0x290] sm:$0xf]
        %v5799 = vld [vmem:[%s5 + $0x294] sm:$0xff]
        %v5800 = vld [vmem:[%s5 + $0x29c] sm:$0xf]
        %v5801 = vld [vmem:[%s5 + $0x2a0] sm:$0xff]
        %v5802 = vld [vmem:[%s5 + $0x2a8] sm:$0xf]
        %v5803 = vld [vmem:[%s5 + $0x2ac] sm:$0xff]
        %v5804 = vld [vmem:[%s5 + $0x2b4] sm:$0xf]
        %v5805 = vld [vmem:[%s5 + $0x2b8] sm:$0xff]
        %v5806 = vld [vmem:[%s5 + $0x2c0] sm:$0xf]
        %v5807 = vld [vmem:[%s5 + $0x2c4] sm:$0xff]
        %v5808 = vld [vmem:[%s5 + $0x2cc] sm:$0xf]
        %v5809 = vld [vmem:[%s5 + $0x2d0] sm:$0xff]
        %v5810 = vld [vmem:[%s5 + $0x2d8] sm:$0xf]
        %v5811 = vld [vmem:[%s5 + $0x2dc] sm:$0xff]
        %v5812 = vld [vmem:[%s5 + $0x2e4] sm:$0xf]
        %v5813 = vld [vmem:[%s5 + $0x2e8] sm:$0xff]
        %v5814 = vld [vmem:[%s5 + $0x2f0] sm:$0xf]
        %v5815 = vld [vmem:[%s5 + $0x2f4] sm:$0xff]
        %v5816 = vld [vmem:[%s5 + $0x2fc] sm:$0xf]
        %v5817 = vld [vmem:[%s5 + $0x300] sm:$0xff]
        %v5818 = vld [vmem:[%s5 + $0x308] sm:$0xf]
        %v5819 = vld [vmem:[%s5 + $0x30c] sm:$0xff]
        %v5820 = vld [vmem:[%s5 + $0x314] sm:$0xf]
        %v5821 = vld [vmem:[%s5 + $0x318] sm:$0xff]
        %v5822 = vld [vmem:[%s5 + $0x320] sm:$0xf]
        %v5823 = vld [vmem:[%s5 + $0x324] sm:$0xff]
        %v5824 = vld [vmem:[%s5 + $0x32c] sm:$0xf]
        %v5825 = vld [vmem:[%s5 + $0x330] sm:$0xff]
        %v5826 = vld [vmem:[%s5 + $0x338] sm:$0xf]
        %v5827 = vld [vmem:[%s5 + $0x33c] sm:$0xff]
        %v5828 = vld [vmem:[%s5 + $0x344] sm:$0xf]
        %v5829 = vld [vmem:[%s5 + $0x348] sm:$0xff]
        %v5830 = vld [vmem:[%s5 + $0x350] sm:$0xf]
        %v5831 = vld [vmem:[%s5 + $0x354] sm:$0xff]
        %v5832 = vld [vmem:[%s5 + $0x35c] sm:$0xf]
        %v5833 = vld [vmem:[%s5 + $0x360] sm:$0xff]
        %v5834 = vld [vmem:[%s5 + $0x368] sm:$0xf]
        %v5835 = vld [vmem:[%s5 + $0x36c] sm:$0xff]
        %v5836 = vld [vmem:[%s5 + $0x374] sm:$0xf]
        %v5837 = vld [vmem:[%s5 + $0x378] sm:$0xff]
        %v5838 = vld [vmem:[%s5 + $0x380] sm:$0xf]
        %v5839 = vld [vmem:[%s5 + $0x384] sm:$0xff]
        %v5840 = vld [vmem:[%s5 + $0x38c] sm:$0xf]
        %v5841 = vld [vmem:[%s5 + $0x390] sm:$0xff]
        %v5842 = vld [vmem:[%s5 + $0x398] sm:$0xf]
        %v5843 = vld [vmem:[%s5 + $0x39c] sm:$0xff]
        %v5844 = vld [vmem:[%s5 + $0x3a4] sm:$0xf]
        %v5845 = vld [vmem:[%s5 + $0x3a8] sm:$0xff]
        %v5846 = vld [vmem:[%s5 + $0x3b0] sm:$0xf]
        %v5847 = vld [vmem:[%s5 + $0x3b4] sm:$0xff]
        %v5848 = vld [vmem:[%s5 + $0x3bc] sm:$0xf]
        %v5854 = vunpack.c.l.b16 %v5519
        %v5855 = vunpack.c.l.b16 %v5520
        %v5856 = vunpack.c.l.b16 %v5521
        %v5857 = vunpack.c.l.b16 %v5522
        %v5858 = vunpack.c.l.b16 %v5523
        %s5859 = scalar_lea.vmem %s5, 960
        %v5860 = vld [vmem:[%s5859] sm:$0xff]
        %v5861 = vld [vmem:[%s5859 + $0x8] sm:$0xf]
        %v5862 = vld [vmem:[%s5859 + $0xc] sm:$0xff]
        %v5863 = vld [vmem:[%s5859 + $0x14] sm:$0xf]
        %v5864 = vld [vmem:[%s5859 + $0x18] sm:$0xff]
        %v5865 = vld [vmem:[%s5859 + $0x20] sm:$0xf]
        %v5866 = vld [vmem:[%s5859 + $0x24] sm:$0xff]
        %v5867 = vld [vmem:[%s5859 + $0x2c] sm:$0xf]
        %v5868 = vld [vmem:[%s5859 + $0x30] sm:$0xff]
        %v5869 = vld [vmem:[%s5859 + $0x38] sm:$0xf]
        %v5870 = vld [vmem:[%s5859 + $0x3c] sm:$0xff]
        %v5871 = vld [vmem:[%s5859 + $0x44] sm:$0xf]
        %v5872 = vld [vmem:[%s5859 + $0x48] sm:$0xff]
        %v5873 = vld [vmem:[%s5859 + $0x50] sm:$0xf]
        %v5874 = vld [vmem:[%s5859 + $0x54] sm:$0xff]
        %v5875 = vld [vmem:[%s5859 + $0x5c] sm:$0xf]
        %v5876 = vld [vmem:[%s5859 + $0x60] sm:$0xff]
        %v5877 = vld [vmem:[%s5859 + $0x68] sm:$0xf]
        %v5878 = vld [vmem:[%s5859 + $0x6c] sm:$0xff]
        %v5879 = vld [vmem:[%s5859 + $0x74] sm:$0xf]
        %v5880 = vld [vmem:[%s5859 + $0x78] sm:$0xff]
        %v5881 = vld [vmem:[%s5859 + $0x80] sm:$0xf]
        %v5882 = vld [vmem:[%s5859 + $0x84] sm:$0xff]
        %v5883 = vld [vmem:[%s5859 + $0x8c] sm:$0xf]
        %v5884 = vld [vmem:[%s5859 + $0x90] sm:$0xff]
        %v5885 = vld [vmem:[%s5859 + $0x98] sm:$0xf]
        %v5886 = vld [vmem:[%s5859 + $0x9c] sm:$0xff]
        %v5887 = vld [vmem:[%s5859 + $0xa4] sm:$0xf]
        %v5888 = vld [vmem:[%s5859 + $0xa8] sm:$0xff]
        %v5889 = vld [vmem:[%s5859 + $0xb0] sm:$0xf]
        %v5890 = vld [vmem:[%s5859 + $0xb4] sm:$0xff]
        %v5891 = vld [vmem:[%s5859 + $0xbc] sm:$0xf]
        %v5892 = vld [vmem:[%s5859 + $0xc0] sm:$0xff]
        %v5893 = vld [vmem:[%s5859 + $0xc8] sm:$0xf]
        %v5894 = vld [vmem:[%s5859 + $0xcc] sm:$0xff]
        %v5895 = vld [vmem:[%s5859 + $0xd4] sm:$0xf]
        %v5896 = vld [vmem:[%s5859 + $0xd8] sm:$0xff]
        %v5897 = vld [vmem:[%s5859 + $0xe0] sm:$0xf]
        %v5898 = vld [vmem:[%s5859 + $0xe4] sm:$0xff]
        %v5899 = vld [vmem:[%s5859 + $0xec] sm:$0xf]
        %v5900 = vld [vmem:[%s5859 + $0xf0] sm:$0xff]
        %v5901 = vld [vmem:[%s5859 + $0xf8] sm:$0xf]
        %v5902 = vld [vmem:[%s5859 + $0xfc] sm:$0xff]
        %v5903 = vld [vmem:[%s5859 + $0x104] sm:$0xf]
        %v5904 = vld [vmem:[%s5859 + $0x108] sm:$0xff]
        %v5905 = vld [vmem:[%s5859 + $0x110] sm:$0xf]
        %v5906 = vld [vmem:[%s5859 + $0x114] sm:$0xff]
        %v5907 = vld [vmem:[%s5859 + $0x11c] sm:$0xf]
        %v5908 = vld [vmem:[%s5859 + $0x120] sm:$0xff]
        %v5909 = vld [vmem:[%s5859 + $0x128] sm:$0xf]
        %v5910 = vld [vmem:[%s5859 + $0x12c] sm:$0xff]
        %v5911 = vld [vmem:[%s5859 + $0x134] sm:$0xf]
        %v5912 = vld [vmem:[%s5859 + $0x138] sm:$0xff]
        %v5913 = vld [vmem:[%s5859 + $0x140] sm:$0xf]
        %v5914 = vld [vmem:[%s5859 + $0x144] sm:$0xff]
        %v5915 = vld [vmem:[%s5859 + $0x14c] sm:$0xf]
        %v5916 = vld [vmem:[%s5859 + $0x150] sm:$0xff]
        %v5917 = vld [vmem:[%s5859 + $0x158] sm:$0xf]
        %v5918 = vld [vmem:[%s5859 + $0x15c] sm:$0xff]
        %v5919 = vld [vmem:[%s5859 + $0x164] sm:$0xf]
        %v5920 = vld [vmem:[%s5859 + $0x168] sm:$0xff]
        %v5921 = vld [vmem:[%s5859 + $0x170] sm:$0xf]
        %v5922 = vld [vmem:[%s5859 + $0x174] sm:$0xff]
        %v5923 = vld [vmem:[%s5859 + $0x17c] sm:$0xf]
        %v5924 = vld [vmem:[%s5859 + $0x180] sm:$0xff]
        %v5925 = vld [vmem:[%s5859 + $0x188] sm:$0xf]
        %v5926 = vld [vmem:[%s5859 + $0x18c] sm:$0xff]
        %v5927 = vld [vmem:[%s5859 + $0x194] sm:$0xf]
        %v5928 = vld [vmem:[%s5859 + $0x198] sm:$0xff]
        %v5929 = vld [vmem:[%s5859 + $0x1a0] sm:$0xf]
        %v5930 = vld [vmem:[%s5859 + $0x1a4] sm:$0xff]
        %v5931 = vld [vmem:[%s5859 + $0x1ac] sm:$0xf]
        %v5932 = vld [vmem:[%s5859 + $0x1b0] sm:$0xff]
        %v5933 = vld [vmem:[%s5859 + $0x1b8] sm:$0xf]
        %v5934 = vld [vmem:[%s5859 + $0x1bc] sm:$0xff]
        %v5935 = vld [vmem:[%s5859 + $0x1c4] sm:$0xf]
        %v5936 = vld [vmem:[%s5859 + $0x1c8] sm:$0xff]
        %v5937 = vld [vmem:[%s5859 + $0x1d0] sm:$0xf]
        %v5938 = vld [vmem:[%s5859 + $0x1d4] sm:$0xff]
        %v5939 = vld [vmem:[%s5859 + $0x1dc] sm:$0xf]
        %v5940 = vld [vmem:[%s5859 + $0x1e0] sm:$0xff]
        %v5941 = vld [vmem:[%s5859 + $0x1e8] sm:$0xf]
        %v5942 = vld [vmem:[%s5859 + $0x1ec] sm:$0xff]
        %v5943 = vld [vmem:[%s5859 + $0x1f4] sm:$0xf]
        %v5944 = vld [vmem:[%s5859 + $0x1f8] sm:$0xff]
        %v5945 = vld [vmem:[%s5859 + $0x200] sm:$0xf]
        %v5946 = vld [vmem:[%s5859 + $0x204] sm:$0xff]
        %v5947 = vld [vmem:[%s5859 + $0x20c] sm:$0xf]
        %v5948 = vld [vmem:[%s5859 + $0x210] sm:$0xff]
        %v5949 = vld [vmem:[%s5859 + $0x218] sm:$0xf]
        %v5950 = vld [vmem:[%s5859 + $0x21c] sm:$0xff]
        %v5951 = vld [vmem:[%s5859 + $0x224] sm:$0xf]
        %v5952 = vld [vmem:[%s5859 + $0x228] sm:$0xff]
        %v5953 = vld [vmem:[%s5859 + $0x230] sm:$0xf]
        %v5954 = vld [vmem:[%s5859 + $0x234] sm:$0xff]
        %v5955 = vld [vmem:[%s5859 + $0x23c] sm:$0xf]
        %v5956 = vld [vmem:[%s5859 + $0x240] sm:$0xff]
        %v5957 = vld [vmem:[%s5859 + $0x248] sm:$0xf]
        %v5958 = vld [vmem:[%s5859 + $0x24c] sm:$0xff]
        %v5959 = vld [vmem:[%s5859 + $0x254] sm:$0xf]
        %v5960 = vld [vmem:[%s5859 + $0x258] sm:$0xff]
        %v5961 = vld [vmem:[%s5859 + $0x260] sm:$0xf]
        %v5962 = vld [vmem:[%s5859 + $0x264] sm:$0xff]
        %v5963 = vld [vmem:[%s5859 + $0x26c] sm:$0xf]
        %v5964 = vld [vmem:[%s5859 + $0x270] sm:$0xff]
        %v5965 = vld [vmem:[%s5859 + $0x278] sm:$0xf]
        %v5966 = vld [vmem:[%s5859 + $0x27c] sm:$0xff]
        %v5967 = vld [vmem:[%s5859 + $0x284] sm:$0xf]
        %v5968 = vld [vmem:[%s5859 + $0x288] sm:$0xff]
        %v5969 = vld [vmem:[%s5859 + $0x290] sm:$0xf]
        %v5970 = vld [vmem:[%s5859 + $0x294] sm:$0xff]
        %v5971 = vld [vmem:[%s5859 + $0x29c] sm:$0xf]
        %v5972 = vld [vmem:[%s5859 + $0x2a0] sm:$0xff]
        %v5973 = vld [vmem:[%s5859 + $0x2a8] sm:$0xf]
        %v5974 = vld [vmem:[%s5859 + $0x2ac] sm:$0xff]
        %v5975 = vld [vmem:[%s5859 + $0x2b4] sm:$0xf]
        %v5976 = vld [vmem:[%s5859 + $0x2b8] sm:$0xff]
        %v5977 = vld [vmem:[%s5859 + $0x2c0] sm:$0xf]
        %v5978 = vld [vmem:[%s5859 + $0x2c4] sm:$0xff]
        %v5979 = vld [vmem:[%s5859 + $0x2cc] sm:$0xf]
        %v5980 = vld [vmem:[%s5859 + $0x2d0] sm:$0xff]
        %v5981 = vld [vmem:[%s5859 + $0x2d8] sm:$0xf]
        %v5982 = vld [vmem:[%s5859 + $0x2dc] sm:$0xff]
        %v5983 = vld [vmem:[%s5859 + $0x2e4] sm:$0xf]
        %v5984 = vld [vmem:[%s5859 + $0x2e8] sm:$0xff]
        %v5985 = vld [vmem:[%s5859 + $0x2f0] sm:$0xf]
        %v5986 = vld [vmem:[%s5859 + $0x2f4] sm:$0xff]
        %v5987 = vld [vmem:[%s5859 + $0x2fc] sm:$0xf]
        %v5988 = vld [vmem:[%s5859 + $0x300] sm:$0xff]
        %v5989 = vld [vmem:[%s5859 + $0x308] sm:$0xf]
        %v5990 = vld [vmem:[%s5859 + $0x30c] sm:$0xff]
        %v5991 = vld [vmem:[%s5859 + $0x314] sm:$0xf]
        %v5992 = vld [vmem:[%s5859 + $0x318] sm:$0xff]
        %v5993 = vld [vmem:[%s5859 + $0x320] sm:$0xf]
        %v5994 = vld [vmem:[%s5859 + $0x324] sm:$0xff]
        %v5995 = vld [vmem:[%s5859 + $0x32c] sm:$0xf]
        %v5996 = vld [vmem:[%s5859 + $0x330] sm:$0xff]
        %v5997 = vld [vmem:[%s5859 + $0x338] sm:$0xf]
        %v5998 = vld [vmem:[%s5859 + $0x33c] sm:$0xff]
        %v5999 = vld [vmem:[%s5859 + $0x344] sm:$0xf]
        %v6000 = vld [vmem:[%s5859 + $0x348] sm:$0xff]
        %v6001 = vld [vmem:[%s5859 + $0x350] sm:$0xf]
        %v6002 = vld [vmem:[%s5859 + $0x354] sm:$0xff]
        %v6003 = vld [vmem:[%s5859 + $0x35c] sm:$0xf]
        %v6004 = vld [vmem:[%s5859 + $0x360] sm:$0xff]
        %v6005 = vld [vmem:[%s5859 + $0x368] sm:$0xf]
        %v6006 = vld [vmem:[%s5859 + $0x36c] sm:$0xff]
        %v6007 = vld [vmem:[%s5859 + $0x374] sm:$0xf]
        %v6008 = vld [vmem:[%s5859 + $0x378] sm:$0xff]
        %v6009 = vld [vmem:[%s5859 + $0x380] sm:$0xf]
        %v6010 = vld [vmem:[%s5859 + $0x384] sm:$0xff]
        %v6011 = vld [vmem:[%s5859 + $0x38c] sm:$0xf]
        %v6012 = vld [vmem:[%s5859 + $0x390] sm:$0xff]
        %v6013 = vld [vmem:[%s5859 + $0x398] sm:$0xf]
        %v6014 = vld [vmem:[%s5859 + $0x39c] sm:$0xff]
        %v6015 = vld [vmem:[%s5859 + $0x3a4] sm:$0xf]
        %v6016 = vld [vmem:[%s5859 + $0x3a8] sm:$0xff]
        %v6017 = vld [vmem:[%s5859 + $0x3b0] sm:$0xf]
        %v6018 = vld [vmem:[%s5859 + $0x3b4] sm:$0xff]
        %v6019 = vld [vmem:[%s5859 + $0x3bc] sm:$0xf]
        %v6020 = vpack.c.b16 %v5619, %v5614
        %v6021 = vpack.c.b16 %v5620, %v5615
        %v6022 = vpack.c.b16 %v5621, %v5616
        %v6023 = vpack.c.b16 %v5622, %v5617
        %v6024 = vpack.c.b16 %v5623, %v5618
        %v6025 = vpack.c.b16 %v5629, %v5624
        %v6026 = vpack.c.b16 %v5630, %v5625
        %v6027 = vpack.c.b16 %v5631, %v5626
        %v6028 = vpack.c.b16 %v5632, %v5627
        %v6029 = vpack.c.b16 %v5633, %v5628
        %v6030 = vpack.c.b16 %v5639, %v5634
        %v6031 = vpack.c.b16 %v5640, %v5635
        %v6032 = vpack.c.b16 %v5641, %v5636
        %v6033 = vpack.c.b16 %v5642, %v5637
        %v6034 = vpack.c.b16 %v5643, %v5638
        %v6035 = vpack.c.b16 %v5649, %v5644
        %v6036 = vpack.c.b16 %v5650, %v5645
        %v6037 = vpack.c.b16 %v5651, %v5646
        %v6038 = vpack.c.b16 %v5652, %v5647
        %v6039 = vpack.c.b16 %v5653, %v5648
        %v6040 = vpack.c.b16 %v5659, %v5654
        %v6041 = vpack.c.b16 %v5660, %v5655
        %v6042 = vpack.c.b16 %v5661, %v5656
        %v6043 = vpack.c.b16 %v5662, %v5657
        %v6044 = vpack.c.b16 %v5663, %v5658
        %v6045 = vpack.c.b16 %v5669, %v5664
        %v6046 = vpack.c.b16 %v5670, %v5665
        %v6047 = vpack.c.b16 %v5671, %v5666
        %v6048 = vpack.c.b16 %v5672, %v5667
        %v6049 = vpack.c.b16 %v5673, %v5668
        %v6050 = vpack.c.b16 %v5679, %v5674
        %v6051 = vpack.c.b16 %v5680, %v5675
        %v6052 = vpack.c.b16 %v5681, %v5676
        %v6053 = vpack.c.b16 %v5682, %v5677
        %v6054 = vpack.c.b16 %v5683, %v5678
        %v6055 = vpack.c.b16 %v5854, %v5684
        %v6056 = vpack.c.b16 %v5855, %v5685
        %v6057 = vpack.c.b16 %v5856, %v5686
        %v6058 = vpack.c.b16 %v5857, %v5687
        %v6059 = vpack.c.b16 %v5858, %v5688
        %v6260 = vunpack.c.l.b16 %v5860
        %v6261 = vunpack.c.h.b16 %v5860
        %v6262 = vunpack.c.l.b16 %v5861
        %v6263 = vunpack.c.l.b16 %v5862
        %v6264 = vunpack.c.h.b16 %v5862
        %v6265 = vunpack.c.l.b16 %v5863
        %v6266 = vunpack.c.l.b16 %v5864
        %v6267 = vunpack.c.h.b16 %v5864
        %v6268 = vunpack.c.l.b16 %v5865
        %v6269 = vunpack.c.l.b16 %v5866
        %v6270 = vunpack.c.h.b16 %v5866
        %v6271 = vunpack.c.l.b16 %v5867
        %v6272 = vunpack.c.l.b16 %v5868
        %v6273 = vunpack.c.h.b16 %v5868
        %v6274 = vunpack.c.l.b16 %v5869
        %v6275 = vunpack.c.l.b16 %v5870
        %v6276 = vunpack.c.h.b16 %v5870
        %v6277 = vunpack.c.l.b16 %v5871
        %v6278 = vunpack.c.l.b16 %v5872
        %v6279 = vunpack.c.h.b16 %v5872
        %v6280 = vunpack.c.l.b16 %v5873
        %v6281 = vunpack.c.l.b16 %v5874
        %v6282 = vunpack.c.h.b16 %v5874
        %v6283 = vunpack.c.l.b16 %v5875
        %v6284 = vunpack.c.l.b16 %v5876
        %v6285 = vunpack.c.h.b16 %v5876
        %v6286 = vunpack.c.l.b16 %v5877
        %v6287 = vunpack.c.l.b16 %v5878
        %v6288 = vunpack.c.h.b16 %v5878
        %v6289 = vunpack.c.l.b16 %v5879
        %v6290 = vunpack.c.l.b16 %v5880
        %v6291 = vunpack.c.h.b16 %v5880
        %v6292 = vunpack.c.l.b16 %v5881
        %v6293 = vunpack.c.l.b16 %v5882
        %v6294 = vunpack.c.h.b16 %v5882
        %v6295 = vunpack.c.l.b16 %v5883
        %v6296 = vunpack.c.l.b16 %v5884
        %v6297 = vunpack.c.h.b16 %v5884
        %v6298 = vunpack.c.l.b16 %v5885
        %v6299 = vunpack.c.l.b16 %v5886
        %v6300 = vunpack.c.h.b16 %v5886
        %v6301 = vunpack.c.l.b16 %v5887
        %v6302 = vunpack.c.l.b16 %v5888
        %v6303 = vunpack.c.h.b16 %v5888
        %v6304 = vunpack.c.l.b16 %v5889
        %v6305 = vunpack.c.l.b16 %v5890
        %v6306 = vunpack.c.h.b16 %v5890
        %v6307 = vunpack.c.l.b16 %v5891
        %v6308 = vunpack.c.l.b16 %v5892
        %v6309 = vunpack.c.h.b16 %v5892
        %v6310 = vunpack.c.l.b16 %v5893
        %v6311 = vunpack.c.l.b16 %v5894
        %v6312 = vunpack.c.h.b16 %v5894
        %v6313 = vunpack.c.l.b16 %v5895
        %v6314 = vunpack.c.l.b16 %v5896
        %v6315 = vunpack.c.h.b16 %v5896
        %v6316 = vunpack.c.l.b16 %v5897
        %v6317 = vunpack.c.l.b16 %v5898
        %v6318 = vunpack.c.h.b16 %v5898
        %v6319 = vunpack.c.l.b16 %v5899
        %v6320 = vunpack.c.l.b16 %v5900
        %v6321 = vunpack.c.h.b16 %v5900
        %v6322 = vunpack.c.l.b16 %v5901
        %v6323 = vunpack.c.l.b16 %v5902
        %v6324 = vunpack.c.h.b16 %v5902
        %v6325 = vunpack.c.l.b16 %v5903
        %v6326 = vunpack.c.l.b16 %v5904
        %v6327 = vunpack.c.h.b16 %v5904
        %v6328 = vunpack.c.l.b16 %v5905
        %v6329 = vunpack.c.l.b16 %v5906
        %v6330 = vunpack.c.h.b16 %v5906
        %v6331 = vunpack.c.l.b16 %v5907
        %v6332 = vunpack.c.l.b16 %v5908
        %v6333 = vunpack.c.h.b16 %v5908
        %v6334 = vunpack.c.l.b16 %v5909
        %v6335 = vunpack.c.l.b16 %v5910
        %v6336 = vunpack.c.h.b16 %v5910
        %v6337 = vunpack.c.l.b16 %v5911
        %v6338 = vunpack.c.l.b16 %v5912
        %v6339 = vunpack.c.h.b16 %v5912
        %v6340 = vunpack.c.l.b16 %v5913
        %v6341 = vunpack.c.l.b16 %v5914
        %v6342 = vunpack.c.h.b16 %v5914
        %v6343 = vunpack.c.l.b16 %v5915
        %v6344 = vunpack.c.l.b16 %v5916
        %v6345 = vunpack.c.h.b16 %v5916
        %v6346 = vunpack.c.l.b16 %v5917
        %v6347 = vunpack.c.l.b16 %v5918
        %v6348 = vunpack.c.h.b16 %v5918
        %v6349 = vunpack.c.l.b16 %v5919
        %v6350 = vunpack.c.l.b16 %v5920
        %v6351 = vunpack.c.h.b16 %v5920
        %v6352 = vunpack.c.l.b16 %v5921
        %v6353 = vunpack.c.l.b16 %v5922
        %v6354 = vunpack.c.h.b16 %v5922
        %v6355 = vunpack.c.l.b16 %v5923
        %v6356 = vunpack.c.l.b16 %v5924
        %v6357 = vunpack.c.h.b16 %v5924
        %v6358 = vunpack.c.l.b16 %v5925
        %v6359 = vunpack.c.l.b16 %v5926
        %v6360 = vunpack.c.h.b16 %v5926
        %v6361 = vunpack.c.l.b16 %v5927
        %v6362 = vunpack.c.l.b16 %v5928
        %v6363 = vunpack.c.h.b16 %v5928
        %v6364 = vunpack.c.l.b16 %v5929
        %v6365 = vunpack.c.l.b16 %v5930
        %v6366 = vunpack.c.h.b16 %v5930
        %v6367 = vunpack.c.l.b16 %v5931
        %v6368 = vunpack.c.l.b16 %v5932
        %v6369 = vunpack.c.h.b16 %v5932
        %v6370 = vunpack.c.l.b16 %v5933
        %v6371 = vunpack.c.l.b16 %v5934
        %v6372 = vunpack.c.h.b16 %v5934
        %v6373 = vunpack.c.l.b16 %v5935
        %v6374 = vunpack.c.l.b16 %v5936
        %v6375 = vunpack.c.h.b16 %v5936
        %v6376 = vunpack.c.l.b16 %v5937
        %v6377 = vunpack.c.l.b16 %v5938
        %v6378 = vunpack.c.h.b16 %v5938
        %v6379 = vunpack.c.l.b16 %v5939
        %v6380 = vunpack.c.l.b16 %v5940
        %v6381 = vunpack.c.h.b16 %v5940
        %v6382 = vunpack.c.l.b16 %v5941
        %v6383 = vunpack.c.l.b16 %v5942
        %v6384 = vunpack.c.h.b16 %v5942
        %v6385 = vunpack.c.l.b16 %v5943
        %v6386 = vunpack.c.l.b16 %v5944
        %v6387 = vunpack.c.h.b16 %v5944
        %v6388 = vunpack.c.l.b16 %v5945
        %v6389 = vunpack.c.l.b16 %v5946
        %v6390 = vunpack.c.h.b16 %v5946
        %v6391 = vunpack.c.l.b16 %v5947
        %v6392 = vunpack.c.l.b16 %v5948
        %v6393 = vunpack.c.h.b16 %v5948
        %v6394 = vunpack.c.l.b16 %v5949
        %v6395 = vunpack.c.l.b16 %v5950
        %v6396 = vunpack.c.h.b16 %v5950
        %v6397 = vunpack.c.l.b16 %v5951
        %v6398 = vunpack.c.l.b16 %v5952
        %v6399 = vunpack.c.h.b16 %v5952
        %v6400 = vunpack.c.l.b16 %v5953
        %v6401 = vunpack.c.l.b16 %v5954
        %v6402 = vunpack.c.h.b16 %v5954
        %v6403 = vunpack.c.l.b16 %v5955
        %v6404 = vunpack.c.l.b16 %v5956
        %v6405 = vunpack.c.h.b16 %v5956
        %v6406 = vunpack.c.l.b16 %v5957
        %v6407 = vunpack.c.l.b16 %v5958
        %v6408 = vunpack.c.h.b16 %v5958
        %v6409 = vunpack.c.l.b16 %v5959
        %v6410 = vunpack.c.l.b16 %v5960
        %v6411 = vunpack.c.h.b16 %v5960
        %v6412 = vunpack.c.l.b16 %v5961
        %v6413 = vunpack.c.l.b16 %v5962
        %v6414 = vunpack.c.h.b16 %v5962
        %v6415 = vunpack.c.l.b16 %v5963
        %v6416 = vunpack.c.l.b16 %v5964
        %v6417 = vunpack.c.h.b16 %v5964
        %v6418 = vunpack.c.l.b16 %v5965
        %v6419 = vunpack.c.l.b16 %v5966
        %v6420 = vunpack.c.h.b16 %v5966
        %v6421 = vunpack.c.l.b16 %v5967
        %v6422 = vunpack.c.l.b16 %v5968
        %v6423 = vunpack.c.h.b16 %v5968
        %v6424 = vunpack.c.l.b16 %v5969
        %v6425 = vunpack.c.l.b16 %v5970
        %v6426 = vunpack.c.h.b16 %v5970
        %v6427 = vunpack.c.l.b16 %v5971
        %v6428 = vunpack.c.l.b16 %v5972
        %v6429 = vunpack.c.h.b16 %v5972
        %v6430 = vunpack.c.l.b16 %v5973
        %v6431 = vunpack.c.l.b16 %v5974
        %v6432 = vunpack.c.h.b16 %v5974
        %v6433 = vunpack.c.l.b16 %v5975
        %v6434 = vunpack.c.l.b16 %v5976
        %v6435 = vunpack.c.h.b16 %v5976
        %v6436 = vunpack.c.l.b16 %v5977
        %v6437 = vunpack.c.l.b16 %v5978
        %v6438 = vunpack.c.h.b16 %v5978
        %v6439 = vunpack.c.l.b16 %v5979
        %v6440 = vunpack.c.l.b16 %v5980
        %v6441 = vunpack.c.h.b16 %v5980
        %v6442 = vunpack.c.l.b16 %v5981
        %v6443 = vunpack.c.l.b16 %v5982
        %v6444 = vunpack.c.h.b16 %v5982
        %v6445 = vunpack.c.l.b16 %v5983
        %v6446 = vunpack.c.l.b16 %v5984
        %v6447 = vunpack.c.h.b16 %v5984
        %v6448 = vunpack.c.l.b16 %v5985
        %v6449 = vunpack.c.l.b16 %v5986
        %v6450 = vunpack.c.h.b16 %v5986
        %v6451 = vunpack.c.l.b16 %v5987
        %v6452 = vunpack.c.l.b16 %v5988
        %v6453 = vunpack.c.h.b16 %v5988
        %v6454 = vunpack.c.l.b16 %v5989
        %v6455 = vunpack.c.l.b16 %v5990
        %v6456 = vunpack.c.h.b16 %v5990
        %v6457 = vunpack.c.l.b16 %v5991
        %v6458 = vunpack.c.l.b16 %v5992
        %v6459 = vunpack.c.h.b16 %v5992
        %v6460 = vunpack.c.l.b16 %v5993
        %v6461 = vunpack.c.l.b16 %v5994
        %v6462 = vunpack.c.h.b16 %v5994
        %v6463 = vunpack.c.l.b16 %v5995
        %v6464 = vunpack.c.l.b16 %v5996
        %v6465 = vunpack.c.h.b16 %v5996
        %v6466 = vunpack.c.l.b16 %v5997
        %v6467 = vunpack.c.l.b16 %v5998
        %v6468 = vunpack.c.h.b16 %v5998
        %v6469 = vunpack.c.l.b16 %v5999
        %v6470 = vunpack.c.l.b16 %v6000
        %v6471 = vunpack.c.h.b16 %v6000
        %v6472 = vunpack.c.l.b16 %v6001
        %v6473 = vunpack.c.l.b16 %v6002
        %v6474 = vunpack.c.h.b16 %v6002
        %v6475 = vunpack.c.l.b16 %v6003
        %v6476 = vunpack.c.l.b16 %v6004
        %v6477 = vunpack.c.h.b16 %v6004
        %v6478 = vunpack.c.l.b16 %v6005
        %v6479 = vunpack.c.l.b16 %v6006
        %v6480 = vunpack.c.h.b16 %v6006
        %v6481 = vunpack.c.l.b16 %v6007
        %v6482 = vunpack.c.l.b16 %v6008
        %v6483 = vunpack.c.h.b16 %v6008
        %v6484 = vunpack.c.l.b16 %v6009
        %v6485 = vunpack.c.l.b16 %v6010
        %v6486 = vunpack.c.h.b16 %v6010
        %v6487 = vunpack.c.l.b16 %v6011
        %v6488 = vunpack.c.l.b16 %v6012
        %v6489 = vunpack.c.h.b16 %v6012
        %v6490 = vunpack.c.l.b16 %v6013
        %v6491 = vunpack.c.l.b16 %v6014
        %v6492 = vunpack.c.h.b16 %v6014
        %v6493 = vunpack.c.l.b16 %v6015
        %v6494 = vunpack.c.l.b16 %v6016
        %v6495 = vunpack.c.h.b16 %v6016
        %v6496 = vunpack.c.l.b16 %v6017
        %v6497 = vunpack.c.l.b16 %v6018
        %v6498 = vunpack.c.h.b16 %v6018
        %v6499 = vunpack.c.l.b16 %v6019
        %v6500 = vpack.c.b16 %v6263, %v6260
        %v6501 = vpack.c.b16 %v6264, %v6261
        %v6502 = vpack.c.b16 %v6265, %v6262
        %v6503 = vpack.c.b16 %v6269, %v6266
        %v6504 = vpack.c.b16 %v6270, %v6267
        %v6505 = vpack.c.b16 %v6271, %v6268
        %v6506 = vpack.c.b16 %v6275, %v6272
        %v6507 = vpack.c.b16 %v6276, %v6273
        %v6508 = vpack.c.b16 %v6277, %v6274
        %v6509 = vpack.c.b16 %v6281, %v6278
        %v6510 = vpack.c.b16 %v6282, %v6279
        %v6511 = vpack.c.b16 %v6283, %v6280
        %v6512 = vpack.c.b16 %v6287, %v6284
        %v6513 = vpack.c.b16 %v6288, %v6285
        %v6514 = vpack.c.b16 %v6289, %v6286
        %v6515 = vpack.c.b16 %v6293, %v6290
        %v6516 = vpack.c.b16 %v6294, %v6291
        %v6517 = vpack.c.b16 %v6295, %v6292
        %v6518 = vpack.c.b16 %v6299, %v6296
        %v6519 = vpack.c.b16 %v6300, %v6297
        %v6520 = vpack.c.b16 %v6301, %v6298
        %v6521 = vpack.c.b16 %v6305, %v6302
        %v6522 = vpack.c.b16 %v6306, %v6303
        %v6523 = vpack.c.b16 %v6307, %v6304
        %v6524 = vpack.c.b16 %v6311, %v6308
        %v6525 = vpack.c.b16 %v6312, %v6309
        %v6526 = vpack.c.b16 %v6313, %v6310
        %v6527 = vpack.c.b16 %v6317, %v6314
        %v6528 = vpack.c.b16 %v6318, %v6315
        %v6529 = vpack.c.b16 %v6319, %v6316
        %v6530 = vpack.c.b16 %v6323, %v6320
        %v6531 = vpack.c.b16 %v6324, %v6321
        %v6532 = vpack.c.b16 %v6325, %v6322
        %v6533 = vpack.c.b16 %v6329, %v6326
        %v6534 = vpack.c.b16 %v6330, %v6327
        %v6535 = vpack.c.b16 %v6331, %v6328
        %v6536 = vpack.c.b16 %v6335, %v6332
        %v6537 = vpack.c.b16 %v6336, %v6333
        %v6538 = vpack.c.b16 %v6337, %v6334
        %v6539 = vpack.c.b16 %v6341, %v6338
        %v6540 = vpack.c.b16 %v6342, %v6339
        %v6541 = vpack.c.b16 %v6343, %v6340
        %v6542 = vpack.c.b16 %v6347, %v6344
        %v6543 = vpack.c.b16 %v6348, %v6345
        %v6544 = vpack.c.b16 %v6349, %v6346
        %v6545 = vpack.c.b16 %v6353, %v6350
        %v6546 = vpack.c.b16 %v6354, %v6351
        %v6547 = vpack.c.b16 %v6355, %v6352
        %v6548 = vpack.c.b16 %v6359, %v6356
        %v6549 = vpack.c.b16 %v6360, %v6357
        %v6550 = vpack.c.b16 %v6361, %v6358
        %v6551 = vpack.c.b16 %v6365, %v6362
        %v6552 = vpack.c.b16 %v6366, %v6363
        %v6553 = vpack.c.b16 %v6367, %v6364
        %v6554 = vpack.c.b16 %v6371, %v6368
        %v6555 = vpack.c.b16 %v6372, %v6369
        %v6556 = vpack.c.b16 %v6373, %v6370
        %v6557 = vpack.c.b16 %v6377, %v6374
        %v6558 = vpack.c.b16 %v6378, %v6375
        %v6559 = vpack.c.b16 %v6379, %v6376
        %v6560 = vpack.c.b16 %v6383, %v6380
        %v6561 = vpack.c.b16 %v6384, %v6381
        %v6562 = vpack.c.b16 %v6385, %v6382
        %v6563 = vpack.c.b16 %v6389, %v6386
        %v6564 = vpack.c.b16 %v6390, %v6387
        %v6565 = vpack.c.b16 %v6391, %v6388
        %v6566 = vpack.c.b16 %v6395, %v6392
        %v6567 = vpack.c.b16 %v6396, %v6393
        %v6568 = vpack.c.b16 %v6397, %v6394
        %v6569 = vpack.c.b16 %v6401, %v6398
        %v6570 = vpack.c.b16 %v6402, %v6399
        %v6571 = vpack.c.b16 %v6403, %v6400
        %v6572 = vpack.c.b16 %v6407, %v6404
        %v6573 = vpack.c.b16 %v6408, %v6405
        %v6574 = vpack.c.b16 %v6409, %v6406
        %v6575 = vpack.c.b16 %v6413, %v6410
        %v6576 = vpack.c.b16 %v6414, %v6411
        %v6577 = vpack.c.b16 %v6415, %v6412
        %v6578 = vpack.c.b16 %v6419, %v6416
        %v6579 = vpack.c.b16 %v6420, %v6417
        %v6580 = vpack.c.b16 %v6421, %v6418
        %v6581 = vpack.c.b16 %v6425, %v6422
        %v6582 = vpack.c.b16 %v6426, %v6423
        %v6583 = vpack.c.b16 %v6427, %v6424
        %v6584 = vpack.c.b16 %v6431, %v6428
        %v6585 = vpack.c.b16 %v6432, %v6429
        %v6586 = vpack.c.b16 %v6433, %v6430
        %v6587 = vpack.c.b16 %v6437, %v6434
        %v6588 = vpack.c.b16 %v6438, %v6435
        %v6589 = vpack.c.b16 %v6439, %v6436
        %v6590 = vpack.c.b16 %v6443, %v6440
        %v6591 = vpack.c.b16 %v6444, %v6441
        %v6592 = vpack.c.b16 %v6445, %v6442
        %v6593 = vpack.c.b16 %v6449, %v6446
        %v6594 = vpack.c.b16 %v6450, %v6447
        %v6595 = vpack.c.b16 %v6451, %v6448
        %v6596 = vpack.c.b16 %v6455, %v6452
        %v6597 = vpack.c.b16 %v6456, %v6453
        %v6598 = vpack.c.b16 %v6457, %v6454
        %v6599 = vpack.c.b16 %v6461, %v6458
        %v6600 = vpack.c.b16 %v6462, %v6459
        %v6601 = vpack.c.b16 %v6463, %v6460
        %v6602 = vpack.c.b16 %v6467, %v6464
        %v6603 = vpack.c.b16 %v6468, %v6465
        %v6604 = vpack.c.b16 %v6469, %v6466
        %v6605 = vpack.c.b16 %v6473, %v6470
        %v6606 = vpack.c.b16 %v6474, %v6471
        %v6607 = vpack.c.b16 %v6475, %v6472
        %v6608 = vpack.c.b16 %v6479, %v6476
        %v6609 = vpack.c.b16 %v6480, %v6477
        %v6610 = vpack.c.b16 %v6481, %v6478
        %v6611 = vpack.c.b16 %v6485, %v6482
        %v6612 = vpack.c.b16 %v6486, %v6483
        %v6613 = vpack.c.b16 %v6487, %v6484
        %v6614 = vpack.c.b16 %v6491, %v6488
        %v6615 = vpack.c.b16 %v6492, %v6489
        %v6616 = vpack.c.b16 %v6493, %v6490
        %v6617 = vpack.c.b16 %v6497, %v6494
        %v6618 = vpack.c.b16 %v6498, %v6495
        %v6619 = vpack.c.b16 %v6499, %v6496
        %6740 = vmatprep.subr.bf16.mxu0 %v6522
        %6741 = vmatpush1.bf16.msra.mxu0 %v6521
        %6742 = vmatprep.subr.bf16.mxu0 %v6519
        %6743 = vmatpush1.bf16.msra.mxu0 %v6518
        %6744 = vmatprep.subr.bf16.mxu0 %v6516
        %6745 = vmatpush1.bf16.msra.mxu0 %v6515
        %6746 = vmatprep.subr.bf16.mxu0 %v6513
        %6747 = vmatpush1.bf16.msra.mxu0 %v6512
        %6748 = vmatprep.subr.bf16.mxu0 %v6510
        %6749 = vmatpush1.bf16.msra.mxu0 %v6509
        %6750 = vmatprep.subr.bf16.mxu0 %v6507
        %6751 = vmatpush1.bf16.msra.mxu0 %v6506
        %6752 = vmatprep.subr.bf16.mxu0 %v6504
        %6753 = vmatpush1.bf16.msra.mxu0 %v6503
        %6754 = vmatprep.subr.bf16.mxu0 %v6501
        %6755 = vmatpush1.bf16.msra.mxu0 %v6500
        %6756 = vmatprep.subr.bf16.mxu0 %v6546
        %6757 = vmatpush2.bf16.msra.mxu0 %v6545
        %6758 = vmatprep.subr.bf16.mxu0 %v6543
        %6759 = vmatpush2.bf16.msra.mxu0 %v6542
        %6760 = vmatprep.subr.bf16.mxu0 %v6540
        %6761 = vmatpush2.bf16.msra.mxu0 %v6539
        %6762 = vmatprep.subr.bf16.mxu0 %v6537
        %6763 = vmatpush2.bf16.msra.mxu0 %v6536
        %6764 = vmatprep.subr.bf16.mxu0 %v6534
        %6765 = vmatpush2.bf16.msra.mxu0 %v6533
        %6766 = vmatprep.subr.bf16.mxu0 %v6531
        %6767 = vmatpush2.bf16.msra.mxu0 %v6530
        %6768 = vmatprep.subr.bf16.mxu0 %v6528
        %6769 = vmatpush2.bf16.msra.mxu0 %v6527
        %6770 = vmatprep.subr.bf16.mxu0 %v6525
        %6771 = vmatpush2.bf16.msra.mxu0 %v6524
        %6772 = vmatprep.mubr.bf16.mxu0 %v6021
        %6773 = vmatmul.mubr.bf16.gmra.mxu0 %v6020
        %v6774 = vpop.f32.mrf.mxu0
        %v6775 = vadd.f32 0.0, %v6774
        %v6776 = vpop.f32.mrf.mxu0
        %v6777 = vadd.f32 0.0, %v6776
        %v6778 = vpop.f32.mrf.mxu0
        %v6779 = vadd.f32 0.0, %v6778
        %v6780 = vpop.f32.mrf.mxu0
        %v6781 = vadd.f32 0.0, %v6780
        %6782 = vmatprep.mubr.bf16.mxu0 %v6026
        %6783 = vmatmul.mubr.bf16.gmra.mxu0 %v6025
        %v6784 = vpop.f32.mrf.mxu0
        %v6785 = vadd.f32 0.0, %v6784
        %v6786 = vpop.f32.mrf.mxu0
        %v6787 = vadd.f32 0.0, %v6786
        %v6788 = vpop.f32.mrf.mxu0
        %v6789 = vadd.f32 0.0, %v6788
        %v6790 = vpop.f32.mrf.mxu0
        %v6791 = vadd.f32 0.0, %v6790
        %6792 = vmatprep.mubr.bf16.mxu0 %v6031
        %6793 = vmatmul.mubr.bf16.gmra.mxu0 %v6030
        %v6794 = vpop.f32.mrf.mxu0
        %v6795 = vadd.f32 0.0, %v6794
        %v6796 = vpop.f32.mrf.mxu0
        %v6797 = vadd.f32 0.0, %v6796
        %v6798 = vpop.f32.mrf.mxu0
        %v6799 = vadd.f32 0.0, %v6798
        %v6800 = vpop.f32.mrf.mxu0
        %v6801 = vadd.f32 0.0, %v6800
        %6802 = vmatprep.mubr.bf16.mxu0 %v6036
        %6803 = vmatmul.mubr.bf16.gmra.mxu0 %v6035
        %v6804 = vpop.f32.mrf.mxu0
        %v6805 = vadd.f32 0.0, %v6804
        %v6806 = vpop.f32.mrf.mxu0
        %v6807 = vadd.f32 0.0, %v6806
        %v6808 = vpop.f32.mrf.mxu0
        %v6809 = vadd.f32 0.0, %v6808
        %v6810 = vpop.f32.mrf.mxu0
        %v6811 = vadd.f32 0.0, %v6810
        %6812 = vmatprep.mubr.bf16.mxu0 %v6041
        %6813 = vmatmul.mubr.bf16.gmra.mxu0 %v6040
        %v6814 = vpop.f32.mrf.mxu0
        %v6815 = vadd.f32 0.0, %v6814
        %v6816 = vpop.f32.mrf.mxu0
        %v6817 = vadd.f32 0.0, %v6816
        %v6818 = vpop.f32.mrf.mxu0
        %v6819 = vadd.f32 0.0, %v6818
        %v6820 = vpop.f32.mrf.mxu0
        %v6821 = vadd.f32 0.0, %v6820
        %6822 = vmatprep.mubr.bf16.mxu0 %v6046
        %6823 = vmatmul.mubr.bf16.gmra.mxu0 %v6045
        %v6824 = vpop.f32.mrf.mxu0
        %v6825 = vadd.f32 0.0, %v6824
        %v6826 = vpop.f32.mrf.mxu0
        %v6827 = vadd.f32 0.0, %v6826
        %v6828 = vpop.f32.mrf.mxu0
        %v6829 = vadd.f32 0.0, %v6828
        %v6830 = vpop.f32.mrf.mxu0
        %v6831 = vadd.f32 0.0, %v6830
        %6832 = vmatprep.mubr.bf16.mxu0 %v6051
        %6833 = vmatmul.mubr.bf16.gmra.mxu0 %v6050
        %v6834 = vpop.f32.mrf.mxu0
        %v6835 = vadd.f32 0.0, %v6834
        %v6836 = vpop.f32.mrf.mxu0
        %v6837 = vadd.f32 0.0, %v6836
        %v6838 = vpop.f32.mrf.mxu0
        %v6839 = vadd.f32 0.0, %v6838
        %v6840 = vpop.f32.mrf.mxu0
        %v6841 = vadd.f32 0.0, %v6840
        %6842 = vmatprep.mubr.bf16.mxu0 %v6056
        %6843 = vmatmul.mubr.bf16.gmra.mxu0 %v6055
        %v6844 = vpop.f32.mrf.mxu0
        %v6845 = vadd.f32 0.0, %v6844
        %v6846 = vpop.f32.mrf.mxu0
        %v6847 = vadd.f32 0.0, %v6846
        %v6848 = vpop.f32.mrf.mxu0
        %v6849 = vpop.f32.mrf.mxu0
        %6850 = vdwg.mxu0
        %6851 = vmatprep.subr.bf16.mxu0 %v6570
        %6852 = vmatpush1.bf16.msra.mxu0 %v6569
        %6853 = vmatprep.subr.bf16.mxu0 %v6567
        %6854 = vmatpush1.bf16.msra.mxu0 %v6566
        %6855 = vmatprep.subr.bf16.mxu0 %v6564
        %6856 = vmatpush1.bf16.msra.mxu0 %v6563
        %6857 = vmatprep.subr.bf16.mxu0 %v6561
        %6858 = vmatpush1.bf16.msra.mxu0 %v6560
        %6859 = vmatprep.subr.bf16.mxu0 %v6558
        %6860 = vmatpush1.bf16.msra.mxu0 %v6557
        %6861 = vmatprep.subr.bf16.mxu0 %v6555
        %6862 = vmatpush1.bf16.msra.mxu0 %v6554
        %6863 = vmatprep.subr.bf16.mxu0 %v6552
        %6864 = vmatpush1.bf16.msra.mxu0 %v6551
        %6865 = vmatprep.subr.bf16.mxu0 %v6549
        %6866 = vmatpush1.bf16.msra.mxu0 %v6548
        %6867 = vmatprep.subr.bf16.mxu0 %v6594
        %6868 = vmatpush2.bf16.msra.mxu0 %v6593
        %6869 = vmatprep.subr.bf16.mxu0 %v6591
        %6870 = vmatpush2.bf16.msra.mxu0 %v6590
        %6871 = vmatprep.subr.bf16.mxu0 %v6588
        %6872 = vmatpush2.bf16.msra.mxu0 %v6587
        %6873 = vmatprep.subr.bf16.mxu0 %v6585
        %6874 = vmatpush2.bf16.msra.mxu0 %v6584
        %6875 = vmatprep.subr.bf16.mxu0 %v6582
        %6876 = vmatpush2.bf16.msra.mxu0 %v6581
        %6877 = vmatprep.subr.bf16.mxu0 %v6579
        %6878 = vmatpush2.bf16.msra.mxu0 %v6578
        %6879 = vmatprep.subr.bf16.mxu0 %v6576
        %6880 = vmatpush2.bf16.msra.mxu0 %v6575
        %6881 = vmatprep.subr.bf16.mxu0 %v6573
        %6882 = vmatpush2.bf16.msra.mxu0 %v6572
        %6883 = vmatprep.mubr.bf16.mxu0 %v6023
        %6884 = vmatmul.mubr.bf16.gmra.mxu0 %v6022
        %v6885 = vpop.f32.mrf.mxu0
        %v6886 = vadd.f32 %v6775, %v6885
        %v6887 = vpop.f32.mrf.mxu0
        %v6888 = vadd.f32 %v6777, %v6887
        %v6889 = vpop.f32.mrf.mxu0
        %v6890 = vadd.f32 %v6779, %v6889
        %v6891 = vpop.f32.mrf.mxu0
        %v6892 = vadd.f32 %v6781, %v6891
        %6893 = vmatprep.mubr.bf16.mxu0 %v6028
        %6894 = vmatmul.mubr.bf16.gmra.mxu0 %v6027
        %v6895 = vpop.f32.mrf.mxu0
        %v6896 = vadd.f32 %v6785, %v6895
        %v6897 = vpop.f32.mrf.mxu0
        %v6898 = vadd.f32 %v6787, %v6897
        %v6899 = vpop.f32.mrf.mxu0
        %v6900 = vadd.f32 %v6789, %v6899
        %v6901 = vpop.f32.mrf.mxu0
        %v6902 = vadd.f32 %v6791, %v6901
        %6903 = vmatprep.mubr.bf16.mxu0 %v6033
        %6904 = vmatmul.mubr.bf16.gmra.mxu0 %v6032
        %v6905 = vpop.f32.mrf.mxu0
        %v6906 = vadd.f32 %v6795, %v6905
        %v6907 = vpop.f32.mrf.mxu0
        %v6908 = vadd.f32 %v6797, %v6907
        %v6909 = vpop.f32.mrf.mxu0
        %v6910 = vadd.f32 %v6799, %v6909
        %v6911 = vpop.f32.mrf.mxu0
        %v6912 = vadd.f32 %v6801, %v6911
        %6913 = vmatprep.mubr.bf16.mxu0 %v6038
        %6914 = vmatmul.mubr.bf16.gmra.mxu0 %v6037
        %v6915 = vpop.f32.mrf.mxu0
        %v6916 = vadd.f32 %v6805, %v6915
        %v6917 = vpop.f32.mrf.mxu0
        %v6918 = vadd.f32 %v6807, %v6917
        %v6919 = vpop.f32.mrf.mxu0
        %v6920 = vadd.f32 %v6809, %v6919
        %v6921 = vpop.f32.mrf.mxu0
        %v6922 = vadd.f32 %v6811, %v6921
        %6923 = vmatprep.mubr.bf16.mxu0 %v6043
        %6924 = vmatmul.mubr.bf16.gmra.mxu0 %v6042
        %v6925 = vpop.f32.mrf.mxu0
        %v6926 = vadd.f32 %v6815, %v6925
        %v6927 = vpop.f32.mrf.mxu0
        %v6928 = vadd.f32 %v6817, %v6927
        %v6929 = vpop.f32.mrf.mxu0
        %v6930 = vadd.f32 %v6819, %v6929
        %v6931 = vpop.f32.mrf.mxu0
        %v6932 = vadd.f32 %v6821, %v6931
        %6933 = vmatprep.mubr.bf16.mxu0 %v6048
        %6934 = vmatmul.mubr.bf16.gmra.mxu0 %v6047
        %v6935 = vpop.f32.mrf.mxu0
        %v6936 = vadd.f32 %v6825, %v6935
        %v6937 = vpop.f32.mrf.mxu0
        %v6938 = vadd.f32 %v6827, %v6937
        %v6939 = vpop.f32.mrf.mxu0
        %v6940 = vadd.f32 %v6829, %v6939
        %v6941 = vpop.f32.mrf.mxu0
        %v6942 = vadd.f32 %v6831, %v6941
        %6943 = vmatprep.mubr.bf16.mxu0 %v6053
        %6944 = vmatmul.mubr.bf16.gmra.mxu0 %v6052
        %v6945 = vpop.f32.mrf.mxu0
        %v6946 = vadd.f32 %v6835, %v6945
        %v6947 = vpop.f32.mrf.mxu0
        %v6948 = vadd.f32 %v6837, %v6947
        %v6949 = vpop.f32.mrf.mxu0
        %v6950 = vadd.f32 %v6839, %v6949
        %v6951 = vpop.f32.mrf.mxu0
        %v6952 = vadd.f32 %v6841, %v6951
        %6953 = vmatprep.mubr.bf16.mxu0 %v6058
        %6954 = vmatmul.mubr.bf16.gmra.mxu0 %v6057
        %v6955 = vpop.f32.mrf.mxu0
        %v6956 = vadd.f32 %v6845, %v6955
        %v6957 = vpop.f32.mrf.mxu0
        %v6958 = vadd.f32 %v6847, %v6957
        %v6959 = vpop.f32.mrf.mxu0
        %v6960 = vpop.f32.mrf.mxu0
        %6961 = vdwg.mxu0
        %6962 = vmatprep.subr.bf16.mxu0 %v6618
        %6963 = vmatpush1.bf16.msra.mxu0 %v6617
        %6964 = vmatprep.subr.bf16.mxu0 %v6615
        %6965 = vmatpush1.bf16.msra.mxu0 %v6614
        %6966 = vmatprep.subr.bf16.mxu0 %v6612
        %6967 = vmatpush1.bf16.msra.mxu0 %v6611
        %6968 = vmatprep.subr.bf16.mxu0 %v6609
        %6969 = vmatpush1.bf16.msra.mxu0 %v6608
        %6970 = vmatprep.subr.bf16.mxu0 %v6606
        %6971 = vmatpush1.bf16.msra.mxu0 %v6605
        %6972 = vmatprep.subr.bf16.mxu0 %v6603
        %6973 = vmatpush1.bf16.msra.mxu0 %v6602
        %6974 = vmatprep.subr.bf16.mxu0 %v6600
        %6975 = vmatpush1.bf16.msra.mxu0 %v6599
        %6976 = vmatprep.subr.bf16.mxu0 %v6597
        %6977 = vmatpush1.bf16.msra.mxu0 %v6596
        %6978 = vmatprep.subr.bf16.mxu0 0
        %6979 = vmatpush2.bf16.msra.mxu0 0
        %6980 = vmatprep.subr.bf16.mxu0 0
        %6981 = vmatpush2.bf16.msra.mxu0 0
        %6982 = vmatprep.subr.bf16.mxu0 0
        %6983 = vmatpush2.bf16.msra.mxu0 0
        %6984 = vmatprep.subr.bf16.mxu0 0
        %6985 = vmatpush2.bf16.msra.mxu0 0
        %6986 = vmatprep.subr.bf16.mxu0 0
        %6987 = vmatpush2.bf16.msra.mxu0 0
        %6988 = vmatprep.subr.bf16.mxu0 0
        %6989 = vmatpush2.bf16.msra.mxu0 0
        %6990 = vmatprep.subr.bf16.mxu0 0
        %6991 = vmatpush2.bf16.msra.mxu0 0
        %6992 = vmatprep.subr.bf16.mxu0 0
        %6993 = vmatpush2.bf16.msra.mxu0 0
        %6994 = vmatprep.mubr.bf16.mxu0 0
        %6995 = vmatmul.mubr.bf16.gmra.mxu0 %v6024
        %v6996 = vpop.f32.mrf.mxu0
        %v6997 = vadd.f32 %v6886, %v6996
        %v6998 = vpop.f32.mrf.mxu0
        %v6999 = vadd.f32 %v6888, %v6998
        %v7000 = vpop.f32.mrf.mxu0
        %v7001 = vadd.f32 %v6890, %v7000
        %v7002 = vpop.f32.mrf.mxu0
        %v7003 = vadd.f32 %v6892, %v7002
        %7004 = vmatprep.mubr.bf16.mxu0 0
        %7005 = vmatmul.mubr.bf16.gmra.mxu0 %v6029
        %v7006 = vpop.f32.mrf.mxu0
        %v7007 = vadd.f32 %v6896, %v7006
        %v7008 = vpop.f32.mrf.mxu0
        %v7009 = vadd.f32 %v6898, %v7008
        %v7010 = vpop.f32.mrf.mxu0
        %v7011 = vadd.f32 %v6900, %v7010
        %v7012 = vpop.f32.mrf.mxu0
        %v7013 = vadd.f32 %v6902, %v7012
        %7014 = vmatprep.mubr.bf16.mxu0 0
        %7015 = vmatmul.mubr.bf16.gmra.mxu0 %v6034
        %v7016 = vpop.f32.mrf.mxu0
        %v7017 = vadd.f32 %v6906, %v7016
        %v7018 = vpop.f32.mrf.mxu0
        %v7019 = vadd.f32 %v6908, %v7018
        %v7020 = vpop.f32.mrf.mxu0
        %v7021 = vadd.f32 %v6910, %v7020
        %v7022 = vpop.f32.mrf.mxu0
        %v7023 = vadd.f32 %v6912, %v7022
        %7024 = vmatprep.mubr.bf16.mxu0 0
        %7025 = vmatmul.mubr.bf16.gmra.mxu0 %v6039
        %v7026 = vpop.f32.mrf.mxu0
        %v7027 = vadd.f32 %v6916, %v7026
        %v7028 = vpop.f32.mrf.mxu0
        %v7029 = vadd.f32 %v6918, %v7028
        %v7030 = vpop.f32.mrf.mxu0
        %v7031 = vadd.f32 %v6920, %v7030
        %v7032 = vpop.f32.mrf.mxu0
        %v7033 = vadd.f32 %v6922, %v7032
        %7034 = vmatprep.mubr.bf16.mxu0 0
        %7035 = vmatmul.mubr.bf16.gmra.mxu0 %v6044
        %v7036 = vpop.f32.mrf.mxu0
        %v7037 = vadd.f32 %v6926, %v7036
        %v7038 = vpop.f32.mrf.mxu0
        %v7039 = vadd.f32 %v6928, %v7038
        %v7040 = vpop.f32.mrf.mxu0
        %v7041 = vadd.f32 %v6930, %v7040
        %v7042 = vpop.f32.mrf.mxu0
        %v7043 = vadd.f32 %v6932, %v7042
        %7044 = vmatprep.mubr.bf16.mxu0 0
        %7045 = vmatmul.mubr.bf16.gmra.mxu0 %v6049
        %v7046 = vpop.f32.mrf.mxu0
        %v7047 = vadd.f32 %v6936, %v7046
        %v7048 = vpop.f32.mrf.mxu0
        %v7049 = vadd.f32 %v6938, %v7048
        %v7050 = vpop.f32.mrf.mxu0
        %v7051 = vadd.f32 %v6940, %v7050
        %v7052 = vpop.f32.mrf.mxu0
        %v7053 = vadd.f32 %v6942, %v7052
        %7054 = vmatprep.mubr.bf16.mxu0 0
        %7055 = vmatmul.mubr.bf16.gmra.mxu0 %v6054
        %v7056 = vpop.f32.mrf.mxu0
        %v7057 = vadd.f32 %v6946, %v7056
        %v7058 = vpop.f32.mrf.mxu0
        %v7059 = vadd.f32 %v6948, %v7058
        %v7060 = vpop.f32.mrf.mxu0
        %v7061 = vadd.f32 %v6950, %v7060
        %v7062 = vpop.f32.mrf.mxu0
        %v7063 = vadd.f32 %v6952, %v7062
        %7064 = vmatprep.mubr.bf16.mxu0 0
        %7065 = vmatmul.mubr.bf16.gmra.mxu0 %v6059
        %v7066 = vpop.f32.mrf.mxu0
        %v7067 = vadd.f32 %v6956, %v7066
        %v7068 = vpop.f32.mrf.mxu0
        %v7069 = vadd.f32 %v6958, %v7068
        %v7070 = vpop.f32.mrf.mxu0
        %v7071 = vpop.f32.mrf.mxu0
        %7072 = vdwg.mxu0
        %7073 = vmatprep.subr.bf16.mxu0 0
        %7074 = vmatpush1.bf16.msra.mxu0 %v6523
        %7075 = vmatprep.subr.bf16.mxu0 0
        %7076 = vmatpush1.bf16.msra.mxu0 %v6520
        %7077 = vmatprep.subr.bf16.mxu0 0
        %7078 = vmatpush1.bf16.msra.mxu0 %v6517
        %7079 = vmatprep.subr.bf16.mxu0 0
        %7080 = vmatpush1.bf16.msra.mxu0 %v6514
        %7081 = vmatprep.subr.bf16.mxu0 0
        %7082 = vmatpush1.bf16.msra.mxu0 %v6511
        %7083 = vmatprep.subr.bf16.mxu0 0
        %7084 = vmatpush1.bf16.msra.mxu0 %v6508
        %7085 = vmatprep.subr.bf16.mxu0 0
        %7086 = vmatpush1.bf16.msra.mxu0 %v6505
        %7087 = vmatprep.subr.bf16.mxu0 0
        %7088 = vmatpush1.bf16.msra.mxu0 %v6502
        %7089 = vmatprep.subr.bf16.mxu0 0
        %7090 = vmatpush2.bf16.msra.mxu0 %v6547
        %7091 = vmatprep.subr.bf16.mxu0 0
        %7092 = vmatpush2.bf16.msra.mxu0 %v6544
        %7093 = vmatprep.subr.bf16.mxu0 0
        %7094 = vmatpush2.bf16.msra.mxu0 %v6541
        %7095 = vmatprep.subr.bf16.mxu0 0
        %7096 = vmatpush2.bf16.msra.mxu0 %v6538
        %7097 = vmatprep.subr.bf16.mxu0 0
        %7098 = vmatpush2.bf16.msra.mxu0 %v6535
        %7099 = vmatprep.subr.bf16.mxu0 0
        %7100 = vmatpush2.bf16.msra.mxu0 %v6532
        %7101 = vmatprep.subr.bf16.mxu0 0
        %7102 = vmatpush2.bf16.msra.mxu0 %v6529
        %7103 = vmatprep.subr.bf16.mxu0 0
        %7104 = vmatpush2.bf16.msra.mxu0 %v6526
        %7105 = vmatprep.mubr.bf16.mxu0 %v6021
        %7106 = vmatmul.mubr.bf16.gmra.mxu0 %v6020
        %v7107 = vpop.f32.mrf.mxu0
        %v7108 = vadd.f32 0.0, %v7107
        %v7109 = vpop.f32.mrf.mxu0
        %v7110 = vpop.f32.mrf.mxu0
        %v7111 = vadd.f32 0.0, %v7110
        %v7112 = vpop.f32.mrf.mxu0
        %7113 = vmatprep.mubr.bf16.mxu0 %v6026
        %7114 = vmatmul.mubr.bf16.gmra.mxu0 %v6025
        %v7115 = vpop.f32.mrf.mxu0
        %v7116 = vadd.f32 0.0, %v7115
        %v7117 = vpop.f32.mrf.mxu0
        %v7118 = vpop.f32.mrf.mxu0
        %v7119 = vadd.f32 0.0, %v7118
        %v7120 = vpop.f32.mrf.mxu0
        %7121 = vmatprep.mubr.bf16.mxu0 %v6031
        %7122 = vmatmul.mubr.bf16.gmra.mxu0 %v6030
        %v7123 = vpop.f32.mrf.mxu0
        %v7124 = vadd.f32 0.0, %v7123
        %v7125 = vpop.f32.mrf.mxu0
        %v7126 = vpop.f32.mrf.mxu0
        %v7127 = vadd.f32 0.0, %v7126
        %v7128 = vpop.f32.mrf.mxu0
        %7129 = vmatprep.mubr.bf16.mxu0 %v6036
        %7130 = vmatmul.mubr.bf16.gmra.mxu0 %v6035
        %v7131 = vpop.f32.mrf.mxu0
        %v7132 = vadd.f32 0.0, %v7131
        %v7133 = vpop.f32.mrf.mxu0
        %v7134 = vpop.f32.mrf.mxu0
        %v7135 = vadd.f32 0.0, %v7134
        %v7136 = vpop.f32.mrf.mxu0
        %7137 = vmatprep.mubr.bf16.mxu0 %v6041
        %7138 = vmatmul.mubr.bf16.gmra.mxu0 %v6040
        %v7139 = vpop.f32.mrf.mxu0
        %v7140 = vadd.f32 0.0, %v7139
        %v7141 = vpop.f32.mrf.mxu0
        %v7142 = vpop.f32.mrf.mxu0
        %v7143 = vadd.f32 0.0, %v7142
        %v7144 = vpop.f32.mrf.mxu0
        %7145 = vmatprep.mubr.bf16.mxu0 %v6046
        %7146 = vmatmul.mubr.bf16.gmra.mxu0 %v6045
        %v7147 = vpop.f32.mrf.mxu0
        %v7148 = vadd.f32 0.0, %v7147
        %v7149 = vpop.f32.mrf.mxu0
        %v7150 = vpop.f32.mrf.mxu0
        %v7151 = vadd.f32 0.0, %v7150
        %v7152 = vpop.f32.mrf.mxu0
        %7153 = vmatprep.mubr.bf16.mxu0 %v6051
        %7154 = vmatmul.mubr.bf16.gmra.mxu0 %v6050
        %v7155 = vpop.f32.mrf.mxu0
        %v7156 = vadd.f32 0.0, %v7155
        %v7157 = vpop.f32.mrf.mxu0
        %v7158 = vpop.f32.mrf.mxu0
        %v7159 = vadd.f32 0.0, %v7158
        %v7160 = vpop.f32.mrf.mxu0
        %7161 = vmatprep.mubr.bf16.mxu0 %v6056
        %7162 = vmatmul.mubr.bf16.gmra.mxu0 %v6055
        %v7163 = vpop.f32.mrf.mxu0
        %v7164 = vadd.f32 0.0, %v7163
        %v7165 = vpop.f32.mrf.mxu0
        %v7166 = vpop.f32.mrf.mxu0
        %v7167 = vpop.f32.mrf.mxu0
        %7168 = vdwg.mxu0
        %7169 = vmatprep.subr.bf16.mxu0 0
        %7170 = vmatpush1.bf16.msra.mxu0 %v6571
        %7171 = vmatprep.subr.bf16.mxu0 0
        %7172 = vmatpush1.bf16.msra.mxu0 %v6568
        %7173 = vmatprep.subr.bf16.mxu0 0
        %7174 = vmatpush1.bf16.msra.mxu0 %v6565
        %7175 = vmatprep.subr.bf16.mxu0 0
        %7176 = vmatpush1.bf16.msra.mxu0 %v6562
        %7177 = vmatprep.subr.bf16.mxu0 0
        %7178 = vmatpush1.bf16.msra.mxu0 %v6559
        %7179 = vmatprep.subr.bf16.mxu0 0
        %7180 = vmatpush1.bf16.msra.mxu0 %v6556
        %7181 = vmatprep.subr.bf16.mxu0 0
        %7182 = vmatpush1.bf16.msra.mxu0 %v6553
        %7183 = vmatprep.subr.bf16.mxu0 0
        %7184 = vmatpush1.bf16.msra.mxu0 %v6550
        %7185 = vmatprep.subr.bf16.mxu0 0
        %7186 = vmatpush2.bf16.msra.mxu0 %v6595
        %7187 = vmatprep.subr.bf16.mxu0 0
        %7188 = vmatpush2.bf16.msra.mxu0 %v6592
        %7189 = vmatprep.subr.bf16.mxu0 0
        %7190 = vmatpush2.bf16.msra.mxu0 %v6589
        %7191 = vmatprep.subr.bf16.mxu0 0
        %7192 = vmatpush2.bf16.msra.mxu0 %v6586
        %7193 = vmatprep.subr.bf16.mxu0 0
        %7194 = vmatpush2.bf16.msra.mxu0 %v6583
        %7195 = vmatprep.subr.bf16.mxu0 0
        %7196 = vmatpush2.bf16.msra.mxu0 %v6580
        %7197 = vmatprep.subr.bf16.mxu0 0
        %7198 = vmatpush2.bf16.msra.mxu0 %v6577
        %7199 = vmatprep.subr.bf16.mxu0 0
        %7200 = vmatpush2.bf16.msra.mxu0 %v6574
        %7201 = vmatprep.mubr.bf16.mxu0 %v6023
        %7202 = vmatmul.mubr.bf16.gmra.mxu0 %v6022
        %v7203 = vpop.f32.mrf.mxu0
        %v7204 = vadd.f32 %v7108, %v7203
        %v7205 = vpop.f32.mrf.mxu0
        %v7206 = vpop.f32.mrf.mxu0
        %v7207 = vadd.f32 %v7111, %v7206
        %v7208 = vpop.f32.mrf.mxu0
        %7209 = vmatprep.mubr.bf16.mxu0 %v6028
        %7210 = vmatmul.mubr.bf16.gmra.mxu0 %v6027
        %v7211 = vpop.f32.mrf.mxu0
        %v7212 = vadd.f32 %v7116, %v7211
        %v7213 = vpop.f32.mrf.mxu0
        %v7214 = vpop.f32.mrf.mxu0
        %v7215 = vadd.f32 %v7119, %v7214
        %v7216 = vpop.f32.mrf.mxu0
        %7217 = vmatprep.mubr.bf16.mxu0 %v6033
        %7218 = vmatmul.mubr.bf16.gmra.mxu0 %v6032
        %v7219 = vpop.f32.mrf.mxu0
        %v7220 = vadd.f32 %v7124, %v7219
        %v7221 = vpop.f32.mrf.mxu0
        %v7222 = vpop.f32.mrf.mxu0
        %v7223 = vadd.f32 %v7127, %v7222
        %v7224 = vpop.f32.mrf.mxu0
        %7225 = vmatprep.mubr.bf16.mxu0 %v6038
        %7226 = vmatmul.mubr.bf16.gmra.mxu0 %v6037
        %v7227 = vpop.f32.mrf.mxu0
        %v7228 = vadd.f32 %v7132, %v7227
        %v7229 = vpop.f32.mrf.mxu0
        %v7230 = vpop.f32.mrf.mxu0
        %v7231 = vadd.f32 %v7135, %v7230
        %v7232 = vpop.f32.mrf.mxu0
        %7233 = vmatprep.mubr.bf16.mxu0 %v6043
        %7234 = vmatmul.mubr.bf16.gmra.mxu0 %v6042
        %v7235 = vpop.f32.mrf.mxu0
        %v7236 = vadd.f32 %v7140, %v7235
        %v7237 = vpop.f32.mrf.mxu0
        %v7238 = vpop.f32.mrf.mxu0
        %v7239 = vadd.f32 %v7143, %v7238
        %v7240 = vpop.f32.mrf.mxu0
        %7241 = vmatprep.mubr.bf16.mxu0 %v6048
        %7242 = vmatmul.mubr.bf16.gmra.mxu0 %v6047
        %v7243 = vpop.f32.mrf.mxu0
        %v7244 = vadd.f32 %v7148, %v7243
        %v7245 = vpop.f32.mrf.mxu0
        %v7246 = vpop.f32.mrf.mxu0
        %v7247 = vadd.f32 %v7151, %v7246
        %v7248 = vpop.f32.mrf.mxu0
        %7249 = vmatprep.mubr.bf16.mxu0 %v6053
        %7250 = vmatmul.mubr.bf16.gmra.mxu0 %v6052
        %v7251 = vpop.f32.mrf.mxu0
        %v7252 = vadd.f32 %v7156, %v7251
        %v7253 = vpop.f32.mrf.mxu0
        %v7254 = vpop.f32.mrf.mxu0
        %v7255 = vadd.f32 %v7159, %v7254
        %v7256 = vpop.f32.mrf.mxu0
        %7257 = vmatprep.mubr.bf16.mxu0 %v6058
        %7258 = vmatmul.mubr.bf16.gmra.mxu0 %v6057
        %v7259 = vpop.f32.mrf.mxu0
        %v7260 = vadd.f32 %v7164, %v7259
        %v7261 = vpop.f32.mrf.mxu0
        %v7262 = vpop.f32.mrf.mxu0
        %v7263 = vpop.f32.mrf.mxu0
        %7264 = vdwg.mxu0
        %7265 = vmatprep.subr.bf16.mxu0 0
        %7266 = vmatpush1.bf16.msra.mxu0 %v6619
        %7267 = vmatprep.subr.bf16.mxu0 0
        %7268 = vmatpush1.bf16.msra.mxu0 %v6616
        %7269 = vmatprep.subr.bf16.mxu0 0
        %7270 = vmatpush1.bf16.msra.mxu0 %v6613
        %7271 = vmatprep.subr.bf16.mxu0 0
        %7272 = vmatpush1.bf16.msra.mxu0 %v6610
        %7273 = vmatprep.subr.bf16.mxu0 0
        %7274 = vmatpush1.bf16.msra.mxu0 %v6607
        %7275 = vmatprep.subr.bf16.mxu0 0
        %7276 = vmatpush1.bf16.msra.mxu0 %v6604
        %7277 = vmatprep.subr.bf16.mxu0 0
        %7278 = vmatpush1.bf16.msra.mxu0 %v6601
        %7279 = vmatprep.subr.bf16.mxu0 0
        %7280 = vmatpush1.bf16.msra.mxu0 %v6598
        %7281 = vmatprep.subr.bf16.mxu0 0
        %7282 = vmatpush2.bf16.msra.mxu0 0
        %7283 = vmatprep.subr.bf16.mxu0 0
        %7284 = vmatpush2.bf16.msra.mxu0 0
        %7285 = vmatprep.subr.bf16.mxu0 0
        %7286 = vmatpush2.bf16.msra.mxu0 0
        %7287 = vmatprep.subr.bf16.mxu0 0
        %7288 = vmatpush2.bf16.msra.mxu0 0
        %7289 = vmatprep.subr.bf16.mxu0 0
        %7290 = vmatpush2.bf16.msra.mxu0 0
        %7291 = vmatprep.subr.bf16.mxu0 0
        %7292 = vmatpush2.bf16.msra.mxu0 0
        %7293 = vmatprep.subr.bf16.mxu0 0
        %7294 = vmatpush2.bf16.msra.mxu0 0
        %7295 = vmatprep.subr.bf16.mxu0 0
        %7296 = vmatpush2.bf16.msra.mxu0 0
        %7297 = vmatprep.mubr.bf16.mxu0 0
        %7298 = vmatmul.mubr.bf16.gmra.mxu0 %v6024
        %v7299 = vpop.f32.mrf.mxu0
        %v7300 = vadd.f32 %v7204, %v7299
        %v7301 = vpop.f32.mrf.mxu0
        %v7302 = vpop.f32.mrf.mxu0
        %v7303 = vadd.f32 %v7207, %v7302
        %v7304 = vpop.f32.mrf.mxu0
        %7305 = vmatprep.mubr.bf16.mxu0 0
        %7306 = vmatmul.mubr.bf16.gmra.mxu0 %v6029
        %v7307 = vpop.f32.mrf.mxu0
        %v7308 = vadd.f32 %v7212, %v7307
        %v7309 = vpop.f32.mrf.mxu0
        %v7310 = vpop.f32.mrf.mxu0
        %v7311 = vadd.f32 %v7215, %v7310
        %v7312 = vpop.f32.mrf.mxu0
        %7313 = vmatprep.mubr.bf16.mxu0 0
        %7314 = vmatmul.mubr.bf16.gmra.mxu0 %v6034
        %v7315 = vpop.f32.mrf.mxu0
        %v7316 = vadd.f32 %v7220, %v7315
        %v7317 = vpop.f32.mrf.mxu0
        %v7318 = vpop.f32.mrf.mxu0
        %v7319 = vadd.f32 %v7223, %v7318
        %v7320 = vpop.f32.mrf.mxu0
        %7321 = vmatprep.mubr.bf16.mxu0 0
        %7322 = vmatmul.mubr.bf16.gmra.mxu0 %v6039
        %v7323 = vpop.f32.mrf.mxu0
        %v7324 = vadd.f32 %v7228, %v7323
        %v7325 = vpop.f32.mrf.mxu0
        %v7326 = vpop.f32.mrf.mxu0
        %v7327 = vadd.f32 %v7231, %v7326
        %v7328 = vpop.f32.mrf.mxu0
        %7329 = vmatprep.mubr.bf16.mxu0 0
        %7330 = vmatmul.mubr.bf16.gmra.mxu0 %v6044
        %v7331 = vpop.f32.mrf.mxu0
        %v7332 = vadd.f32 %v7236, %v7331
        %v7333 = vpop.f32.mrf.mxu0
        %v7334 = vpop.f32.mrf.mxu0
        %v7335 = vadd.f32 %v7239, %v7334
        %v7336 = vpop.f32.mrf.mxu0
        %7337 = vmatprep.mubr.bf16.mxu0 0
        %7338 = vmatmul.mubr.bf16.gmra.mxu0 %v6049
        %v7339 = vpop.f32.mrf.mxu0
        %v7340 = vadd.f32 %v7244, %v7339
        %v7341 = vpop.f32.mrf.mxu0
        %v7342 = vpop.f32.mrf.mxu0
        %v7343 = vadd.f32 %v7247, %v7342
        %v7344 = vpop.f32.mrf.mxu0
        %7345 = vmatprep.mubr.bf16.mxu0 0
        %7346 = vmatmul.mubr.bf16.gmra.mxu0 %v6054
        %v7347 = vpop.f32.mrf.mxu0
        %v7348 = vadd.f32 %v7252, %v7347
        %v7349 = vpop.f32.mrf.mxu0
        %v7350 = vpop.f32.mrf.mxu0
        %v7351 = vadd.f32 %v7255, %v7350
        %v7352 = vpop.f32.mrf.mxu0
        %7353 = vmatprep.mubr.bf16.mxu0 0
        %7354 = vmatmul.mubr.bf16.gmra.mxu0 %v6059
        %v7355 = vpop.f32.mrf.mxu0
        %v7356 = vadd.f32 %v7260, %v7355
        %v7357 = vpop.f32.mrf.mxu0
        %v7358 = vpop.f32.mrf.mxu0
        %v7359 = vpop.f32.mrf.mxu0
        %7360 = vdwg.mxu0
        %v7361 = vpack.c.b16 %v5614, %v5609
        %v7362 = vpack.c.b16 %v5615, %v5610
        %v7363 = vpack.c.b16 %v5616, %v5611
        %v7364 = vpack.c.b16 %v5617, %v5612
        %v7365 = vpack.c.b16 %v5618, %v5613
        %v7366 = vpack.c.b16 %v5624, %v5619
        %v7367 = vpack.c.b16 %v5625, %v5620
        %v7368 = vpack.c.b16 %v5626, %v5621
        %v7369 = vpack.c.b16 %v5627, %v5622
        %v7370 = vpack.c.b16 %v5628, %v5623
        %v7371 = vpack.c.b16 %v5634, %v5629
        %v7372 = vpack.c.b16 %v5635, %v5630
        %v7373 = vpack.c.b16 %v5636, %v5631
        %v7374 = vpack.c.b16 %v5637, %v5632
        %v7375 = vpack.c.b16 %v5638, %v5633
        %v7376 = vpack.c.b16 %v5644, %v5639
        %v7377 = vpack.c.b16 %v5645, %v5640
        %v7378 = vpack.c.b16 %v5646, %v5641
        %v7379 = vpack.c.b16 %v5647, %v5642
        %v7380 = vpack.c.b16 %v5648, %v5643
        %v7381 = vpack.c.b16 %v5654, %v5649
        %v7382 = vpack.c.b16 %v5655, %v5650
        %v7383 = vpack.c.b16 %v5656, %v5651
        %v7384 = vpack.c.b16 %v5657, %v5652
        %v7385 = vpack.c.b16 %v5658, %v5653
        %v7386 = vpack.c.b16 %v5664, %v5659
        %v7387 = vpack.c.b16 %v5665, %v5660
        %v7388 = vpack.c.b16 %v5666, %v5661
        %v7389 = vpack.c.b16 %v5667, %v5662
        %v7390 = vpack.c.b16 %v5668, %v5663
        %v7391 = vpack.c.b16 %v5674, %v5669
        %v7392 = vpack.c.b16 %v5675, %v5670
        %v7393 = vpack.c.b16 %v5676, %v5671
        %v7394 = vpack.c.b16 %v5677, %v5672
        %v7395 = vpack.c.b16 %v5678, %v5673
        %v7396 = vpack.c.b16 %v5684, %v5679
        %v7397 = vpack.c.b16 %v5685, %v5680
        %v7398 = vpack.c.b16 %v5686, %v5681
        %v7399 = vpack.c.b16 %v5687, %v5682
        %v7400 = vpack.c.b16 %v5688, %v5683
        %v7601 = vunpack.c.l.b16 %v5689
        %v7602 = vunpack.c.h.b16 %v5689
        %v7603 = vunpack.c.l.b16 %v5690
        %v7604 = vunpack.c.l.b16 %v5691
        %v7605 = vunpack.c.h.b16 %v5691
        %v7606 = vunpack.c.l.b16 %v5692
        %v7607 = vunpack.c.l.b16 %v5693
        %v7608 = vunpack.c.h.b16 %v5693
        %v7609 = vunpack.c.l.b16 %v5694
        %v7610 = vunpack.c.l.b16 %v5695
        %v7611 = vunpack.c.h.b16 %v5695
        %v7612 = vunpack.c.l.b16 %v5696
        %v7613 = vunpack.c.l.b16 %v5697
        %v7614 = vunpack.c.h.b16 %v5697
        %v7615 = vunpack.c.l.b16 %v5698
        %v7616 = vunpack.c.l.b16 %v5699
        %v7617 = vunpack.c.h.b16 %v5699
        %v7618 = vunpack.c.l.b16 %v5700
        %v7619 = vunpack.c.l.b16 %v5701
        %v7620 = vunpack.c.h.b16 %v5701
        %v7621 = vunpack.c.l.b16 %v5702
        %v7622 = vunpack.c.l.b16 %v5703
        %v7623 = vunpack.c.h.b16 %v5703
        %v7624 = vunpack.c.l.b16 %v5704
        %v7625 = vunpack.c.l.b16 %v5705
        %v7626 = vunpack.c.h.b16 %v5705
        %v7627 = vunpack.c.l.b16 %v5706
        %v7628 = vunpack.c.l.b16 %v5707
        %v7629 = vunpack.c.h.b16 %v5707
        %v7630 = vunpack.c.l.b16 %v5708
        %v7631 = vunpack.c.l.b16 %v5709
        %v7632 = vunpack.c.h.b16 %v5709
        %v7633 = vunpack.c.l.b16 %v5710
        %v7634 = vunpack.c.l.b16 %v5711
        %v7635 = vunpack.c.h.b16 %v5711
        %v7636 = vunpack.c.l.b16 %v5712
        %v7637 = vunpack.c.l.b16 %v5713
        %v7638 = vunpack.c.h.b16 %v5713
        %v7639 = vunpack.c.l.b16 %v5714
        %v7640 = vunpack.c.l.b16 %v5715
        %v7641 = vunpack.c.h.b16 %v5715
        %v7642 = vunpack.c.l.b16 %v5716
        %v7643 = vunpack.c.l.b16 %v5717
        %v7644 = vunpack.c.h.b16 %v5717
        %v7645 = vunpack.c.l.b16 %v5718
        %v7646 = vunpack.c.l.b16 %v5719
        %v7647 = vunpack.c.h.b16 %v5719
        %v7648 = vunpack.c.l.b16 %v5720
        %v7649 = vunpack.c.l.b16 %v5721
        %v7650 = vunpack.c.h.b16 %v5721
        %v7651 = vunpack.c.l.b16 %v5722
        %v7652 = vunpack.c.l.b16 %v5723
        %v7653 = vunpack.c.h.b16 %v5723
        %v7654 = vunpack.c.l.b16 %v5724
        %v7655 = vunpack.c.l.b16 %v5725
        %v7656 = vunpack.c.h.b16 %v5725
        %v7657 = vunpack.c.l.b16 %v5726
        %v7658 = vunpack.c.l.b16 %v5727
        %v7659 = vunpack.c.h.b16 %v5727
        %v7660 = vunpack.c.l.b16 %v5728
        %v7661 = vunpack.c.l.b16 %v5729
        %v7662 = vunpack.c.h.b16 %v5729
        %v7663 = vunpack.c.l.b16 %v5730
        %v7664 = vunpack.c.l.b16 %v5731
        %v7665 = vunpack.c.h.b16 %v5731
        %v7666 = vunpack.c.l.b16 %v5732
        %v7667 = vunpack.c.l.b16 %v5733
        %v7668 = vunpack.c.h.b16 %v5733
        %v7669 = vunpack.c.l.b16 %v5734
        %v7670 = vunpack.c.l.b16 %v5735
        %v7671 = vunpack.c.h.b16 %v5735
        %v7672 = vunpack.c.l.b16 %v5736
        %v7673 = vunpack.c.l.b16 %v5737
        %v7674 = vunpack.c.h.b16 %v5737
        %v7675 = vunpack.c.l.b16 %v5738
        %v7676 = vunpack.c.l.b16 %v5739
        %v7677 = vunpack.c.h.b16 %v5739
        %v7678 = vunpack.c.l.b16 %v5740
        %v7679 = vunpack.c.l.b16 %v5741
        %v7680 = vunpack.c.h.b16 %v5741
        %v7681 = vunpack.c.l.b16 %v5742
        %v7682 = vunpack.c.l.b16 %v5743
        %v7683 = vunpack.c.h.b16 %v5743
        %v7684 = vunpack.c.l.b16 %v5744
        %v7685 = vunpack.c.l.b16 %v5745
        %v7686 = vunpack.c.h.b16 %v5745
        %v7687 = vunpack.c.l.b16 %v5746
        %v7688 = vunpack.c.l.b16 %v5747
        %v7689 = vunpack.c.h.b16 %v5747
        %v7690 = vunpack.c.l.b16 %v5748
        %v7691 = vunpack.c.l.b16 %v5749
        %v7692 = vunpack.c.h.b16 %v5749
        %v7693 = vunpack.c.l.b16 %v5750
        %v7694 = vunpack.c.l.b16 %v5751
        %v7695 = vunpack.c.h.b16 %v5751
        %v7696 = vunpack.c.l.b16 %v5752
        %v7697 = vunpack.c.l.b16 %v5753
        %v7698 = vunpack.c.h.b16 %v5753
        %v7699 = vunpack.c.l.b16 %v5754
        %v7700 = vunpack.c.l.b16 %v5755
        %v7701 = vunpack.c.h.b16 %v5755
        %v7702 = vunpack.c.l.b16 %v5756
        %v7703 = vunpack.c.l.b16 %v5757
        %v7704 = vunpack.c.h.b16 %v5757
        %v7705 = vunpack.c.l.b16 %v5758
        %v7706 = vunpack.c.l.b16 %v5759
        %v7707 = vunpack.c.h.b16 %v5759
        %v7708 = vunpack.c.l.b16 %v5760
        %v7709 = vunpack.c.l.b16 %v5761
        %v7710 = vunpack.c.h.b16 %v5761
        %v7711 = vunpack.c.l.b16 %v5762
        %v7712 = vunpack.c.l.b16 %v5763
        %v7713 = vunpack.c.h.b16 %v5763
        %v7714 = vunpack.c.l.b16 %v5764
        %v7715 = vunpack.c.l.b16 %v5765
        %v7716 = vunpack.c.h.b16 %v5765
        %v7717 = vunpack.c.l.b16 %v5766
        %v7718 = vunpack.c.l.b16 %v5767
        %v7719 = vunpack.c.h.b16 %v5767
        %v7720 = vunpack.c.l.b16 %v5768
        %v7721 = vunpack.c.l.b16 %v5769
        %v7722 = vunpack.c.h.b16 %v5769
        %v7723 = vunpack.c.l.b16 %v5770
        %v7724 = vunpack.c.l.b16 %v5771
        %v7725 = vunpack.c.h.b16 %v5771
        %v7726 = vunpack.c.l.b16 %v5772
        %v7727 = vunpack.c.l.b16 %v5773
        %v7728 = vunpack.c.h.b16 %v5773
        %v7729 = vunpack.c.l.b16 %v5774
        %v7730 = vunpack.c.l.b16 %v5775
        %v7731 = vunpack.c.h.b16 %v5775
        %v7732 = vunpack.c.l.b16 %v5776
        %v7733 = vunpack.c.l.b16 %v5777
        %v7734 = vunpack.c.h.b16 %v5777
        %v7735 = vunpack.c.l.b16 %v5778
        %v7736 = vunpack.c.l.b16 %v5779
        %v7737 = vunpack.c.h.b16 %v5779
        %v7738 = vunpack.c.l.b16 %v5780
        %v7739 = vunpack.c.l.b16 %v5781
        %v7740 = vunpack.c.h.b16 %v5781
        %v7741 = vunpack.c.l.b16 %v5782
        %v7742 = vunpack.c.l.b16 %v5783
        %v7743 = vunpack.c.h.b16 %v5783
        %v7744 = vunpack.c.l.b16 %v5784
        %v7745 = vunpack.c.l.b16 %v5785
        %v7746 = vunpack.c.h.b16 %v5785
        %v7747 = vunpack.c.l.b16 %v5786
        %v7748 = vunpack.c.l.b16 %v5787
        %v7749 = vunpack.c.h.b16 %v5787
        %v7750 = vunpack.c.l.b16 %v5788
        %v7751 = vunpack.c.l.b16 %v5789
        %v7752 = vunpack.c.h.b16 %v5789
        %v7753 = vunpack.c.l.b16 %v5790
        %v7754 = vunpack.c.l.b16 %v5791
        %v7755 = vunpack.c.h.b16 %v5791
        %v7756 = vunpack.c.l.b16 %v5792
        %v7757 = vunpack.c.l.b16 %v5793
        %v7758 = vunpack.c.h.b16 %v5793
        %v7759 = vunpack.c.l.b16 %v5794
        %v7760 = vunpack.c.l.b16 %v5795
        %v7761 = vunpack.c.h.b16 %v5795
        %v7762 = vunpack.c.l.b16 %v5796
        %v7763 = vunpack.c.l.b16 %v5797
        %v7764 = vunpack.c.h.b16 %v5797
        %v7765 = vunpack.c.l.b16 %v5798
        %v7766 = vunpack.c.l.b16 %v5799
        %v7767 = vunpack.c.h.b16 %v5799
        %v7768 = vunpack.c.l.b16 %v5800
        %v7769 = vunpack.c.l.b16 %v5801
        %v7770 = vunpack.c.h.b16 %v5801
        %v7771 = vunpack.c.l.b16 %v5802
        %v7772 = vunpack.c.l.b16 %v5803
        %v7773 = vunpack.c.h.b16 %v5803
        %v7774 = vunpack.c.l.b16 %v5804
        %v7775 = vunpack.c.l.b16 %v5805
        %v7776 = vunpack.c.h.b16 %v5805
        %v7777 = vunpack.c.l.b16 %v5806
        %v7778 = vunpack.c.l.b16 %v5807
        %v7779 = vunpack.c.h.b16 %v5807
        %v7780 = vunpack.c.l.b16 %v5808
        %v7781 = vunpack.c.l.b16 %v5809
        %v7782 = vunpack.c.h.b16 %v5809
        %v7783 = vunpack.c.l.b16 %v5810
        %v7784 = vunpack.c.l.b16 %v5811
        %v7785 = vunpack.c.h.b16 %v5811
        %v7786 = vunpack.c.l.b16 %v5812
        %v7787 = vunpack.c.l.b16 %v5813
        %v7788 = vunpack.c.h.b16 %v5813
        %v7789 = vunpack.c.l.b16 %v5814
        %v7790 = vunpack.c.l.b16 %v5815
        %v7791 = vunpack.c.h.b16 %v5815
        %v7792 = vunpack.c.l.b16 %v5816
        %v7793 = vunpack.c.l.b16 %v5817
        %v7794 = vunpack.c.h.b16 %v5817
        %v7795 = vunpack.c.l.b16 %v5818
        %v7796 = vunpack.c.l.b16 %v5819
        %v7797 = vunpack.c.h.b16 %v5819
        %v7798 = vunpack.c.l.b16 %v5820
        %v7799 = vunpack.c.l.b16 %v5821
        %v7800 = vunpack.c.h.b16 %v5821
        %v7801 = vunpack.c.l.b16 %v5822
        %v7802 = vunpack.c.l.b16 %v5823
        %v7803 = vunpack.c.h.b16 %v5823
        %v7804 = vunpack.c.l.b16 %v5824
        %v7805 = vunpack.c.l.b16 %v5825
        %v7806 = vunpack.c.h.b16 %v5825
        %v7807 = vunpack.c.l.b16 %v5826
        %v7808 = vunpack.c.l.b16 %v5827
        %v7809 = vunpack.c.h.b16 %v5827
        %v7810 = vunpack.c.l.b16 %v5828
        %v7811 = vunpack.c.l.b16 %v5829
        %v7812 = vunpack.c.h.b16 %v5829
        %v7813 = vunpack.c.l.b16 %v5830
        %v7814 = vunpack.c.l.b16 %v5831
        %v7815 = vunpack.c.h.b16 %v5831
        %v7816 = vunpack.c.l.b16 %v5832
        %v7817 = vunpack.c.l.b16 %v5833
        %v7818 = vunpack.c.h.b16 %v5833
        %v7819 = vunpack.c.l.b16 %v5834
        %v7820 = vunpack.c.l.b16 %v5835
        %v7821 = vunpack.c.h.b16 %v5835
        %v7822 = vunpack.c.l.b16 %v5836
        %v7823 = vunpack.c.l.b16 %v5837
        %v7824 = vunpack.c.h.b16 %v5837
        %v7825 = vunpack.c.l.b16 %v5838
        %v7826 = vunpack.c.l.b16 %v5839
        %v7827 = vunpack.c.h.b16 %v5839
        %v7828 = vunpack.c.l.b16 %v5840
        %v7829 = vunpack.c.l.b16 %v5841
        %v7830 = vunpack.c.h.b16 %v5841
        %v7831 = vunpack.c.l.b16 %v5842
        %v7832 = vunpack.c.l.b16 %v5843
        %v7833 = vunpack.c.h.b16 %v5843
        %v7834 = vunpack.c.l.b16 %v5844
        %v7835 = vunpack.c.l.b16 %v5845
        %v7836 = vunpack.c.h.b16 %v5845
        %v7837 = vunpack.c.l.b16 %v5846
        %v7838 = vunpack.c.l.b16 %v5847
        %v7839 = vunpack.c.h.b16 %v5847
        %v7840 = vunpack.c.l.b16 %v5848
        %v7841 = vpack.c.b16 %v7604, %v7601
        %v7842 = vpack.c.b16 %v7605, %v7602
        %v7843 = vpack.c.b16 %v7606, %v7603
        %v7844 = vpack.c.b16 %v7610, %v7607
        %v7845 = vpack.c.b16 %v7611, %v7608
        %v7846 = vpack.c.b16 %v7612, %v7609
        %v7847 = vpack.c.b16 %v7616, %v7613
        %v7848 = vpack.c.b16 %v7617, %v7614
        %v7849 = vpack.c.b16 %v7618, %v7615
        %v7850 = vpack.c.b16 %v7622, %v7619
        %v7851 = vpack.c.b16 %v7623, %v7620
        %v7852 = vpack.c.b16 %v7624, %v7621
        %v7853 = vpack.c.b16 %v7628, %v7625
        %v7854 = vpack.c.b16 %v7629, %v7626
        %v7855 = vpack.c.b16 %v7630, %v7627
        %v7856 = vpack.c.b16 %v7634, %v7631
        %v7857 = vpack.c.b16 %v7635, %v7632
        %v7858 = vpack.c.b16 %v7636, %v7633
        %v7859 = vpack.c.b16 %v7640, %v7637
        %v7860 = vpack.c.b16 %v7641, %v7638
        %v7861 = vpack.c.b16 %v7642, %v7639
        %v7862 = vpack.c.b16 %v7646, %v7643
        %v7863 = vpack.c.b16 %v7647, %v7644
        %v7864 = vpack.c.b16 %v7648, %v7645
        %v7865 = vpack.c.b16 %v7652, %v7649
        %v7866 = vpack.c.b16 %v7653, %v7650
        %v7867 = vpack.c.b16 %v7654, %v7651
        %v7868 = vpack.c.b16 %v7658, %v7655
        %v7869 = vpack.c.b16 %v7659, %v7656
        %v7870 = vpack.c.b16 %v7660, %v7657
        %v7871 = vpack.c.b16 %v7664, %v7661
        %v7872 = vpack.c.b16 %v7665, %v7662
        %v7873 = vpack.c.b16 %v7666, %v7663
        %v7874 = vpack.c.b16 %v7670, %v7667
        %v7875 = vpack.c.b16 %v7671, %v7668
        %v7876 = vpack.c.b16 %v7672, %v7669
        %v7877 = vpack.c.b16 %v7676, %v7673
        %v7878 = vpack.c.b16 %v7677, %v7674
        %v7879 = vpack.c.b16 %v7678, %v7675
        %v7880 = vpack.c.b16 %v7682, %v7679
        %v7881 = vpack.c.b16 %v7683, %v7680
        %v7882 = vpack.c.b16 %v7684, %v7681
        %v7883 = vpack.c.b16 %v7688, %v7685
        %v7884 = vpack.c.b16 %v7689, %v7686
        %v7885 = vpack.c.b16 %v7690, %v7687
        %v7886 = vpack.c.b16 %v7694, %v7691
        %v7887 = vpack.c.b16 %v7695, %v7692
        %v7888 = vpack.c.b16 %v7696, %v7693
        %v7889 = vpack.c.b16 %v7700, %v7697
        %v7890 = vpack.c.b16 %v7701, %v7698
        %v7891 = vpack.c.b16 %v7702, %v7699
        %v7892 = vpack.c.b16 %v7706, %v7703
        %v7893 = vpack.c.b16 %v7707, %v7704
        %v7894 = vpack.c.b16 %v7708, %v7705
        %v7895 = vpack.c.b16 %v7712, %v7709
        %v7896 = vpack.c.b16 %v7713, %v7710
        %v7897 = vpack.c.b16 %v7714, %v7711
        %v7898 = vpack.c.b16 %v7718, %v7715
        %v7899 = vpack.c.b16 %v7719, %v7716
        %v7900 = vpack.c.b16 %v7720, %v7717
        %v7901 = vpack.c.b16 %v7724, %v7721
        %v7902 = vpack.c.b16 %v7725, %v7722
        %v7903 = vpack.c.b16 %v7726, %v7723
        %v7904 = vpack.c.b16 %v7730, %v7727
        %v7905 = vpack.c.b16 %v7731, %v7728
        %v7906 = vpack.c.b16 %v7732, %v7729
        %v7907 = vpack.c.b16 %v7736, %v7733
        %v7908 = vpack.c.b16 %v7737, %v7734
        %v7909 = vpack.c.b16 %v7738, %v7735
        %v7910 = vpack.c.b16 %v7742, %v7739
        %v7911 = vpack.c.b16 %v7743, %v7740
        %v7912 = vpack.c.b16 %v7744, %v7741
        %v7913 = vpack.c.b16 %v7748, %v7745
        %v7914 = vpack.c.b16 %v7749, %v7746
        %v7915 = vpack.c.b16 %v7750, %v7747
        %v7916 = vpack.c.b16 %v7754, %v7751
        %v7917 = vpack.c.b16 %v7755, %v7752
        %v7918 = vpack.c.b16 %v7756, %v7753
        %v7919 = vpack.c.b16 %v7760, %v7757
        %v7920 = vpack.c.b16 %v7761, %v7758
        %v7921 = vpack.c.b16 %v7762, %v7759
        %v7922 = vpack.c.b16 %v7766, %v7763
        %v7923 = vpack.c.b16 %v7767, %v7764
        %v7924 = vpack.c.b16 %v7768, %v7765
        %v7925 = vpack.c.b16 %v7772, %v7769
        %v7926 = vpack.c.b16 %v7773, %v7770
        %v7927 = vpack.c.b16 %v7774, %v7771
        %v7928 = vpack.c.b16 %v7778, %v7775
        %v7929 = vpack.c.b16 %v7779, %v7776
        %v7930 = vpack.c.b16 %v7780, %v7777
        %v7931 = vpack.c.b16 %v7784, %v7781
        %v7932 = vpack.c.b16 %v7785, %v7782
        %v7933 = vpack.c.b16 %v7786, %v7783
        %v7934 = vpack.c.b16 %v7790, %v7787
        %v7935 = vpack.c.b16 %v7791, %v7788
        %v7936 = vpack.c.b16 %v7792, %v7789
        %v7937 = vpack.c.b16 %v7796, %v7793
        %v7938 = vpack.c.b16 %v7797, %v7794
        %v7939 = vpack.c.b16 %v7798, %v7795
        %v7940 = vpack.c.b16 %v7802, %v7799
        %v7941 = vpack.c.b16 %v7803, %v7800
        %v7942 = vpack.c.b16 %v7804, %v7801
        %v7943 = vpack.c.b16 %v7808, %v7805
        %v7944 = vpack.c.b16 %v7809, %v7806
        %v7945 = vpack.c.b16 %v7810, %v7807
        %v7946 = vpack.c.b16 %v7814, %v7811
        %v7947 = vpack.c.b16 %v7815, %v7812
        %v7948 = vpack.c.b16 %v7816, %v7813
        %v7949 = vpack.c.b16 %v7820, %v7817
        %v7950 = vpack.c.b16 %v7821, %v7818
        %v7951 = vpack.c.b16 %v7822, %v7819
        %v7952 = vpack.c.b16 %v7826, %v7823
        %v7953 = vpack.c.b16 %v7827, %v7824
        %v7954 = vpack.c.b16 %v7828, %v7825
        %v7955 = vpack.c.b16 %v7832, %v7829
        %v7956 = vpack.c.b16 %v7833, %v7830
        %v7957 = vpack.c.b16 %v7834, %v7831
        %v7958 = vpack.c.b16 %v7838, %v7835
        %v7959 = vpack.c.b16 %v7839, %v7836
        %v7960 = vpack.c.b16 %v7840, %v7837
        %8081 = vmatprep.subr.bf16.mxu0 %v7863
        %8082 = vmatpush1.bf16.msra.mxu0 %v7862
        %8083 = vmatprep.subr.bf16.mxu0 %v7860
        %8084 = vmatpush1.bf16.msra.mxu0 %v7859
        %8085 = vmatprep.subr.bf16.mxu0 %v7857
        %8086 = vmatpush1.bf16.msra.mxu0 %v7856
        %8087 = vmatprep.subr.bf16.mxu0 %v7854
        %8088 = vmatpush1.bf16.msra.mxu0 %v7853
        %8089 = vmatprep.subr.bf16.mxu0 %v7851
        %8090 = vmatpush1.bf16.msra.mxu0 %v7850
        %8091 = vmatprep.subr.bf16.mxu0 %v7848
        %8092 = vmatpush1.bf16.msra.mxu0 %v7847
        %8093 = vmatprep.subr.bf16.mxu0 %v7845
        %8094 = vmatpush1.bf16.msra.mxu0 %v7844
        %8095 = vmatprep.subr.bf16.mxu0 %v7842
        %8096 = vmatpush1.bf16.msra.mxu0 %v7841
        %8097 = vmatprep.subr.bf16.mxu0 %v7887
        %8098 = vmatpush2.bf16.msra.mxu0 %v7886
        %8099 = vmatprep.subr.bf16.mxu0 %v7884
        %8100 = vmatpush2.bf16.msra.mxu0 %v7883
        %8101 = vmatprep.subr.bf16.mxu0 %v7881
        %8102 = vmatpush2.bf16.msra.mxu0 %v7880
        %8103 = vmatprep.subr.bf16.mxu0 %v7878
        %8104 = vmatpush2.bf16.msra.mxu0 %v7877
        %8105 = vmatprep.subr.bf16.mxu0 %v7875
        %8106 = vmatpush2.bf16.msra.mxu0 %v7874
        %8107 = vmatprep.subr.bf16.mxu0 %v7872
        %8108 = vmatpush2.bf16.msra.mxu0 %v7871
        %8109 = vmatprep.subr.bf16.mxu0 %v7869
        %8110 = vmatpush2.bf16.msra.mxu0 %v7868
        %8111 = vmatprep.subr.bf16.mxu0 %v7866
        %8112 = vmatpush2.bf16.msra.mxu0 %v7865
        %8113 = vmatprep.mubr.bf16.mxu0 %v7362
        %8114 = vmatmul.mubr.bf16.gmra.mxu0 %v7361
        %v8115 = vpop.f32.mrf.mxu0
        %v8116 = vadd.f32 %v6997, %v8115
        %v8117 = vpop.f32.mrf.mxu0
        %v8118 = vadd.f32 %v6999, %v8117
        %v8119 = vpop.f32.mrf.mxu0
        %v8120 = vadd.f32 %v7001, %v8119
        %v8121 = vpop.f32.mrf.mxu0
        %v8122 = vadd.f32 %v7003, %v8121
        %8123 = vmatprep.mubr.bf16.mxu0 %v7367
        %8124 = vmatmul.mubr.bf16.gmra.mxu0 %v7366
        %v8125 = vpop.f32.mrf.mxu0
        %v8126 = vadd.f32 %v7007, %v8125
        %v8127 = vpop.f32.mrf.mxu0
        %v8128 = vadd.f32 %v7009, %v8127
        %v8129 = vpop.f32.mrf.mxu0
        %v8130 = vadd.f32 %v7011, %v8129
        %v8131 = vpop.f32.mrf.mxu0
        %v8132 = vadd.f32 %v7013, %v8131
        %8133 = vmatprep.mubr.bf16.mxu0 %v7372
        %8134 = vmatmul.mubr.bf16.gmra.mxu0 %v7371
        %v8135 = vpop.f32.mrf.mxu0
        %v8136 = vadd.f32 %v7017, %v8135
        %v8137 = vpop.f32.mrf.mxu0
        %v8138 = vadd.f32 %v7019, %v8137
        %v8139 = vpop.f32.mrf.mxu0
        %v8140 = vadd.f32 %v7021, %v8139
        %v8141 = vpop.f32.mrf.mxu0
        %v8142 = vadd.f32 %v7023, %v8141
        %8143 = vmatprep.mubr.bf16.mxu0 %v7377
        %8144 = vmatmul.mubr.bf16.gmra.mxu0 %v7376
        %v8145 = vpop.f32.mrf.mxu0
        %v8146 = vadd.f32 %v7027, %v8145
        %v8147 = vpop.f32.mrf.mxu0
        %v8148 = vadd.f32 %v7029, %v8147
        %v8149 = vpop.f32.mrf.mxu0
        %v8150 = vadd.f32 %v7031, %v8149
        %v8151 = vpop.f32.mrf.mxu0
        %v8152 = vadd.f32 %v7033, %v8151
        %8153 = vmatprep.mubr.bf16.mxu0 %v7382
        %8154 = vmatmul.mubr.bf16.gmra.mxu0 %v7381
        %v8155 = vpop.f32.mrf.mxu0
        %v8156 = vadd.f32 %v7037, %v8155
        %v8157 = vpop.f32.mrf.mxu0
        %v8158 = vadd.f32 %v7039, %v8157
        %v8159 = vpop.f32.mrf.mxu0
        %v8160 = vadd.f32 %v7041, %v8159
        %v8161 = vpop.f32.mrf.mxu0
        %v8162 = vadd.f32 %v7043, %v8161
        %8163 = vmatprep.mubr.bf16.mxu0 %v7387
        %8164 = vmatmul.mubr.bf16.gmra.mxu0 %v7386
        %v8165 = vpop.f32.mrf.mxu0
        %v8166 = vadd.f32 %v7047, %v8165
        %v8167 = vpop.f32.mrf.mxu0
        %v8168 = vadd.f32 %v7049, %v8167
        %v8169 = vpop.f32.mrf.mxu0
        %v8170 = vadd.f32 %v7051, %v8169
        %v8171 = vpop.f32.mrf.mxu0
        %v8172 = vadd.f32 %v7053, %v8171
        %8173 = vmatprep.mubr.bf16.mxu0 %v7392
        %8174 = vmatmul.mubr.bf16.gmra.mxu0 %v7391
        %v8175 = vpop.f32.mrf.mxu0
        %v8176 = vadd.f32 %v7057, %v8175
        %v8177 = vpop.f32.mrf.mxu0
        %v8178 = vadd.f32 %v7059, %v8177
        %v8179 = vpop.f32.mrf.mxu0
        %v8180 = vadd.f32 %v7061, %v8179
        %v8181 = vpop.f32.mrf.mxu0
        %v8182 = vadd.f32 %v7063, %v8181
        %8183 = vmatprep.mubr.bf16.mxu0 %v7397
        %8184 = vmatmul.mubr.bf16.gmra.mxu0 %v7396
        %v8185 = vpop.f32.mrf.mxu0
        %v8186 = vadd.f32 %v7067, %v8185
        %v8187 = vpop.f32.mrf.mxu0
        %v8188 = vadd.f32 %v7069, %v8187
        %v8189 = vpop.f32.mrf.mxu0
        %v8190 = vpop.f32.mrf.mxu0
        %8191 = vdwg.mxu0
        %8192 = vmatprep.subr.bf16.mxu0 %v7911
        %8193 = vmatpush1.bf16.msra.mxu0 %v7910
        %8194 = vmatprep.subr.bf16.mxu0 %v7908
        %8195 = vmatpush1.bf16.msra.mxu0 %v7907
        %8196 = vmatprep.subr.bf16.mxu0 %v7905
        %8197 = vmatpush1.bf16.msra.mxu0 %v7904
        %8198 = vmatprep.subr.bf16.mxu0 %v7902
        %8199 = vmatpush1.bf16.msra.mxu0 %v7901
        %8200 = vmatprep.subr.bf16.mxu0 %v7899
        %8201 = vmatpush1.bf16.msra.mxu0 %v7898
        %8202 = vmatprep.subr.bf16.mxu0 %v7896
        %8203 = vmatpush1.bf16.msra.mxu0 %v7895
        %8204 = vmatprep.subr.bf16.mxu0 %v7893
        %8205 = vmatpush1.bf16.msra.mxu0 %v7892
        %8206 = vmatprep.subr.bf16.mxu0 %v7890
        %8207 = vmatpush1.bf16.msra.mxu0 %v7889
        %8208 = vmatprep.subr.bf16.mxu0 %v7935
        %8209 = vmatpush2.bf16.msra.mxu0 %v7934
        %8210 = vmatprep.subr.bf16.mxu0 %v7932
        %8211 = vmatpush2.bf16.msra.mxu0 %v7931
        %8212 = vmatprep.subr.bf16.mxu0 %v7929
        %8213 = vmatpush2.bf16.msra.mxu0 %v7928
        %8214 = vmatprep.subr.bf16.mxu0 %v7926
        %8215 = vmatpush2.bf16.msra.mxu0 %v7925
        %8216 = vmatprep.subr.bf16.mxu0 %v7923
        %8217 = vmatpush2.bf16.msra.mxu0 %v7922
        %8218 = vmatprep.subr.bf16.mxu0 %v7920
        %8219 = vmatpush2.bf16.msra.mxu0 %v7919
        %8220 = vmatprep.subr.bf16.mxu0 %v7917
        %8221 = vmatpush2.bf16.msra.mxu0 %v7916
        %8222 = vmatprep.subr.bf16.mxu0 %v7914
        %8223 = vmatpush2.bf16.msra.mxu0 %v7913
        %8224 = vmatprep.mubr.bf16.mxu0 %v7364
        %8225 = vmatmul.mubr.bf16.gmra.mxu0 %v7363
        %v8226 = vpop.f32.mrf.mxu0
        %v8227 = vadd.f32 %v8116, %v8226
        %v8228 = vpop.f32.mrf.mxu0
        %v8229 = vadd.f32 %v8118, %v8228
        %v8230 = vpop.f32.mrf.mxu0
        %v8231 = vadd.f32 %v8120, %v8230
        %v8232 = vpop.f32.mrf.mxu0
        %v8233 = vadd.f32 %v8122, %v8232
        %8234 = vmatprep.mubr.bf16.mxu0 %v7369
        %8235 = vmatmul.mubr.bf16.gmra.mxu0 %v7368
        %v8236 = vpop.f32.mrf.mxu0
        %v8237 = vadd.f32 %v8126, %v8236
        %v8238 = vpop.f32.mrf.mxu0
        %v8239 = vadd.f32 %v8128, %v8238
        %v8240 = vpop.f32.mrf.mxu0
        %v8241 = vadd.f32 %v8130, %v8240
        %v8242 = vpop.f32.mrf.mxu0
        %v8243 = vadd.f32 %v8132, %v8242
        %8244 = vmatprep.mubr.bf16.mxu0 %v7374
        %8245 = vmatmul.mubr.bf16.gmra.mxu0 %v7373
        %v8246 = vpop.f32.mrf.mxu0
        %v8247 = vadd.f32 %v8136, %v8246
        %v8248 = vpop.f32.mrf.mxu0
        %v8249 = vadd.f32 %v8138, %v8248
        %v8250 = vpop.f32.mrf.mxu0
        %v8251 = vadd.f32 %v8140, %v8250
        %v8252 = vpop.f32.mrf.mxu0
        %v8253 = vadd.f32 %v8142, %v8252
        %8254 = vmatprep.mubr.bf16.mxu0 %v7379
        %8255 = vmatmul.mubr.bf16.gmra.mxu0 %v7378
        %v8256 = vpop.f32.mrf.mxu0
        %v8257 = vadd.f32 %v8146, %v8256
        %v8258 = vpop.f32.mrf.mxu0
        %v8259 = vadd.f32 %v8148, %v8258
        %v8260 = vpop.f32.mrf.mxu0
        %v8261 = vadd.f32 %v8150, %v8260
        %v8262 = vpop.f32.mrf.mxu0
        %v8263 = vadd.f32 %v8152, %v8262
        %8264 = vmatprep.mubr.bf16.mxu0 %v7384
        %8265 = vmatmul.mubr.bf16.gmra.mxu0 %v7383
        %v8266 = vpop.f32.mrf.mxu0
        %v8267 = vadd.f32 %v8156, %v8266
        %v8268 = vpop.f32.mrf.mxu0
        %v8269 = vadd.f32 %v8158, %v8268
        %v8270 = vpop.f32.mrf.mxu0
        %v8271 = vadd.f32 %v8160, %v8270
        %v8272 = vpop.f32.mrf.mxu0
        %v8273 = vadd.f32 %v8162, %v8272
        %8274 = vmatprep.mubr.bf16.mxu0 %v7389
        %8275 = vmatmul.mubr.bf16.gmra.mxu0 %v7388
        %v8276 = vpop.f32.mrf.mxu0
        %v8277 = vadd.f32 %v8166, %v8276
        %v8278 = vpop.f32.mrf.mxu0
        %v8279 = vadd.f32 %v8168, %v8278
        %v8280 = vpop.f32.mrf.mxu0
        %v8281 = vadd.f32 %v8170, %v8280
        %v8282 = vpop.f32.mrf.mxu0
        %v8283 = vadd.f32 %v8172, %v8282
        %8284 = vmatprep.mubr.bf16.mxu0 %v7394
        %8285 = vmatmul.mubr.bf16.gmra.mxu0 %v7393
        %v8286 = vpop.f32.mrf.mxu0
        %v8287 = vadd.f32 %v8176, %v8286
        %v8288 = vpop.f32.mrf.mxu0
        %v8289 = vadd.f32 %v8178, %v8288
        %v8290 = vpop.f32.mrf.mxu0
        %v8291 = vadd.f32 %v8180, %v8290
        %v8292 = vpop.f32.mrf.mxu0
        %v8293 = vadd.f32 %v8182, %v8292
        %8294 = vmatprep.mubr.bf16.mxu0 %v7399
        %8295 = vmatmul.mubr.bf16.gmra.mxu0 %v7398
        %v8296 = vpop.f32.mrf.mxu0
        %v8297 = vadd.f32 %v8186, %v8296
        %v8298 = vpop.f32.mrf.mxu0
        %v8299 = vadd.f32 %v8188, %v8298
        %v8300 = vpop.f32.mrf.mxu0
        %v8301 = vpop.f32.mrf.mxu0
        %8302 = vdwg.mxu0
        %8303 = vmatprep.subr.bf16.mxu0 %v7959
        %8304 = vmatpush1.bf16.msra.mxu0 %v7958
        %8305 = vmatprep.subr.bf16.mxu0 %v7956
        %8306 = vmatpush1.bf16.msra.mxu0 %v7955
        %8307 = vmatprep.subr.bf16.mxu0 %v7953
        %8308 = vmatpush1.bf16.msra.mxu0 %v7952
        %8309 = vmatprep.subr.bf16.mxu0 %v7950
        %8310 = vmatpush1.bf16.msra.mxu0 %v7949
        %8311 = vmatprep.subr.bf16.mxu0 %v7947
        %8312 = vmatpush1.bf16.msra.mxu0 %v7946
        %8313 = vmatprep.subr.bf16.mxu0 %v7944
        %8314 = vmatpush1.bf16.msra.mxu0 %v7943
        %8315 = vmatprep.subr.bf16.mxu0 %v7941
        %8316 = vmatpush1.bf16.msra.mxu0 %v7940
        %8317 = vmatprep.subr.bf16.mxu0 %v7938
        %8318 = vmatpush1.bf16.msra.mxu0 %v7937
        %8319 = vmatprep.subr.bf16.mxu0 0
        %8320 = vmatpush2.bf16.msra.mxu0 0
        %8321 = vmatprep.subr.bf16.mxu0 0
        %8322 = vmatpush2.bf16.msra.mxu0 0
        %8323 = vmatprep.subr.bf16.mxu0 0
        %8324 = vmatpush2.bf16.msra.mxu0 0
        %8325 = vmatprep.subr.bf16.mxu0 0
        %8326 = vmatpush2.bf16.msra.mxu0 0
        %8327 = vmatprep.subr.bf16.mxu0 0
        %8328 = vmatpush2.bf16.msra.mxu0 0
        %8329 = vmatprep.subr.bf16.mxu0 0
        %8330 = vmatpush2.bf16.msra.mxu0 0
        %8331 = vmatprep.subr.bf16.mxu0 0
        %8332 = vmatpush2.bf16.msra.mxu0 0
        %8333 = vmatprep.subr.bf16.mxu0 0
        %8334 = vmatpush2.bf16.msra.mxu0 0
        %8335 = vmatprep.mubr.bf16.mxu0 0
        %8336 = vmatmul.mubr.bf16.gmra.mxu0 %v7365
        %v8337 = vpop.f32.mrf.mxu0
        %v8338 = vadd.f32 %v8227, %v8337
        %v8339 = vpop.f32.mrf.mxu0
        %v8340 = vadd.f32 %v8229, %v8339
        %v8341 = vpop.f32.mrf.mxu0
        %v8342 = vadd.f32 %v8231, %v8341
        %v8343 = vpop.f32.mrf.mxu0
        %v8344 = vadd.f32 %v8233, %v8343
        %8345 = vmatprep.mubr.bf16.mxu0 0
        %8346 = vmatmul.mubr.bf16.gmra.mxu0 %v7370
        %v8347 = vpop.f32.mrf.mxu0
        %v8348 = vadd.f32 %v8237, %v8347
        %v8349 = vpop.f32.mrf.mxu0
        %v8350 = vadd.f32 %v8239, %v8349
        %v8351 = vpop.f32.mrf.mxu0
        %v8352 = vadd.f32 %v8241, %v8351
        %v8353 = vpop.f32.mrf.mxu0
        %v8354 = vadd.f32 %v8243, %v8353
        %8355 = vmatprep.mubr.bf16.mxu0 0
        %8356 = vmatmul.mubr.bf16.gmra.mxu0 %v7375
        %v8357 = vpop.f32.mrf.mxu0
        %v8358 = vadd.f32 %v8247, %v8357
        %v8359 = vpop.f32.mrf.mxu0
        %v8360 = vadd.f32 %v8249, %v8359
        %v8361 = vpop.f32.mrf.mxu0
        %v8362 = vadd.f32 %v8251, %v8361
        %v8363 = vpop.f32.mrf.mxu0
        %v8364 = vadd.f32 %v8253, %v8363
        %8365 = vmatprep.mubr.bf16.mxu0 0
        %8366 = vmatmul.mubr.bf16.gmra.mxu0 %v7380
        %v8367 = vpop.f32.mrf.mxu0
        %v8368 = vadd.f32 %v8257, %v8367
        %v8369 = vpop.f32.mrf.mxu0
        %v8370 = vadd.f32 %v8259, %v8369
        %v8371 = vpop.f32.mrf.mxu0
        %v8372 = vadd.f32 %v8261, %v8371
        %v8373 = vpop.f32.mrf.mxu0
        %v8374 = vadd.f32 %v8263, %v8373
        %8375 = vmatprep.mubr.bf16.mxu0 0
        %8376 = vmatmul.mubr.bf16.gmra.mxu0 %v7385
        %v8377 = vpop.f32.mrf.mxu0
        %v8378 = vadd.f32 %v8267, %v8377
        %v8379 = vpop.f32.mrf.mxu0
        %v8380 = vadd.f32 %v8269, %v8379
        %v8381 = vpop.f32.mrf.mxu0
        %v8382 = vadd.f32 %v8271, %v8381
        %v8383 = vpop.f32.mrf.mxu0
        %v8384 = vadd.f32 %v8273, %v8383
        %8385 = vmatprep.mubr.bf16.mxu0 0
        %8386 = vmatmul.mubr.bf16.gmra.mxu0 %v7390
        %v8387 = vpop.f32.mrf.mxu0
        %v8388 = vadd.f32 %v8277, %v8387
        %v8389 = vpop.f32.mrf.mxu0
        %v8390 = vadd.f32 %v8279, %v8389
        %v8391 = vpop.f32.mrf.mxu0
        %v8392 = vadd.f32 %v8281, %v8391
        %v8393 = vpop.f32.mrf.mxu0
        %v8394 = vadd.f32 %v8283, %v8393
        %8395 = vmatprep.mubr.bf16.mxu0 0
        %8396 = vmatmul.mubr.bf16.gmra.mxu0 %v7395
        %v8397 = vpop.f32.mrf.mxu0
        %v8398 = vadd.f32 %v8287, %v8397
        %v8399 = vpop.f32.mrf.mxu0
        %v8400 = vadd.f32 %v8289, %v8399
        %v8401 = vpop.f32.mrf.mxu0
        %v8402 = vadd.f32 %v8291, %v8401
        %v8403 = vpop.f32.mrf.mxu0
        %v8404 = vadd.f32 %v8293, %v8403
        %8405 = vmatprep.mubr.bf16.mxu0 0
        %8406 = vmatmul.mubr.bf16.gmra.mxu0 %v7400
        %v8407 = vpop.f32.mrf.mxu0
        %v8408 = vadd.f32 %v8297, %v8407
        %v8409 = vpop.f32.mrf.mxu0
        %v8410 = vadd.f32 %v8299, %v8409
        %v8411 = vpop.f32.mrf.mxu0
        %v8412 = vpop.f32.mrf.mxu0
        %8413 = vdwg.mxu0
        %8414 = vmatprep.subr.bf16.mxu0 0
        %8415 = vmatpush1.bf16.msra.mxu0 %v7864
        %8416 = vmatprep.subr.bf16.mxu0 0
        %8417 = vmatpush1.bf16.msra.mxu0 %v7861
        %8418 = vmatprep.subr.bf16.mxu0 0
        %8419 = vmatpush1.bf16.msra.mxu0 %v7858
        %8420 = vmatprep.subr.bf16.mxu0 0
        %8421 = vmatpush1.bf16.msra.mxu0 %v7855
        %8422 = vmatprep.subr.bf16.mxu0 0
        %8423 = vmatpush1.bf16.msra.mxu0 %v7852
        %8424 = vmatprep.subr.bf16.mxu0 0
        %8425 = vmatpush1.bf16.msra.mxu0 %v7849
        %8426 = vmatprep.subr.bf16.mxu0 0
        %8427 = vmatpush1.bf16.msra.mxu0 %v7846
        %8428 = vmatprep.subr.bf16.mxu0 0
        %8429 = vmatpush1.bf16.msra.mxu0 %v7843
        %8430 = vmatprep.subr.bf16.mxu0 0
        %8431 = vmatpush2.bf16.msra.mxu0 %v7888
        %8432 = vmatprep.subr.bf16.mxu0 0
        %8433 = vmatpush2.bf16.msra.mxu0 %v7885
        %8434 = vmatprep.subr.bf16.mxu0 0
        %8435 = vmatpush2.bf16.msra.mxu0 %v7882
        %8436 = vmatprep.subr.bf16.mxu0 0
        %8437 = vmatpush2.bf16.msra.mxu0 %v7879
        %8438 = vmatprep.subr.bf16.mxu0 0
        %8439 = vmatpush2.bf16.msra.mxu0 %v7876
        %8440 = vmatprep.subr.bf16.mxu0 0
        %8441 = vmatpush2.bf16.msra.mxu0 %v7873
        %8442 = vmatprep.subr.bf16.mxu0 0
        %8443 = vmatpush2.bf16.msra.mxu0 %v7870
        %8444 = vmatprep.subr.bf16.mxu0 0
        %8445 = vmatpush2.bf16.msra.mxu0 %v7867
        %8446 = vmatprep.mubr.bf16.mxu0 %v7362
        %8447 = vmatmul.mubr.bf16.gmra.mxu0 %v7361
        %v8448 = vpop.f32.mrf.mxu0
        %v8449 = vadd.f32 %v7300, %v8448
        %v8450 = vpop.f32.mrf.mxu0
        %v8451 = vpop.f32.mrf.mxu0
        %v8452 = vadd.f32 %v7303, %v8451
        %v8453 = vpop.f32.mrf.mxu0
        %8454 = vmatprep.mubr.bf16.mxu0 %v7367
        %8455 = vmatmul.mubr.bf16.gmra.mxu0 %v7366
        %v8456 = vpop.f32.mrf.mxu0
        %v8457 = vadd.f32 %v7308, %v8456
        %v8458 = vpop.f32.mrf.mxu0
        %v8459 = vpop.f32.mrf.mxu0
        %v8460 = vadd.f32 %v7311, %v8459
        %v8461 = vpop.f32.mrf.mxu0
        %8462 = vmatprep.mubr.bf16.mxu0 %v7372
        %8463 = vmatmul.mubr.bf16.gmra.mxu0 %v7371
        %v8464 = vpop.f32.mrf.mxu0
        %v8465 = vadd.f32 %v7316, %v8464
        %v8466 = vpop.f32.mrf.mxu0
        %v8467 = vpop.f32.mrf.mxu0
        %v8468 = vadd.f32 %v7319, %v8467
        %v8469 = vpop.f32.mrf.mxu0
        %8470 = vmatprep.mubr.bf16.mxu0 %v7377
        %8471 = vmatmul.mubr.bf16.gmra.mxu0 %v7376
        %v8472 = vpop.f32.mrf.mxu0
        %v8473 = vadd.f32 %v7324, %v8472
        %v8474 = vpop.f32.mrf.mxu0
        %v8475 = vpop.f32.mrf.mxu0
        %v8476 = vadd.f32 %v7327, %v8475
        %v8477 = vpop.f32.mrf.mxu0
        %8478 = vmatprep.mubr.bf16.mxu0 %v7382
        %8479 = vmatmul.mubr.bf16.gmra.mxu0 %v7381
        %v8480 = vpop.f32.mrf.mxu0
        %v8481 = vadd.f32 %v7332, %v8480
        %v8482 = vpop.f32.mrf.mxu0
        %v8483 = vpop.f32.mrf.mxu0
        %v8484 = vadd.f32 %v7335, %v8483
        %v8485 = vpop.f32.mrf.mxu0
        %8486 = vmatprep.mubr.bf16.mxu0 %v7387
        %8487 = vmatmul.mubr.bf16.gmra.mxu0 %v7386
        %v8488 = vpop.f32.mrf.mxu0
        %v8489 = vadd.f32 %v7340, %v8488
        %v8490 = vpop.f32.mrf.mxu0
        %v8491 = vpop.f32.mrf.mxu0
        %v8492 = vadd.f32 %v7343, %v8491
        %v8493 = vpop.f32.mrf.mxu0
        %8494 = vmatprep.mubr.bf16.mxu0 %v7392
        %8495 = vmatmul.mubr.bf16.gmra.mxu0 %v7391
        %v8496 = vpop.f32.mrf.mxu0
        %v8497 = vadd.f32 %v7348, %v8496
        %v8498 = vpop.f32.mrf.mxu0
        %v8499 = vpop.f32.mrf.mxu0
        %v8500 = vadd.f32 %v7351, %v8499
        %v8501 = vpop.f32.mrf.mxu0
        %8502 = vmatprep.mubr.bf16.mxu0 %v7397
        %8503 = vmatmul.mubr.bf16.gmra.mxu0 %v7396
        %v8504 = vpop.f32.mrf.mxu0
        %v8505 = vadd.f32 %v7356, %v8504
        %v8506 = vpop.f32.mrf.mxu0
        %v8507 = vpop.f32.mrf.mxu0
        %v8508 = vpop.f32.mrf.mxu0
        %8509 = vdwg.mxu0
        %8510 = vmatprep.subr.bf16.mxu0 0
        %8511 = vmatpush1.bf16.msra.mxu0 %v7912
        %8512 = vmatprep.subr.bf16.mxu0 0
        %8513 = vmatpush1.bf16.msra.mxu0 %v7909
        %8514 = vmatprep.subr.bf16.mxu0 0
        %8515 = vmatpush1.bf16.msra.mxu0 %v7906
        %8516 = vmatprep.subr.bf16.mxu0 0
        %8517 = vmatpush1.bf16.msra.mxu0 %v7903
        %8518 = vmatprep.subr.bf16.mxu0 0
        %8519 = vmatpush1.bf16.msra.mxu0 %v7900
        %8520 = vmatprep.subr.bf16.mxu0 0
        %8521 = vmatpush1.bf16.msra.mxu0 %v7897
        %8522 = vmatprep.subr.bf16.mxu0 0
        %8523 = vmatpush1.bf16.msra.mxu0 %v7894
        %8524 = vmatprep.subr.bf16.mxu0 0
        %8525 = vmatpush1.bf16.msra.mxu0 %v7891
        %8526 = vmatprep.subr.bf16.mxu0 0
        %8527 = vmatpush2.bf16.msra.mxu0 %v7936
        %8528 = vmatprep.subr.bf16.mxu0 0
        %8529 = vmatpush2.bf16.msra.mxu0 %v7933
        %8530 = vmatprep.subr.bf16.mxu0 0
        %8531 = vmatpush2.bf16.msra.mxu0 %v7930
        %8532 = vmatprep.subr.bf16.mxu0 0
        %8533 = vmatpush2.bf16.msra.mxu0 %v7927
        %8534 = vmatprep.subr.bf16.mxu0 0
        %8535 = vmatpush2.bf16.msra.mxu0 %v7924
        %8536 = vmatprep.subr.bf16.mxu0 0
        %8537 = vmatpush2.bf16.msra.mxu0 %v7921
        %8538 = vmatprep.subr.bf16.mxu0 0
        %8539 = vmatpush2.bf16.msra.mxu0 %v7918
        %8540 = vmatprep.subr.bf16.mxu0 0
        %8541 = vmatpush2.bf16.msra.mxu0 %v7915
        %8542 = vmatprep.mubr.bf16.mxu0 %v7364
        %8543 = vmatmul.mubr.bf16.gmra.mxu0 %v7363
        %v8544 = vpop.f32.mrf.mxu0
        %v8545 = vadd.f32 %v8449, %v8544
        %v8546 = vpop.f32.mrf.mxu0
        %v8547 = vpop.f32.mrf.mxu0
        %v8548 = vadd.f32 %v8452, %v8547
        %v8549 = vpop.f32.mrf.mxu0
        %8550 = vmatprep.mubr.bf16.mxu0 %v7369
        %8551 = vmatmul.mubr.bf16.gmra.mxu0 %v7368
        %v8552 = vpop.f32.mrf.mxu0
        %v8553 = vadd.f32 %v8457, %v8552
        %v8554 = vpop.f32.mrf.mxu0
        %v8555 = vpop.f32.mrf.mxu0
        %v8556 = vadd.f32 %v8460, %v8555
        %v8557 = vpop.f32.mrf.mxu0
        %8558 = vmatprep.mubr.bf16.mxu0 %v7374
        %8559 = vmatmul.mubr.bf16.gmra.mxu0 %v7373
        %v8560 = vpop.f32.mrf.mxu0
        %v8561 = vadd.f32 %v8465, %v8560
        %v8562 = vpop.f32.mrf.mxu0
        %v8563 = vpop.f32.mrf.mxu0
        %v8564 = vadd.f32 %v8468, %v8563
        %v8565 = vpop.f32.mrf.mxu0
        %8566 = vmatprep.mubr.bf16.mxu0 %v7379
        %8567 = vmatmul.mubr.bf16.gmra.mxu0 %v7378
        %v8568 = vpop.f32.mrf.mxu0
        %v8569 = vadd.f32 %v8473, %v8568
        %v8570 = vpop.f32.mrf.mxu0
        %v8571 = vpop.f32.mrf.mxu0
        %v8572 = vadd.f32 %v8476, %v8571
        %v8573 = vpop.f32.mrf.mxu0
        %8574 = vmatprep.mubr.bf16.mxu0 %v7384
        %8575 = vmatmul.mubr.bf16.gmra.mxu0 %v7383
        %v8576 = vpop.f32.mrf.mxu0
        %v8577 = vadd.f32 %v8481, %v8576
        %v8578 = vpop.f32.mrf.mxu0
        %v8579 = vpop.f32.mrf.mxu0
        %v8580 = vadd.f32 %v8484, %v8579
        %v8581 = vpop.f32.mrf.mxu0
        %8582 = vmatprep.mubr.bf16.mxu0 %v7389
        %8583 = vmatmul.mubr.bf16.gmra.mxu0 %v7388
        %v8584 = vpop.f32.mrf.mxu0
        %v8585 = vadd.f32 %v8489, %v8584
        %v8586 = vpop.f32.mrf.mxu0
        %v8587 = vpop.f32.mrf.mxu0
        %v8588 = vadd.f32 %v8492, %v8587
        %v8589 = vpop.f32.mrf.mxu0
        %8590 = vmatprep.mubr.bf16.mxu0 %v7394
        %8591 = vmatmul.mubr.bf16.gmra.mxu0 %v7393
        %v8592 = vpop.f32.mrf.mxu0
        %v8593 = vadd.f32 %v8497, %v8592
        %v8594 = vpop.f32.mrf.mxu0
        %v8595 = vpop.f32.mrf.mxu0
        %v8596 = vadd.f32 %v8500, %v8595
        %v8597 = vpop.f32.mrf.mxu0
        %8598 = vmatprep.mubr.bf16.mxu0 %v7399
        %8599 = vmatmul.mubr.bf16.gmra.mxu0 %v7398
        %v8600 = vpop.f32.mrf.mxu0
        %v8601 = vadd.f32 %v8505, %v8600
        %v8602 = vpop.f32.mrf.mxu0
        %v8603 = vpop.f32.mrf.mxu0
        %v8604 = vpop.f32.mrf.mxu0
        %8605 = vdwg.mxu0
        %8606 = vmatprep.subr.bf16.mxu0 0
        %8607 = vmatpush1.bf16.msra.mxu0 %v7960
        %8608 = vmatprep.subr.bf16.mxu0 0
        %8609 = vmatpush1.bf16.msra.mxu0 %v7957
        %8610 = vmatprep.subr.bf16.mxu0 0
        %8611 = vmatpush1.bf16.msra.mxu0 %v7954
        %8612 = vmatprep.subr.bf16.mxu0 0
        %8613 = vmatpush1.bf16.msra.mxu0 %v7951
        %8614 = vmatprep.subr.bf16.mxu0 0
        %8615 = vmatpush1.bf16.msra.mxu0 %v7948
        %8616 = vmatprep.subr.bf16.mxu0 0
        %8617 = vmatpush1.bf16.msra.mxu0 %v7945
        %8618 = vmatprep.subr.bf16.mxu0 0
        %8619 = vmatpush1.bf16.msra.mxu0 %v7942
        %8620 = vmatprep.subr.bf16.mxu0 0
        %8621 = vmatpush1.bf16.msra.mxu0 %v7939
        %8622 = vmatprep.subr.bf16.mxu0 0
        %8623 = vmatpush2.bf16.msra.mxu0 0
        %8624 = vmatprep.subr.bf16.mxu0 0
        %8625 = vmatpush2.bf16.msra.mxu0 0
        %8626 = vmatprep.subr.bf16.mxu0 0
        %8627 = vmatpush2.bf16.msra.mxu0 0
        %8628 = vmatprep.subr.bf16.mxu0 0
        %8629 = vmatpush2.bf16.msra.mxu0 0
        %8630 = vmatprep.subr.bf16.mxu0 0
        %8631 = vmatpush2.bf16.msra.mxu0 0
        %8632 = vmatprep.subr.bf16.mxu0 0
        %8633 = vmatpush2.bf16.msra.mxu0 0
        %8634 = vmatprep.subr.bf16.mxu0 0
        %8635 = vmatpush2.bf16.msra.mxu0 0
        %8636 = vmatprep.subr.bf16.mxu0 0
        %8637 = vmatpush2.bf16.msra.mxu0 0
        %8638 = vmatprep.mubr.bf16.mxu0 0
        %8639 = vmatmul.mubr.bf16.gmra.mxu0 %v7365
        %v8640 = vpop.f32.mrf.mxu0
        %v8641 = vadd.f32 %v8545, %v8640
        %v8642 = vpop.f32.mrf.mxu0
        %v8643 = vpop.f32.mrf.mxu0
        %v8644 = vadd.f32 %v8548, %v8643
        %v8645 = vpop.f32.mrf.mxu0
        %8646 = vmatprep.mubr.bf16.mxu0 0
        %8647 = vmatmul.mubr.bf16.gmra.mxu0 %v7370
        %v8648 = vpop.f32.mrf.mxu0
        %v8649 = vadd.f32 %v8553, %v8648
        %v8650 = vpop.f32.mrf.mxu0
        %v8651 = vpop.f32.mrf.mxu0
        %v8652 = vadd.f32 %v8556, %v8651
        %v8653 = vpop.f32.mrf.mxu0
        %8654 = vmatprep.mubr.bf16.mxu0 0
        %8655 = vmatmul.mubr.bf16.gmra.mxu0 %v7375
        %v8656 = vpop.f32.mrf.mxu0
        %v8657 = vadd.f32 %v8561, %v8656
        %v8658 = vpop.f32.mrf.mxu0
        %v8659 = vpop.f32.mrf.mxu0
        %v8660 = vadd.f32 %v8564, %v8659
        %v8661 = vpop.f32.mrf.mxu0
        %8662 = vmatprep.mubr.bf16.mxu0 0
        %8663 = vmatmul.mubr.bf16.gmra.mxu0 %v7380
        %v8664 = vpop.f32.mrf.mxu0
        %v8665 = vadd.f32 %v8569, %v8664
        %v8666 = vpop.f32.mrf.mxu0
        %v8667 = vpop.f32.mrf.mxu0
        %v8668 = vadd.f32 %v8572, %v8667
        %v8669 = vpop.f32.mrf.mxu0
        %8670 = vmatprep.mubr.bf16.mxu0 0
        %8671 = vmatmul.mubr.bf16.gmra.mxu0 %v7385
        %v8672 = vpop.f32.mrf.mxu0
        %v8673 = vadd.f32 %v8577, %v8672
        %v8674 = vpop.f32.mrf.mxu0
        %v8675 = vpop.f32.mrf.mxu0
        %v8676 = vadd.f32 %v8580, %v8675
        %v8677 = vpop.f32.mrf.mxu0
        %8678 = vmatprep.mubr.bf16.mxu0 0
        %8679 = vmatmul.mubr.bf16.gmra.mxu0 %v7390
        %v8680 = vpop.f32.mrf.mxu0
        %v8681 = vadd.f32 %v8585, %v8680
        %v8682 = vpop.f32.mrf.mxu0
        %v8683 = vpop.f32.mrf.mxu0
        %v8684 = vadd.f32 %v8588, %v8683
        %v8685 = vpop.f32.mrf.mxu0
        %8686 = vmatprep.mubr.bf16.mxu0 0
        %8687 = vmatmul.mubr.bf16.gmra.mxu0 %v7395
        %v8688 = vpop.f32.mrf.mxu0
        %v8689 = vadd.f32 %v8593, %v8688
        %v8690 = vpop.f32.mrf.mxu0
        %v8691 = vpop.f32.mrf.mxu0
        %v8692 = vadd.f32 %v8596, %v8691
        %v8693 = vpop.f32.mrf.mxu0
        %8694 = vmatprep.mubr.bf16.mxu0 0
        %8695 = vmatmul.mubr.bf16.gmra.mxu0 %v7400
        %v8696 = vpop.f32.mrf.mxu0
        %v8697 = vadd.f32 %v8601, %v8696
        %v8698 = vpop.f32.mrf.mxu0
        %v8699 = vpop.f32.mrf.mxu0
        %v8700 = vpop.f32.mrf.mxu0
        %8701 = vdwg.mxu0
        %v8707 = vunpack.c.l.b16 %v5524
        %v8708 = vunpack.c.l.b16 %v5525
        %v8709 = vunpack.c.l.b16 %v5526
        %v8710 = vunpack.c.l.b16 %v5527
        %v8711 = vunpack.c.l.b16 %v5528
        %s8712 = scalar_lea.vmem %s5, 1920
        %v8713 = vld [vmem:[%s8712] sm:$0xff]
        %v8714 = vld [vmem:[%s8712 + $0x8] sm:$0xf]
        %v8715 = vld [vmem:[%s8712 + $0xc] sm:$0xff]
        %v8716 = vld [vmem:[%s8712 + $0x14] sm:$0xf]
        %v8717 = vld [vmem:[%s8712 + $0x18] sm:$0xff]
        %v8718 = vld [vmem:[%s8712 + $0x20] sm:$0xf]
        %v8719 = vld [vmem:[%s8712 + $0x24] sm:$0xff]
        %v8720 = vld [vmem:[%s8712 + $0x2c] sm:$0xf]
        %v8721 = vld [vmem:[%s8712 + $0x30] sm:$0xff]
        %v8722 = vld [vmem:[%s8712 + $0x38] sm:$0xf]
        %v8723 = vld [vmem:[%s8712 + $0x3c] sm:$0xff]
        %v8724 = vld [vmem:[%s8712 + $0x44] sm:$0xf]
        %v8725 = vld [vmem:[%s8712 + $0x48] sm:$0xff]
        %v8726 = vld [vmem:[%s8712 + $0x50] sm:$0xf]
        %v8727 = vld [vmem:[%s8712 + $0x54] sm:$0xff]
        %v8728 = vld [vmem:[%s8712 + $0x5c] sm:$0xf]
        %v8729 = vld [vmem:[%s8712 + $0x60] sm:$0xff]
        %v8730 = vld [vmem:[%s8712 + $0x68] sm:$0xf]
        %v8731 = vld [vmem:[%s8712 + $0x6c] sm:$0xff]
        %v8732 = vld [vmem:[%s8712 + $0x74] sm:$0xf]
        %v8733 = vld [vmem:[%s8712 + $0x78] sm:$0xff]
        %v8734 = vld [vmem:[%s8712 + $0x80] sm:$0xf]
        %v8735 = vld [vmem:[%s8712 + $0x84] sm:$0xff]
        %v8736 = vld [vmem:[%s8712 + $0x8c] sm:$0xf]
        %v8737 = vld [vmem:[%s8712 + $0x90] sm:$0xff]
        %v8738 = vld [vmem:[%s8712 + $0x98] sm:$0xf]
        %v8739 = vld [vmem:[%s8712 + $0x9c] sm:$0xff]
        %v8740 = vld [vmem:[%s8712 + $0xa4] sm:$0xf]
        %v8741 = vld [vmem:[%s8712 + $0xa8] sm:$0xff]
        %v8742 = vld [vmem:[%s8712 + $0xb0] sm:$0xf]
        %v8743 = vld [vmem:[%s8712 + $0xb4] sm:$0xff]
        %v8744 = vld [vmem:[%s8712 + $0xbc] sm:$0xf]
        %v8745 = vld [vmem:[%s8712 + $0xc0] sm:$0xff]
        %v8746 = vld [vmem:[%s8712 + $0xc8] sm:$0xf]
        %v8747 = vld [vmem:[%s8712 + $0xcc] sm:$0xff]
        %v8748 = vld [vmem:[%s8712 + $0xd4] sm:$0xf]
        %v8749 = vld [vmem:[%s8712 + $0xd8] sm:$0xff]
        %v8750 = vld [vmem:[%s8712 + $0xe0] sm:$0xf]
        %v8751 = vld [vmem:[%s8712 + $0xe4] sm:$0xff]
        %v8752 = vld [vmem:[%s8712 + $0xec] sm:$0xf]
        %v8753 = vld [vmem:[%s8712 + $0xf0] sm:$0xff]
        %v8754 = vld [vmem:[%s8712 + $0xf8] sm:$0xf]
        %v8755 = vld [vmem:[%s8712 + $0xfc] sm:$0xff]
        %v8756 = vld [vmem:[%s8712 + $0x104] sm:$0xf]
        %v8757 = vld [vmem:[%s8712 + $0x108] sm:$0xff]
        %v8758 = vld [vmem:[%s8712 + $0x110] sm:$0xf]
        %v8759 = vld [vmem:[%s8712 + $0x114] sm:$0xff]
        %v8760 = vld [vmem:[%s8712 + $0x11c] sm:$0xf]
        %v8761 = vld [vmem:[%s8712 + $0x120] sm:$0xff]
        %v8762 = vld [vmem:[%s8712 + $0x128] sm:$0xf]
        %v8763 = vld [vmem:[%s8712 + $0x12c] sm:$0xff]
        %v8764 = vld [vmem:[%s8712 + $0x134] sm:$0xf]
        %v8765 = vld [vmem:[%s8712 + $0x138] sm:$0xff]
        %v8766 = vld [vmem:[%s8712 + $0x140] sm:$0xf]
        %v8767 = vld [vmem:[%s8712 + $0x144] sm:$0xff]
        %v8768 = vld [vmem:[%s8712 + $0x14c] sm:$0xf]
        %v8769 = vld [vmem:[%s8712 + $0x150] sm:$0xff]
        %v8770 = vld [vmem:[%s8712 + $0x158] sm:$0xf]
        %v8771 = vld [vmem:[%s8712 + $0x15c] sm:$0xff]
        %v8772 = vld [vmem:[%s8712 + $0x164] sm:$0xf]
        %v8773 = vld [vmem:[%s8712 + $0x168] sm:$0xff]
        %v8774 = vld [vmem:[%s8712 + $0x170] sm:$0xf]
        %v8775 = vld [vmem:[%s8712 + $0x174] sm:$0xff]
        %v8776 = vld [vmem:[%s8712 + $0x17c] sm:$0xf]
        %v8777 = vld [vmem:[%s8712 + $0x180] sm:$0xff]
        %v8778 = vld [vmem:[%s8712 + $0x188] sm:$0xf]
        %v8779 = vld [vmem:[%s8712 + $0x18c] sm:$0xff]
        %v8780 = vld [vmem:[%s8712 + $0x194] sm:$0xf]
        %v8781 = vld [vmem:[%s8712 + $0x198] sm:$0xff]
        %v8782 = vld [vmem:[%s8712 + $0x1a0] sm:$0xf]
        %v8783 = vld [vmem:[%s8712 + $0x1a4] sm:$0xff]
        %v8784 = vld [vmem:[%s8712 + $0x1ac] sm:$0xf]
        %v8785 = vld [vmem:[%s8712 + $0x1b0] sm:$0xff]
        %v8786 = vld [vmem:[%s8712 + $0x1b8] sm:$0xf]
        %v8787 = vld [vmem:[%s8712 + $0x1bc] sm:$0xff]
        %v8788 = vld [vmem:[%s8712 + $0x1c4] sm:$0xf]
        %v8789 = vld [vmem:[%s8712 + $0x1c8] sm:$0xff]
        %v8790 = vld [vmem:[%s8712 + $0x1d0] sm:$0xf]
        %v8791 = vld [vmem:[%s8712 + $0x1d4] sm:$0xff]
        %v8792 = vld [vmem:[%s8712 + $0x1dc] sm:$0xf]
        %v8793 = vld [vmem:[%s8712 + $0x1e0] sm:$0xff]
        %v8794 = vld [vmem:[%s8712 + $0x1e8] sm:$0xf]
        %v8795 = vld [vmem:[%s8712 + $0x1ec] sm:$0xff]
        %v8796 = vld [vmem:[%s8712 + $0x1f4] sm:$0xf]
        %v8797 = vld [vmem:[%s8712 + $0x1f8] sm:$0xff]
        %v8798 = vld [vmem:[%s8712 + $0x200] sm:$0xf]
        %v8799 = vld [vmem:[%s8712 + $0x204] sm:$0xff]
        %v8800 = vld [vmem:[%s8712 + $0x20c] sm:$0xf]
        %v8801 = vld [vmem:[%s8712 + $0x210] sm:$0xff]
        %v8802 = vld [vmem:[%s8712 + $0x218] sm:$0xf]
        %v8803 = vld [vmem:[%s8712 + $0x21c] sm:$0xff]
        %v8804 = vld [vmem:[%s8712 + $0x224] sm:$0xf]
        %v8805 = vld [vmem:[%s8712 + $0x228] sm:$0xff]
        %v8806 = vld [vmem:[%s8712 + $0x230] sm:$0xf]
        %v8807 = vld [vmem:[%s8712 + $0x234] sm:$0xff]
        %v8808 = vld [vmem:[%s8712 + $0x23c] sm:$0xf]
        %v8809 = vld [vmem:[%s8712 + $0x240] sm:$0xff]
        %v8810 = vld [vmem:[%s8712 + $0x248] sm:$0xf]
        %v8811 = vld [vmem:[%s8712 + $0x24c] sm:$0xff]
        %v8812 = vld [vmem:[%s8712 + $0x254] sm:$0xf]
        %v8813 = vld [vmem:[%s8712 + $0x258] sm:$0xff]
        %v8814 = vld [vmem:[%s8712 + $0x260] sm:$0xf]
        %v8815 = vld [vmem:[%s8712 + $0x264] sm:$0xff]
        %v8816 = vld [vmem:[%s8712 + $0x26c] sm:$0xf]
        %v8817 = vld [vmem:[%s8712 + $0x270] sm:$0xff]
        %v8818 = vld [vmem:[%s8712 + $0x278] sm:$0xf]
        %v8819 = vld [vmem:[%s8712 + $0x27c] sm:$0xff]
        %v8820 = vld [vmem:[%s8712 + $0x284] sm:$0xf]
        %v8821 = vld [vmem:[%s8712 + $0x288] sm:$0xff]
        %v8822 = vld [vmem:[%s8712 + $0x290] sm:$0xf]
        %v8823 = vld [vmem:[%s8712 + $0x294] sm:$0xff]
        %v8824 = vld [vmem:[%s8712 + $0x29c] sm:$0xf]
        %v8825 = vld [vmem:[%s8712 + $0x2a0] sm:$0xff]
        %v8826 = vld [vmem:[%s8712 + $0x2a8] sm:$0xf]
        %v8827 = vld [vmem:[%s8712 + $0x2ac] sm:$0xff]
        %v8828 = vld [vmem:[%s8712 + $0x2b4] sm:$0xf]
        %v8829 = vld [vmem:[%s8712 + $0x2b8] sm:$0xff]
        %v8830 = vld [vmem:[%s8712 + $0x2c0] sm:$0xf]
        %v8831 = vld [vmem:[%s8712 + $0x2c4] sm:$0xff]
        %v8832 = vld [vmem:[%s8712 + $0x2cc] sm:$0xf]
        %v8833 = vld [vmem:[%s8712 + $0x2d0] sm:$0xff]
        %v8834 = vld [vmem:[%s8712 + $0x2d8] sm:$0xf]
        %v8835 = vld [vmem:[%s8712 + $0x2dc] sm:$0xff]
        %v8836 = vld [vmem:[%s8712 + $0x2e4] sm:$0xf]
        %v8837 = vld [vmem:[%s8712 + $0x2e8] sm:$0xff]
        %v8838 = vld [vmem:[%s8712 + $0x2f0] sm:$0xf]
        %v8839 = vld [vmem:[%s8712 + $0x2f4] sm:$0xff]
        %v8840 = vld [vmem:[%s8712 + $0x2fc] sm:$0xf]
        %v8841 = vld [vmem:[%s8712 + $0x300] sm:$0xff]
        %v8842 = vld [vmem:[%s8712 + $0x308] sm:$0xf]
        %v8843 = vld [vmem:[%s8712 + $0x30c] sm:$0xff]
        %v8844 = vld [vmem:[%s8712 + $0x314] sm:$0xf]
        %v8845 = vld [vmem:[%s8712 + $0x318] sm:$0xff]
        %v8846 = vld [vmem:[%s8712 + $0x320] sm:$0xf]
        %v8847 = vld [vmem:[%s8712 + $0x324] sm:$0xff]
        %v8848 = vld [vmem:[%s8712 + $0x32c] sm:$0xf]
        %v8849 = vld [vmem:[%s8712 + $0x330] sm:$0xff]
        %v8850 = vld [vmem:[%s8712 + $0x338] sm:$0xf]
        %v8851 = vld [vmem:[%s8712 + $0x33c] sm:$0xff]
        %v8852 = vld [vmem:[%s8712 + $0x344] sm:$0xf]
        %v8853 = vld [vmem:[%s8712 + $0x348] sm:$0xff]
        %v8854 = vld [vmem:[%s8712 + $0x350] sm:$0xf]
        %v8855 = vld [vmem:[%s8712 + $0x354] sm:$0xff]
        %v8856 = vld [vmem:[%s8712 + $0x35c] sm:$0xf]
        %v8857 = vld [vmem:[%s8712 + $0x360] sm:$0xff]
        %v8858 = vld [vmem:[%s8712 + $0x368] sm:$0xf]
        %v8859 = vld [vmem:[%s8712 + $0x36c] sm:$0xff]
        %v8860 = vld [vmem:[%s8712 + $0x374] sm:$0xf]
        %v8861 = vld [vmem:[%s8712 + $0x378] sm:$0xff]
        %v8862 = vld [vmem:[%s8712 + $0x380] sm:$0xf]
        %v8863 = vld [vmem:[%s8712 + $0x384] sm:$0xff]
        %v8864 = vld [vmem:[%s8712 + $0x38c] sm:$0xf]
        %v8865 = vld [vmem:[%s8712 + $0x390] sm:$0xff]
        %v8866 = vld [vmem:[%s8712 + $0x398] sm:$0xf]
        %v8867 = vld [vmem:[%s8712 + $0x39c] sm:$0xff]
        %v8868 = vld [vmem:[%s8712 + $0x3a4] sm:$0xf]
        %v8869 = vld [vmem:[%s8712 + $0x3a8] sm:$0xff]
        %v8870 = vld [vmem:[%s8712 + $0x3b0] sm:$0xf]
        %v8871 = vld [vmem:[%s8712 + $0x3b4] sm:$0xff]
        %v8872 = vld [vmem:[%s8712 + $0x3bc] sm:$0xf]
        %v8873 = vpack.c.b16 %v8707, %v5854
        %v8874 = vpack.c.b16 %v8708, %v5855
        %v8875 = vpack.c.b16 %v8709, %v5856
        %v8876 = vpack.c.b16 %v8710, %v5857
        %v8877 = vpack.c.b16 %v8711, %v5858
        %v9043 = vunpack.c.l.b16 %v8713
        %v9044 = vunpack.c.h.b16 %v8713
        %v9045 = vunpack.c.l.b16 %v8714
        %v9046 = vunpack.c.l.b16 %v8715
        %v9047 = vunpack.c.h.b16 %v8715
        %v9048 = vunpack.c.l.b16 %v8716
        %v9049 = vunpack.c.l.b16 %v8717
        %v9050 = vunpack.c.h.b16 %v8717
        %v9051 = vunpack.c.l.b16 %v8718
        %v9052 = vunpack.c.l.b16 %v8719
        %v9053 = vunpack.c.h.b16 %v8719
        %v9054 = vunpack.c.l.b16 %v8720
        %v9055 = vunpack.c.l.b16 %v8721
        %v9056 = vunpack.c.h.b16 %v8721
        %v9057 = vunpack.c.l.b16 %v8722
        %v9058 = vunpack.c.l.b16 %v8723
        %v9059 = vunpack.c.h.b16 %v8723
        %v9060 = vunpack.c.l.b16 %v8724
        %v9061 = vunpack.c.l.b16 %v8725
        %v9062 = vunpack.c.h.b16 %v8725
        %v9063 = vunpack.c.l.b16 %v8726
        %v9064 = vunpack.c.l.b16 %v8727
        %v9065 = vunpack.c.h.b16 %v8727
        %v9066 = vunpack.c.l.b16 %v8728
        %v9067 = vunpack.c.l.b16 %v8729
        %v9068 = vunpack.c.h.b16 %v8729
        %v9069 = vunpack.c.l.b16 %v8730
        %v9070 = vunpack.c.l.b16 %v8731
        %v9071 = vunpack.c.h.b16 %v8731
        %v9072 = vunpack.c.l.b16 %v8732
        %v9073 = vunpack.c.l.b16 %v8733
        %v9074 = vunpack.c.h.b16 %v8733
        %v9075 = vunpack.c.l.b16 %v8734
        %v9076 = vunpack.c.l.b16 %v8735
        %v9077 = vunpack.c.h.b16 %v8735
        %v9078 = vunpack.c.l.b16 %v8736
        %v9079 = vunpack.c.l.b16 %v8737
        %v9080 = vunpack.c.h.b16 %v8737
        %v9081 = vunpack.c.l.b16 %v8738
        %v9082 = vunpack.c.l.b16 %v8739
        %v9083 = vunpack.c.h.b16 %v8739
        %v9084 = vunpack.c.l.b16 %v8740
        %v9085 = vunpack.c.l.b16 %v8741
        %v9086 = vunpack.c.h.b16 %v8741
        %v9087 = vunpack.c.l.b16 %v8742
        %v9088 = vunpack.c.l.b16 %v8743
        %v9089 = vunpack.c.h.b16 %v8743
        %v9090 = vunpack.c.l.b16 %v8744
        %v9091 = vunpack.c.l.b16 %v8745
        %v9092 = vunpack.c.h.b16 %v8745
        %v9093 = vunpack.c.l.b16 %v8746
        %v9094 = vunpack.c.l.b16 %v8747
        %v9095 = vunpack.c.h.b16 %v8747
        %v9096 = vunpack.c.l.b16 %v8748
        %v9097 = vunpack.c.l.b16 %v8749
        %v9098 = vunpack.c.h.b16 %v8749
        %v9099 = vunpack.c.l.b16 %v8750
        %v9100 = vunpack.c.l.b16 %v8751
        %v9101 = vunpack.c.h.b16 %v8751
        %v9102 = vunpack.c.l.b16 %v8752
        %v9103 = vunpack.c.l.b16 %v8753
        %v9104 = vunpack.c.h.b16 %v8753
        %v9105 = vunpack.c.l.b16 %v8754
        %v9106 = vunpack.c.l.b16 %v8755
        %v9107 = vunpack.c.h.b16 %v8755
        %v9108 = vunpack.c.l.b16 %v8756
        %v9109 = vunpack.c.l.b16 %v8757
        %v9110 = vunpack.c.h.b16 %v8757
        %v9111 = vunpack.c.l.b16 %v8758
        %v9112 = vunpack.c.l.b16 %v8759
        %v9113 = vunpack.c.h.b16 %v8759
        %v9114 = vunpack.c.l.b16 %v8760
        %v9115 = vunpack.c.l.b16 %v8761
        %v9116 = vunpack.c.h.b16 %v8761
        %v9117 = vunpack.c.l.b16 %v8762
        %v9118 = vunpack.c.l.b16 %v8763
        %v9119 = vunpack.c.h.b16 %v8763
        %v9120 = vunpack.c.l.b16 %v8764
        %v9121 = vunpack.c.l.b16 %v8765
        %v9122 = vunpack.c.h.b16 %v8765
        %v9123 = vunpack.c.l.b16 %v8766
        %v9124 = vunpack.c.l.b16 %v8767
        %v9125 = vunpack.c.h.b16 %v8767
        %v9126 = vunpack.c.l.b16 %v8768
        %v9127 = vunpack.c.l.b16 %v8769
        %v9128 = vunpack.c.h.b16 %v8769
        %v9129 = vunpack.c.l.b16 %v8770
        %v9130 = vunpack.c.l.b16 %v8771
        %v9131 = vunpack.c.h.b16 %v8771
        %v9132 = vunpack.c.l.b16 %v8772
        %v9133 = vunpack.c.l.b16 %v8773
        %v9134 = vunpack.c.h.b16 %v8773
        %v9135 = vunpack.c.l.b16 %v8774
        %v9136 = vunpack.c.l.b16 %v8775
        %v9137 = vunpack.c.h.b16 %v8775
        %v9138 = vunpack.c.l.b16 %v8776
        %v9139 = vunpack.c.l.b16 %v8777
        %v9140 = vunpack.c.h.b16 %v8777
        %v9141 = vunpack.c.l.b16 %v8778
        %v9142 = vunpack.c.l.b16 %v8779
        %v9143 = vunpack.c.h.b16 %v8779
        %v9144 = vunpack.c.l.b16 %v8780
        %v9145 = vunpack.c.l.b16 %v8781
        %v9146 = vunpack.c.h.b16 %v8781
        %v9147 = vunpack.c.l.b16 %v8782
        %v9148 = vunpack.c.l.b16 %v8783
        %v9149 = vunpack.c.h.b16 %v8783
        %v9150 = vunpack.c.l.b16 %v8784
        %v9151 = vunpack.c.l.b16 %v8785
        %v9152 = vunpack.c.h.b16 %v8785
        %v9153 = vunpack.c.l.b16 %v8786
        %v9154 = vunpack.c.l.b16 %v8787
        %v9155 = vunpack.c.h.b16 %v8787
        %v9156 = vunpack.c.l.b16 %v8788
        %v9157 = vunpack.c.l.b16 %v8789
        %v9158 = vunpack.c.h.b16 %v8789
        %v9159 = vunpack.c.l.b16 %v8790
        %v9160 = vunpack.c.l.b16 %v8791
        %v9161 = vunpack.c.h.b16 %v8791
        %v9162 = vunpack.c.l.b16 %v8792
        %v9163 = vunpack.c.l.b16 %v8793
        %v9164 = vunpack.c.h.b16 %v8793
        %v9165 = vunpack.c.l.b16 %v8794
        %v9166 = vunpack.c.l.b16 %v8795
        %v9167 = vunpack.c.h.b16 %v8795
        %v9168 = vunpack.c.l.b16 %v8796
        %v9169 = vunpack.c.l.b16 %v8797
        %v9170 = vunpack.c.h.b16 %v8797
        %v9171 = vunpack.c.l.b16 %v8798
        %v9172 = vunpack.c.l.b16 %v8799
        %v9173 = vunpack.c.h.b16 %v8799
        %v9174 = vunpack.c.l.b16 %v8800
        %v9175 = vunpack.c.l.b16 %v8801
        %v9176 = vunpack.c.h.b16 %v8801
        %v9177 = vunpack.c.l.b16 %v8802
        %v9178 = vunpack.c.l.b16 %v8803
        %v9179 = vunpack.c.h.b16 %v8803
        %v9180 = vunpack.c.l.b16 %v8804
        %v9181 = vunpack.c.l.b16 %v8805
        %v9182 = vunpack.c.h.b16 %v8805
        %v9183 = vunpack.c.l.b16 %v8806
        %v9184 = vunpack.c.l.b16 %v8807
        %v9185 = vunpack.c.h.b16 %v8807
        %v9186 = vunpack.c.l.b16 %v8808
        %v9187 = vunpack.c.l.b16 %v8809
        %v9188 = vunpack.c.h.b16 %v8809
        %v9189 = vunpack.c.l.b16 %v8810
        %v9190 = vunpack.c.l.b16 %v8811
        %v9191 = vunpack.c.h.b16 %v8811
        %v9192 = vunpack.c.l.b16 %v8812
        %v9193 = vunpack.c.l.b16 %v8813
        %v9194 = vunpack.c.h.b16 %v8813
        %v9195 = vunpack.c.l.b16 %v8814
        %v9196 = vunpack.c.l.b16 %v8815
        %v9197 = vunpack.c.h.b16 %v8815
        %v9198 = vunpack.c.l.b16 %v8816
        %v9199 = vunpack.c.l.b16 %v8817
        %v9200 = vunpack.c.h.b16 %v8817
        %v9201 = vunpack.c.l.b16 %v8818
        %v9202 = vunpack.c.l.b16 %v8819
        %v9203 = vunpack.c.h.b16 %v8819
        %v9204 = vunpack.c.l.b16 %v8820
        %v9205 = vunpack.c.l.b16 %v8821
        %v9206 = vunpack.c.h.b16 %v8821
        %v9207 = vunpack.c.l.b16 %v8822
        %v9208 = vunpack.c.l.b16 %v8823
        %v9209 = vunpack.c.h.b16 %v8823
        %v9210 = vunpack.c.l.b16 %v8824
        %v9211 = vunpack.c.l.b16 %v8825
        %v9212 = vunpack.c.h.b16 %v8825
        %v9213 = vunpack.c.l.b16 %v8826
        %v9214 = vunpack.c.l.b16 %v8827
        %v9215 = vunpack.c.h.b16 %v8827
        %v9216 = vunpack.c.l.b16 %v8828
        %v9217 = vunpack.c.l.b16 %v8829
        %v9218 = vunpack.c.h.b16 %v8829
        %v9219 = vunpack.c.l.b16 %v8830
        %v9220 = vunpack.c.l.b16 %v8831
        %v9221 = vunpack.c.h.b16 %v8831
        %v9222 = vunpack.c.l.b16 %v8832
        %v9223 = vunpack.c.l.b16 %v8833
        %v9224 = vunpack.c.h.b16 %v8833
        %v9225 = vunpack.c.l.b16 %v8834
        %v9226 = vunpack.c.l.b16 %v8835
        %v9227 = vunpack.c.h.b16 %v8835
        %v9228 = vunpack.c.l.b16 %v8836
        %v9229 = vunpack.c.l.b16 %v8837
        %v9230 = vunpack.c.h.b16 %v8837
        %v9231 = vunpack.c.l.b16 %v8838
        %v9232 = vunpack.c.l.b16 %v8839
        %v9233 = vunpack.c.h.b16 %v8839
        %v9234 = vunpack.c.l.b16 %v8840
        %v9235 = vunpack.c.l.b16 %v8841
        %v9236 = vunpack.c.h.b16 %v8841
        %v9237 = vunpack.c.l.b16 %v8842
        %v9238 = vunpack.c.l.b16 %v8843
        %v9239 = vunpack.c.h.b16 %v8843
        %v9240 = vunpack.c.l.b16 %v8844
        %v9241 = vunpack.c.l.b16 %v8845
        %v9242 = vunpack.c.h.b16 %v8845
        %v9243 = vunpack.c.l.b16 %v8846
        %v9244 = vunpack.c.l.b16 %v8847
        %v9245 = vunpack.c.h.b16 %v8847
        %v9246 = vunpack.c.l.b16 %v8848
        %v9247 = vunpack.c.l.b16 %v8849
        %v9248 = vunpack.c.h.b16 %v8849
        %v9249 = vunpack.c.l.b16 %v8850
        %v9250 = vunpack.c.l.b16 %v8851
        %v9251 = vunpack.c.h.b16 %v8851
        %v9252 = vunpack.c.l.b16 %v8852
        %v9253 = vunpack.c.l.b16 %v8853
        %v9254 = vunpack.c.h.b16 %v8853
        %v9255 = vunpack.c.l.b16 %v8854
        %v9256 = vunpack.c.l.b16 %v8855
        %v9257 = vunpack.c.h.b16 %v8855
        %v9258 = vunpack.c.l.b16 %v8856
        %v9259 = vunpack.c.l.b16 %v8857
        %v9260 = vunpack.c.h.b16 %v8857
        %v9261 = vunpack.c.l.b16 %v8858
        %v9262 = vunpack.c.l.b16 %v8859
        %v9263 = vunpack.c.h.b16 %v8859
        %v9264 = vunpack.c.l.b16 %v8860
        %v9265 = vunpack.c.l.b16 %v8861
        %v9266 = vunpack.c.h.b16 %v8861
        %v9267 = vunpack.c.l.b16 %v8862
        %v9268 = vunpack.c.l.b16 %v8863
        %v9269 = vunpack.c.h.b16 %v8863
        %v9270 = vunpack.c.l.b16 %v8864
        %v9271 = vunpack.c.l.b16 %v8865
        %v9272 = vunpack.c.h.b16 %v8865
        %v9273 = vunpack.c.l.b16 %v8866
        %v9274 = vunpack.c.l.b16 %v8867
        %v9275 = vunpack.c.h.b16 %v8867
        %v9276 = vunpack.c.l.b16 %v8868
        %v9277 = vunpack.c.l.b16 %v8869
        %v9278 = vunpack.c.h.b16 %v8869
        %v9279 = vunpack.c.l.b16 %v8870
        %v9280 = vunpack.c.l.b16 %v8871
        %v9281 = vunpack.c.h.b16 %v8871
        %v9282 = vunpack.c.l.b16 %v8872
        %v9283 = vpack.c.b16 %v9046, %v9043
        %v9284 = vpack.c.b16 %v9047, %v9044
        %v9285 = vpack.c.b16 %v9048, %v9045
        %v9286 = vpack.c.b16 %v9052, %v9049
        %v9287 = vpack.c.b16 %v9053, %v9050
        %v9288 = vpack.c.b16 %v9054, %v9051
        %v9289 = vpack.c.b16 %v9058, %v9055
        %v9290 = vpack.c.b16 %v9059, %v9056
        %v9291 = vpack.c.b16 %v9060, %v9057
        %v9292 = vpack.c.b16 %v9064, %v9061
        %v9293 = vpack.c.b16 %v9065, %v9062
        %v9294 = vpack.c.b16 %v9066, %v9063
        %v9295 = vpack.c.b16 %v9070, %v9067
        %v9296 = vpack.c.b16 %v9071, %v9068
        %v9297 = vpack.c.b16 %v9072, %v9069
        %v9298 = vpack.c.b16 %v9076, %v9073
        %v9299 = vpack.c.b16 %v9077, %v9074
        %v9300 = vpack.c.b16 %v9078, %v9075
        %v9301 = vpack.c.b16 %v9082, %v9079
        %v9302 = vpack.c.b16 %v9083, %v9080
        %v9303 = vpack.c.b16 %v9084, %v9081
        %v9304 = vpack.c.b16 %v9088, %v9085
        %v9305 = vpack.c.b16 %v9089, %v9086
        %v9306 = vpack.c.b16 %v9090, %v9087
        %v9307 = vpack.c.b16 %v9094, %v9091
        %v9308 = vpack.c.b16 %v9095, %v9092
        %v9309 = vpack.c.b16 %v9096, %v9093
        %v9310 = vpack.c.b16 %v9100, %v9097
        %v9311 = vpack.c.b16 %v9101, %v9098
        %v9312 = vpack.c.b16 %v9102, %v9099
        %v9313 = vpack.c.b16 %v9106, %v9103
        %v9314 = vpack.c.b16 %v9107, %v9104
        %v9315 = vpack.c.b16 %v9108, %v9105
        %v9316 = vpack.c.b16 %v9112, %v9109
        %v9317 = vpack.c.b16 %v9113, %v9110
        %v9318 = vpack.c.b16 %v9114, %v9111
        %v9319 = vpack.c.b16 %v9118, %v9115
        %v9320 = vpack.c.b16 %v9119, %v9116
        %v9321 = vpack.c.b16 %v9120, %v9117
        %v9322 = vpack.c.b16 %v9124, %v9121
        %v9323 = vpack.c.b16 %v9125, %v9122
        %v9324 = vpack.c.b16 %v9126, %v9123
        %v9325 = vpack.c.b16 %v9130, %v9127
        %v9326 = vpack.c.b16 %v9131, %v9128
        %v9327 = vpack.c.b16 %v9132, %v9129
        %v9328 = vpack.c.b16 %v9136, %v9133
        %v9329 = vpack.c.b16 %v9137, %v9134
        %v9330 = vpack.c.b16 %v9138, %v9135
        %v9331 = vpack.c.b16 %v9142, %v9139
        %v9332 = vpack.c.b16 %v9143, %v9140
        %v9333 = vpack.c.b16 %v9144, %v9141
        %v9334 = vpack.c.b16 %v9148, %v9145
        %v9335 = vpack.c.b16 %v9149, %v9146
        %v9336 = vpack.c.b16 %v9150, %v9147
        %v9337 = vpack.c.b16 %v9154, %v9151
        %v9338 = vpack.c.b16 %v9155, %v9152
        %v9339 = vpack.c.b16 %v9156, %v9153
        %v9340 = vpack.c.b16 %v9160, %v9157
        %v9341 = vpack.c.b16 %v9161, %v9158
        %v9342 = vpack.c.b16 %v9162, %v9159
        %v9343 = vpack.c.b16 %v9166, %v9163
        %v9344 = vpack.c.b16 %v9167, %v9164
        %v9345 = vpack.c.b16 %v9168, %v9165
        %v9346 = vpack.c.b16 %v9172, %v9169
        %v9347 = vpack.c.b16 %v9173, %v9170
        %v9348 = vpack.c.b16 %v9174, %v9171
        %v9349 = vpack.c.b16 %v9178, %v9175
        %v9350 = vpack.c.b16 %v9179, %v9176
        %v9351 = vpack.c.b16 %v9180, %v9177
        %v9352 = vpack.c.b16 %v9184, %v9181
        %v9353 = vpack.c.b16 %v9185, %v9182
        %v9354 = vpack.c.b16 %v9186, %v9183
        %v9355 = vpack.c.b16 %v9190, %v9187
        %v9356 = vpack.c.b16 %v9191, %v9188
        %v9357 = vpack.c.b16 %v9192, %v9189
        %v9358 = vpack.c.b16 %v9196, %v9193
        %v9359 = vpack.c.b16 %v9197, %v9194
        %v9360 = vpack.c.b16 %v9198, %v9195
        %v9361 = vpack.c.b16 %v9202, %v9199
        %v9362 = vpack.c.b16 %v9203, %v9200
        %v9363 = vpack.c.b16 %v9204, %v9201
        %v9364 = vpack.c.b16 %v9208, %v9205
        %v9365 = vpack.c.b16 %v9209, %v9206
        %v9366 = vpack.c.b16 %v9210, %v9207
        %v9367 = vpack.c.b16 %v9214, %v9211
        %v9368 = vpack.c.b16 %v9215, %v9212
        %v9369 = vpack.c.b16 %v9216, %v9213
        %v9370 = vpack.c.b16 %v9220, %v9217
        %v9371 = vpack.c.b16 %v9221, %v9218
        %v9372 = vpack.c.b16 %v9222, %v9219
        %v9373 = vpack.c.b16 %v9226, %v9223
        %v9374 = vpack.c.b16 %v9227, %v9224
        %v9375 = vpack.c.b16 %v9228, %v9225
        %v9376 = vpack.c.b16 %v9232, %v9229
        %v9377 = vpack.c.b16 %v9233, %v9230
        %v9378 = vpack.c.b16 %v9234, %v9231
        %v9379 = vpack.c.b16 %v9238, %v9235
        %v9380 = vpack.c.b16 %v9239, %v9236
        %v9381 = vpack.c.b16 %v9240, %v9237
        %v9382 = vpack.c.b16 %v9244, %v9241
        %v9383 = vpack.c.b16 %v9245, %v9242
        %v9384 = vpack.c.b16 %v9246, %v9243
        %v9385 = vpack.c.b16 %v9250, %v9247
        %v9386 = vpack.c.b16 %v9251, %v9248
        %v9387 = vpack.c.b16 %v9252, %v9249
        %v9388 = vpack.c.b16 %v9256, %v9253
        %v9389 = vpack.c.b16 %v9257, %v9254
        %v9390 = vpack.c.b16 %v9258, %v9255
        %v9391 = vpack.c.b16 %v9262, %v9259
        %v9392 = vpack.c.b16 %v9263, %v9260
        %v9393 = vpack.c.b16 %v9264, %v9261
        %v9394 = vpack.c.b16 %v9268, %v9265
        %v9395 = vpack.c.b16 %v9269, %v9266
        %v9396 = vpack.c.b16 %v9270, %v9267
        %v9397 = vpack.c.b16 %v9274, %v9271
        %v9398 = vpack.c.b16 %v9275, %v9272
        %v9399 = vpack.c.b16 %v9276, %v9273
        %v9400 = vpack.c.b16 %v9280, %v9277
        %v9401 = vpack.c.b16 %v9281, %v9278
        %v9402 = vpack.c.b16 %v9282, %v9279
        %9523 = vmatprep.subr.bf16.mxu0 %v9305
        %9524 = vmatpush1.bf16.msra.mxu0 %v9304
        %9525 = vmatprep.subr.bf16.mxu0 %v9302
        %9526 = vmatpush1.bf16.msra.mxu0 %v9301
        %9527 = vmatprep.subr.bf16.mxu0 %v9299
        %9528 = vmatpush1.bf16.msra.mxu0 %v9298
        %9529 = vmatprep.subr.bf16.mxu0 %v9296
        %9530 = vmatpush1.bf16.msra.mxu0 %v9295
        %9531 = vmatprep.subr.bf16.mxu0 %v9293
        %9532 = vmatpush1.bf16.msra.mxu0 %v9292
        %9533 = vmatprep.subr.bf16.mxu0 %v9290
        %9534 = vmatpush1.bf16.msra.mxu0 %v9289
        %9535 = vmatprep.subr.bf16.mxu0 %v9287
        %9536 = vmatpush1.bf16.msra.mxu0 %v9286
        %9537 = vmatprep.subr.bf16.mxu0 %v9284
        %9538 = vmatpush1.bf16.msra.mxu0 %v9283
        %9539 = vmatprep.subr.bf16.mxu0 %v9329
        %9540 = vmatpush2.bf16.msra.mxu0 %v9328
        %9541 = vmatprep.subr.bf16.mxu0 %v9326
        %9542 = vmatpush2.bf16.msra.mxu0 %v9325
        %9543 = vmatprep.subr.bf16.mxu0 %v9323
        %9544 = vmatpush2.bf16.msra.mxu0 %v9322
        %9545 = vmatprep.subr.bf16.mxu0 %v9320
        %9546 = vmatpush2.bf16.msra.mxu0 %v9319
        %9547 = vmatprep.subr.bf16.mxu0 %v9317
        %9548 = vmatpush2.bf16.msra.mxu0 %v9316
        %9549 = vmatprep.subr.bf16.mxu0 %v9314
        %9550 = vmatpush2.bf16.msra.mxu0 %v9313
        %9551 = vmatprep.subr.bf16.mxu0 %v9311
        %9552 = vmatpush2.bf16.msra.mxu0 %v9310
        %9553 = vmatprep.subr.bf16.mxu0 %v9308
        %9554 = vmatpush2.bf16.msra.mxu0 %v9307
        %9555 = vmatprep.mubr.bf16.mxu0 %v7367
        %9556 = vmatmul.mubr.bf16.gmra.mxu0 %v7366
        %v9557 = vpop.f32.mrf.mxu0
        %v9558 = vadd.f32 0.0, %v9557
        %v9559 = vpop.f32.mrf.mxu0
        %v9560 = vadd.f32 0.0, %v9559
        %v9561 = vpop.f32.mrf.mxu0
        %v9562 = vadd.f32 0.0, %v9561
        %v9563 = vpop.f32.mrf.mxu0
        %v9564 = vadd.f32 0.0, %v9563
        %9565 = vmatprep.mubr.bf16.mxu0 %v7372
        %9566 = vmatmul.mubr.bf16.gmra.mxu0 %v7371
        %v9567 = vpop.f32.mrf.mxu0
        %v9568 = vadd.f32 0.0, %v9567
        %v9569 = vpop.f32.mrf.mxu0
        %v9570 = vadd.f32 0.0, %v9569
        %v9571 = vpop.f32.mrf.mxu0
        %v9572 = vadd.f32 0.0, %v9571
        %v9573 = vpop.f32.mrf.mxu0
        %v9574 = vadd.f32 0.0, %v9573
        %9575 = vmatprep.mubr.bf16.mxu0 %v7377
        %9576 = vmatmul.mubr.bf16.gmra.mxu0 %v7376
        %v9577 = vpop.f32.mrf.mxu0
        %v9578 = vadd.f32 0.0, %v9577
        %v9579 = vpop.f32.mrf.mxu0
        %v9580 = vadd.f32 0.0, %v9579
        %v9581 = vpop.f32.mrf.mxu0
        %v9582 = vadd.f32 0.0, %v9581
        %v9583 = vpop.f32.mrf.mxu0
        %v9584 = vadd.f32 0.0, %v9583
        %9585 = vmatprep.mubr.bf16.mxu0 %v7382
        %9586 = vmatmul.mubr.bf16.gmra.mxu0 %v7381
        %v9587 = vpop.f32.mrf.mxu0
        %v9588 = vadd.f32 0.0, %v9587
        %v9589 = vpop.f32.mrf.mxu0
        %v9590 = vadd.f32 0.0, %v9589
        %v9591 = vpop.f32.mrf.mxu0
        %v9592 = vadd.f32 0.0, %v9591
        %v9593 = vpop.f32.mrf.mxu0
        %v9594 = vadd.f32 0.0, %v9593
        %9595 = vmatprep.mubr.bf16.mxu0 %v7387
        %9596 = vmatmul.mubr.bf16.gmra.mxu0 %v7386
        %v9597 = vpop.f32.mrf.mxu0
        %v9598 = vadd.f32 0.0, %v9597
        %v9599 = vpop.f32.mrf.mxu0
        %v9600 = vadd.f32 0.0, %v9599
        %v9601 = vpop.f32.mrf.mxu0
        %v9602 = vadd.f32 0.0, %v9601
        %v9603 = vpop.f32.mrf.mxu0
        %v9604 = vadd.f32 0.0, %v9603
        %9605 = vmatprep.mubr.bf16.mxu0 %v7392
        %9606 = vmatmul.mubr.bf16.gmra.mxu0 %v7391
        %v9607 = vpop.f32.mrf.mxu0
        %v9608 = vadd.f32 0.0, %v9607
        %v9609 = vpop.f32.mrf.mxu0
        %v9610 = vadd.f32 0.0, %v9609
        %v9611 = vpop.f32.mrf.mxu0
        %v9612 = vadd.f32 0.0, %v9611
        %v9613 = vpop.f32.mrf.mxu0
        %v9614 = vadd.f32 0.0, %v9613
        %9615 = vmatprep.mubr.bf16.mxu0 %v7397
        %9616 = vmatmul.mubr.bf16.gmra.mxu0 %v7396
        %v9617 = vpop.f32.mrf.mxu0
        %v9618 = vadd.f32 0.0, %v9617
        %v9619 = vpop.f32.mrf.mxu0
        %v9620 = vadd.f32 0.0, %v9619
        %v9621 = vpop.f32.mrf.mxu0
        %v9622 = vadd.f32 0.0, %v9621
        %v9623 = vpop.f32.mrf.mxu0
        %v9624 = vadd.f32 0.0, %v9623
        %9625 = vmatprep.mubr.bf16.mxu0 %v8874
        %9626 = vmatmul.mubr.bf16.gmra.mxu0 %v8873
        %v9627 = vpop.f32.mrf.mxu0
        %v9628 = vadd.f32 0.0, %v9627
        %v9629 = vpop.f32.mrf.mxu0
        %v9630 = vadd.f32 0.0, %v9629
        %v9631 = vpop.f32.mrf.mxu0
        %v9632 = vpop.f32.mrf.mxu0
        %9633 = vdwg.mxu0
        %9634 = vmatprep.subr.bf16.mxu0 %v9353
        %9635 = vmatpush1.bf16.msra.mxu0 %v9352
        %9636 = vmatprep.subr.bf16.mxu0 %v9350
        %9637 = vmatpush1.bf16.msra.mxu0 %v9349
        %9638 = vmatprep.subr.bf16.mxu0 %v9347
        %9639 = vmatpush1.bf16.msra.mxu0 %v9346
        %9640 = vmatprep.subr.bf16.mxu0 %v9344
        %9641 = vmatpush1.bf16.msra.mxu0 %v9343
        %9642 = vmatprep.subr.bf16.mxu0 %v9341
        %9643 = vmatpush1.bf16.msra.mxu0 %v9340
        %9644 = vmatprep.subr.bf16.mxu0 %v9338
        %9645 = vmatpush1.bf16.msra.mxu0 %v9337
        %9646 = vmatprep.subr.bf16.mxu0 %v9335
        %9647 = vmatpush1.bf16.msra.mxu0 %v9334
        %9648 = vmatprep.subr.bf16.mxu0 %v9332
        %9649 = vmatpush1.bf16.msra.mxu0 %v9331
        %9650 = vmatprep.subr.bf16.mxu0 %v9377
        %9651 = vmatpush2.bf16.msra.mxu0 %v9376
        %9652 = vmatprep.subr.bf16.mxu0 %v9374
        %9653 = vmatpush2.bf16.msra.mxu0 %v9373
        %9654 = vmatprep.subr.bf16.mxu0 %v9371
        %9655 = vmatpush2.bf16.msra.mxu0 %v9370
        %9656 = vmatprep.subr.bf16.mxu0 %v9368
        %9657 = vmatpush2.bf16.msra.mxu0 %v9367
        %9658 = vmatprep.subr.bf16.mxu0 %v9365
        %9659 = vmatpush2.bf16.msra.mxu0 %v9364
        %9660 = vmatprep.subr.bf16.mxu0 %v9362
        %9661 = vmatpush2.bf16.msra.mxu0 %v9361
        %9662 = vmatprep.subr.bf16.mxu0 %v9359
        %9663 = vmatpush2.bf16.msra.mxu0 %v9358
        %9664 = vmatprep.subr.bf16.mxu0 %v9356
        %9665 = vmatpush2.bf16.msra.mxu0 %v9355
        %9666 = vmatprep.mubr.bf16.mxu0 %v7369
        %9667 = vmatmul.mubr.bf16.gmra.mxu0 %v7368
        %v9668 = vpop.f32.mrf.mxu0
        %v9669 = vadd.f32 %v9558, %v9668
        %v9670 = vpop.f32.mrf.mxu0
        %v9671 = vadd.f32 %v9560, %v9670
        %v9672 = vpop.f32.mrf.mxu0
        %v9673 = vadd.f32 %v9562, %v9672
        %v9674 = vpop.f32.mrf.mxu0
        %v9675 = vadd.f32 %v9564, %v9674
        %9676 = vmatprep.mubr.bf16.mxu0 %v7374
        %9677 = vmatmul.mubr.bf16.gmra.mxu0 %v7373
        %v9678 = vpop.f32.mrf.mxu0
        %v9679 = vadd.f32 %v9568, %v9678
        %v9680 = vpop.f32.mrf.mxu0
        %v9681 = vadd.f32 %v9570, %v9680
        %v9682 = vpop.f32.mrf.mxu0
        %v9683 = vadd.f32 %v9572, %v9682
        %v9684 = vpop.f32.mrf.mxu0
        %v9685 = vadd.f32 %v9574, %v9684
        %9686 = vmatprep.mubr.bf16.mxu0 %v7379
        %9687 = vmatmul.mubr.bf16.gmra.mxu0 %v7378
        %v9688 = vpop.f32.mrf.mxu0
        %v9689 = vadd.f32 %v9578, %v9688
        %v9690 = vpop.f32.mrf.mxu0
        %v9691 = vadd.f32 %v9580, %v9690
        %v9692 = vpop.f32.mrf.mxu0
        %v9693 = vadd.f32 %v9582, %v9692
        %v9694 = vpop.f32.mrf.mxu0
        %v9695 = vadd.f32 %v9584, %v9694
        %9696 = vmatprep.mubr.bf16.mxu0 %v7384
        %9697 = vmatmul.mubr.bf16.gmra.mxu0 %v7383
        %v9698 = vpop.f32.mrf.mxu0
        %v9699 = vadd.f32 %v9588, %v9698
        %v9700 = vpop.f32.mrf.mxu0
        %v9701 = vadd.f32 %v9590, %v9700
        %v9702 = vpop.f32.mrf.mxu0
        %v9703 = vadd.f32 %v9592, %v9702
        %v9704 = vpop.f32.mrf.mxu0
        %v9705 = vadd.f32 %v9594, %v9704
        %9706 = vmatprep.mubr.bf16.mxu0 %v7389
        %9707 = vmatmul.mubr.bf16.gmra.mxu0 %v7388
        %v9708 = vpop.f32.mrf.mxu0
        %v9709 = vadd.f32 %v9598, %v9708
        %v9710 = vpop.f32.mrf.mxu0
        %v9711 = vadd.f32 %v9600, %v9710
        %v9712 = vpop.f32.mrf.mxu0
        %v9713 = vadd.f32 %v9602, %v9712
        %v9714 = vpop.f32.mrf.mxu0
        %v9715 = vadd.f32 %v9604, %v9714
        %9716 = vmatprep.mubr.bf16.mxu0 %v7394
        %9717 = vmatmul.mubr.bf16.gmra.mxu0 %v7393
        %v9718 = vpop.f32.mrf.mxu0
        %v9719 = vadd.f32 %v9608, %v9718
        %v9720 = vpop.f32.mrf.mxu0
        %v9721 = vadd.f32 %v9610, %v9720
        %v9722 = vpop.f32.mrf.mxu0
        %v9723 = vadd.f32 %v9612, %v9722
        %v9724 = vpop.f32.mrf.mxu0
        %v9725 = vadd.f32 %v9614, %v9724
        %9726 = vmatprep.mubr.bf16.mxu0 %v7399
        %9727 = vmatmul.mubr.bf16.gmra.mxu0 %v7398
        %v9728 = vpop.f32.mrf.mxu0
        %v9729 = vadd.f32 %v9618, %v9728
        %v9730 = vpop.f32.mrf.mxu0
        %v9731 = vadd.f32 %v9620, %v9730
        %v9732 = vpop.f32.mrf.mxu0
        %v9733 = vadd.f32 %v9622, %v9732
        %v9734 = vpop.f32.mrf.mxu0
        %v9735 = vadd.f32 %v9624, %v9734
        %9736 = vmatprep.mubr.bf16.mxu0 %v8876
        %9737 = vmatmul.mubr.bf16.gmra.mxu0 %v8875
        %v9738 = vpop.f32.mrf.mxu0
        %v9739 = vadd.f32 %v9628, %v9738
        %v9740 = vpop.f32.mrf.mxu0
        %v9741 = vadd.f32 %v9630, %v9740
        %v9742 = vpop.f32.mrf.mxu0
        %v9743 = vpop.f32.mrf.mxu0
        %9744 = vdwg.mxu0
        %9745 = vmatprep.subr.bf16.mxu0 %v9401
        %9746 = vmatpush1.bf16.msra.mxu0 %v9400
        %9747 = vmatprep.subr.bf16.mxu0 %v9398
        %9748 = vmatpush1.bf16.msra.mxu0 %v9397
        %9749 = vmatprep.subr.bf16.mxu0 %v9395
        %9750 = vmatpush1.bf16.msra.mxu0 %v9394
        %9751 = vmatprep.subr.bf16.mxu0 %v9392
        %9752 = vmatpush1.bf16.msra.mxu0 %v9391
        %9753 = vmatprep.subr.bf16.mxu0 %v9389
        %9754 = vmatpush1.bf16.msra.mxu0 %v9388
        %9755 = vmatprep.subr.bf16.mxu0 %v9386
        %9756 = vmatpush1.bf16.msra.mxu0 %v9385
        %9757 = vmatprep.subr.bf16.mxu0 %v9383
        %9758 = vmatpush1.bf16.msra.mxu0 %v9382
        %9759 = vmatprep.subr.bf16.mxu0 %v9380
        %9760 = vmatpush1.bf16.msra.mxu0 %v9379
        %9761 = vmatprep.subr.bf16.mxu0 0
        %9762 = vmatpush2.bf16.msra.mxu0 0
        %9763 = vmatprep.subr.bf16.mxu0 0
        %9764 = vmatpush2.bf16.msra.mxu0 0
        %9765 = vmatprep.subr.bf16.mxu0 0
        %9766 = vmatpush2.bf16.msra.mxu0 0
        %9767 = vmatprep.subr.bf16.mxu0 0
        %9768 = vmatpush2.bf16.msra.mxu0 0
        %9769 = vmatprep.subr.bf16.mxu0 0
        %9770 = vmatpush2.bf16.msra.mxu0 0
        %9771 = vmatprep.subr.bf16.mxu0 0
        %9772 = vmatpush2.bf16.msra.mxu0 0
        %9773 = vmatprep.subr.bf16.mxu0 0
        %9774 = vmatpush2.bf16.msra.mxu0 0
        %9775 = vmatprep.subr.bf16.mxu0 0
        %9776 = vmatpush2.bf16.msra.mxu0 0
        %9777 = vmatprep.mubr.bf16.mxu0 0
        %9778 = vmatmul.mubr.bf16.gmra.mxu0 %v7370
        %v9779 = vpop.f32.mrf.mxu0
        %v9780 = vadd.f32 %v9669, %v9779
        %v9781 = vpop.f32.mrf.mxu0
        %v9782 = vadd.f32 %v9671, %v9781
        %v9783 = vpop.f32.mrf.mxu0
        %v9784 = vadd.f32 %v9673, %v9783
        %v9785 = vpop.f32.mrf.mxu0
        %v9786 = vadd.f32 %v9675, %v9785
        %9787 = vmatprep.mubr.bf16.mxu0 0
        %9788 = vmatmul.mubr.bf16.gmra.mxu0 %v7375
        %v9789 = vpop.f32.mrf.mxu0
        %v9790 = vadd.f32 %v9679, %v9789
        %v9791 = vpop.f32.mrf.mxu0
        %v9792 = vadd.f32 %v9681, %v9791
        %v9793 = vpop.f32.mrf.mxu0
        %v9794 = vadd.f32 %v9683, %v9793
        %v9795 = vpop.f32.mrf.mxu0
        %v9796 = vadd.f32 %v9685, %v9795
        %9797 = vmatprep.mubr.bf16.mxu0 0
        %9798 = vmatmul.mubr.bf16.gmra.mxu0 %v7380
        %v9799 = vpop.f32.mrf.mxu0
        %v9800 = vadd.f32 %v9689, %v9799
        %v9801 = vpop.f32.mrf.mxu0
        %v9802 = vadd.f32 %v9691, %v9801
        %v9803 = vpop.f32.mrf.mxu0
        %v9804 = vadd.f32 %v9693, %v9803
        %v9805 = vpop.f32.mrf.mxu0
        %v9806 = vadd.f32 %v9695, %v9805
        %9807 = vmatprep.mubr.bf16.mxu0 0
        %9808 = vmatmul.mubr.bf16.gmra.mxu0 %v7385
        %v9809 = vpop.f32.mrf.mxu0
        %v9810 = vadd.f32 %v9699, %v9809
        %v9811 = vpop.f32.mrf.mxu0
        %v9812 = vadd.f32 %v9701, %v9811
        %v9813 = vpop.f32.mrf.mxu0
        %v9814 = vadd.f32 %v9703, %v9813
        %v9815 = vpop.f32.mrf.mxu0
        %v9816 = vadd.f32 %v9705, %v9815
        %9817 = vmatprep.mubr.bf16.mxu0 0
        %9818 = vmatmul.mubr.bf16.gmra.mxu0 %v7390
        %v9819 = vpop.f32.mrf.mxu0
        %v9820 = vadd.f32 %v9709, %v9819
        %v9821 = vpop.f32.mrf.mxu0
        %v9822 = vadd.f32 %v9711, %v9821
        %v9823 = vpop.f32.mrf.mxu0
        %v9824 = vadd.f32 %v9713, %v9823
        %v9825 = vpop.f32.mrf.mxu0
        %v9826 = vadd.f32 %v9715, %v9825
        %9827 = vmatprep.mubr.bf16.mxu0 0
        %9828 = vmatmul.mubr.bf16.gmra.mxu0 %v7395
        %v9829 = vpop.f32.mrf.mxu0
        %v9830 = vadd.f32 %v9719, %v9829
        %v9831 = vpop.f32.mrf.mxu0
        %v9832 = vadd.f32 %v9721, %v9831
        %v9833 = vpop.f32.mrf.mxu0
        %v9834 = vadd.f32 %v9723, %v9833
        %v9835 = vpop.f32.mrf.mxu0
        %v9836 = vadd.f32 %v9725, %v9835
        %9837 = vmatprep.mubr.bf16.mxu0 0
        %9838 = vmatmul.mubr.bf16.gmra.mxu0 %v7400
        %v9839 = vpop.f32.mrf.mxu0
        %v9840 = vadd.f32 %v9729, %v9839
        %v9841 = vpop.f32.mrf.mxu0
        %v9842 = vadd.f32 %v9731, %v9841
        %v9843 = vpop.f32.mrf.mxu0
        %v9844 = vadd.f32 %v9733, %v9843
        %v9845 = vpop.f32.mrf.mxu0
        %v9846 = vadd.f32 %v9735, %v9845
        %9847 = vmatprep.mubr.bf16.mxu0 0
        %9848 = vmatmul.mubr.bf16.gmra.mxu0 %v8877
        %v9849 = vpop.f32.mrf.mxu0
        %v9850 = vadd.f32 %v9739, %v9849
        %v9851 = vpop.f32.mrf.mxu0
        %v9852 = vadd.f32 %v9741, %v9851
        %v9853 = vpop.f32.mrf.mxu0
        %v9854 = vpop.f32.mrf.mxu0
        %9855 = vdwg.mxu0
        %9856 = vmatprep.subr.bf16.mxu0 0
        %9857 = vmatpush1.bf16.msra.mxu0 %v9306
        %9858 = vmatprep.subr.bf16.mxu0 0
        %9859 = vmatpush1.bf16.msra.mxu0 %v9303
        %9860 = vmatprep.subr.bf16.mxu0 0
        %9861 = vmatpush1.bf16.msra.mxu0 %v9300
        %9862 = vmatprep.subr.bf16.mxu0 0
        %9863 = vmatpush1.bf16.msra.mxu0 %v9297
        %9864 = vmatprep.subr.bf16.mxu0 0
        %9865 = vmatpush1.bf16.msra.mxu0 %v9294
        %9866 = vmatprep.subr.bf16.mxu0 0
        %9867 = vmatpush1.bf16.msra.mxu0 %v9291
        %9868 = vmatprep.subr.bf16.mxu0 0
        %9869 = vmatpush1.bf16.msra.mxu0 %v9288
        %9870 = vmatprep.subr.bf16.mxu0 0
        %9871 = vmatpush1.bf16.msra.mxu0 %v9285
        %9872 = vmatprep.subr.bf16.mxu0 0
        %9873 = vmatpush2.bf16.msra.mxu0 %v9330
        %9874 = vmatprep.subr.bf16.mxu0 0
        %9875 = vmatpush2.bf16.msra.mxu0 %v9327
        %9876 = vmatprep.subr.bf16.mxu0 0
        %9877 = vmatpush2.bf16.msra.mxu0 %v9324
        %9878 = vmatprep.subr.bf16.mxu0 0
        %9879 = vmatpush2.bf16.msra.mxu0 %v9321
        %9880 = vmatprep.subr.bf16.mxu0 0
        %9881 = vmatpush2.bf16.msra.mxu0 %v9318
        %9882 = vmatprep.subr.bf16.mxu0 0
        %9883 = vmatpush2.bf16.msra.mxu0 %v9315
        %9884 = vmatprep.subr.bf16.mxu0 0
        %9885 = vmatpush2.bf16.msra.mxu0 %v9312
        %9886 = vmatprep.subr.bf16.mxu0 0
        %9887 = vmatpush2.bf16.msra.mxu0 %v9309
        %9888 = vmatprep.mubr.bf16.mxu0 %v7367
        %9889 = vmatmul.mubr.bf16.gmra.mxu0 %v7366
        %v9890 = vpop.f32.mrf.mxu0
        %v9891 = vadd.f32 0.0, %v9890
        %v9892 = vpop.f32.mrf.mxu0
        %v9893 = vpop.f32.mrf.mxu0
        %v9894 = vadd.f32 0.0, %v9893
        %v9895 = vpop.f32.mrf.mxu0
        %9896 = vmatprep.mubr.bf16.mxu0 %v7372
        %9897 = vmatmul.mubr.bf16.gmra.mxu0 %v7371
        %v9898 = vpop.f32.mrf.mxu0
        %v9899 = vadd.f32 0.0, %v9898
        %v9900 = vpop.f32.mrf.mxu0
        %v9901 = vpop.f32.mrf.mxu0
        %v9902 = vadd.f32 0.0, %v9901
        %v9903 = vpop.f32.mrf.mxu0
        %9904 = vmatprep.mubr.bf16.mxu0 %v7377
        %9905 = vmatmul.mubr.bf16.gmra.mxu0 %v7376
        %v9906 = vpop.f32.mrf.mxu0
        %v9907 = vadd.f32 0.0, %v9906
        %v9908 = vpop.f32.mrf.mxu0
        %v9909 = vpop.f32.mrf.mxu0
        %v9910 = vadd.f32 0.0, %v9909
        %v9911 = vpop.f32.mrf.mxu0
        %9912 = vmatprep.mubr.bf16.mxu0 %v7382
        %9913 = vmatmul.mubr.bf16.gmra.mxu0 %v7381
        %v9914 = vpop.f32.mrf.mxu0
        %v9915 = vadd.f32 0.0, %v9914
        %v9916 = vpop.f32.mrf.mxu0
        %v9917 = vpop.f32.mrf.mxu0
        %v9918 = vadd.f32 0.0, %v9917
        %v9919 = vpop.f32.mrf.mxu0
        %9920 = vmatprep.mubr.bf16.mxu0 %v7387
        %9921 = vmatmul.mubr.bf16.gmra.mxu0 %v7386
        %v9922 = vpop.f32.mrf.mxu0
        %v9923 = vadd.f32 0.0, %v9922
        %v9924 = vpop.f32.mrf.mxu0
        %v9925 = vpop.f32.mrf.mxu0
        %v9926 = vadd.f32 0.0, %v9925
        %v9927 = vpop.f32.mrf.mxu0
        %9928 = vmatprep.mubr.bf16.mxu0 %v7392
        %9929 = vmatmul.mubr.bf16.gmra.mxu0 %v7391
        %v9930 = vpop.f32.mrf.mxu0
        %v9931 = vadd.f32 0.0, %v9930
        %v9932 = vpop.f32.mrf.mxu0
        %v9933 = vpop.f32.mrf.mxu0
        %v9934 = vadd.f32 0.0, %v9933
        %v9935 = vpop.f32.mrf.mxu0
        %9936 = vmatprep.mubr.bf16.mxu0 %v7397
        %9937 = vmatmul.mubr.bf16.gmra.mxu0 %v7396
        %v9938 = vpop.f32.mrf.mxu0
        %v9939 = vadd.f32 0.0, %v9938
        %v9940 = vpop.f32.mrf.mxu0
        %v9941 = vpop.f32.mrf.mxu0
        %v9942 = vadd.f32 0.0, %v9941
        %v9943 = vpop.f32.mrf.mxu0
        %9944 = vmatprep.mubr.bf16.mxu0 %v8874
        %9945 = vmatmul.mubr.bf16.gmra.mxu0 %v8873
        %v9946 = vpop.f32.mrf.mxu0
        %v9947 = vadd.f32 0.0, %v9946
        %v9948 = vpop.f32.mrf.mxu0
        %v9949 = vpop.f32.mrf.mxu0
        %v9950 = vpop.f32.mrf.mxu0
        %9951 = vdwg.mxu0
        %9952 = vmatprep.subr.bf16.mxu0 0
        %9953 = vmatpush1.bf16.msra.mxu0 %v9354
        %9954 = vmatprep.subr.bf16.mxu0 0
        %9955 = vmatpush1.bf16.msra.mxu0 %v9351
        %9956 = vmatprep.subr.bf16.mxu0 0
        %9957 = vmatpush1.bf16.msra.mxu0 %v9348
        %9958 = vmatprep.subr.bf16.mxu0 0
        %9959 = vmatpush1.bf16.msra.mxu0 %v9345
        %9960 = vmatprep.subr.bf16.mxu0 0
        %9961 = vmatpush1.bf16.msra.mxu0 %v9342
        %9962 = vmatprep.subr.bf16.mxu0 0
        %9963 = vmatpush1.bf16.msra.mxu0 %v9339
        %9964 = vmatprep.subr.bf16.mxu0 0
        %9965 = vmatpush1.bf16.msra.mxu0 %v9336
        %9966 = vmatprep.subr.bf16.mxu0 0
        %9967 = vmatpush1.bf16.msra.mxu0 %v9333
        %9968 = vmatprep.subr.bf16.mxu0 0
        %9969 = vmatpush2.bf16.msra.mxu0 %v9378
        %9970 = vmatprep.subr.bf16.mxu0 0
        %9971 = vmatpush2.bf16.msra.mxu0 %v9375
        %9972 = vmatprep.subr.bf16.mxu0 0
        %9973 = vmatpush2.bf16.msra.mxu0 %v9372
        %9974 = vmatprep.subr.bf16.mxu0 0
        %9975 = vmatpush2.bf16.msra.mxu0 %v9369
        %9976 = vmatprep.subr.bf16.mxu0 0
        %9977 = vmatpush2.bf16.msra.mxu0 %v9366
        %9978 = vmatprep.subr.bf16.mxu0 0
        %9979 = vmatpush2.bf16.msra.mxu0 %v9363
        %9980 = vmatprep.subr.bf16.mxu0 0
        %9981 = vmatpush2.bf16.msra.mxu0 %v9360
        %9982 = vmatprep.subr.bf16.mxu0 0
        %9983 = vmatpush2.bf16.msra.mxu0 %v9357
        %9984 = vmatprep.mubr.bf16.mxu0 %v7369
        %9985 = vmatmul.mubr.bf16.gmra.mxu0 %v7368
        %v9986 = vpop.f32.mrf.mxu0
        %v9987 = vadd.f32 %v9891, %v9986
        %v9988 = vpop.f32.mrf.mxu0
        %v9989 = vpop.f32.mrf.mxu0
        %v9990 = vadd.f32 %v9894, %v9989
        %v9991 = vpop.f32.mrf.mxu0
        %9992 = vmatprep.mubr.bf16.mxu0 %v7374
        %9993 = vmatmul.mubr.bf16.gmra.mxu0 %v7373
        %v9994 = vpop.f32.mrf.mxu0
        %v9995 = vadd.f32 %v9899, %v9994
        %v9996 = vpop.f32.mrf.mxu0
        %v9997 = vpop.f32.mrf.mxu0
        %v9998 = vadd.f32 %v9902, %v9997
        %v9999 = vpop.f32.mrf.mxu0
        %10000 = vmatprep.mubr.bf16.mxu0 %v7379
        %10001 = vmatmul.mubr.bf16.gmra.mxu0 %v7378
        %v10002 = vpop.f32.mrf.mxu0
        %v10003 = vadd.f32 %v9907, %v10002
        %v10004 = vpop.f32.mrf.mxu0
        %v10005 = vpop.f32.mrf.mxu0
        %v10006 = vadd.f32 %v9910, %v10005
        %v10007 = vpop.f32.mrf.mxu0
        %10008 = vmatprep.mubr.bf16.mxu0 %v7384
        %10009 = vmatmul.mubr.bf16.gmra.mxu0 %v7383
        %v10010 = vpop.f32.mrf.mxu0
        %v10011 = vadd.f32 %v9915, %v10010
        %v10012 = vpop.f32.mrf.mxu0
        %v10013 = vpop.f32.mrf.mxu0
        %v10014 = vadd.f32 %v9918, %v10013
        %v10015 = vpop.f32.mrf.mxu0
        %10016 = vmatprep.mubr.bf16.mxu0 %v7389
        %10017 = vmatmul.mubr.bf16.gmra.mxu0 %v7388
        %v10018 = vpop.f32.mrf.mxu0
        %v10019 = vadd.f32 %v9923, %v10018
        %v10020 = vpop.f32.mrf.mxu0
        %v10021 = vpop.f32.mrf.mxu0
        %v10022 = vadd.f32 %v9926, %v10021
        %v10023 = vpop.f32.mrf.mxu0
        %10024 = vmatprep.mubr.bf16.mxu0 %v7394
        %10025 = vmatmul.mubr.bf16.gmra.mxu0 %v7393
        %v10026 = vpop.f32.mrf.mxu0
        %v10027 = vadd.f32 %v9931, %v10026
        %v10028 = vpop.f32.mrf.mxu0
        %v10029 = vpop.f32.mrf.mxu0
        %v10030 = vadd.f32 %v9934, %v10029
        %v10031 = vpop.f32.mrf.mxu0
        %10032 = vmatprep.mubr.bf16.mxu0 %v7399
        %10033 = vmatmul.mubr.bf16.gmra.mxu0 %v7398
        %v10034 = vpop.f32.mrf.mxu0
        %v10035 = vadd.f32 %v9939, %v10034
        %v10036 = vpop.f32.mrf.mxu0
        %v10037 = vpop.f32.mrf.mxu0
        %v10038 = vadd.f32 %v9942, %v10037
        %v10039 = vpop.f32.mrf.mxu0
        %10040 = vmatprep.mubr.bf16.mxu0 %v8876
        %10041 = vmatmul.mubr.bf16.gmra.mxu0 %v8875
        %v10042 = vpop.f32.mrf.mxu0
        %v10043 = vadd.f32 %v9947, %v10042
        %v10044 = vpop.f32.mrf.mxu0
        %v10045 = vpop.f32.mrf.mxu0
        %v10046 = vpop.f32.mrf.mxu0
        %10047 = vdwg.mxu0
        %10048 = vmatprep.subr.bf16.mxu0 0
        %10049 = vmatpush1.bf16.msra.mxu0 %v9402
        %10050 = vmatprep.subr.bf16.mxu0 0
        %10051 = vmatpush1.bf16.msra.mxu0 %v9399
        %10052 = vmatprep.subr.bf16.mxu0 0
        %10053 = vmatpush1.bf16.msra.mxu0 %v9396
        %10054 = vmatprep.subr.bf16.mxu0 0
        %10055 = vmatpush1.bf16.msra.mxu0 %v9393
        %10056 = vmatprep.subr.bf16.mxu0 0
        %10057 = vmatpush1.bf16.msra.mxu0 %v9390
        %10058 = vmatprep.subr.bf16.mxu0 0
        %10059 = vmatpush1.bf16.msra.mxu0 %v9387
        %10060 = vmatprep.subr.bf16.mxu0 0
        %10061 = vmatpush1.bf16.msra.mxu0 %v9384
        %10062 = vmatprep.subr.bf16.mxu0 0
        %10063 = vmatpush1.bf16.msra.mxu0 %v9381
        %10064 = vmatprep.subr.bf16.mxu0 0
        %10065 = vmatpush2.bf16.msra.mxu0 0
        %10066 = vmatprep.subr.bf16.mxu0 0
        %10067 = vmatpush2.bf16.msra.mxu0 0
        %10068 = vmatprep.subr.bf16.mxu0 0
        %10069 = vmatpush2.bf16.msra.mxu0 0
        %10070 = vmatprep.subr.bf16.mxu0 0
        %10071 = vmatpush2.bf16.msra.mxu0 0
        %10072 = vmatprep.subr.bf16.mxu0 0
        %10073 = vmatpush2.bf16.msra.mxu0 0
        %10074 = vmatprep.subr.bf16.mxu0 0
        %10075 = vmatpush2.bf16.msra.mxu0 0
        %10076 = vmatprep.subr.bf16.mxu0 0
        %10077 = vmatpush2.bf16.msra.mxu0 0
        %10078 = vmatprep.subr.bf16.mxu0 0
        %10079 = vmatpush2.bf16.msra.mxu0 0
        %10080 = vmatprep.mubr.bf16.mxu0 0
        %10081 = vmatmul.mubr.bf16.gmra.mxu0 %v7370
        %v10082 = vpop.f32.mrf.mxu0
        %v10083 = vadd.f32 %v9987, %v10082
        %v10084 = vpop.f32.mrf.mxu0
        %v10085 = vpop.f32.mrf.mxu0
        %v10086 = vadd.f32 %v9990, %v10085
        %v10087 = vpop.f32.mrf.mxu0
        %10088 = vmatprep.mubr.bf16.mxu0 0
        %10089 = vmatmul.mubr.bf16.gmra.mxu0 %v7375
        %v10090 = vpop.f32.mrf.mxu0
        %v10091 = vadd.f32 %v9995, %v10090
        %v10092 = vpop.f32.mrf.mxu0
        %v10093 = vpop.f32.mrf.mxu0
        %v10094 = vadd.f32 %v9998, %v10093
        %v10095 = vpop.f32.mrf.mxu0
        %10096 = vmatprep.mubr.bf16.mxu0 0
        %10097 = vmatmul.mubr.bf16.gmra.mxu0 %v7380
        %v10098 = vpop.f32.mrf.mxu0
        %v10099 = vadd.f32 %v10003, %v10098
        %v10100 = vpop.f32.mrf.mxu0
        %v10101 = vpop.f32.mrf.mxu0
        %v10102 = vadd.f32 %v10006, %v10101
        %v10103 = vpop.f32.mrf.mxu0
        %10104 = vmatprep.mubr.bf16.mxu0 0
        %10105 = vmatmul.mubr.bf16.gmra.mxu0 %v7385
        %v10106 = vpop.f32.mrf.mxu0
        %v10107 = vadd.f32 %v10011, %v10106
        %v10108 = vpop.f32.mrf.mxu0
        %v10109 = vpop.f32.mrf.mxu0
        %v10110 = vadd.f32 %v10014, %v10109
        %v10111 = vpop.f32.mrf.mxu0
        %10112 = vmatprep.mubr.bf16.mxu0 0
        %10113 = vmatmul.mubr.bf16.gmra.mxu0 %v7390
        %v10114 = vpop.f32.mrf.mxu0
        %v10115 = vadd.f32 %v10019, %v10114
        %v10116 = vpop.f32.mrf.mxu0
        %v10117 = vpop.f32.mrf.mxu0
        %v10118 = vadd.f32 %v10022, %v10117
        %v10119 = vpop.f32.mrf.mxu0
        %10120 = vmatprep.mubr.bf16.mxu0 0
        %10121 = vmatmul.mubr.bf16.gmra.mxu0 %v7395
        %v10122 = vpop.f32.mrf.mxu0
        %v10123 = vadd.f32 %v10027, %v10122
        %v10124 = vpop.f32.mrf.mxu0
        %v10125 = vpop.f32.mrf.mxu0
        %v10126 = vadd.f32 %v10030, %v10125
        %v10127 = vpop.f32.mrf.mxu0
        %10128 = vmatprep.mubr.bf16.mxu0 0
        %10129 = vmatmul.mubr.bf16.gmra.mxu0 %v7400
        %v10130 = vpop.f32.mrf.mxu0
        %v10131 = vadd.f32 %v10035, %v10130
        %v10132 = vpop.f32.mrf.mxu0
        %v10133 = vpop.f32.mrf.mxu0
        %v10134 = vadd.f32 %v10038, %v10133
        %v10135 = vpop.f32.mrf.mxu0
        %10136 = vmatprep.mubr.bf16.mxu0 0
        %10137 = vmatmul.mubr.bf16.gmra.mxu0 %v8877
        %v10138 = vpop.f32.mrf.mxu0
        %v10139 = vadd.f32 %v10043, %v10138
        %v10140 = vpop.f32.mrf.mxu0
        %v10141 = vpop.f32.mrf.mxu0
        %v10142 = vpop.f32.mrf.mxu0
        %10143 = vdwg.mxu0
        %v10144 = vadd.f32 %v8338, %v9780
        %v10145 = vadd.f32 %v8340, %v9782
        %v10146 = vadd.f32 %v8641, %v10083
        %v10147 = vadd.f32 %v8342, %v9784
        %v10148 = vadd.f32 %v8344, %v9786
        %v10149 = vadd.f32 %v8644, %v10086
        %v10150 = vadd.f32 %v8348, %v9790
        %v10151 = vadd.f32 %v8350, %v9792
        %v10152 = vadd.f32 %v8649, %v10091
        %v10153 = vadd.f32 %v8352, %v9794
        %v10154 = vadd.f32 %v8354, %v9796
        %v10155 = vadd.f32 %v8652, %v10094
        %v10156 = vadd.f32 %v8358, %v9800
        %v10157 = vadd.f32 %v8360, %v9802
        %v10158 = vadd.f32 %v8657, %v10099
        %v10159 = vadd.f32 %v8362, %v9804
        %v10160 = vadd.f32 %v8364, %v9806
        %v10161 = vadd.f32 %v8660, %v10102
        %v10162 = vadd.f32 %v8368, %v9810
        %v10163 = vadd.f32 %v8370, %v9812
        %v10164 = vadd.f32 %v8665, %v10107
        %v10165 = vadd.f32 %v8372, %v9814
        %v10166 = vadd.f32 %v8374, %v9816
        %v10167 = vadd.f32 %v8668, %v10110
        %v10168 = vadd.f32 %v8378, %v9820
        %v10169 = vadd.f32 %v8380, %v9822
        %v10170 = vadd.f32 %v8673, %v10115
        %v10171 = vadd.f32 %v8382, %v9824
        %v10172 = vadd.f32 %v8384, %v9826
        %v10173 = vadd.f32 %v8676, %v10118
        %v10174 = vadd.f32 %v8388, %v9830
        %v10175 = vadd.f32 %v8390, %v9832
        %v10176 = vadd.f32 %v8681, %v10123
        %v10177 = vadd.f32 %v8392, %v9834
        %v10178 = vadd.f32 %v8394, %v9836
        %v10179 = vadd.f32 %v8684, %v10126
        %v10180 = vadd.f32 %v8398, %v9840
        %v10181 = vadd.f32 %v8400, %v9842
        %v10182 = vadd.f32 %v8689, %v10131
        %v10183 = vadd.f32 %v8402, %v9844
        %v10184 = vadd.f32 %v8404, %v9846
        %v10185 = vadd.f32 %v8692, %v10134
        %v10186 = vadd.f32 %v8408, %v9850
        %v10187 = vadd.f32 %v8410, %v9852
        %v10188 = vadd.f32 %v8697, %v10139
        %v10189 = vld [vmem:[%s6] sm:$0x7]
        %v10191 = vlaneseq
        %v10192 = vshrl.u32 %v10191, 7
        %v10193 = vsub.s32 0, %v10192
        %v10194 = vrot.slane %v10189, %v10193
        %v10195 = vlaneseq
        %v10196 = vshrl.u32 %v10195, 7
        %v10197 = vsub.s32 1, %v10196
        %v10198 = vrot.slane %v10189, %v10197
        %v10199 = vlaneseq
        %v10200 = vshrl.u32 %v10199, 7
        %v10201 = vsub.s32 2, %v10200
        %v10202 = vrot.slane %v10189, %v10201
        %v10206 = vadd.f32 %v10144, %v10194
        %v10207 = vadd.f32 %v10145, %v10198
        %v10208 = vadd.f32 %v10146, %v10202
        %v10209 = vadd.f32 %v10147, %v10194
        %v10210 = vadd.f32 %v10148, %v10198
        %v10211 = vadd.f32 %v10149, %v10202
        %v10212 = vadd.f32 %v10150, %v10194
        %v10213 = vadd.f32 %v10151, %v10198
        %v10214 = vadd.f32 %v10152, %v10202
        %v10215 = vadd.f32 %v10153, %v10194
        %v10216 = vadd.f32 %v10154, %v10198
        %v10217 = vadd.f32 %v10155, %v10202
        %v10218 = vadd.f32 %v10156, %v10194
        %v10219 = vadd.f32 %v10157, %v10198
        %v10220 = vadd.f32 %v10158, %v10202
        %v10221 = vadd.f32 %v10159, %v10194
        %v10222 = vadd.f32 %v10160, %v10198
        %v10223 = vadd.f32 %v10161, %v10202
        %v10224 = vadd.f32 %v10162, %v10194
        %v10225 = vadd.f32 %v10163, %v10198
        %v10226 = vadd.f32 %v10164, %v10202
        %v10227 = vadd.f32 %v10165, %v10194
        %v10228 = vadd.f32 %v10166, %v10198
        %v10229 = vadd.f32 %v10167, %v10202
        %v10230 = vadd.f32 %v10168, %v10194
        %v10231 = vadd.f32 %v10169, %v10198
        %v10232 = vadd.f32 %v10170, %v10202
        %v10233 = vadd.f32 %v10171, %v10194
        %v10234 = vadd.f32 %v10172, %v10198
        %v10235 = vadd.f32 %v10173, %v10202
        %v10236 = vadd.f32 %v10174, %v10194
        %v10237 = vadd.f32 %v10175, %v10198
        %v10238 = vadd.f32 %v10176, %v10202
        %v10239 = vadd.f32 %v10177, %v10194
        %v10240 = vadd.f32 %v10178, %v10198
        %v10241 = vadd.f32 %v10179, %v10202
        %v10242 = vadd.f32 %v10180, %v10194
        %v10243 = vadd.f32 %v10181, %v10198
        %v10244 = vadd.f32 %v10182, %v10202
        %v10245 = vadd.f32 %v10183, %v10194
        %v10246 = vadd.f32 %v10184, %v10198
        %v10247 = vadd.f32 %v10185, %v10202
        %v10248 = vadd.f32 %v10186, %v10194
        %v10249 = vadd.f32 %v10187, %v10198
        %v10250 = vadd.f32 %v10188, %v10202
        %v10251 = vmax.f32 %v10206, 0.0
        %v10252 = vmax.f32 %v10207, 0.0
        %v10253 = vmax.f32 %v10208, 0.0
        %v10254 = vmax.f32 %v10209, 0.0
        %v10255 = vmax.f32 %v10210, 0.0
        %v10256 = vmax.f32 %v10211, 0.0
        %v10257 = vmax.f32 %v10212, 0.0
        %v10258 = vmax.f32 %v10213, 0.0
        %v10259 = vmax.f32 %v10214, 0.0
        %v10260 = vmax.f32 %v10215, 0.0
        %v10261 = vmax.f32 %v10216, 0.0
        %v10262 = vmax.f32 %v10217, 0.0
        %v10263 = vmax.f32 %v10218, 0.0
        %v10264 = vmax.f32 %v10219, 0.0
        %v10265 = vmax.f32 %v10220, 0.0
        %v10266 = vmax.f32 %v10221, 0.0
        %v10267 = vmax.f32 %v10222, 0.0
        %v10268 = vmax.f32 %v10223, 0.0
        %v10269 = vmax.f32 %v10224, 0.0
        %v10270 = vmax.f32 %v10225, 0.0
        %v10271 = vmax.f32 %v10226, 0.0
        %v10272 = vmax.f32 %v10227, 0.0
        %v10273 = vmax.f32 %v10228, 0.0
        %v10274 = vmax.f32 %v10229, 0.0
        %v10275 = vmax.f32 %v10230, 0.0
        %v10276 = vmax.f32 %v10231, 0.0
        %v10277 = vmax.f32 %v10232, 0.0
        %v10278 = vmax.f32 %v10233, 0.0
        %v10279 = vmax.f32 %v10234, 0.0
        %v10280 = vmax.f32 %v10235, 0.0
        %v10281 = vmax.f32 %v10236, 0.0
        %v10282 = vmax.f32 %v10237, 0.0
        %v10283 = vmax.f32 %v10238, 0.0
        %v10284 = vmax.f32 %v10239, 0.0
        %v10285 = vmax.f32 %v10240, 0.0
        %v10286 = vmax.f32 %v10241, 0.0
        %v10287 = vmax.f32 %v10242, 0.0
        %v10288 = vmax.f32 %v10243, 0.0
        %v10289 = vmax.f32 %v10244, 0.0
        %v10290 = vmax.f32 %v10245, 0.0
        %v10291 = vmax.f32 %v10246, 0.0
        %v10292 = vmax.f32 %v10247, 0.0
        %v10293 = vmax.f32 %v10248, 0.0
        %v10294 = vmax.f32 %v10249, 0.0
        %v10295 = vmax.f32 %v10250, 0.0
        %v10296 = vld [vmem:[%s7] sm:$0x7]
        %v10298 = vlaneseq
        %v10299 = vshrl.u32 %v10298, 7
        %v10300 = vsub.s32 0, %v10299
        %v10301 = vrot.slane %v10296, %v10300
        %v10302 = vlaneseq
        %v10303 = vshrl.u32 %v10302, 7
        %v10304 = vsub.s32 1, %v10303
        %v10305 = vrot.slane %v10296, %v10304
        %v10306 = vlaneseq
        %v10307 = vshrl.u32 %v10306, 7
        %v10308 = vsub.s32 2, %v10307
        %v10309 = vrot.slane %v10296, %v10308
        %v10313 = vmul.f32 %v10251, %v10301
        %v10314 = vmul.f32 %v10252, %v10305
        %v10315 = vmul.f32 %v10253, %v10309
        %v10316 = vmul.f32 %v10254, %v10301
        %v10317 = vmul.f32 %v10255, %v10305
        %v10318 = vmul.f32 %v10256, %v10309
        %v10319 = vmul.f32 %v10257, %v10301
        %v10320 = vmul.f32 %v10258, %v10305
        %v10321 = vmul.f32 %v10259, %v10309
        %v10322 = vmul.f32 %v10260, %v10301
        %v10323 = vmul.f32 %v10261, %v10305
        %v10324 = vmul.f32 %v10262, %v10309
        %v10325 = vmul.f32 %v10263, %v10301
        %v10326 = vmul.f32 %v10264, %v10305
        %v10327 = vmul.f32 %v10265, %v10309
        %v10328 = vmul.f32 %v10266, %v10301
        %v10329 = vmul.f32 %v10267, %v10305
        %v10330 = vmul.f32 %v10268, %v10309
        %v10331 = vmul.f32 %v10269, %v10301
        %v10332 = vmul.f32 %v10270, %v10305
        %v10333 = vmul.f32 %v10271, %v10309
        %v10334 = vmul.f32 %v10272, %v10301
        %v10335 = vmul.f32 %v10273, %v10305
        %v10336 = vmul.f32 %v10274, %v10309
        %v10337 = vmul.f32 %v10275, %v10301
        %v10338 = vmul.f32 %v10276, %v10305
        %v10339 = vmul.f32 %v10277, %v10309
        %v10340 = vmul.f32 %v10278, %v10301
        %v10341 = vmul.f32 %v10279, %v10305
        %v10342 = vmul.f32 %v10280, %v10309
        %v10343 = vmul.f32 %v10281, %v10301
        %v10344 = vmul.f32 %v10282, %v10305
        %v10345 = vmul.f32 %v10283, %v10309
        %v10346 = vmul.f32 %v10284, %v10301
        %v10347 = vmul.f32 %v10285, %v10305
        %v10348 = vmul.f32 %v10286, %v10309
        %v10349 = vmul.f32 %v10287, %v10301
        %v10350 = vmul.f32 %v10288, %v10305
        %v10351 = vmul.f32 %v10289, %v10309
        %v10352 = vmul.f32 %v10290, %v10301
        %v10353 = vmul.f32 %v10291, %v10305
        %v10354 = vmul.f32 %v10292, %v10309
        %v10355 = vmul.f32 %v10293, %v10301
        %v10356 = vmul.f32 %v10294, %v10305
        %v10357 = vmul.f32 %v10295, %v10309
        %v10358 = vld [vmem:[%s8] sm:$0x7]
        %v10360 = vlaneseq
        %v10361 = vshrl.u32 %v10360, 7
        %v10362 = vsub.s32 0, %v10361
        %v10363 = vrot.slane %v10358, %v10362
        %v10364 = vlaneseq
        %v10365 = vshrl.u32 %v10364, 7
        %v10366 = vsub.s32 1, %v10365
        %v10367 = vrot.slane %v10358, %v10366
        %v10368 = vlaneseq
        %v10369 = vshrl.u32 %v10368, 7
        %v10370 = vsub.s32 2, %v10369
        %v10371 = vrot.slane %v10358, %v10370
        %v10375 = vadd.f32 %v10313, %v10363
        %v10376 = vadd.f32 %v10314, %v10367
        %v10377 = vadd.f32 %v10315, %v10371
        %v10378 = vadd.f32 %v10316, %v10363
        %v10379 = vadd.f32 %v10317, %v10367
        %v10380 = vadd.f32 %v10318, %v10371
        %v10381 = vadd.f32 %v10319, %v10363
        %v10382 = vadd.f32 %v10320, %v10367
        %v10383 = vadd.f32 %v10321, %v10371
        %v10384 = vadd.f32 %v10322, %v10363
        %v10385 = vadd.f32 %v10323, %v10367
        %v10386 = vadd.f32 %v10324, %v10371
        %v10387 = vadd.f32 %v10325, %v10363
        %v10388 = vadd.f32 %v10326, %v10367
        %v10389 = vadd.f32 %v10327, %v10371
        %v10390 = vadd.f32 %v10328, %v10363
        %v10391 = vadd.f32 %v10329, %v10367
        %v10392 = vadd.f32 %v10330, %v10371
        %v10393 = vadd.f32 %v10331, %v10363
        %v10394 = vadd.f32 %v10332, %v10367
        %v10395 = vadd.f32 %v10333, %v10371
        %v10396 = vadd.f32 %v10334, %v10363
        %v10397 = vadd.f32 %v10335, %v10367
        %v10398 = vadd.f32 %v10336, %v10371
        %v10399 = vadd.f32 %v10337, %v10363
        %v10400 = vadd.f32 %v10338, %v10367
        %v10401 = vadd.f32 %v10339, %v10371
        %v10402 = vadd.f32 %v10340, %v10363
        %v10403 = vadd.f32 %v10341, %v10367
        %v10404 = vadd.f32 %v10342, %v10371
        %v10405 = vadd.f32 %v10343, %v10363
        %v10406 = vadd.f32 %v10344, %v10367
        %v10407 = vadd.f32 %v10345, %v10371
        %v10408 = vadd.f32 %v10346, %v10363
        %v10409 = vadd.f32 %v10347, %v10367
        %v10410 = vadd.f32 %v10348, %v10371
        %v10411 = vadd.f32 %v10349, %v10363
        %v10412 = vadd.f32 %v10350, %v10367
        %v10413 = vadd.f32 %v10351, %v10371
        %v10414 = vadd.f32 %v10352, %v10363
        %v10415 = vadd.f32 %v10353, %v10367
        %v10416 = vadd.f32 %v10354, %v10371
        %v10417 = vadd.f32 %v10355, %v10363
        %v10418 = vadd.f32 %v10356, %v10367
        %v10419 = vadd.f32 %v10357, %v10371
        %v10420 = vmax.f32 %v10375, %v10378
        %v10421 = vmax.f32 %v10376, %v10379
        %v10422 = vmax.f32 %v10377, %v10380
        %v10423 = vmax.f32 %v10384, %v10387
        %v10424 = vmax.f32 %v10385, %v10388
        %v10425 = vmax.f32 %v10386, %v10389
        %v10426 = vmax.f32 %v10393, %v10396
        %v10427 = vmax.f32 %v10394, %v10397
        %v10428 = vmax.f32 %v10395, %v10398
        %v10429 = vmax.f32 %v10402, %v10405
        %v10430 = vmax.f32 %v10403, %v10406
        %v10431 = vmax.f32 %v10404, %v10407
        %v10432 = vmax.f32 %v10411, %v10414
        %v10433 = vmax.f32 %v10412, %v10415
        %v10434 = vmax.f32 %v10413, %v10416
        %v10435 = vmax.f32 %v10420, %v10381
        %v10436 = vmax.f32 %v10421, %v10382
        %v10437 = vmax.f32 %v10422, %v10383
        %v10438 = vmax.f32 %v10423, %v10390
        %v10439 = vmax.f32 %v10424, %v10391
        %v10440 = vmax.f32 %v10425, %v10392
        %v10441 = vmax.f32 %v10426, %v10399
        %v10442 = vmax.f32 %v10427, %v10400
        %v10443 = vmax.f32 %v10428, %v10401
        %v10444 = vmax.f32 %v10429, %v10408
        %v10445 = vmax.f32 %v10430, %v10409
        %v10446 = vmax.f32 %v10431, %v10410
        %v10447 = vmax.f32 %v10432, %v10417
        %v10448 = vmax.f32 %v10433, %v10418
        %v10449 = vmax.f32 %v10434, %v10419
        %v10450 = vpack.c.bf16 %v10435, %v10435
        %v10451 = vpack.c.bf16 %v10436, %v10436
        %v10452 = vpack.c.bf16 %v10437, %v10437
        %v10453 = vpack.c.bf16 %v10438, %v10438
        %v10454 = vpack.c.bf16 %v10439, %v10439
        %v10455 = vpack.c.bf16 %v10440, %v10440
        %v10456 = vpack.c.bf16 %v10441, %v10441
        %v10457 = vpack.c.bf16 %v10442, %v10442
        %v10458 = vpack.c.bf16 %v10443, %v10443
        %v10459 = vpack.c.bf16 %v10444, %v10444
        %v10460 = vpack.c.bf16 %v10445, %v10445
        %v10461 = vpack.c.bf16 %v10446, %v10446
        %v10462 = vpack.c.bf16 %v10447, %v10447
        %v10463 = vpack.c.bf16 %v10448, %v10448
        %v10464 = vpack.c.bf16 %v10449, %v10449
        %v10474 = vunpack.c.l.b16 %v10450
        %v10475 = vunpack.c.l.b16 %v10451
        %v10476 = vunpack.c.l.b16 %v10452
        %v10477 = vunpack.c.l.b16 %v10453
        %v10478 = vunpack.c.l.b16 %v10454
        %v10479 = vunpack.c.l.b16 %v10455
        %v10480 = vunpack.c.l.b16 %v10456
        %v10481 = vunpack.c.l.b16 %v10457
        %v10482 = vunpack.c.l.b16 %v10458
        %v10483 = vld [vmem:[%s9] sm:$0xff]
        %v10484 = vld [vmem:[%s9 + $0x8] sm:$0xff]
        %v10485 = vld [vmem:[%s9 + $0x10] sm:$0xff]
        %v10486 = vld [vmem:[%s9 + $0x18] sm:$0xff]
        %v10487 = vld [vmem:[%s9 + $0x20] sm:$0xff]
        %v10488 = vld [vmem:[%s9 + $0x28] sm:$0xff]
        %v10489 = vld [vmem:[%s9 + $0x30] sm:$0xff]
        %v10490 = vld [vmem:[%s9 + $0x38] sm:$0xff]
        %v10491 = vld [vmem:[%s9 + $0x40] sm:$0xff]
        %v10492 = vld [vmem:[%s9 + $0x48] sm:$0xff]
        %v10493 = vld [vmem:[%s9 + $0x50] sm:$0xff]
        %v10494 = vld [vmem:[%s9 + $0x58] sm:$0xff]
        %v10495 = vld [vmem:[%s9 + $0x60] sm:$0xff]
        %v10496 = vld [vmem:[%s9 + $0x68] sm:$0xff]
        %v10497 = vld [vmem:[%s9 + $0x70] sm:$0xff]
        %v10498 = vld [vmem:[%s9 + $0x78] sm:$0xff]
        %v10499 = vld [vmem:[%s9 + $0x80] sm:$0xff]
        %v10500 = vld [vmem:[%s9 + $0x88] sm:$0xff]
        %v10501 = vld [vmem:[%s9 + $0x90] sm:$0xff]
        %v10502 = vld [vmem:[%s9 + $0x98] sm:$0xff]
        %v10503 = vld [vmem:[%s9 + $0xa0] sm:$0xff]
        %v10504 = vld [vmem:[%s9 + $0xa8] sm:$0xff]
        %v10505 = vld [vmem:[%s9 + $0xb0] sm:$0xff]
        %v10506 = vld [vmem:[%s9 + $0xb8] sm:$0xff]
        %v10507 = vld [vmem:[%s9 + $0xc0] sm:$0xff]
        %v10508 = vld [vmem:[%s9 + $0xc8] sm:$0xff]
        %v10509 = vld [vmem:[%s9 + $0xd0] sm:$0xff]
        %v10510 = vld [vmem:[%s9 + $0xd8] sm:$0xff]
        %v10511 = vld [vmem:[%s9 + $0xe0] sm:$0xff]
        %v10512 = vld [vmem:[%s9 + $0xe8] sm:$0xff]
        %v10513 = vld [vmem:[%s9 + $0xf0] sm:$0xff]
        %v10514 = vld [vmem:[%s9 + $0xf8] sm:$0xff]
        %v10515 = vld [vmem:[%s9 + $0x100] sm:$0xff]
        %v10516 = vld [vmem:[%s9 + $0x108] sm:$0xff]
        %v10517 = vld [vmem:[%s9 + $0x110] sm:$0xff]
        %v10518 = vld [vmem:[%s9 + $0x118] sm:$0xff]
        %v10519 = vld [vmem:[%s9 + $0x120] sm:$0xff]
        %v10520 = vld [vmem:[%s9 + $0x128] sm:$0xff]
        %v10521 = vld [vmem:[%s9 + $0x130] sm:$0xff]
        %v10522 = vld [vmem:[%s9 + $0x138] sm:$0xff]
        %v10526 = vunpack.c.l.b16 %v10459
        %v10527 = vunpack.c.l.b16 %v10460
        %v10528 = vunpack.c.l.b16 %v10461
        %s10529 = scalar_lea.vmem %s9, 320
        %v10530 = vld [vmem:[%s10529] sm:$0xff]
        %v10531 = vld [vmem:[%s10529 + $0x8] sm:$0xff]
        %v10532 = vld [vmem:[%s10529 + $0x10] sm:$0xff]
        %v10533 = vld [vmem:[%s10529 + $0x18] sm:$0xff]
        %v10534 = vld [vmem:[%s10529 + $0x20] sm:$0xff]
        %v10535 = vld [vmem:[%s10529 + $0x28] sm:$0xff]
        %v10536 = vld [vmem:[%s10529 + $0x30] sm:$0xff]
        %v10537 = vld [vmem:[%s10529 + $0x38] sm:$0xff]
        %v10538 = vld [vmem:[%s10529 + $0x40] sm:$0xff]
        %v10539 = vld [vmem:[%s10529 + $0x48] sm:$0xff]
        %v10540 = vld [vmem:[%s10529 + $0x50] sm:$0xff]
        %v10541 = vld [vmem:[%s10529 + $0x58] sm:$0xff]
        %v10542 = vld [vmem:[%s10529 + $0x60] sm:$0xff]
        %v10543 = vld [vmem:[%s10529 + $0x68] sm:$0xff]
        %v10544 = vld [vmem:[%s10529 + $0x70] sm:$0xff]
        %v10545 = vld [vmem:[%s10529 + $0x78] sm:$0xff]
        %v10546 = vld [vmem:[%s10529 + $0x80] sm:$0xff]
        %v10547 = vld [vmem:[%s10529 + $0x88] sm:$0xff]
        %v10548 = vld [vmem:[%s10529 + $0x90] sm:$0xff]
        %v10549 = vld [vmem:[%s10529 + $0x98] sm:$0xff]
        %v10550 = vld [vmem:[%s10529 + $0xa0] sm:$0xff]
        %v10551 = vld [vmem:[%s10529 + $0xa8] sm:$0xff]
        %v10552 = vld [vmem:[%s10529 + $0xb0] sm:$0xff]
        %v10553 = vld [vmem:[%s10529 + $0xb8] sm:$0xff]
        %v10554 = vld [vmem:[%s10529 + $0xc0] sm:$0xff]
        %v10555 = vld [vmem:[%s10529 + $0xc8] sm:$0xff]
        %v10556 = vld [vmem:[%s10529 + $0xd0] sm:$0xff]
        %v10557 = vld [vmem:[%s10529 + $0xd8] sm:$0xff]
        %v10558 = vld [vmem:[%s10529 + $0xe0] sm:$0xff]
        %v10559 = vld [vmem:[%s10529 + $0xe8] sm:$0xff]
        %v10560 = vld [vmem:[%s10529 + $0xf0] sm:$0xff]
        %v10561 = vld [vmem:[%s10529 + $0xf8] sm:$0xff]
        %v10562 = vld [vmem:[%s10529 + $0x100] sm:$0xff]
        %v10563 = vld [vmem:[%s10529 + $0x108] sm:$0xff]
        %v10564 = vld [vmem:[%s10529 + $0x110] sm:$0xff]
        %v10565 = vld [vmem:[%s10529 + $0x118] sm:$0xff]
        %v10566 = vld [vmem:[%s10529 + $0x120] sm:$0xff]
        %v10567 = vld [vmem:[%s10529 + $0x128] sm:$0xff]
        %v10568 = vld [vmem:[%s10529 + $0x130] sm:$0xff]
        %v10569 = vld [vmem:[%s10529 + $0x138] sm:$0xff]
        %v10570 = vpack.c.b16 %v10480, %v10477
        %v10571 = vpack.c.b16 %v10481, %v10478
        %v10572 = vpack.c.b16 %v10482, %v10479
        %v10573 = vpack.c.b16 %v10526, %v10526
        %v10574 = vpack.c.b16 %v10527, %v10527
        %v10575 = vpack.c.b16 %v10528, %v10528
        %v10620 = vunpack.c.l.b16 %v10530
        %v10621 = vunpack.c.h.b16 %v10530
        %v10622 = vunpack.c.l.b16 %v10531
        %v10623 = vunpack.c.h.b16 %v10531
        %v10624 = vunpack.c.l.b16 %v10532
        %v10625 = vunpack.c.h.b16 %v10532
        %v10626 = vunpack.c.l.b16 %v10533
        %v10627 = vunpack.c.h.b16 %v10533
        %v10628 = vunpack.c.l.b16 %v10534
        %v10629 = vunpack.c.h.b16 %v10534
        %v10630 = vunpack.c.l.b16 %v10535
        %v10631 = vunpack.c.h.b16 %v10535
        %v10632 = vunpack.c.l.b16 %v10536
        %v10633 = vunpack.c.h.b16 %v10536
        %v10634 = vunpack.c.l.b16 %v10537
        %v10635 = vunpack.c.h.b16 %v10537
        %v10636 = vunpack.c.l.b16 %v10538
        %v10637 = vunpack.c.h.b16 %v10538
        %v10638 = vunpack.c.l.b16 %v10539
        %v10639 = vunpack.c.h.b16 %v10539
        %v10640 = vunpack.c.l.b16 %v10540
        %v10641 = vunpack.c.h.b16 %v10540
        %v10642 = vunpack.c.l.b16 %v10541
        %v10643 = vunpack.c.h.b16 %v10541
        %v10644 = vunpack.c.l.b16 %v10542
        %v10645 = vunpack.c.h.b16 %v10542
        %v10646 = vunpack.c.l.b16 %v10543
        %v10647 = vunpack.c.h.b16 %v10543
        %v10648 = vunpack.c.l.b16 %v10544
        %v10649 = vunpack.c.h.b16 %v10544
        %v10650 = vunpack.c.l.b16 %v10545
        %v10651 = vunpack.c.h.b16 %v10545
        %v10652 = vunpack.c.l.b16 %v10546
        %v10653 = vunpack.c.h.b16 %v10546
        %v10654 = vunpack.c.l.b16 %v10547
        %v10655 = vunpack.c.h.b16 %v10547
        %v10656 = vunpack.c.l.b16 %v10548
        %v10657 = vunpack.c.h.b16 %v10548
        %v10658 = vunpack.c.l.b16 %v10549
        %v10659 = vunpack.c.h.b16 %v10549
        %v10660 = vunpack.c.l.b16 %v10550
        %v10661 = vunpack.c.h.b16 %v10550
        %v10662 = vunpack.c.l.b16 %v10551
        %v10663 = vunpack.c.h.b16 %v10551
        %v10664 = vunpack.c.l.b16 %v10552
        %v10665 = vunpack.c.h.b16 %v10552
        %v10666 = vunpack.c.l.b16 %v10553
        %v10667 = vunpack.c.h.b16 %v10553
        %v10668 = vunpack.c.l.b16 %v10554
        %v10669 = vunpack.c.h.b16 %v10554
        %v10670 = vunpack.c.l.b16 %v10555
        %v10671 = vunpack.c.h.b16 %v10555
        %v10672 = vunpack.c.l.b16 %v10556
        %v10673 = vunpack.c.h.b16 %v10556
        %v10674 = vunpack.c.l.b16 %v10557
        %v10675 = vunpack.c.h.b16 %v10557
        %v10676 = vunpack.c.l.b16 %v10558
        %v10677 = vunpack.c.h.b16 %v10558
        %v10678 = vunpack.c.l.b16 %v10559
        %v10679 = vunpack.c.h.b16 %v10559
        %v10680 = vunpack.c.l.b16 %v10560
        %v10681 = vunpack.c.h.b16 %v10560
        %v10682 = vunpack.c.l.b16 %v10561
        %v10683 = vunpack.c.h.b16 %v10561
        %v10684 = vunpack.c.l.b16 %v10562
        %v10685 = vunpack.c.h.b16 %v10562
        %v10686 = vunpack.c.l.b16 %v10563
        %v10687 = vunpack.c.h.b16 %v10563
        %v10688 = vunpack.c.l.b16 %v10564
        %v10689 = vunpack.c.h.b16 %v10564
        %v10690 = vunpack.c.l.b16 %v10565
        %v10691 = vunpack.c.h.b16 %v10565
        %v10692 = vunpack.c.l.b16 %v10566
        %v10693 = vunpack.c.h.b16 %v10566
        %v10694 = vunpack.c.l.b16 %v10567
        %v10695 = vunpack.c.h.b16 %v10567
        %v10696 = vunpack.c.l.b16 %v10568
        %v10697 = vunpack.c.h.b16 %v10568
        %v10698 = vunpack.c.l.b16 %v10569
        %v10699 = vunpack.c.h.b16 %v10569
        %v10700 = vpack.c.b16 %v10622, %v10620
        %v10701 = vpack.c.b16 %v10623, %v10621
        %v10702 = vpack.c.b16 %v10626, %v10624
        %v10703 = vpack.c.b16 %v10627, %v10625
        %v10704 = vpack.c.b16 %v10630, %v10628
        %v10705 = vpack.c.b16 %v10631, %v10629
        %v10706 = vpack.c.b16 %v10634, %v10632
        %v10707 = vpack.c.b16 %v10635, %v10633
        %v10708 = vpack.c.b16 %v10638, %v10636
        %v10709 = vpack.c.b16 %v10639, %v10637
        %v10710 = vpack.c.b16 %v10642, %v10640
        %v10711 = vpack.c.b16 %v10643, %v10641
        %v10712 = vpack.c.b16 %v10646, %v10644
        %v10713 = vpack.c.b16 %v10647, %v10645
        %v10714 = vpack.c.b16 %v10650, %v10648
        %v10715 = vpack.c.b16 %v10651, %v10649
        %v10716 = vpack.c.b16 %v10654, %v10652
        %v10717 = vpack.c.b16 %v10655, %v10653
        %v10718 = vpack.c.b16 %v10658, %v10656
        %v10719 = vpack.c.b16 %v10659, %v10657
        %v10720 = vpack.c.b16 %v10662, %v10660
        %v10721 = vpack.c.b16 %v10663, %v10661
        %v10722 = vpack.c.b16 %v10666, %v10664
        %v10723 = vpack.c.b16 %v10667, %v10665
        %v10724 = vpack.c.b16 %v10670, %v10668
        %v10725 = vpack.c.b16 %v10671, %v10669
        %v10726 = vpack.c.b16 %v10674, %v10672
        %v10727 = vpack.c.b16 %v10675, %v10673
        %v10728 = vpack.c.b16 %v10678, %v10676
        %v10729 = vpack.c.b16 %v10679, %v10677
        %v10730 = vpack.c.b16 %v10682, %v10680
        %v10731 = vpack.c.b16 %v10683, %v10681
        %v10732 = vpack.c.b16 %v10686, %v10684
        %v10733 = vpack.c.b16 %v10687, %v10685
        %v10734 = vpack.c.b16 %v10690, %v10688
        %v10735 = vpack.c.b16 %v10691, %v10689
        %v10736 = vpack.c.b16 %v10694, %v10692
        %v10737 = vpack.c.b16 %v10695, %v10693
        %v10738 = vpack.c.b16 %v10698, %v10696
        %v10739 = vpack.c.b16 %v10699, %v10697
        %vm10780 = vcmask 523264
        %v10782 = vsel %vm10780, %v10572, 0
        %v10785 = vsel %vm10780, %v10575, 0
        %10787 = vmatprep.subr.bf16.mxu0 %v10715
        %10788 = vmatpush1.bf16.msra.mxu0 %v10714
        %10789 = vmatprep.subr.bf16.mxu0 %v10713
        %10790 = vmatpush1.bf16.msra.mxu0 %v10712
        %10791 = vmatprep.subr.bf16.mxu0 %v10711
        %10792 = vmatpush1.bf16.msra.mxu0 %v10710
        %10793 = vmatprep.subr.bf16.mxu0 %v10709
        %10794 = vmatpush1.bf16.msra.mxu0 %v10708
        %10795 = vmatprep.subr.bf16.mxu0 %v10707
        %10796 = vmatpush1.bf16.msra.mxu0 %v10706
        %10797 = vmatprep.subr.bf16.mxu0 %v10705
        %10798 = vmatpush1.bf16.msra.mxu0 %v10704
        %10799 = vmatprep.subr.bf16.mxu0 %v10703
        %10800 = vmatpush1.bf16.msra.mxu0 %v10702
        %10801 = vmatprep.subr.bf16.mxu0 %v10701
        %10802 = vmatpush1.bf16.msra.mxu0 %v10700
        %10803 = vmatprep.subr.bf16.mxu0 %v10731
        %10804 = vmatpush2.bf16.msra.mxu0 %v10730
        %10805 = vmatprep.subr.bf16.mxu0 %v10729
        %10806 = vmatpush2.bf16.msra.mxu0 %v10728
        %10807 = vmatprep.subr.bf16.mxu0 %v10727
        %10808 = vmatpush2.bf16.msra.mxu0 %v10726
        %10809 = vmatprep.subr.bf16.mxu0 %v10725
        %10810 = vmatpush2.bf16.msra.mxu0 %v10724
        %10811 = vmatprep.subr.bf16.mxu0 %v10723
        %10812 = vmatpush2.bf16.msra.mxu0 %v10722
        %10813 = vmatprep.subr.bf16.mxu0 %v10721
        %10814 = vmatpush2.bf16.msra.mxu0 %v10720
        %10815 = vmatprep.subr.bf16.mxu0 %v10719
        %10816 = vmatpush2.bf16.msra.mxu0 %v10718
        %10817 = vmatprep.subr.bf16.mxu0 %v10717
        %10818 = vmatpush2.bf16.msra.mxu0 %v10716
        %10819 = vmatprep.mubr.bf16.mxu0 %v10571
        %10820 = vmatmul.mubr.bf16.gmra.mxu0 %v10570
        %v10821 = vpop.f32.mrf.mxu0
        %v10822 = vadd.f32 0.0, %v10821
        %v10823 = vpop.f32.mrf.mxu0
        %v10824 = vadd.f32 0.0, %v10823
        %v10825 = vpop.f32.mrf.mxu0
        %v10826 = vadd.f32 0.0, %v10825
        %v10827 = vpop.f32.mrf.mxu0
        %v10828 = vadd.f32 0.0, %v10827
        %10829 = vmatprep.mubr.bf16.mxu0 %v10574
        %10830 = vmatmul.mubr.bf16.gmra.mxu0 %v10573
        %v10831 = vpop.f32.mrf.mxu0
        %v10832 = vadd.f32 0.0, %v10831
        %v10833 = vpop.f32.mrf.mxu0
        %v10834 = vadd.f32 0.0, %v10833
        %v10835 = vpop.f32.mrf.mxu0
        %v10836 = vpop.f32.mrf.mxu0
        %10837 = vdwg.mxu0
        %10838 = vmatprep.subr.bf16.mxu0 0
        %10839 = vmatpush1.bf16.msra.mxu0 0
        %10840 = vmatprep.subr.bf16.mxu0 0
        %10841 = vmatpush1.bf16.msra.mxu0 0
        %10842 = vmatprep.subr.bf16.mxu0 0
        %10843 = vmatpush1.bf16.msra.mxu0 0
        %10844 = vmatprep.subr.bf16.mxu0 0
        %10845 = vmatpush1.bf16.msra.mxu0 0
        %10846 = vmatprep.subr.bf16.mxu0 %v10739
        %10847 = vmatpush1.bf16.msra.mxu0 %v10738
        %10848 = vmatprep.subr.bf16.mxu0 %v10737
        %10849 = vmatpush1.bf16.msra.mxu0 %v10736
        %10850 = vmatprep.subr.bf16.mxu0 %v10735
        %10851 = vmatpush1.bf16.msra.mxu0 %v10734
        %10852 = vmatprep.subr.bf16.mxu0 %v10733
        %10853 = vmatpush1.bf16.msra.mxu0 %v10732
        %10854 = vmatprep.subr.bf16.mxu0 0
        %10855 = vmatpush2.bf16.msra.mxu0 0
        %10856 = vmatprep.subr.bf16.mxu0 0
        %10857 = vmatpush2.bf16.msra.mxu0 0
        %10858 = vmatprep.subr.bf16.mxu0 0
        %10859 = vmatpush2.bf16.msra.mxu0 0
        %10860 = vmatprep.subr.bf16.mxu0 0
        %10861 = vmatpush2.bf16.msra.mxu0 0
        %10862 = vmatprep.subr.bf16.mxu0 0
        %10863 = vmatpush2.bf16.msra.mxu0 0
        %10864 = vmatprep.subr.bf16.mxu0 0
        %10865 = vmatpush2.bf16.msra.mxu0 0
        %10866 = vmatprep.subr.bf16.mxu0 0
        %10867 = vmatpush2.bf16.msra.mxu0 0
        %10868 = vmatprep.subr.bf16.mxu0 0
        %10869 = vmatpush2.bf16.msra.mxu0 0
        %10870 = vmatprep.mubr.bf16.mxu0 0
        %10871 = vmatmul.mubr.bf16.gmra.mxu0 %v10782
        %v10872 = vpop.f32.mrf.mxu0
        %v10873 = vadd.f32 %v10822, %v10872
        %v10874 = vpop.f32.mrf.mxu0
        %v10875 = vadd.f32 %v10824, %v10874
        %v10876 = vpop.f32.mrf.mxu0
        %v10877 = vadd.f32 %v10826, %v10876
        %v10878 = vpop.f32.mrf.mxu0
        %v10879 = vadd.f32 %v10828, %v10878
        %10880 = vmatprep.mubr.bf16.mxu0 0
        %10881 = vmatmul.mubr.bf16.gmra.mxu0 %v10785
        %v10882 = vpop.f32.mrf.mxu0
        %v10883 = vadd.f32 %v10832, %v10882
        %v10884 = vpop.f32.mrf.mxu0
        %v10885 = vadd.f32 %v10834, %v10884
        %v10886 = vpop.f32.mrf.mxu0
        %v10887 = vpop.f32.mrf.mxu0
        %10888 = vdwg.mxu0
        %v10889 = vpack.c.b16 %v10477, %v10474
        %v10890 = vpack.c.b16 %v10478, %v10475
        %v10891 = vpack.c.b16 %v10479, %v10476
        %v10892 = vpack.c.b16 %v10480, %v10480
        %v10893 = vpack.c.b16 %v10481, %v10481
        %v10894 = vpack.c.b16 %v10482, %v10482
        %v10939 = vunpack.c.l.b16 %v10483
        %v10940 = vunpack.c.h.b16 %v10483
        %v10941 = vunpack.c.l.b16 %v10484
        %v10942 = vunpack.c.h.b16 %v10484
        %v10943 = vunpack.c.l.b16 %v10485
        %v10944 = vunpack.c.h.b16 %v10485
        %v10945 = vunpack.c.l.b16 %v10486
        %v10946 = vunpack.c.h.b16 %v10486
        %v10947 = vunpack.c.l.b16 %v10487
        %v10948 = vunpack.c.h.b16 %v10487
        %v10949 = vunpack.c.l.b16 %v10488
        %v10950 = vunpack.c.h.b16 %v10488
        %v10951 = vunpack.c.l.b16 %v10489
        %v10952 = vunpack.c.h.b16 %v10489
        %v10953 = vunpack.c.l.b16 %v10490
        %v10954 = vunpack.c.h.b16 %v10490
        %v10955 = vunpack.c.l.b16 %v10491
        %v10956 = vunpack.c.h.b16 %v10491
        %v10957 = vunpack.c.l.b16 %v10492
        %v10958 = vunpack.c.h.b16 %v10492
        %v10959 = vunpack.c.l.b16 %v10493
        %v10960 = vunpack.c.h.b16 %v10493
        %v10961 = vunpack.c.l.b16 %v10494
        %v10962 = vunpack.c.h.b16 %v10494
        %v10963 = vunpack.c.l.b16 %v10495
        %v10964 = vunpack.c.h.b16 %v10495
        %v10965 = vunpack.c.l.b16 %v10496
        %v10966 = vunpack.c.h.b16 %v10496
        %v10967 = vunpack.c.l.b16 %v10497
        %v10968 = vunpack.c.h.b16 %v10497
        %v10969 = vunpack.c.l.b16 %v10498
        %v10970 = vunpack.c.h.b16 %v10498
        %v10971 = vunpack.c.l.b16 %v10499
        %v10972 = vunpack.c.h.b16 %v10499
        %v10973 = vunpack.c.l.b16 %v10500
        %v10974 = vunpack.c.h.b16 %v10500
        %v10975 = vunpack.c.l.b16 %v10501
        %v10976 = vunpack.c.h.b16 %v10501
        %v10977 = vunpack.c.l.b16 %v10502
        %v10978 = vunpack.c.h.b16 %v10502
        %v10979 = vunpack.c.l.b16 %v10503
        %v10980 = vunpack.c.h.b16 %v10503
        %v10981 = vunpack.c.l.b16 %v10504
        %v10982 = vunpack.c.h.b16 %v10504
        %v10983 = vunpack.c.l.b16 %v10505
        %v10984 = vunpack.c.h.b16 %v10505
        %v10985 = vunpack.c.l.b16 %v10506
        %v10986 = vunpack.c.h.b16 %v10506
        %v10987 = vunpack.c.l.b16 %v10507
        %v10988 = vunpack.c.h.b16 %v10507
        %v10989 = vunpack.c.l.b16 %v10508
        %v10990 = vunpack.c.h.b16 %v10508
        %v10991 = vunpack.c.l.b16 %v10509
        %v10992 = vunpack.c.h.b16 %v10509
        %v10993 = vunpack.c.l.b16 %v10510
        %v10994 = vunpack.c.h.b16 %v10510
        %v10995 = vunpack.c.l.b16 %v10511
        %v10996 = vunpack.c.h.b16 %v10511
        %v10997 = vunpack.c.l.b16 %v10512
        %v10998 = vunpack.c.h.b16 %v10512
        %v10999 = vunpack.c.l.b16 %v10513
        %v11000 = vunpack.c.h.b16 %v10513
        %v11001 = vunpack.c.l.b16 %v10514
        %v11002 = vunpack.c.h.b16 %v10514
        %v11003 = vunpack.c.l.b16 %v10515
        %v11004 = vunpack.c.h.b16 %v10515
        %v11005 = vunpack.c.l.b16 %v10516
        %v11006 = vunpack.c.h.b16 %v10516
        %v11007 = vunpack.c.l.b16 %v10517
        %v11008 = vunpack.c.h.b16 %v10517
        %v11009 = vunpack.c.l.b16 %v10518
        %v11010 = vunpack.c.h.b16 %v10518
        %v11011 = vunpack.c.l.b16 %v10519
        %v11012 = vunpack.c.h.b16 %v10519
        %v11013 = vunpack.c.l.b16 %v10520
        %v11014 = vunpack.c.h.b16 %v10520
        %v11015 = vunpack.c.l.b16 %v10521
        %v11016 = vunpack.c.h.b16 %v10521
        %v11017 = vunpack.c.l.b16 %v10522
        %v11018 = vunpack.c.h.b16 %v10522
        %v11019 = vpack.c.b16 %v10941, %v10939
        %v11020 = vpack.c.b16 %v10942, %v10940
        %v11021 = vpack.c.b16 %v10945, %v10943
        %v11022 = vpack.c.b16 %v10946, %v10944
        %v11023 = vpack.c.b16 %v10949, %v10947
        %v11024 = vpack.c.b16 %v10950, %v10948
        %v11025 = vpack.c.b16 %v10953, %v10951
        %v11026 = vpack.c.b16 %v10954, %v10952
        %v11027 = vpack.c.b16 %v10957, %v10955
        %v11028 = vpack.c.b16 %v10958, %v10956
        %v11029 = vpack.c.b16 %v10961, %v10959
        %v11030 = vpack.c.b16 %v10962, %v10960
        %v11031 = vpack.c.b16 %v10965, %v10963
        %v11032 = vpack.c.b16 %v10966, %v10964
        %v11033 = vpack.c.b16 %v10969, %v10967
        %v11034 = vpack.c.b16 %v10970, %v10968
        %v11035 = vpack.c.b16 %v10973, %v10971
        %v11036 = vpack.c.b16 %v10974, %v10972
        %v11037 = vpack.c.b16 %v10977, %v10975
        %v11038 = vpack.c.b16 %v10978, %v10976
        %v11039 = vpack.c.b16 %v10981, %v10979
        %v11040 = vpack.c.b16 %v10982, %v10980
        %v11041 = vpack.c.b16 %v10985, %v10983
        %v11042 = vpack.c.b16 %v10986, %v10984
        %v11043 = vpack.c.b16 %v10989, %v10987
        %v11044 = vpack.c.b16 %v10990, %v10988
        %v11045 = vpack.c.b16 %v10993, %v10991
        %v11046 = vpack.c.b16 %v10994, %v10992
        %v11047 = vpack.c.b16 %v10997, %v10995
        %v11048 = vpack.c.b16 %v10998, %v10996
        %v11049 = vpack.c.b16 %v11001, %v10999
        %v11050 = vpack.c.b16 %v11002, %v11000
        %v11051 = vpack.c.b16 %v11005, %v11003
        %v11052 = vpack.c.b16 %v11006, %v11004
        %v11053 = vpack.c.b16 %v11009, %v11007
        %v11054 = vpack.c.b16 %v11010, %v11008
        %v11055 = vpack.c.b16 %v11013, %v11011
        %v11056 = vpack.c.b16 %v11014, %v11012
        %v11057 = vpack.c.b16 %v11017, %v11015
        %v11058 = vpack.c.b16 %v11018, %v11016
        %v11100 = vsel %vm10780, %v10891, 0
        %v11103 = vsel %vm10780, %v10894, 0
        %11105 = vmatprep.subr.bf16.mxu0 %v11034
        %11106 = vmatpush1.bf16.msra.mxu0 %v11033
        %11107 = vmatprep.subr.bf16.mxu0 %v11032
        %11108 = vmatpush1.bf16.msra.mxu0 %v11031
        %11109 = vmatprep.subr.bf16.mxu0 %v11030
        %11110 = vmatpush1.bf16.msra.mxu0 %v11029
        %11111 = vmatprep.subr.bf16.mxu0 %v11028
        %11112 = vmatpush1.bf16.msra.mxu0 %v11027
        %11113 = vmatprep.subr.bf16.mxu0 %v11026
        %11114 = vmatpush1.bf16.msra.mxu0 %v11025
        %11115 = vmatprep.subr.bf16.mxu0 %v11024
        %11116 = vmatpush1.bf16.msra.mxu0 %v11023
        %11117 = vmatprep.subr.bf16.mxu0 %v11022
        %11118 = vmatpush1.bf16.msra.mxu0 %v11021
        %11119 = vmatprep.subr.bf16.mxu0 %v11020
        %11120 = vmatpush1.bf16.msra.mxu0 %v11019
        %11121 = vmatprep.subr.bf16.mxu0 %v11050
        %11122 = vmatpush2.bf16.msra.mxu0 %v11049
        %11123 = vmatprep.subr.bf16.mxu0 %v11048
        %11124 = vmatpush2.bf16.msra.mxu0 %v11047
        %11125 = vmatprep.subr.bf16.mxu0 %v11046
        %11126 = vmatpush2.bf16.msra.mxu0 %v11045
        %11127 = vmatprep.subr.bf16.mxu0 %v11044
        %11128 = vmatpush2.bf16.msra.mxu0 %v11043
        %11129 = vmatprep.subr.bf16.mxu0 %v11042
        %11130 = vmatpush2.bf16.msra.mxu0 %v11041
        %11131 = vmatprep.subr.bf16.mxu0 %v11040
        %11132 = vmatpush2.bf16.msra.mxu0 %v11039
        %11133 = vmatprep.subr.bf16.mxu0 %v11038
        %11134 = vmatpush2.bf16.msra.mxu0 %v11037
        %11135 = vmatprep.subr.bf16.mxu0 %v11036
        %11136 = vmatpush2.bf16.msra.mxu0 %v11035
        %11137 = vmatprep.mubr.bf16.mxu0 %v10890
        %11138 = vmatmul.mubr.bf16.gmra.mxu0 %v10889
        %v11139 = vpop.f32.mrf.mxu0
        %v11140 = vadd.f32 %v10873, %v11139
        %v11141 = vpop.f32.mrf.mxu0
        %v11142 = vadd.f32 %v10875, %v11141
        %v11143 = vpop.f32.mrf.mxu0
        %v11144 = vadd.f32 %v10877, %v11143
        %v11145 = vpop.f32.mrf.mxu0
        %v11146 = vadd.f32 %v10879, %v11145
        %11147 = vmatprep.mubr.bf16.mxu0 %v10893
        %11148 = vmatmul.mubr.bf16.gmra.mxu0 %v10892
        %v11149 = vpop.f32.mrf.mxu0
        %v11150 = vadd.f32 %v10883, %v11149
        %v11151 = vpop.f32.mrf.mxu0
        %v11152 = vadd.f32 %v10885, %v11151
        %v11153 = vpop.f32.mrf.mxu0
        %v11154 = vpop.f32.mrf.mxu0
        %11155 = vdwg.mxu0
        %11156 = vmatprep.subr.bf16.mxu0 0
        %11157 = vmatpush1.bf16.msra.mxu0 0
        %11158 = vmatprep.subr.bf16.mxu0 0
        %11159 = vmatpush1.bf16.msra.mxu0 0
        %11160 = vmatprep.subr.bf16.mxu0 0
        %11161 = vmatpush1.bf16.msra.mxu0 0
        %11162 = vmatprep.subr.bf16.mxu0 0
        %11163 = vmatpush1.bf16.msra.mxu0 0
        %11164 = vmatprep.subr.bf16.mxu0 %v11058
        %11165 = vmatpush1.bf16.msra.mxu0 %v11057
        %11166 = vmatprep.subr.bf16.mxu0 %v11056
        %11167 = vmatpush1.bf16.msra.mxu0 %v11055
        %11168 = vmatprep.subr.bf16.mxu0 %v11054
        %11169 = vmatpush1.bf16.msra.mxu0 %v11053
        %11170 = vmatprep.subr.bf16.mxu0 %v11052
        %11171 = vmatpush1.bf16.msra.mxu0 %v11051
        %11172 = vmatprep.subr.bf16.mxu0 0
        %11173 = vmatpush2.bf16.msra.mxu0 0
        %11174 = vmatprep.subr.bf16.mxu0 0
        %11175 = vmatpush2.bf16.msra.mxu0 0
        %11176 = vmatprep.subr.bf16.mxu0 0
        %11177 = vmatpush2.bf16.msra.mxu0 0
        %11178 = vmatprep.subr.bf16.mxu0 0
        %11179 = vmatpush2.bf16.msra.mxu0 0
        %11180 = vmatprep.subr.bf16.mxu0 0
        %11181 = vmatpush2.bf16.msra.mxu0 0
        %11182 = vmatprep.subr.bf16.mxu0 0
        %11183 = vmatpush2.bf16.msra.mxu0 0
        %11184 = vmatprep.subr.bf16.mxu0 0
        %11185 = vmatpush2.bf16.msra.mxu0 0
        %11186 = vmatprep.subr.bf16.mxu0 0
        %11187 = vmatpush2.bf16.msra.mxu0 0
        %11188 = vmatprep.mubr.bf16.mxu0 0
        %11189 = vmatmul.mubr.bf16.gmra.mxu0 %v11100
        %v11190 = vpop.f32.mrf.mxu0
        %v11191 = vadd.f32 %v11140, %v11190
        %v11192 = vpop.f32.mrf.mxu0
        %v11193 = vadd.f32 %v11142, %v11192
        %v11194 = vpop.f32.mrf.mxu0
        %v11195 = vadd.f32 %v11144, %v11194
        %v11196 = vpop.f32.mrf.mxu0
        %v11197 = vadd.f32 %v11146, %v11196
        %11198 = vmatprep.mubr.bf16.mxu0 0
        %11199 = vmatmul.mubr.bf16.gmra.mxu0 %v11103
        %v11200 = vpop.f32.mrf.mxu0
        %v11201 = vadd.f32 %v11150, %v11200
        %v11202 = vpop.f32.mrf.mxu0
        %v11203 = vadd.f32 %v11152, %v11202
        %v11204 = vpop.f32.mrf.mxu0
        %v11205 = vpop.f32.mrf.mxu0
        %11206 = vdwg.mxu0
        %v11210 = vunpack.c.l.b16 %v10462
        %v11211 = vunpack.c.l.b16 %v10463
        %v11212 = vunpack.c.l.b16 %v10464
        %s11213 = scalar_lea.vmem %s9, 640
        %v11214 = vld [vmem:[%s11213] sm:$0xff]
        %v11215 = vld [vmem:[%s11213 + $0x8] sm:$0xff]
        %v11216 = vld [vmem:[%s11213 + $0x10] sm:$0xff]
        %v11217 = vld [vmem:[%s11213 + $0x18] sm:$0xff]
        %v11218 = vld [vmem:[%s11213 + $0x20] sm:$0xff]
        %v11219 = vld [vmem:[%s11213 + $0x28] sm:$0xff]
        %v11220 = vld [vmem:[%s11213 + $0x30] sm:$0xff]
        %v11221 = vld [vmem:[%s11213 + $0x38] sm:$0xff]
        %v11222 = vld [vmem:[%s11213 + $0x40] sm:$0xff]
        %v11223 = vld [vmem:[%s11213 + $0x48] sm:$0xff]
        %v11224 = vld [vmem:[%s11213 + $0x50] sm:$0xff]
        %v11225 = vld [vmem:[%s11213 + $0x58] sm:$0xff]
        %v11226 = vld [vmem:[%s11213 + $0x60] sm:$0xff]
        %v11227 = vld [vmem:[%s11213 + $0x68] sm:$0xff]
        %v11228 = vld [vmem:[%s11213 + $0x70] sm:$0xff]
        %v11229 = vld [vmem:[%s11213 + $0x78] sm:$0xff]
        %v11230 = vld [vmem:[%s11213 + $0x80] sm:$0xff]
        %v11231 = vld [vmem:[%s11213 + $0x88] sm:$0xff]
        %v11232 = vld [vmem:[%s11213 + $0x90] sm:$0xff]
        %v11233 = vld [vmem:[%s11213 + $0x98] sm:$0xff]
        %v11234 = vld [vmem:[%s11213 + $0xa0] sm:$0xff]
        %v11235 = vld [vmem:[%s11213 + $0xa8] sm:$0xff]
        %v11236 = vld [vmem:[%s11213 + $0xb0] sm:$0xff]
        %v11237 = vld [vmem:[%s11213 + $0xb8] sm:$0xff]
        %v11238 = vld [vmem:[%s11213 + $0xc0] sm:$0xff]
        %v11239 = vld [vmem:[%s11213 + $0xc8] sm:$0xff]
        %v11240 = vld [vmem:[%s11213 + $0xd0] sm:$0xff]
        %v11241 = vld [vmem:[%s11213 + $0xd8] sm:$0xff]
        %v11242 = vld [vmem:[%s11213 + $0xe0] sm:$0xff]
        %v11243 = vld [vmem:[%s11213 + $0xe8] sm:$0xff]
        %v11244 = vld [vmem:[%s11213 + $0xf0] sm:$0xff]
        %v11245 = vld [vmem:[%s11213 + $0xf8] sm:$0xff]
        %v11246 = vld [vmem:[%s11213 + $0x100] sm:$0xff]
        %v11247 = vld [vmem:[%s11213 + $0x108] sm:$0xff]
        %v11248 = vld [vmem:[%s11213 + $0x110] sm:$0xff]
        %v11249 = vld [vmem:[%s11213 + $0x118] sm:$0xff]
        %v11250 = vld [vmem:[%s11213 + $0x120] sm:$0xff]
        %v11251 = vld [vmem:[%s11213 + $0x128] sm:$0xff]
        %v11252 = vld [vmem:[%s11213 + $0x130] sm:$0xff]
        %v11253 = vld [vmem:[%s11213 + $0x138] sm:$0xff]
        %v11254 = vpack.c.b16 %v10526, %v10480
        %v11255 = vpack.c.b16 %v10527, %v10481
        %v11256 = vpack.c.b16 %v10528, %v10482
        %v11257 = vpack.c.b16 %v11210, %v11210
        %v11258 = vpack.c.b16 %v11211, %v11211
        %v11259 = vpack.c.b16 %v11212, %v11212
        %v11304 = vunpack.c.l.b16 %v11214
        %v11305 = vunpack.c.h.b16 %v11214
        %v11306 = vunpack.c.l.b16 %v11215
        %v11307 = vunpack.c.h.b16 %v11215
        %v11308 = vunpack.c.l.b16 %v11216
        %v11309 = vunpack.c.h.b16 %v11216
        %v11310 = vunpack.c.l.b16 %v11217
        %v11311 = vunpack.c.h.b16 %v11217
        %v11312 = vunpack.c.l.b16 %v11218
        %v11313 = vunpack.c.h.b16 %v11218
        %v11314 = vunpack.c.l.b16 %v11219
        %v11315 = vunpack.c.h.b16 %v11219
        %v11316 = vunpack.c.l.b16 %v11220
        %v11317 = vunpack.c.h.b16 %v11220
        %v11318 = vunpack.c.l.b16 %v11221
        %v11319 = vunpack.c.h.b16 %v11221
        %v11320 = vunpack.c.l.b16 %v11222
        %v11321 = vunpack.c.h.b16 %v11222
        %v11322 = vunpack.c.l.b16 %v11223
        %v11323 = vunpack.c.h.b16 %v11223
        %v11324 = vunpack.c.l.b16 %v11224
        %v11325 = vunpack.c.h.b16 %v11224
        %v11326 = vunpack.c.l.b16 %v11225
        %v11327 = vunpack.c.h.b16 %v11225
        %v11328 = vunpack.c.l.b16 %v11226
        %v11329 = vunpack.c.h.b16 %v11226
        %v11330 = vunpack.c.l.b16 %v11227
        %v11331 = vunpack.c.h.b16 %v11227
        %v11332 = vunpack.c.l.b16 %v11228
        %v11333 = vunpack.c.h.b16 %v11228
        %v11334 = vunpack.c.l.b16 %v11229
        %v11335 = vunpack.c.h.b16 %v11229
        %v11336 = vunpack.c.l.b16 %v11230
        %v11337 = vunpack.c.h.b16 %v11230
        %v11338 = vunpack.c.l.b16 %v11231
        %v11339 = vunpack.c.h.b16 %v11231
        %v11340 = vunpack.c.l.b16 %v11232
        %v11341 = vunpack.c.h.b16 %v11232
        %v11342 = vunpack.c.l.b16 %v11233
        %v11343 = vunpack.c.h.b16 %v11233
        %v11344 = vunpack.c.l.b16 %v11234
        %v11345 = vunpack.c.h.b16 %v11234
        %v11346 = vunpack.c.l.b16 %v11235
        %v11347 = vunpack.c.h.b16 %v11235
        %v11348 = vunpack.c.l.b16 %v11236
        %v11349 = vunpack.c.h.b16 %v11236
        %v11350 = vunpack.c.l.b16 %v11237
        %v11351 = vunpack.c.h.b16 %v11237
        %v11352 = vunpack.c.l.b16 %v11238
        %v11353 = vunpack.c.h.b16 %v11238
        %v11354 = vunpack.c.l.b16 %v11239
        %v11355 = vunpack.c.h.b16 %v11239
        %v11356 = vunpack.c.l.b16 %v11240
        %v11357 = vunpack.c.h.b16 %v11240
        %v11358 = vunpack.c.l.b16 %v11241
        %v11359 = vunpack.c.h.b16 %v11241
        %v11360 = vunpack.c.l.b16 %v11242
        %v11361 = vunpack.c.h.b16 %v11242
        %v11362 = vunpack.c.l.b16 %v11243
        %v11363 = vunpack.c.h.b16 %v11243
        %v11364 = vunpack.c.l.b16 %v11244
        %v11365 = vunpack.c.h.b16 %v11244
        %v11366 = vunpack.c.l.b16 %v11245
        %v11367 = vunpack.c.h.b16 %v11245
        %v11368 = vunpack.c.l.b16 %v11246
        %v11369 = vunpack.c.h.b16 %v11246
        %v11370 = vunpack.c.l.b16 %v11247
        %v11371 = vunpack.c.h.b16 %v11247
        %v11372 = vunpack.c.l.b16 %v11248
        %v11373 = vunpack.c.h.b16 %v11248
        %v11374 = vunpack.c.l.b16 %v11249
        %v11375 = vunpack.c.h.b16 %v11249
        %v11376 = vunpack.c.l.b16 %v11250
        %v11377 = vunpack.c.h.b16 %v11250
        %v11378 = vunpack.c.l.b16 %v11251
        %v11379 = vunpack.c.h.b16 %v11251
        %v11380 = vunpack.c.l.b16 %v11252
        %v11381 = vunpack.c.h.b16 %v11252
        %v11382 = vunpack.c.l.b16 %v11253
        %v11383 = vunpack.c.h.b16 %v11253
        %v11384 = vpack.c.b16 %v11306, %v11304
        %v11385 = vpack.c.b16 %v11307, %v11305
        %v11386 = vpack.c.b16 %v11310, %v11308
        %v11387 = vpack.c.b16 %v11311, %v11309
        %v11388 = vpack.c.b16 %v11314, %v11312
        %v11389 = vpack.c.b16 %v11315, %v11313
        %v11390 = vpack.c.b16 %v11318, %v11316
        %v11391 = vpack.c.b16 %v11319, %v11317
        %v11392 = vpack.c.b16 %v11322, %v11320
        %v11393 = vpack.c.b16 %v11323, %v11321
        %v11394 = vpack.c.b16 %v11326, %v11324
        %v11395 = vpack.c.b16 %v11327, %v11325
        %v11396 = vpack.c.b16 %v11330, %v11328
        %v11397 = vpack.c.b16 %v11331, %v11329
        %v11398 = vpack.c.b16 %v11334, %v11332
        %v11399 = vpack.c.b16 %v11335, %v11333
        %v11400 = vpack.c.b16 %v11338, %v11336
        %v11401 = vpack.c.b16 %v11339, %v11337
        %v11402 = vpack.c.b16 %v11342, %v11340
        %v11403 = vpack.c.b16 %v11343, %v11341
        %v11404 = vpack.c.b16 %v11346, %v11344
        %v11405 = vpack.c.b16 %v11347, %v11345
        %v11406 = vpack.c.b16 %v11350, %v11348
        %v11407 = vpack.c.b16 %v11351, %v11349
        %v11408 = vpack.c.b16 %v11354, %v11352
        %v11409 = vpack.c.b16 %v11355, %v11353
        %v11410 = vpack.c.b16 %v11358, %v11356
        %v11411 = vpack.c.b16 %v11359, %v11357
        %v11412 = vpack.c.b16 %v11362, %v11360
        %v11413 = vpack.c.b16 %v11363, %v11361
        %v11414 = vpack.c.b16 %v11366, %v11364
        %v11415 = vpack.c.b16 %v11367, %v11365
        %v11416 = vpack.c.b16 %v11370, %v11368
        %v11417 = vpack.c.b16 %v11371, %v11369
        %v11418 = vpack.c.b16 %v11374, %v11372
        %v11419 = vpack.c.b16 %v11375, %v11373
        %v11420 = vpack.c.b16 %v11378, %v11376
        %v11421 = vpack.c.b16 %v11379, %v11377
        %v11422 = vpack.c.b16 %v11382, %v11380
        %v11423 = vpack.c.b16 %v11383, %v11381
        %v11465 = vsel %vm10780, %v11256, 0
        %v11468 = vsel %vm10780, %v11259, 0
        %11470 = vmatprep.subr.bf16.mxu0 %v11399
        %11471 = vmatpush1.bf16.msra.mxu0 %v11398
        %11472 = vmatprep.subr.bf16.mxu0 %v11397
        %11473 = vmatpush1.bf16.msra.mxu0 %v11396
        %11474 = vmatprep.subr.bf16.mxu0 %v11395
        %11475 = vmatpush1.bf16.msra.mxu0 %v11394
        %11476 = vmatprep.subr.bf16.mxu0 %v11393
        %11477 = vmatpush1.bf16.msra.mxu0 %v11392
        %11478 = vmatprep.subr.bf16.mxu0 %v11391
        %11479 = vmatpush1.bf16.msra.mxu0 %v11390
        %11480 = vmatprep.subr.bf16.mxu0 %v11389
        %11481 = vmatpush1.bf16.msra.mxu0 %v11388
        %11482 = vmatprep.subr.bf16.mxu0 %v11387
        %11483 = vmatpush1.bf16.msra.mxu0 %v11386
        %11484 = vmatprep.subr.bf16.mxu0 %v11385
        %11485 = vmatpush1.bf16.msra.mxu0 %v11384
        %11486 = vmatprep.subr.bf16.mxu0 %v11415
        %11487 = vmatpush2.bf16.msra.mxu0 %v11414
        %11488 = vmatprep.subr.bf16.mxu0 %v11413
        %11489 = vmatpush2.bf16.msra.mxu0 %v11412
        %11490 = vmatprep.subr.bf16.mxu0 %v11411
        %11491 = vmatpush2.bf16.msra.mxu0 %v11410
        %11492 = vmatprep.subr.bf16.mxu0 %v11409
        %11493 = vmatpush2.bf16.msra.mxu0 %v11408
        %11494 = vmatprep.subr.bf16.mxu0 %v11407
        %11495 = vmatpush2.bf16.msra.mxu0 %v11406
        %11496 = vmatprep.subr.bf16.mxu0 %v11405
        %11497 = vmatpush2.bf16.msra.mxu0 %v11404
        %11498 = vmatprep.subr.bf16.mxu0 %v11403
        %11499 = vmatpush2.bf16.msra.mxu0 %v11402
        %11500 = vmatprep.subr.bf16.mxu0 %v11401
        %11501 = vmatpush2.bf16.msra.mxu0 %v11400
        %11502 = vmatprep.mubr.bf16.mxu0 %v11255
        %11503 = vmatmul.mubr.bf16.gmra.mxu0 %v11254
        %v11504 = vpop.f32.mrf.mxu0
        %v11505 = vadd.f32 0.0, %v11504
        %v11506 = vpop.f32.mrf.mxu0
        %v11507 = vadd.f32 0.0, %v11506
        %v11508 = vpop.f32.mrf.mxu0
        %v11509 = vadd.f32 0.0, %v11508
        %v11510 = vpop.f32.mrf.mxu0
        %v11511 = vadd.f32 0.0, %v11510
        %11512 = vmatprep.mubr.bf16.mxu0 %v11258
        %11513 = vmatmul.mubr.bf16.gmra.mxu0 %v11257
        %v11514 = vpop.f32.mrf.mxu0
        %v11515 = vadd.f32 0.0, %v11514
        %v11516 = vpop.f32.mrf.mxu0
        %v11517 = vadd.f32 0.0, %v11516
        %v11518 = vpop.f32.mrf.mxu0
        %v11519 = vpop.f32.mrf.mxu0
        %11520 = vdwg.mxu0
        %11521 = vmatprep.subr.bf16.mxu0 0
        %11522 = vmatpush1.bf16.msra.mxu0 0
        %11523 = vmatprep.subr.bf16.mxu0 0
        %11524 = vmatpush1.bf16.msra.mxu0 0
        %11525 = vmatprep.subr.bf16.mxu0 0
        %11526 = vmatpush1.bf16.msra.mxu0 0
        %11527 = vmatprep.subr.bf16.mxu0 0
        %11528 = vmatpush1.bf16.msra.mxu0 0
        %11529 = vmatprep.subr.bf16.mxu0 %v11423
        %11530 = vmatpush1.bf16.msra.mxu0 %v11422
        %11531 = vmatprep.subr.bf16.mxu0 %v11421
        %11532 = vmatpush1.bf16.msra.mxu0 %v11420
        %11533 = vmatprep.subr.bf16.mxu0 %v11419
        %11534 = vmatpush1.bf16.msra.mxu0 %v11418
        %11535 = vmatprep.subr.bf16.mxu0 %v11417
        %11536 = vmatpush1.bf16.msra.mxu0 %v11416
        %11537 = vmatprep.subr.bf16.mxu0 0
        %11538 = vmatpush2.bf16.msra.mxu0 0
        %11539 = vmatprep.subr.bf16.mxu0 0
        %11540 = vmatpush2.bf16.msra.mxu0 0
        %11541 = vmatprep.subr.bf16.mxu0 0
        %11542 = vmatpush2.bf16.msra.mxu0 0
        %11543 = vmatprep.subr.bf16.mxu0 0
        %11544 = vmatpush2.bf16.msra.mxu0 0
        %11545 = vmatprep.subr.bf16.mxu0 0
        %11546 = vmatpush2.bf16.msra.mxu0 0
        %11547 = vmatprep.subr.bf16.mxu0 0
        %11548 = vmatpush2.bf16.msra.mxu0 0
        %11549 = vmatprep.subr.bf16.mxu0 0
        %11550 = vmatpush2.bf16.msra.mxu0 0
        %11551 = vmatprep.subr.bf16.mxu0 0
        %11552 = vmatpush2.bf16.msra.mxu0 0
        %11553 = vmatprep.mubr.bf16.mxu0 0
        %11554 = vmatmul.mubr.bf16.gmra.mxu0 %v11465
        %v11555 = vpop.f32.mrf.mxu0
        %v11556 = vadd.f32 %v11505, %v11555
        %v11557 = vpop.f32.mrf.mxu0
        %v11558 = vadd.f32 %v11507, %v11557
        %v11559 = vpop.f32.mrf.mxu0
        %v11560 = vadd.f32 %v11509, %v11559
        %v11561 = vpop.f32.mrf.mxu0
        %v11562 = vadd.f32 %v11511, %v11561
        %11563 = vmatprep.mubr.bf16.mxu0 0
        %11564 = vmatmul.mubr.bf16.gmra.mxu0 %v11468
        %v11565 = vpop.f32.mrf.mxu0
        %v11566 = vadd.f32 %v11515, %v11565
        %v11567 = vpop.f32.mrf.mxu0
        %v11568 = vadd.f32 %v11517, %v11567
        %v11569 = vpop.f32.mrf.mxu0
        %v11570 = vpop.f32.mrf.mxu0
        %11571 = vdwg.mxu0
        %v11572 = vadd.f32 %v11191, %v11556
        %v11573 = vadd.f32 %v11193, %v11558
        %v11574 = vadd.f32 %v11195, %v11560
        %v11575 = vadd.f32 %v11197, %v11562
        %v11576 = vadd.f32 %v11201, %v11566
        %v11577 = vadd.f32 %v11203, %v11568
        %v11578 = vld [vmem:[%s10] sm:$0x3]
        %v11580 = vlaneseq
        %v11581 = vshrl.u32 %v11580, 7
        %v11582 = vsub.s32 0, %v11581
        %v11583 = vrot.slane %v11578, %v11582
        %v11584 = vlaneseq
        %v11585 = vshrl.u32 %v11584, 7
        %v11586 = vsub.s32 1, %v11585
        %v11587 = vrot.slane %v11578, %v11586
        %v11590 = vadd.f32 %v11572, %v11583
        %v11591 = vadd.f32 %v11573, %v11587
        %v11592 = vadd.f32 %v11574, %v11583
        %v11593 = vadd.f32 %v11575, %v11587
        %v11594 = vadd.f32 %v11576, %v11583
        %v11595 = vadd.f32 %v11577, %v11587
        %v11596 = vmax.f32 %v11590, 0.0
        %v11597 = vmax.f32 %v11591, 0.0
        %v11598 = vmax.f32 %v11592, 0.0
        %v11599 = vmax.f32 %v11593, 0.0
        %v11600 = vmax.f32 %v11594, 0.0
        %v11601 = vmax.f32 %v11595, 0.0
        %v11602 = vld [vmem:[%s11] sm:$0x3]
        %v11604 = vlaneseq
        %v11605 = vshrl.u32 %v11604, 7
        %v11606 = vsub.s32 0, %v11605
        %v11607 = vrot.slane %v11602, %v11606
        %v11608 = vlaneseq
        %v11609 = vshrl.u32 %v11608, 7
        %v11610 = vsub.s32 1, %v11609
        %v11611 = vrot.slane %v11602, %v11610
        %v11614 = vmul.f32 %v11596, %v11607
        %v11615 = vmul.f32 %v11597, %v11611
        %v11616 = vmul.f32 %v11598, %v11607
        %v11617 = vmul.f32 %v11599, %v11611
        %v11618 = vmul.f32 %v11600, %v11607
        %v11619 = vmul.f32 %v11601, %v11611
        %v11620 = vld [vmem:[%s12] sm:$0x3]
        %v11622 = vlaneseq
        %v11623 = vshrl.u32 %v11622, 7
        %v11624 = vsub.s32 0, %v11623
        %v11625 = vrot.slane %v11620, %v11624
        %v11626 = vlaneseq
        %v11627 = vshrl.u32 %v11626, 7
        %v11628 = vsub.s32 1, %v11627
        %v11629 = vrot.slane %v11620, %v11628
        %v11632 = vadd.f32 %v11614, %v11625
        %v11633 = vadd.f32 %v11615, %v11629
        %v11634 = vadd.f32 %v11616, %v11625
        %v11635 = vadd.f32 %v11617, %v11629
        %v11636 = vadd.f32 %v11618, %v11625
        %v11637 = vadd.f32 %v11619, %v11629
        %v11638 = vmax.f32 %v11632, %v11634
        %v11639 = vmax.f32 %v11633, %v11635
        %v11640 = vmax.f32 %v11638, %v11636
        %v11641 = vmax.f32 %v11639, %v11637
        %v11642 = vpack.c.bf16 %v11640, %v11640
        %v11643 = vpack.c.bf16 %v11641, %v11641
        %v11644 = vld [vmem:[%s13] sm:$0xf]
        %v11645 = vld [vmem:[%s13 + $0x4] sm:$0xf]
        %v11646 = vld [vmem:[%s13 + $0x8] sm:$0xf]
        %v11647 = vld [vmem:[%s13 + $0xc] sm:$0xf]
        %v11648 = vld [vmem:[%s13 + $0x10] sm:$0xf]
        %v11649 = vld [vmem:[%s13 + $0x14] sm:$0xf]
        %v11650 = vld [vmem:[%s13 + $0x18] sm:$0xf]
        %v11651 = vld [vmem:[%s13 + $0x1c] sm:$0xf]
        %v11652 = vld [vmem:[%s13 + $0x20] sm:$0xf]
        %v11653 = vld [vmem:[%s13 + $0x24] sm:$0xf]
        %v11654 = vld [vmem:[%s13 + $0x28] sm:$0xf]
        %v11655 = vld [vmem:[%s13 + $0x2c] sm:$0xf]
        %v11656 = vld [vmem:[%s13 + $0x30] sm:$0xf]
        %v11657 = vld [vmem:[%s13 + $0x34] sm:$0xf]
        %v11658 = vld [vmem:[%s13 + $0x38] sm:$0xf]
        %v11659 = vld [vmem:[%s13 + $0x3c] sm:$0xf]
        %v11660 = vld [vmem:[%s13 + $0x40] sm:$0xf]
        %v11661 = vld [vmem:[%s13 + $0x44] sm:$0xf]
        %v11662 = vld [vmem:[%s13 + $0x48] sm:$0xf]
        %v11663 = vld [vmem:[%s13 + $0x4c] sm:$0xf]
        %v11664 = vld [vmem:[%s14] sm:$0x1]
        %v11666 = vlaneseq
        %v11667 = vshrl.u32 %v11666, 7
        %v11668 = vsub.s32 0, %v11667
        %v11669 = vrot.slane %v11664, %v11668
        %v11691 = vunpack.c.l.b16 %v11644
        %v11692 = vunpack.c.l.b16 %v11645
        %v11693 = vunpack.c.l.b16 %v11646
        %v11694 = vunpack.c.l.b16 %v11647
        %v11695 = vunpack.c.l.b16 %v11648
        %v11696 = vunpack.c.l.b16 %v11649
        %v11697 = vunpack.c.l.b16 %v11650
        %v11698 = vunpack.c.l.b16 %v11651
        %v11699 = vunpack.c.l.b16 %v11652
        %v11700 = vunpack.c.l.b16 %v11653
        %v11701 = vunpack.c.l.b16 %v11654
        %v11702 = vunpack.c.l.b16 %v11655
        %v11703 = vunpack.c.l.b16 %v11656
        %v11704 = vunpack.c.l.b16 %v11657
        %v11705 = vunpack.c.l.b16 %v11658
        %v11706 = vunpack.c.l.b16 %v11659
        %v11707 = vunpack.c.l.b16 %v11660
        %v11708 = vunpack.c.l.b16 %v11661
        %v11709 = vunpack.c.l.b16 %v11662
        %v11710 = vunpack.c.l.b16 %v11663
        %v11711 = vpack.c.b16 %v11692, %v11691
        %v11712 = vpack.c.b16 %v11694, %v11693
        %v11713 = vpack.c.b16 %v11696, %v11695
        %v11714 = vpack.c.b16 %v11698, %v11697
        %v11715 = vpack.c.b16 %v11700, %v11699
        %v11716 = vpack.c.b16 %v11702, %v11701
        %v11717 = vpack.c.b16 %v11704, %v11703
        %v11718 = vpack.c.b16 %v11706, %v11705
        %v11719 = vpack.c.b16 %v11708, %v11707
        %v11720 = vpack.c.b16 %v11710, %v11709
        %vm11731 = vcmask 261120
        %v11733 = vsel %vm11731, %v11643, 0
        %11735 = vmatprep.subr.bf16.mxu0 0
        %11736 = vmatpush1.bf16.msra.mxu0 %v11718
        %11737 = vmatprep.subr.bf16.mxu0 0
        %11738 = vmatpush1.bf16.msra.mxu0 %v11717
        %11739 = vmatprep.subr.bf16.mxu0 0
        %11740 = vmatpush1.bf16.msra.mxu0 %v11716
        %11741 = vmatprep.subr.bf16.mxu0 0
        %11742 = vmatpush1.bf16.msra.mxu0 %v11715
        %11743 = vmatprep.subr.bf16.mxu0 0
        %11744 = vmatpush1.bf16.msra.mxu0 %v11714
        %11745 = vmatprep.subr.bf16.mxu0 0
        %11746 = vmatpush1.bf16.msra.mxu0 %v11713
        %11747 = vmatprep.subr.bf16.mxu0 0
        %11748 = vmatpush1.bf16.msra.mxu0 %v11712
        %11749 = vmatprep.subr.bf16.mxu0 0
        %11750 = vmatpush1.bf16.msra.mxu0 %v11711
        %11751 = vmatprep.subr.bf16.mxu0 0
        %11752 = vmatpush2.bf16.msra.mxu0 0
        %11753 = vmatprep.subr.bf16.mxu0 0
        %11754 = vmatpush2.bf16.msra.mxu0 0
        %11755 = vmatprep.subr.bf16.mxu0 0
        %11756 = vmatpush2.bf16.msra.mxu0 0
        %11757 = vmatprep.subr.bf16.mxu0 0
        %11758 = vmatpush2.bf16.msra.mxu0 0
        %11759 = vmatprep.subr.bf16.mxu0 0
        %11760 = vmatpush2.bf16.msra.mxu0 0
        %11761 = vmatprep.subr.bf16.mxu0 0
        %11762 = vmatpush2.bf16.msra.mxu0 0
        %11763 = vmatprep.subr.bf16.mxu0 0
        %11764 = vmatpush2.bf16.msra.mxu0 %v11720
        %11765 = vmatprep.subr.bf16.mxu0 0
        %11766 = vmatpush2.bf16.msra.mxu0 %v11719
        %11767 = vmatprep.mubr.bf16.mxu0 %v11733
        %11768 = vmatmul.mubr.bf16.gmra.mxu0 %v11642
        %v11769 = vpop.f32.mrf.mxu0
        %v11770 = vadd.f32 %v11669, %v11769
        %v11771 = vpop.f32.mrf.mxu0
        %v11772 = vpop.f32.mrf.mxu0
        %v11773 = vpop.f32.mrf.mxu0
        %11774 = vdwg.mxu0
        %v11775 = vtanh.pop %v11770
        %11776 = vst [vmem:[%s579] sm:$0xff] %v11775
        %v11777 = vpack.c.bf16 %v11775, %v11775
        %v11778 = vld [vmem:[%s15] sm:$0xf]
        %v11779 = vld [vmem:[%s15 + $0x4] sm:$0xf]
        %v11780 = vld [vmem:[%s15 + $0x8] sm:$0xf]
        %v11781 = vld [vmem:[%s15 + $0xc] sm:$0xf]
        %v11782 = vld [vmem:[%s15 + $0x10] sm:$0xf]
        %v11783 = vld [vmem:[%s15 + $0x14] sm:$0xf]
        %v11784 = vld [vmem:[%s15 + $0x18] sm:$0xf]
        %v11785 = vld [vmem:[%s15 + $0x1c] sm:$0xf]
        %v11786 = vld [vmem:[%s15 + $0x20] sm:$0xf]
        %v11787 = vld [vmem:[%s15 + $0x24] sm:$0xf]
        %v11788 = vld [vmem:[%s15 + $0x28] sm:$0xf]
        %v11789 = vld [vmem:[%s15 + $0x2c] sm:$0xf]
        %v11790 = vld [vmem:[%s15 + $0x30] sm:$0xf]
        %v11791 = vld [vmem:[%s15 + $0x34] sm:$0xf]
        %v11792 = vld [vmem:[%s15 + $0x38] sm:$0xf]
        %v11793 = vld [vmem:[%s15 + $0x3c] sm:$0xf]
        %v11794 = vld [vmem:[%s16] sm:$0x1]
        %v11796 = vlaneseq
        %v11797 = vshrl.u32 %v11796, 7
        %v11798 = vsub.s32 0, %v11797
        %v11799 = vrot.slane %v11794, %v11798
        %v11817 = vunpack.c.l.b16 %v11778
        %v11818 = vunpack.c.l.b16 %v11779
        %v11819 = vunpack.c.l.b16 %v11780
        %v11820 = vunpack.c.l.b16 %v11781
        %v11821 = vunpack.c.l.b16 %v11782
        %v11822 = vunpack.c.l.b16 %v11783
        %v11823 = vunpack.c.l.b16 %v11784
        %v11824 = vunpack.c.l.b16 %v11785
        %v11825 = vunpack.c.l.b16 %v11786
        %v11826 = vunpack.c.l.b16 %v11787
        %v11827 = vunpack.c.l.b16 %v11788
        %v11828 = vunpack.c.l.b16 %v11789
        %v11829 = vunpack.c.l.b16 %v11790
        %v11830 = vunpack.c.l.b16 %v11791
        %v11831 = vunpack.c.l.b16 %v11792
        %v11832 = vunpack.c.l.b16 %v11793
        %v11833 = vpack.c.b16 %v11818, %v11817
        %v11834 = vpack.c.b16 %v11820, %v11819
        %v11835 = vpack.c.b16 %v11822, %v11821
        %v11836 = vpack.c.b16 %v11824, %v11823
        %v11837 = vpack.c.b16 %v11826, %v11825
        %v11838 = vpack.c.b16 %v11828, %v11827
        %v11839 = vpack.c.b16 %v11830, %v11829
        %v11840 = vpack.c.b16 %v11832, %v11831
        %11849 = vmatprep.subr.bf16.mxu0 0
        %11850 = vmatpush1.bf16.msra.mxu0 %v11840
        %11851 = vmatprep.subr.bf16.mxu0 0
        %11852 = vmatpush1.bf16.msra.mxu0 %v11839
        %11853 = vmatprep.subr.bf16.mxu0 0
        %11854 = vmatpush1.bf16.msra.mxu0 %v11838
        %11855 = vmatprep.subr.bf16.mxu0 0
        %11856 = vmatpush1.bf16.msra.mxu0 %v11837
        %11857 = vmatprep.subr.bf16.mxu0 0
        %11858 = vmatpush1.bf16.msra.mxu0 %v11836
        %11859 = vmatprep.subr.bf16.mxu0 0
        %11860 = vmatpush1.bf16.msra.mxu0 %v11835
        %11861 = vmatprep.subr.bf16.mxu0 0
        %11862 = vmatpush1.bf16.msra.mxu0 %v11834
        %11863 = vmatprep.subr.bf16.mxu0 0
        %11864 = vmatpush1.bf16.msra.mxu0 %v11833
        %11865 = vmatprep.subr.bf16.mxu0 0
        %11866 = vmatpush2.bf16.msra.mxu0 0
        %11867 = vmatprep.subr.bf16.mxu0 0
        %11868 = vmatpush2.bf16.msra.mxu0 0
        %11869 = vmatprep.subr.bf16.mxu0 0
        %11870 = vmatpush2.bf16.msra.mxu0 0
        %11871 = vmatprep.subr.bf16.mxu0 0
        %11872 = vmatpush2.bf16.msra.mxu0 0
        %11873 = vmatprep.subr.bf16.mxu0 0
        %11874 = vmatpush2.bf16.msra.mxu0 0
        %11875 = vmatprep.subr.bf16.mxu0 0
        %11876 = vmatpush2.bf16.msra.mxu0 0
        %11877 = vmatprep.subr.bf16.mxu0 0
        %11878 = vmatpush2.bf16.msra.mxu0 0
        %11879 = vmatprep.subr.bf16.mxu0 0
        %11880 = vmatpush2.bf16.msra.mxu0 0
        %11881 = vmatprep.mubr.bf16.mxu0 0
        %11882 = vmatmul.mubr.bf16.gmra.mxu0 %v11777
        %v11883 = vpop.f32.mrf.mxu0
        %v11884 = vadd.f32 %v11799, %v11883
        %v11885 = vpop.f32.mrf.mxu0
        %v11886 = vpop.f32.mrf.mxu0
        %v11887 = vpop.f32.mrf.mxu0
        %11888 = vdwg.mxu0
        %11889 = vst [vmem:[%s572] sm:$0xff] %v11884
        %s11890 = sand.u32 %s406, 1
        %s11891 = scalar_lea.sflag [#allocation3], %s11890
        %s11892 = sand.u32 %s406, 1
        %s11893 = smul.addr %s11892, 8
        %s11894 = scalar_lea.vmem [#allocation2], %s11893
        %s11895 = sand.u32 %s432, 1
        %s11896 = scalar_lea.sflag [#allocation5], %s11895
        %s11897 = sand.u32 %s432, 1
        %s11898 = smul.addr %s11897, 8
        %s11899 = scalar_lea.vmem [#allocation4], %s11898
        // Predicated region
        $region89: #{forward.1} parent=87 // pred_check
          %p11900 = pneg %p416
        $region90: #{forward.1} parent=87 // pred_check_branch
          %11902 = sbr.rel (%p11900) target = $region92
        $region91: #{forward.1} parent=87 // pred_region
          %s11904 = ssub.s32 128, 128
          %11905 = vsyncadd %s11891, %s11904
          %s11906 = smul.addr %s36, 128
          %s11907 = scalar_lea.hbm %s17, %s11906
          %s11909 = sshll.u32 %s11894, 4
          %s11910 = int_to_ptr.vmem [resolvable:$true] %s11909
          %11912 = dma.vmem_to_hbm [thread:$0]  %s11910, 128, %s11907, %s11891
        $region92: #{forward.1} parent=87 // pred_fallthru
          _
        // Predicated region
        $region93: #{forward.1} parent=87 // pred_check
          %p11913 = pneg %p442
        $region94: #{forward.1} parent=87 // pred_check_branch
          %11915 = sbr.rel (%p11913) target = $region96
        $region95: #{forward.1} parent=87 // pred_region
          %s11917 = ssub.s32 128, 128
          %11918 = vsyncadd %s11896, %s11917
          %s11919 = smul.addr %s36, 128
          %s11920 = scalar_lea.hbm %s18, %s11919
          %s11922 = sshll.u32 %s11899, 4
          %s11923 = int_to_ptr.vmem [resolvable:$true] %s11922
          %11925 = dma.vmem_to_hbm [thread:$0]  %s11923, 128, %s11920, %s11896
        $region96: #{forward.1} parent=87 // pred_fallthru
          _
      $region88: #{forward.1} parent=5 // pred_fallthru
        _
      %p11926 = scmp.le.s32.totalorder 2, %s31
      // Predicated region
      $region97: #{forward.1} parent=5 // pred_check
        %p11927 = pneg %p11926
      $region98: #{forward.1} parent=5 // pred_check_branch
        %11929 = sbr.rel (%p11927) target = $region100
      $region99: #{forward.1} parent=5 // pred_region
        %s11930 = ssub.s32 %s31, 2
        // Predicated region
        $region101: #{forward.1} parent=99 // pred_check
          %p11931 = pneg %p422
        $region102: #{forward.1} parent=99 // pred_check_branch
          %11933 = sbr.rel (%p11931) target = $region104
        $region103: #{forward.1} parent=99 // pred_region
          %s11934 = sand.u32 %s407, 1
          %s11935 = scalar_lea.sflag [#allocation3], %s11934
          %s11936 = sand.u32 %s407, 1
          %s11937 = smul.addr %s11936, 8
          %s11938 = scalar_lea.vmem [#allocation2], %s11937
          %11939 = dma.done %s11935, 128
        $region104: #{forward.1} parent=99 // pred_fallthru
          _
        // Predicated region
        $region105: #{forward.1} parent=99 // pred_check
          %p11940 = pneg %p448
        $region106: #{forward.1} parent=99 // pred_check_branch
          %11942 = sbr.rel (%p11940) target = $region108
        $region107: #{forward.1} parent=99 // pred_region
          %s11943 = sand.u32 %s433, 1
          %s11944 = scalar_lea.sflag [#allocation5], %s11943
          %s11945 = sand.u32 %s433, 1
          %s11946 = smul.addr %s11945, 8
          %s11947 = scalar_lea.vmem [#allocation4], %s11946
          %11948 = dma.done %s11944, 128
        $region108: #{forward.1} parent=99 // pred_fallthru
          _
      $region100: #{forward.1} parent=5 // pred_fallthru
        _
    $region6: #{forward.1} parent=1 // loop_footer
      %s35 = sadd.s32 1, %s31
    $region7: #{forward.1} parent=1 // loop_footer_branch
      %30 = sbr.rel target = $region3
    $region8: #{forward.1} parent=1 // loop_exit
      _
    %11949 = vsyncpa [#allocation3], 1
    %s11950 = scalar_lea.sflag [#allocation3], 1
    %11951 = vsyncpa %s11950, 1
    %11952 = vsyncpa [#allocation5], 1
    %s11953 = scalar_lea.sflag [#allocation5], 1
    %11954 = vsyncpa %s11953, 1

</llo_original>
